<compile_context>
chip_gen: v6e
topology: v6e:2x2x1
jax: 0.10.0
libtpu: 0.0.40
codegen_flags: <defaults>
</compile_context>

<pallas_src>
import math

import jax
import jax.numpy as jnp
from jax.experimental import pallas as pl
from jax.experimental.pallas import tpu as pltpu  # noqa: F401  (TPU backend)

# ----------------------------- model config ---------------------------------
B = 2                  # batch
T = 16                 # sequence length
BT = B * T             # batch folded into rows
HIDDEN = 64            # hidden_channels
FILTER = 128           # filter_channels
N_HEADS = 2
HEAD_DIM = HIDDEN // N_HEADS
N_LAYERS = 2
KERNEL_SIZE = 3        # FFN conv kernel size
OUT_CHANNELS = 32
WINDOW = 4             # relative-attention window (attentions.Encoder default)
NREL = 2 * WINDOW + 1
EPS = 1e-5             # LayerNorm eps
NEG = -1e4             # attention mask fill value (matches reference)
PACK = 128             # lane-dense packed output width  [m | logs | z | pad]


def _layer_norm(x, gamma, beta):
    mu = jnp.mean(x, axis=-1, keepdims=True)
    var = jnp.mean((x - mu) ** 2, axis=-1, keepdims=True)
    return (x - mu) * jax.lax.rsqrt(var + EPS) * gamma + beta


# ------------------------------- fused kernel --------------------------------
def text_encoder_kernel(
    x_ref, emb_ref, mcol_ref, mrow_ref, bidc_ref, bidr_ref, zn_ref,
    wq_ref, bq_ref, wk_ref, bk_ref, wv_ref, bv_ref, wo_ref, bo_ref,
    ln1g_ref, ln1b_ref, relk_ref, relv_ref,
    w1_ref, b1_ref, w2_ref, b2_ref, ln2g_ref, ln2b_ref,
    projw_ref, projb_ref,
    out_ref,
):
    f32, bf16 = jnp.float32, jnp.bfloat16
    scale = 1.0 / math.sqrt(HEAD_DIM)

    mcol = mcol_ref[...]                                    # (BT, 1)  0/1 mask
    mrow = mrow_ref[...]                                    # (1, BT)

    # ---- shared index machinery (computed once, reused everywhere) ---------
    row = jax.lax.broadcasted_iota(jnp.int32, (BT, BT), 0)
    col = jax.lax.broadcasted_iota(jnp.int32, (BT, BT), 1)
    diag = col - row                                        # j - i
    same_blk = bidc_ref[...] == bidr_ref[...]               # block-diag (per batch elem)
    amask = jnp.logical_and(same_blk, (mcol * mrow) > 0.0)  # attention mask
    # relative-position diagonal selectors (|j-i| <= WINDOW, same batch elem)
    diag_sel = [jnp.logical_and(same_blk, diag == (r - WINDOW))
                for r in range(NREL)]
    # shift matrices for the k=3 same-padding conv (zero pad at segment edges)
    pad_l = (KERNEL_SIZE - 1) // 2
    shift = [jnp.where(jnp.logical_and(same_blk, diag == (tau - pad_l)),
                       1.0, 0.0).astype(bf16)
             for tau in range(KERNEL_SIZE)]
    lane_r = jax.lax.broadcasted_iota(jnp.int32, (BT, NREL), 1)

    # ---- x = (x + f0_emb(f0)) * x_mask   (Encoder entry) -------------------
    h = (x_ref[...] + emb_ref[...]) * mcol                  # (BT, H) f32

    for l in range(N_LAYERS):
        # ---------------- multi-head self-attention (rel-pos, window=4) -----
        hb = h.astype(bf16)
        relk_l = relk_ref[l]                                # (NREL, DK) bf16
        relv_l = relv_ref[l]
        y = jnp.zeros((BT, HIDDEN), f32) + bo_ref[l]        # output-proj bias
        for hh in range(N_HEADS):
            i = l * N_HEADS + hh
            qh = (jnp.dot(hb, wq_ref[i], preferred_element_type=f32)
                  + bq_ref[i]) * scale                      # (BT, DK)
            kh = jnp.dot(hb, wk_ref[i], preferred_element_type=f32) + bk_ref[i]
            vh = jnp.dot(hb, wv_ref[i], preferred_element_type=f32) + bv_ref[i]
            qb, kb = qh.astype(bf16), kh.astype(bf16)
            # content scores q.k^T (block-diagonal (BT, BT))
            scores = jax.lax.dot_general(qb, kb, (((1,), (1,)), ((), ())),
                                         preferred_element_type=f32)
            # relative-key logits q.E_k^T, scattered onto |j-i|<=W diagonals
            rlog = jax.lax.dot_general(qb, relk_l, (((1,), (1,)), ((), ())),
                                       preferred_element_type=f32)  # (BT, NREL)
            for r in range(NREL):
                scores = scores + jnp.where(diag_sel[r], rlog[:, r:r + 1], 0.0)
            scores = jnp.where(amask, scores, NEG)
            # softmax: EUP exp + approx reciprocal
            mx = jnp.max(scores, axis=-1, keepdims=True)
            e = jnp.exp(scores - mx)
            p = e * pl.reciprocal(jnp.sum(e, axis=-1, keepdims=True),
                                  approx=True)
            # content values
            oh = jnp.dot(p.astype(bf16), vh.astype(bf16),
                         preferred_element_type=f32)        # (BT, DK)
            # relative-value term: gather diagonals of p -> (BT, NREL) @ E_v
            prel = jnp.zeros((BT, NREL), f32)
            for r in range(NREL):
                pc = jnp.sum(jnp.where(diag_sel[r], p, 0.0), axis=-1,
                             keepdims=True)                 # (BT, 1)
                prel = prel + jnp.where(lane_r == r, pc, 0.0)
            oh = oh + jnp.dot(prel.astype(bf16), relv_l,
                              preferred_element_type=f32)
            # per-head output projection, accumulated (no head concat)
            y = y + jnp.dot(oh.astype(bf16), wo_ref[i],
                            preferred_element_type=f32)
        h = _layer_norm(h + y, ln1g_ref[l], ln1b_ref[l])

        # ---------------- FFN: mask->conv(k)->relu->mask->conv(k)->mask -----
        xm = (h * mcol).astype(bf16)
        y1 = jnp.zeros((BT, FILTER), f32) + b1_ref[l]
        for tau in range(KERNEL_SIZE):
            xs = jnp.dot(shift[tau], xm,
                         preferred_element_type=f32).astype(bf16)
            y1 = y1 + jnp.dot(xs, w1_ref[l * KERNEL_SIZE + tau],
                              preferred_element_type=f32)
        y1 = jnp.maximum(y1, 0.0) * mcol
        yb = y1.astype(bf16)
        z1 = jnp.zeros((BT, HIDDEN), f32) + b2_ref[l]
        for tau in range(KERNEL_SIZE):
            ys = jnp.dot(shift[tau], yb,
                         preferred_element_type=f32).astype(bf16)
            z1 = z1 + jnp.dot(ys, w2_ref[l * KERNEL_SIZE + tau],
                              preferred_element_type=f32)
        z1 = z1 * mcol
        h = _layer_norm(h + z1, ln2g_ref[l], ln2b_ref[l])

    # ---- Encoder exit mask, 1x1 projection, split (m, logs), z sampling ----
    hx = (h * mcol).astype(bf16)                            # Encoder returns x*mask
    stats = (jnp.dot(hx, projw_ref[...], preferred_element_type=f32)
             + projb_ref[...]) * mcol                       # (BT, 2*O) = [m|logs]
    mstat = stats[:, :OUT_CHANNELS]
    logs = stats[:, OUT_CHANNELS:]
    zsmp = (mstat + zn_ref[...] * jnp.exp(logs)) * mcol
    # single lane-dense packed store: [m | logs | z | 0] -> (BT, 128)
    out_ref[...] = jnp.concatenate(
        [stats, zsmp, jnp.zeros((BT, PACK - 3 * OUT_CHANNELS), f32)], axis=-1)


# ------------------------------ forward (glue) --------------------------------
def text_encoder_forward(params, x, x_mask, f0, z):
    """x: (B, H, T) f32, x_mask: (B, 1, T) f32, f0: (B, T) int32, z: (B, O, T) f32.
    Returns (z, m, logs, x_mask) in PyTorch (B, C, T) layout."""
    x_bt = jnp.transpose(x, (0, 2, 1)).reshape(BT, HIDDEN)
    # TODO(synk): f0 embedding gather stays in XLA (data-dependent gather).
    emb = jnp.take(params["f0_emb"], f0, axis=0).reshape(BT, HIDDEN)
    mcol = jnp.transpose(x_mask, (0, 2, 1)).reshape(BT, 1)
    mrow = mcol.reshape(1, BT)
    bid = jnp.repeat(jnp.arange(B, dtype=jnp.int32), T)
    bidc = bid.reshape(BT, 1)
    bidr = bid.reshape(1, BT)
    zn = jnp.transpose(z, (0, 2, 1)).reshape(BT, OUT_CHANNELS)

    packed = pl.pallas_call(
        text_encoder_kernel,
        out_shape=jax.ShapeDtypeStruct((BT, PACK), jnp.float32),
    )(x_bt, emb, mcol, mrow, bidc, bidr, zn,
      params["wq"], params["bq"], params["wk"], params["bk"],
      params["wv"], params["bv"], params["wo"], params["bo"],
      params["ln1_g"], params["ln1_b"],
      params["emb_rel_k"], params["emb_rel_v"],
      params["w1"], params["b1"], params["w2"], params["b2"],
      params["ln2_g"], params["ln2_b"],
      params["proj_w"], params["proj_b"])

    packed = packed.reshape(B, T, PACK)
    m = packed[..., :OUT_CHANNELS]
    logs = packed[..., OUT_CHANNELS:2 * OUT_CHANNELS]
    zout = packed[..., 2 * OUT_CHANNELS:3 * OUT_CHANNELS]
    # back to PyTorch (B, C, T) layout
    return (jnp.transpose(zout, (0, 2, 1)),
            jnp.transpose(m, (0, 2, 1)),
            jnp.transpose(logs, (0, 2, 1)),
            x_mask)


# ------------------------------ parameter init --------------------------------
def init_params(key):
    keys = iter(jax.random.split(key, 32))
    bf16 = jnp.bfloat16

    def nrm(shape, scale=0.02, dtype=jnp.float32):
        return (jax.random.normal(next(keys), shape, jnp.float32)
                * scale).astype(dtype)

    rel_std = HEAD_DIM ** -0.5
    ones_h = jnp.ones((N_LAYERS, 1, HIDDEN), jnp.float32)
    zeros_h = jnp.zeros((N_LAYERS, 1, HIDDEN), jnp.float32)
    return {
        "f0_emb": nrm((256, HIDDEN), 1.0),                        # nn.Embedding(256, H)
        # attention projections, pre-split per head, stacked over layers
        # (MXU weight operands stored in bf16, biases / LN params in f32)
        "wq": nrm((N_LAYERS * N_HEADS, HIDDEN, HEAD_DIM), dtype=bf16),
        "bq": nrm((N_LAYERS * N_HEADS, 1, HEAD_DIM)),
        "wk": nrm((N_LAYERS * N_HEADS, HIDDEN, HEAD_DIM), dtype=bf16),
        "bk": nrm((N_LAYERS * N_HEADS, 1, HEAD_DIM)),
        "wv": nrm((N_LAYERS * N_HEADS, HIDDEN, HEAD_DIM), dtype=bf16),
        "bv": nrm((N_LAYERS * N_HEADS, 1, HEAD_DIM)),
        "wo": nrm((N_LAYERS * N_HEADS, HEAD_DIM, HIDDEN), dtype=bf16),
        "bo": nrm((N_LAYERS, 1, HIDDEN)),
        "emb_rel_k": nrm((N_LAYERS, NREL, HEAD_DIM), rel_std, dtype=bf16),
        "emb_rel_v": nrm((N_LAYERS, NREL, HEAD_DIM), rel_std, dtype=bf16),
        "ln1_g": ones_h, "ln1_b": zeros_h,
        # FFN convs Conv1d(H,F,3) / Conv1d(F,H,3), stacked over (layer, tap)
        "w1": nrm((N_LAYERS * KERNEL_SIZE, HIDDEN, FILTER), dtype=bf16),
        "b1": nrm((N_LAYERS, 1, FILTER)),
        "w2": nrm((N_LAYERS * KERNEL_SIZE, FILTER, HIDDEN), dtype=bf16),
        "b2": nrm((N_LAYERS, 1, HIDDEN)),
        "ln2_g": ones_h, "ln2_b": zeros_h,
        # final 1x1 projection to 2*out_channels
        "proj_w": nrm((HIDDEN, 2 * OUT_CHANNELS), dtype=bf16),
        "proj_b": nrm((1, 2 * OUT_CHANNELS)),
    }


# ----------------------------------- main --------------------------------------
if __name__ == "__main__":
    key = jax.random.PRNGKey(0)
    k_x, k_f0, k_z, k_p = jax.random.split(key, 4)

    x = jax.random.normal(k_x, (B, HIDDEN, T), jnp.float32)
    f0 = jax.random.randint(k_f0, (B, T), 0, 256, jnp.int32)
    z_noise = jax.random.normal(k_z, (B, OUT_CHANNELS, T), jnp.float32)
    lengths = jnp.array([T, T - 4])
    x_mask = (jnp.arange(T)[None, :] < lengths[:, None]
              ).astype(jnp.float32)[:, None, :]               # (B, 1, T)

    params = init_params(k_p)

    fwd = jax.jit(text_encoder_forward)
    z_out, m_out, logs_out, mask_out = fwd(params, x, x_mask, f0, z_noise)
    jax.block_until_ready((z_out, m_out, logs_out, mask_out))

    assert z_out.shape == (B, OUT_CHANNELS, T)
    assert m_out.shape == (B, OUT_CHANNELS, T)
    assert logs_out.shape == (B, OUT_CHANNELS, T)
    assert mask_out.shape == (B, 1, T)
    assert bool(jnp.all(jnp.isfinite(z_out)))
    assert bool(jnp.all(jnp.isfinite(m_out)))
    assert bool(jnp.all(jnp.isfinite(logs_out)))
    print("KERNEL_OK")
</pallas_src>

<mosaic_0001>
module attributes {stable_mosaic.version = 11 : i64} {
  func.func @text_encoder_kernel(%arg0: memref<32x64xf32, #tpu.memory_space<vmem>>, %arg1: memref<32x64xf32, #tpu.memory_space<vmem>>, %arg2: memref<32x1xf32, #tpu.memory_space<vmem>>, %arg3: memref<1x32xf32, #tpu.memory_space<vmem>>, %arg4: memref<32x1xi32, #tpu.memory_space<vmem>>, %arg5: memref<1x32xi32, #tpu.memory_space<vmem>>, %arg6: memref<32x32xf32, #tpu.memory_space<vmem>>, %arg7: memref<4x64x32xbf16, #tpu.memory_space<vmem>>, %arg8: memref<4x1x32xf32, #tpu.memory_space<vmem>>, %arg9: memref<4x64x32xbf16, #tpu.memory_space<vmem>>, %arg10: memref<4x1x32xf32, #tpu.memory_space<vmem>>, %arg11: memref<4x64x32xbf16, #tpu.memory_space<vmem>>, %arg12: memref<4x1x32xf32, #tpu.memory_space<vmem>>, %arg13: memref<4x32x64xbf16, #tpu.memory_space<vmem>>, %arg14: memref<2x1x64xf32, #tpu.memory_space<vmem>>, %arg15: memref<2x1x64xf32, #tpu.memory_space<vmem>>, %arg16: memref<2x1x64xf32, #tpu.memory_space<vmem>>, %arg17: memref<2x9x32xbf16, #tpu.memory_space<vmem>>, %arg18: memref<2x9x32xbf16, #tpu.memory_space<vmem>>, %arg19: memref<6x64x128xbf16, #tpu.memory_space<vmem>>, %arg20: memref<2x1x128xf32, #tpu.memory_space<vmem>>, %arg21: memref<6x128x64xbf16, #tpu.memory_space<vmem>>, %arg22: memref<2x1x64xf32, #tpu.memory_space<vmem>>, %arg23: memref<2x1x64xf32, #tpu.memory_space<vmem>>, %arg24: memref<2x1x64xf32, #tpu.memory_space<vmem>>, %arg25: memref<64x64xbf16, #tpu.memory_space<vmem>>, %arg26: memref<1x64xf32, #tpu.memory_space<vmem>>, %arg27: memref<32x128xf32, #tpu.memory_space<vmem>>) attributes {dimension_semantics = [], scalar_prefetch = 0 : i64, scratch_operands = 0 : i64, tpu.core_type = #tpu.core_type<tc>} {
    %c0 = arith.constant 0 : index
    %c0_0 = arith.constant 0 : index
    %0 = vector.load %arg2[%c0, %c0_0] : memref<32x1xf32, #tpu.memory_space<vmem>>, vector<32x1xf32>
    %c0_1 = arith.constant 0 : index
    %c0_2 = arith.constant 0 : index
    %1 = vector.load %arg3[%c0_1, %c0_2] : memref<1x32xf32, #tpu.memory_space<vmem>>, vector<1x32xf32>
    %2 = tpu.iota {dimensions = array<i32: 0>} : vector<32x32xi32>
    %3 = tpu.iota {dimensions = array<i32: 1>} : vector<32x32xi32>
    %4 = arith.subi %3, %2 : vector<32x32xi32>
    %c0_3 = arith.constant 0 : index
    %c0_4 = arith.constant 0 : index
    %5 = vector.load %arg4[%c0_3, %c0_4] : memref<32x1xi32, #tpu.memory_space<vmem>>, vector<32x1xi32>
    %c0_5 = arith.constant 0 : index
    %c0_6 = arith.constant 0 : index
    %6 = vector.load %arg5[%c0_5, %c0_6] : memref<1x32xi32, #tpu.memory_space<vmem>>, vector<1x32xi32>
    %7 = vector.broadcast %5 : vector<32x1xi32> to vector<32x32xi32>
    %8 = vector.broadcast %6 : vector<1x32xi32> to vector<32x32xi32>
    %9 = arith.cmpi eq, %7, %8 : vector<32x32xi32>
    %10 = vector.broadcast %0 : vector<32x1xf32> to vector<32x32xf32>
    %11 = vector.broadcast %1 : vector<1x32xf32> to vector<32x32xf32>
    %12 = arith.mulf %10, %11 : vector<32x32xf32>
    %cst = arith.constant 0.000000e+00 : f32
    %13 = vector.broadcast %cst : f32 to vector<32x32xf32>
    %14 = arith.cmpf ogt, %12, %13 : vector<32x32xf32>
    %15 = arith.andi %9, %14 : vector<32x32xi1>
    %c-4_i32 = arith.constant -4 : i32
    %16 = vector.broadcast %c-4_i32 : i32 to vector<32x32xi32>
    %17 = arith.cmpi eq, %4, %16 : vector<32x32xi32>
    %18 = arith.andi %9, %17 : vector<32x32xi1>
    %c-3_i32 = arith.constant -3 : i32
    %19 = vector.broadcast %c-3_i32 : i32 to vector<32x32xi32>
    %20 = arith.cmpi eq, %4, %19 : vector<32x32xi32>
    %21 = arith.andi %9, %20 : vector<32x32xi1>
    %c-2_i32 = arith.constant -2 : i32
    %22 = vector.broadcast %c-2_i32 : i32 to vector<32x32xi32>
    %23 = arith.cmpi eq, %4, %22 : vector<32x32xi32>
    %24 = arith.andi %9, %23 : vector<32x32xi1>
    %c-1_i32 = arith.constant -1 : i32
    %25 = vector.broadcast %c-1_i32 : i32 to vector<32x32xi32>
    %26 = arith.cmpi eq, %4, %25 : vector<32x32xi32>
    %27 = arith.andi %9, %26 : vector<32x32xi1>
    %c0_i32 = arith.constant 0 : i32
    %28 = vector.broadcast %c0_i32 : i32 to vector<32x32xi32>
    %29 = arith.cmpi eq, %4, %28 : vector<32x32xi32>
    %30 = arith.andi %9, %29 : vector<32x32xi1>
    %c1_i32 = arith.constant 1 : i32
    %31 = vector.broadcast %c1_i32 : i32 to vector<32x32xi32>
    %32 = arith.cmpi eq, %4, %31 : vector<32x32xi32>
    %33 = arith.andi %9, %32 : vector<32x32xi1>
    %c2_i32 = arith.constant 2 : i32
    %34 = vector.broadcast %c2_i32 : i32 to vector<32x32xi32>
    %35 = arith.cmpi eq, %4, %34 : vector<32x32xi32>
    %36 = arith.andi %9, %35 : vector<32x32xi1>
    %c3_i32 = arith.constant 3 : i32
    %37 = vector.broadcast %c3_i32 : i32 to vector<32x32xi32>
    %38 = arith.cmpi eq, %4, %37 : vector<32x32xi32>
    %39 = arith.andi %9, %38 : vector<32x32xi1>
    %c4_i32 = arith.constant 4 : i32
    %40 = vector.broadcast %c4_i32 : i32 to vector<32x32xi32>
    %41 = arith.cmpi eq, %4, %40 : vector<32x32xi32>
    %42 = arith.andi %9, %41 : vector<32x32xi1>
    %c-1_i32_7 = arith.constant -1 : i32
    %43 = vector.broadcast %c-1_i32_7 : i32 to vector<32x32xi32>
    %44 = arith.cmpi eq, %4, %43 : vector<32x32xi32>
    %45 = arith.andi %9, %44 : vector<32x32xi1>
    %cst_8 = arith.constant 1.000000e+00 : f32
    %cst_9 = arith.constant 0.000000e+00 : f32
    %46 = vector.broadcast %cst_8 : f32 to vector<32x32xf32>
    %47 = vector.broadcast %cst_9 : f32 to vector<32x32xf32>
    %48 = arith.select %45, %46, %47 : vector<32x32xi1>, vector<32x32xf32>
    %49 = arith.truncf %48 : vector<32x32xf32> to vector<32x32xbf16>
    %c0_i32_10 = arith.constant 0 : i32
    %50 = vector.broadcast %c0_i32_10 : i32 to vector<32x32xi32>
    %51 = arith.cmpi eq, %4, %50 : vector<32x32xi32>
    %52 = arith.andi %9, %51 : vector<32x32xi1>
    %cst_11 = arith.constant 1.000000e+00 : f32
    %cst_12 = arith.constant 0.000000e+00 : f32
    %53 = vector.broadcast %cst_11 : f32 to vector<32x32xf32>
    %54 = vector.broadcast %cst_12 : f32 to vector<32x32xf32>
    %55 = arith.select %52, %53, %54 : vector<32x32xi1>, vector<32x32xf32>
    %56 = arith.truncf %55 : vector<32x32xf32> to vector<32x32xbf16>
    %c1_i32_13 = arith.constant 1 : i32
    %57 = vector.broadcast %c1_i32_13 : i32 to vector<32x32xi32>
    %58 = arith.cmpi eq, %4, %57 : vector<32x32xi32>
    %59 = arith.andi %9, %58 : vector<32x32xi1>
    %cst_14 = arith.constant 1.000000e+00 : f32
    %cst_15 = arith.constant 0.000000e+00 : f32
    %60 = vector.broadcast %cst_14 : f32 to vector<32x32xf32>
    %61 = vector.broadcast %cst_15 : f32 to vector<32x32xf32>
    %62 = arith.select %59, %60, %61 : vector<32x32xi1>, vector<32x32xf32>
    %63 = arith.truncf %62 : vector<32x32xf32> to vector<32x32xbf16>
    %64 = tpu.iota {dimensions = array<i32: 1>} : vector<32x9xi32>
    %c0_16 = arith.constant 0 : index
    %c0_17 = arith.constant 0 : index
    %65 = vector.load %arg0[%c0_16, %c0_17] : memref<32x64xf32, #tpu.memory_space<vmem>>, vector<32x64xf32>
    %c0_18 = arith.constant 0 : index
    %c0_19 = arith.constant 0 : index
    %66 = vector.load %arg1[%c0_18, %c0_19] : memref<32x64xf32, #tpu.memory_space<vmem>>, vector<32x64xf32>
    %67 = arith.addf %65, %66 : vector<32x64xf32>
    %68 = vector.broadcast %0 : vector<32x1xf32> to vector<32x64xf32>
    %69 = arith.mulf %67, %68 : vector<32x64xf32>
    %70 = arith.truncf %69 : vector<32x64xf32> to vector<32x64xbf16>
    %c0_20 = arith.constant 0 : index
    %c0_21 = arith.constant 0 : index
    %c0_22 = arith.constant 0 : index
    %71 = vector.load %arg17[%c0_20, %c0_21, %c0_22] : memref<2x9x32xbf16, #tpu.memory_space<vmem>>, vector<1x9x32xbf16>
    %72 = vector.shape_cast %71 : vector<1x9x32xbf16> to vector<9x32xbf16>
    %c0_23 = arith.constant 0 : index
    %c0_24 = arith.constant 0 : index
    %c0_25 = arith.constant 0 : index
    %73 = vector.load %arg18[%c0_23, %c0_24, %c0_25] : memref<2x9x32xbf16, #tpu.memory_space<vmem>>, vector<1x9x32xbf16>
    %74 = vector.shape_cast %73 : vector<1x9x32xbf16> to vector<9x32xbf16>
    %cst_26 = arith.constant 0.000000e+00 : f32
    %75 = vector.broadcast %cst_26 : f32 to vector<32x64xf32>
    %c0_27 = arith.constant 0 : index
    %c0_28 = arith.constant 0 : index
    %c0_29 = arith.constant 0 : index
    %76 = vector.load %arg14[%c0_27, %c0_28, %c0_29] : memref<2x1x64xf32, #tpu.memory_space<vmem>>, vector<1x1x64xf32>
    %77 = vector.shape_cast %76 : vector<1x1x64xf32> to vector<1x64xf32>
    %78 = vector.broadcast %77 : vector<1x64xf32> to vector<32x64xf32>
    %79 = arith.addf %75, %78 : vector<32x64xf32>
    %c0_30 = arith.constant 0 : index
    %c0_31 = arith.constant 0 : index
    %c0_32 = arith.constant 0 : index
    %80 = vector.load %arg7[%c0_30, %c0_31, %c0_32] : memref<4x64x32xbf16, #tpu.memory_space<vmem>>, vector<1x64x32xbf16>
    %81 = vector.shape_cast %80 : vector<1x64x32xbf16> to vector<64x32xbf16>
    %cst_33 = arith.constant dense<0.000000e+00> : vector<32x32xf32>
    %82 = tpu.matmul %70, %81, %cst_33 {dimension_numbers = #tpu.dot_dimension_numbers<[1], [0], [0], [1], [0, 0, 1, 1], [], []>} : vector<32x64xbf16>, vector<64x32xbf16>, vector<32x32xf32> -> vector<32x32xf32>
    %c0_34 = arith.constant 0 : index
    %c0_35 = arith.constant 0 : index
    %c0_36 = arith.constant 0 : index
    %83 = vector.load %arg8[%c0_34, %c0_35, %c0_36] : memref<4x1x32xf32, #tpu.memory_space<vmem>>, vector<1x1x32xf32>
    %84 = vector.shape_cast %83 : vector<1x1x32xf32> to vector<1x32xf32>
    %85 = vector.broadcast %84 : vector<1x32xf32> to vector<32x32xf32>
    %86 = arith.addf %82, %85 : vector<32x32xf32>
    %cst_37 = arith.constant 0.176776692 : f32
    %87 = vector.broadcast %cst_37 : f32 to vector<32x32xf32>
    %88 = arith.mulf %86, %87 : vector<32x32xf32>
    %c0_38 = arith.constant 0 : index
    %c0_39 = arith.constant 0 : index
    %c0_40 = arith.constant 0 : index
    %89 = vector.load %arg9[%c0_38, %c0_39, %c0_40] : memref<4x64x32xbf16, #tpu.memory_space<vmem>>, vector<1x64x32xbf16>
    %90 = vector.shape_cast %89 : vector<1x64x32xbf16> to vector<64x32xbf16>
    %cst_41 = arith.constant dense<0.000000e+00> : vector<32x32xf32>
    %91 = tpu.matmul %70, %90, %cst_41 {dimension_numbers = #tpu.dot_dimension_numbers<[1], [0], [0], [1], [0, 0, 1, 1], [], []>} : vector<32x64xbf16>, vector<64x32xbf16>, vector<32x32xf32> -> vector<32x32xf32>
    %c0_42 = arith.constant 0 : index
    %c0_43 = arith.constant 0 : index
    %c0_44 = arith.constant 0 : index
    %92 = vector.load %arg10[%c0_42, %c0_43, %c0_44] : memref<4x1x32xf32, #tpu.memory_space<vmem>>, vector<1x1x32xf32>
    %93 = vector.shape_cast %92 : vector<1x1x32xf32> to vector<1x32xf32>
    %94 = vector.broadcast %93 : vector<1x32xf32> to vector<32x32xf32>
    %95 = arith.addf %91, %94 : vector<32x32xf32>
    %c0_45 = arith.constant 0 : index
    %c0_46 = arith.constant 0 : index
    %c0_47 = arith.constant 0 : index
    %96 = vector.load %arg11[%c0_45, %c0_46, %c0_47] : memref<4x64x32xbf16, #tpu.memory_space<vmem>>, vector<1x64x32xbf16>
    %97 = vector.shape_cast %96 : vector<1x64x32xbf16> to vector<64x32xbf16>
    %cst_48 = arith.constant dense<0.000000e+00> : vector<32x32xf32>
    %98 = tpu.matmul %70, %97, %cst_48 {dimension_numbers = #tpu.dot_dimension_numbers<[1], [0], [0], [1], [0, 0, 1, 1], [], []>} : vector<32x64xbf16>, vector<64x32xbf16>, vector<32x32xf32> -> vector<32x32xf32>
    %c0_49 = arith.constant 0 : index
    %c0_50 = arith.constant 0 : index
    %c0_51 = arith.constant 0 : index
    %99 = vector.load %arg12[%c0_49, %c0_50, %c0_51] : memref<4x1x32xf32, #tpu.memory_space<vmem>>, vector<1x1x32xf32>
    %100 = vector.shape_cast %99 : vector<1x1x32xf32> to vector<1x32xf32>
    %101 = vector.broadcast %100 : vector<1x32xf32> to vector<32x32xf32>
    %102 = arith.addf %98, %101 : vector<32x32xf32>
    %103 = arith.truncf %88 : vector<32x32xf32> to vector<32x32xbf16>
    %104 = arith.truncf %95 : vector<32x32xf32> to vector<32x32xbf16>
    %cst_52 = arith.constant dense<0.000000e+00> : vector<32x32xf32>
    %105 = tpu.matmul %103, %104, %cst_52 {dimension_numbers = #tpu.dot_dimension_numbers<[1], [1], [0], [0], [0, 0, 1, 0], [], []>} : vector<32x32xbf16>, vector<32x32xbf16>, vector<32x32xf32> -> vector<32x32xf32>
    %cst_53 = arith.constant dense<0.000000e+00> : vector<32x9xf32>
    %106 = tpu.matmul %103, %72, %cst_53 {dimension_numbers = #tpu.dot_dimension_numbers<[1], [1], [0], [0], [0, 0, 1, 0], [], []>} : vector<32x32xbf16>, vector<9x32xbf16>, vector<32x9xf32> -> vector<32x9xf32>
    %107 = vector.extract_strided_slice %106 {offsets = [0, 0], sizes = [32, 1], strides = [1, 1]} : vector<32x9xf32> to vector<32x1xf32>
    %cst_54 = arith.constant 0.000000e+00 : f32
    %108 = vector.shape_cast %107 : vector<32x1xf32> to vector<32x1xf32>
    %109 = vector.broadcast %108 : vector<32x1xf32> to vector<32x32xf32>
    %110 = vector.broadcast %cst_54 : f32 to vector<32x32xf32>
    %111 = arith.select %18, %109, %110 : vector<32x32xi1>, vector<32x32xf32>
    %112 = arith.addf %105, %111 : vector<32x32xf32>
    %113 = vector.extract_strided_slice %106 {offsets = [0, 1], sizes = [32, 1], strides = [1, 1]} : vector<32x9xf32> to vector<32x1xf32>
    %cst_55 = arith.constant 0.000000e+00 : f32
    %114 = vector.shape_cast %113 : vector<32x1xf32> to vector<32x1xf32>
    %115 = vector.broadcast %114 : vector<32x1xf32> to vector<32x32xf32>
    %116 = vector.broadcast %cst_55 : f32 to vector<32x32xf32>
    %117 = arith.select %21, %115, %116 : vector<32x32xi1>, vector<32x32xf32>
    %118 = arith.addf %112, %117 : vector<32x32xf32>
    %119 = vector.extract_strided_slice %106 {offsets = [0, 2], sizes = [32, 1], strides = [1, 1]} : vector<32x9xf32> to vector<32x1xf32>
    %cst_56 = arith.constant 0.000000e+00 : f32
    %120 = vector.shape_cast %119 : vector<32x1xf32> to vector<32x1xf32>
    %121 = vector.broadcast %120 : vector<32x1xf32> to vector<32x32xf32>
    %122 = vector.broadcast %cst_56 : f32 to vector<32x32xf32>
    %123 = arith.select %24, %121, %122 : vector<32x32xi1>, vector<32x32xf32>
    %124 = arith.addf %118, %123 : vector<32x32xf32>
    %125 = vector.extract_strided_slice %106 {offsets = [0, 3], sizes = [32, 1], strides = [1, 1]} : vector<32x9xf32> to vector<32x1xf32>
    %cst_57 = arith.constant 0.000000e+00 : f32
    %126 = vector.shape_cast %125 : vector<32x1xf32> to vector<32x1xf32>
    %127 = vector.broadcast %126 : vector<32x1xf32> to vector<32x32xf32>
    %128 = vector.broadcast %cst_57 : f32 to vector<32x32xf32>
    %129 = arith.select %27, %127, %128 : vector<32x32xi1>, vector<32x32xf32>
    %130 = arith.addf %124, %129 : vector<32x32xf32>
    %131 = vector.extract_strided_slice %106 {offsets = [0, 4], sizes = [32, 1], strides = [1, 1]} : vector<32x9xf32> to vector<32x1xf32>
    %cst_58 = arith.constant 0.000000e+00 : f32
    %132 = vector.shape_cast %131 : vector<32x1xf32> to vector<32x1xf32>
    %133 = vector.broadcast %132 : vector<32x1xf32> to vector<32x32xf32>
    %134 = vector.broadcast %cst_58 : f32 to vector<32x32xf32>
    %135 = arith.select %30, %133, %134 : vector<32x32xi1>, vector<32x32xf32>
    %136 = arith.addf %130, %135 : vector<32x32xf32>
    %137 = vector.extract_strided_slice %106 {offsets = [0, 5], sizes = [32, 1], strides = [1, 1]} : vector<32x9xf32> to vector<32x1xf32>
    %cst_59 = arith.constant 0.000000e+00 : f32
    %138 = vector.shape_cast %137 : vector<32x1xf32> to vector<32x1xf32>
    %139 = vector.broadcast %138 : vector<32x1xf32> to vector<32x32xf32>
    %140 = vector.broadcast %cst_59 : f32 to vector<32x32xf32>
    %141 = arith.select %33, %139, %140 : vector<32x32xi1>, vector<32x32xf32>
    %142 = arith.addf %136, %141 : vector<32x32xf32>
    %143 = vector.extract_strided_slice %106 {offsets = [0, 6], sizes = [32, 1], strides = [1, 1]} : vector<32x9xf32> to vector<32x1xf32>
    %cst_60 = arith.constant 0.000000e+00 : f32
    %144 = vector.shape_cast %143 : vector<32x1xf32> to vector<32x1xf32>
    %145 = vector.broadcast %144 : vector<32x1xf32> to vector<32x32xf32>
    %146 = vector.broadcast %cst_60 : f32 to vector<32x32xf32>
    %147 = arith.select %36, %145, %146 : vector<32x32xi1>, vector<32x32xf32>
    %148 = arith.addf %142, %147 : vector<32x32xf32>
    %149 = vector.extract_strided_slice %106 {offsets = [0, 7], sizes = [32, 1], strides = [1, 1]} : vector<32x9xf32> to vector<32x1xf32>
    %cst_61 = arith.constant 0.000000e+00 : f32
    %150 = vector.shape_cast %149 : vector<32x1xf32> to vector<32x1xf32>
    %151 = vector.broadcast %150 : vector<32x1xf32> to vector<32x32xf32>
    %152 = vector.broadcast %cst_61 : f32 to vector<32x32xf32>
    %153 = arith.select %39, %151, %152 : vector<32x32xi1>, vector<32x32xf32>
    %154 = arith.addf %148, %153 : vector<32x32xf32>
    %155 = vector.extract_strided_slice %106 {offsets = [0, 8], sizes = [32, 1], strides = [1, 1]} : vector<32x9xf32> to vector<32x1xf32>
    %cst_62 = arith.constant 0.000000e+00 : f32
    %156 = vector.shape_cast %155 : vector<32x1xf32> to vector<32x1xf32>
    %157 = vector.broadcast %156 : vector<32x1xf32> to vector<32x32xf32>
    %158 = vector.broadcast %cst_62 : f32 to vector<32x32xf32>
    %159 = arith.select %42, %157, %158 : vector<32x32xi1>, vector<32x32xf32>
    %160 = arith.addf %154, %159 : vector<32x32xf32>
    %cst_63 = arith.constant -1.000000e+04 : f32
    %161 = vector.broadcast %cst_63 : f32 to vector<32x32xf32>
    %162 = arith.select %15, %160, %161 : vector<32x32xi1>, vector<32x32xf32>
    %cst_64 = arith.constant dense<0xFF800000> : vector<32xf32>
    %163 = vector.multi_reduction <maximumf>, %162, %cst_64 [1] : vector<32x32xf32> to vector<32xf32>
    %164 = vector.shape_cast %163 : vector<32xf32> to vector<32x1xf32>
    %165 = vector.broadcast %164 : vector<32x1xf32> to vector<32x32xf32>
    %166 = arith.subf %162, %165 : vector<32x32xf32>
    %167 = math.exp %166 : vector<32x32xf32>
    %cst_65 = arith.constant dense<0.000000e+00> : vector<32xf32>
    %168 = vector.multi_reduction <add>, %167, %cst_65 [1] : vector<32x32xf32> to vector<32xf32>
    %169 = vector.shape_cast %168 : vector<32xf32> to vector<32x1xf32>
    %170 = tpu.reciprocal %169 {approx = true} : vector<32x1xf32> -> vector<32x1xf32>
    %171 = vector.broadcast %170 : vector<32x1xf32> to vector<32x32xf32>
    %172 = arith.mulf %167, %171 : vector<32x32xf32>
    %173 = arith.truncf %172 : vector<32x32xf32> to vector<32x32xbf16>
    %174 = arith.truncf %102 : vector<32x32xf32> to vector<32x32xbf16>
    %cst_66 = arith.constant dense<0.000000e+00> : vector<32x32xf32>
    %175 = tpu.matmul %173, %174, %cst_66 {dimension_numbers = #tpu.dot_dimension_numbers<[1], [0], [0], [1], [0, 0, 1, 1], [], []>} : vector<32x32xbf16>, vector<32x32xbf16>, vector<32x32xf32> -> vector<32x32xf32>
    %cst_67 = arith.constant 0.000000e+00 : f32
    %176 = vector.broadcast %cst_67 : f32 to vector<32x9xf32>
    %cst_68 = arith.constant 0.000000e+00 : f32
    %177 = vector.broadcast %cst_68 : f32 to vector<32x32xf32>
    %178 = arith.select %18, %172, %177 : vector<32x32xi1>, vector<32x32xf32>
    %cst_69 = arith.constant dense<0.000000e+00> : vector<32xf32>
    %179 = vector.multi_reduction <add>, %178, %cst_69 [1] : vector<32x32xf32> to vector<32xf32>
    %180 = vector.shape_cast %179 : vector<32xf32> to vector<32x1xf32>
    %c0_i32_70 = arith.constant 0 : i32
    %181 = vector.broadcast %c0_i32_70 : i32 to vector<32x9xi32>
    %182 = arith.cmpi eq, %64, %181 : vector<32x9xi32>
    %cst_71 = arith.constant 0.000000e+00 : f32
    %183 = vector.shape_cast %180 : vector<32x1xf32> to vector<32x1xf32>
    %184 = vector.broadcast %183 : vector<32x1xf32> to vector<32x9xf32>
    %185 = vector.broadcast %cst_71 : f32 to vector<32x9xf32>
    %186 = arith.select %182, %184, %185 : vector<32x9xi1>, vector<32x9xf32>
    %187 = arith.addf %176, %186 : vector<32x9xf32>
    %cst_72 = arith.constant 0.000000e+00 : f32
    %188 = vector.broadcast %cst_72 : f32 to vector<32x32xf32>
    %189 = arith.select %21, %172, %188 : vector<32x32xi1>, vector<32x32xf32>
    %cst_73 = arith.constant dense<0.000000e+00> : vector<32xf32>
    %190 = vector.multi_reduction <add>, %189, %cst_73 [1] : vector<32x32xf32> to vector<32xf32>
    %191 = vector.shape_cast %190 : vector<32xf32> to vector<32x1xf32>
    %c1_i32_74 = arith.constant 1 : i32
    %192 = vector.broadcast %c1_i32_74 : i32 to vector<32x9xi32>
    %193 = arith.cmpi eq, %64, %192 : vector<32x9xi32>
    %cst_75 = arith.constant 0.000000e+00 : f32
    %194 = vector.shape_cast %191 : vector<32x1xf32> to vector<32x1xf32>
    %195 = vector.broadcast %194 : vector<32x1xf32> to vector<32x9xf32>
    %196 = vector.broadcast %cst_75 : f32 to vector<32x9xf32>
    %197 = arith.select %193, %195, %196 : vector<32x9xi1>, vector<32x9xf32>
    %198 = arith.addf %187, %197 : vector<32x9xf32>
    %cst_76 = arith.constant 0.000000e+00 : f32
    %199 = vector.broadcast %cst_76 : f32 to vector<32x32xf32>
    %200 = arith.select %24, %172, %199 : vector<32x32xi1>, vector<32x32xf32>
    %cst_77 = arith.constant dense<0.000000e+00> : vector<32xf32>
    %201 = vector.multi_reduction <add>, %200, %cst_77 [1] : vector<32x32xf32> to vector<32xf32>
    %202 = vector.shape_cast %201 : vector<32xf32> to vector<32x1xf32>
    %c2_i32_78 = arith.constant 2 : i32
    %203 = vector.broadcast %c2_i32_78 : i32 to vector<32x9xi32>
    %204 = arith.cmpi eq, %64, %203 : vector<32x9xi32>
    %cst_79 = arith.constant 0.000000e+00 : f32
    %205 = vector.shape_cast %202 : vector<32x1xf32> to vector<32x1xf32>
    %206 = vector.broadcast %205 : vector<32x1xf32> to vector<32x9xf32>
    %207 = vector.broadcast %cst_79 : f32 to vector<32x9xf32>
    %208 = arith.select %204, %206, %207 : vector<32x9xi1>, vector<32x9xf32>
    %209 = arith.addf %198, %208 : vector<32x9xf32>
    %cst_80 = arith.constant 0.000000e+00 : f32
    %210 = vector.broadcast %cst_80 : f32 to vector<32x32xf32>
    %211 = arith.select %27, %172, %210 : vector<32x32xi1>, vector<32x32xf32>
    %cst_81 = arith.constant dense<0.000000e+00> : vector<32xf32>
    %212 = vector.multi_reduction <add>, %211, %cst_81 [1] : vector<32x32xf32> to vector<32xf32>
    %213 = vector.shape_cast %212 : vector<32xf32> to vector<32x1xf32>
    %c3_i32_82 = arith.constant 3 : i32
    %214 = vector.broadcast %c3_i32_82 : i32 to vector<32x9xi32>
    %215 = arith.cmpi eq, %64, %214 : vector<32x9xi32>
    %cst_83 = arith.constant 0.000000e+00 : f32
    %216 = vector.shape_cast %213 : vector<32x1xf32> to vector<32x1xf32>
    %217 = vector.broadcast %216 : vector<32x1xf32> to vector<32x9xf32>
    %218 = vector.broadcast %cst_83 : f32 to vector<32x9xf32>
    %219 = arith.select %215, %217, %218 : vector<32x9xi1>, vector<32x9xf32>
    %220 = arith.addf %209, %219 : vector<32x9xf32>
    %cst_84 = arith.constant 0.000000e+00 : f32
    %221 = vector.broadcast %cst_84 : f32 to vector<32x32xf32>
    %222 = arith.select %30, %172, %221 : vector<32x32xi1>, vector<32x32xf32>
    %cst_85 = arith.constant dense<0.000000e+00> : vector<32xf32>
    %223 = vector.multi_reduction <add>, %222, %cst_85 [1] : vector<32x32xf32> to vector<32xf32>
    %224 = vector.shape_cast %223 : vector<32xf32> to vector<32x1xf32>
    %c4_i32_86 = arith.constant 4 : i32
    %225 = vector.broadcast %c4_i32_86 : i32 to vector<32x9xi32>
    %226 = arith.cmpi eq, %64, %225 : vector<32x9xi32>
    %cst_87 = arith.constant 0.000000e+00 : f32
    %227 = vector.shape_cast %224 : vector<32x1xf32> to vector<32x1xf32>
    %228 = vector.broadcast %227 : vector<32x1xf32> to vector<32x9xf32>
    %229 = vector.broadcast %cst_87 : f32 to vector<32x9xf32>
    %230 = arith.select %226, %228, %229 : vector<32x9xi1>, vector<32x9xf32>
    %231 = arith.addf %220, %230 : vector<32x9xf32>
    %cst_88 = arith.constant 0.000000e+00 : f32
    %232 = vector.broadcast %cst_88 : f32 to vector<32x32xf32>
    %233 = arith.select %33, %172, %232 : vector<32x32xi1>, vector<32x32xf32>
    %cst_89 = arith.constant dense<0.000000e+00> : vector<32xf32>
    %234 = vector.multi_reduction <add>, %233, %cst_89 [1] : vector<32x32xf32> to vector<32xf32>
    %235 = vector.shape_cast %234 : vector<32xf32> to vector<32x1xf32>
    %c5_i32 = arith.constant 5 : i32
    %236 = vector.broadcast %c5_i32 : i32 to vector<32x9xi32>
    %237 = arith.cmpi eq, %64, %236 : vector<32x9xi32>
    %cst_90 = arith.constant 0.000000e+00 : f32
    %238 = vector.shape_cast %235 : vector<32x1xf32> to vector<32x1xf32>
    %239 = vector.broadcast %238 : vector<32x1xf32> to vector<32x9xf32>
    %240 = vector.broadcast %cst_90 : f32 to vector<32x9xf32>
    %241 = arith.select %237, %239, %240 : vector<32x9xi1>, vector<32x9xf32>
    %242 = arith.addf %231, %241 : vector<32x9xf32>
    %cst_91 = arith.constant 0.000000e+00 : f32
    %243 = vector.broadcast %cst_91 : f32 to vector<32x32xf32>
    %244 = arith.select %36, %172, %243 : vector<32x32xi1>, vector<32x32xf32>
    %cst_92 = arith.constant dense<0.000000e+00> : vector<32xf32>
    %245 = vector.multi_reduction <add>, %244, %cst_92 [1] : vector<32x32xf32> to vector<32xf32>
    %246 = vector.shape_cast %245 : vector<32xf32> to vector<32x1xf32>
    %c6_i32 = arith.constant 6 : i32
    %247 = vector.broadcast %c6_i32 : i32 to vector<32x9xi32>
    %248 = arith.cmpi eq, %64, %247 : vector<32x9xi32>
    %cst_93 = arith.constant 0.000000e+00 : f32
    %249 = vector.shape_cast %246 : vector<32x1xf32> to vector<32x1xf32>
    %250 = vector.broadcast %249 : vector<32x1xf32> to vector<32x9xf32>
    %251 = vector.broadcast %cst_93 : f32 to vector<32x9xf32>
    %252 = arith.select %248, %250, %251 : vector<32x9xi1>, vector<32x9xf32>
    %253 = arith.addf %242, %252 : vector<32x9xf32>
    %cst_94 = arith.constant 0.000000e+00 : f32
    %254 = vector.broadcast %cst_94 : f32 to vector<32x32xf32>
    %255 = arith.select %39, %172, %254 : vector<32x32xi1>, vector<32x32xf32>
    %cst_95 = arith.constant dense<0.000000e+00> : vector<32xf32>
    %256 = vector.multi_reduction <add>, %255, %cst_95 [1] : vector<32x32xf32> to vector<32xf32>
    %257 = vector.shape_cast %256 : vector<32xf32> to vector<32x1xf32>
    %c7_i32 = arith.constant 7 : i32
    %258 = vector.broadcast %c7_i32 : i32 to vector<32x9xi32>
    %259 = arith.cmpi eq, %64, %258 : vector<32x9xi32>
    %cst_96 = arith.constant 0.000000e+00 : f32
    %260 = vector.shape_cast %257 : vector<32x1xf32> to vector<32x1xf32>
    %261 = vector.broadcast %260 : vector<32x1xf32> to vector<32x9xf32>
    %262 = vector.broadcast %cst_96 : f32 to vector<32x9xf32>
    %263 = arith.select %259, %261, %262 : vector<32x9xi1>, vector<32x9xf32>
    %264 = arith.addf %253, %263 : vector<32x9xf32>
    %cst_97 = arith.constant 0.000000e+00 : f32
    %265 = vector.broadcast %cst_97 : f32 to vector<32x32xf32>
    %266 = arith.select %42, %172, %265 : vector<32x32xi1>, vector<32x32xf32>
    %cst_98 = arith.constant dense<0.000000e+00> : vector<32xf32>
    %267 = vector.multi_reduction <add>, %266, %cst_98 [1] : vector<32x32xf32> to vector<32xf32>
    %268 = vector.shape_cast %267 : vector<32xf32> to vector<32x1xf32>
    %c8_i32 = arith.constant 8 : i32
    %269 = vector.broadcast %c8_i32 : i32 to vector<32x9xi32>
    %270 = arith.cmpi eq, %64, %269 : vector<32x9xi32>
    %cst_99 = arith.constant 0.000000e+00 : f32
    %271 = vector.shape_cast %268 : vector<32x1xf32> to vector<32x1xf32>
    %272 = vector.broadcast %271 : vector<32x1xf32> to vector<32x9xf32>
    %273 = vector.broadcast %cst_99 : f32 to vector<32x9xf32>
    %274 = arith.select %270, %272, %273 : vector<32x9xi1>, vector<32x9xf32>
    %275 = arith.addf %264, %274 : vector<32x9xf32>
    %276 = arith.truncf %275 : vector<32x9xf32> to vector<32x9xbf16>
    %cst_100 = arith.constant dense<0.000000e+00> : vector<32x32xf32>
    %277 = tpu.matmul %276, %74, %cst_100 {dimension_numbers = #tpu.dot_dimension_numbers<[1], [0], [0], [1], [0, 0, 1, 1], [], []>} : vector<32x9xbf16>, vector<9x32xbf16>, vector<32x32xf32> -> vector<32x32xf32>
    %278 = arith.addf %175, %277 : vector<32x32xf32>
    %279 = arith.truncf %278 : vector<32x32xf32> to vector<32x32xbf16>
    %c0_101 = arith.constant 0 : index
    %c0_102 = arith.constant 0 : index
    %c0_103 = arith.constant 0 : index
    %280 = vector.load %arg13[%c0_101, %c0_102, %c0_103] : memref<4x32x64xbf16, #tpu.memory_space<vmem>>, vector<1x32x64xbf16>
    %281 = vector.shape_cast %280 : vector<1x32x64xbf16> to vector<32x64xbf16>
    %cst_104 = arith.constant dense<0.000000e+00> : vector<32x64xf32>
    %282 = tpu.matmul %279, %281, %cst_104 {dimension_numbers = #tpu.dot_dimension_numbers<[1], [0], [0], [1], [0, 0, 1, 1], [], []>} : vector<32x32xbf16>, vector<32x64xbf16>, vector<32x64xf32> -> vector<32x64xf32>
    %283 = arith.addf %79, %282 : vector<32x64xf32>
    %c1 = arith.constant 1 : index
    %c0_105 = arith.constant 0 : index
    %c0_106 = arith.constant 0 : index
    %284 = vector.load %arg7[%c1, %c0_105, %c0_106] : memref<4x64x32xbf16, #tpu.memory_space<vmem>>, vector<1x64x32xbf16>
    %285 = vector.shape_cast %284 : vector<1x64x32xbf16> to vector<64x32xbf16>
    %cst_107 = arith.constant dense<0.000000e+00> : vector<32x32xf32>
    %286 = tpu.matmul %70, %285, %cst_107 {dimension_numbers = #tpu.dot_dimension_numbers<[1], [0], [0], [1], [0, 0, 1, 1], [], []>} : vector<32x64xbf16>, vector<64x32xbf16>, vector<32x32xf32> -> vector<32x32xf32>
    %c1_108 = arith.constant 1 : index
    %c0_109 = arith.constant 0 : index
    %c0_110 = arith.constant 0 : index
    %287 = vector.load %arg8[%c1_108, %c0_109, %c0_110] : memref<4x1x32xf32, #tpu.memory_space<vmem>>, vector<1x1x32xf32>
    %288 = vector.shape_cast %287 : vector<1x1x32xf32> to vector<1x32xf32>
    %289 = vector.broadcast %288 : vector<1x32xf32> to vector<32x32xf32>
    %290 = arith.addf %286, %289 : vector<32x32xf32>
    %cst_111 = arith.constant 0.176776692 : f32
    %291 = vector.broadcast %cst_111 : f32 to vector<32x32xf32>
    %292 = arith.mulf %290, %291 : vector<32x32xf32>
    %c1_112 = arith.constant 1 : index
    %c0_113 = arith.constant 0 : index
    %c0_114 = arith.constant 0 : index
    %293 = vector.load %arg9[%c1_112, %c0_113, %c0_114] : memref<4x64x32xbf16, #tpu.memory_space<vmem>>, vector<1x64x32xbf16>
    %294 = vector.shape_cast %293 : vector<1x64x32xbf16> to vector<64x32xbf16>
    %cst_115 = arith.constant dense<0.000000e+00> : vector<32x32xf32>
    %295 = tpu.matmul %70, %294, %cst_115 {dimension_numbers = #tpu.dot_dimension_numbers<[1], [0], [0], [1], [0, 0, 1, 1], [], []>} : vector<32x64xbf16>, vector<64x32xbf16>, vector<32x32xf32> -> vector<32x32xf32>
    %c1_116 = arith.constant 1 : index
    %c0_117 = arith.constant 0 : index
    %c0_118 = arith.constant 0 : index
    %296 = vector.load %arg10[%c1_116, %c0_117, %c0_118] : memref<4x1x32xf32, #tpu.memory_space<vmem>>, vector<1x1x32xf32>
    %297 = vector.shape_cast %296 : vector<1x1x32xf32> to vector<1x32xf32>
    %298 = vector.broadcast %297 : vector<1x32xf32> to vector<32x32xf32>
    %299 = arith.addf %295, %298 : vector<32x32xf32>
    %c1_119 = arith.constant 1 : index
    %c0_120 = arith.constant 0 : index
    %c0_121 = arith.constant 0 : index
    %300 = vector.load %arg11[%c1_119, %c0_120, %c0_121] : memref<4x64x32xbf16, #tpu.memory_space<vmem>>, vector<1x64x32xbf16>
    %301 = vector.shape_cast %300 : vector<1x64x32xbf16> to vector<64x32xbf16>
    %cst_122 = arith.constant dense<0.000000e+00> : vector<32x32xf32>
    %302 = tpu.matmul %70, %301, %cst_122 {dimension_numbers = #tpu.dot_dimension_numbers<[1], [0], [0], [1], [0, 0, 1, 1], [], []>} : vector<32x64xbf16>, vector<64x32xbf16>, vector<32x32xf32> -> vector<32x32xf32>
    %c1_123 = arith.constant 1 : index
    %c0_124 = arith.constant 0 : index
    %c0_125 = arith.constant 0 : index
    %303 = vector.load %arg12[%c1_123, %c0_124, %c0_125] : memref<4x1x32xf32, #tpu.memory_space<vmem>>, vector<1x1x32xf32>
    %304 = vector.shape_cast %303 : vector<1x1x32xf32> to vector<1x32xf32>
    %305 = vector.broadcast %304 : vector<1x32xf32> to vector<32x32xf32>
    %306 = arith.addf %302, %305 : vector<32x32xf32>
    %307 = arith.truncf %292 : vector<32x32xf32> to vector<32x32xbf16>
    %308 = arith.truncf %299 : vector<32x32xf32> to vector<32x32xbf16>
    %cst_126 = arith.constant dense<0.000000e+00> : vector<32x32xf32>
    %309 = tpu.matmul %307, %308, %cst_126 {dimension_numbers = #tpu.dot_dimension_numbers<[1], [1], [0], [0], [0, 0, 1, 0], [], []>} : vector<32x32xbf16>, vector<32x32xbf16>, vector<32x32xf32> -> vector<32x32xf32>
    %cst_127 = arith.constant dense<0.000000e+00> : vector<32x9xf32>
    %310 = tpu.matmul %307, %72, %cst_127 {dimension_numbers = #tpu.dot_dimension_numbers<[1], [1], [0], [0], [0, 0, 1, 0], [], []>} : vector<32x32xbf16>, vector<9x32xbf16>, vector<32x9xf32> -> vector<32x9xf32>
    %311 = vector.extract_strided_slice %310 {offsets = [0, 0], sizes = [32, 1], strides = [1, 1]} : vector<32x9xf32> to vector<32x1xf32>
    %cst_128 = arith.constant 0.000000e+00 : f32
    %312 = vector.shape_cast %311 : vector<32x1xf32> to vector<32x1xf32>
    %313 = vector.broadcast %312 : vector<32x1xf32> to vector<32x32xf32>
    %314 = vector.broadcast %cst_128 : f32 to vector<32x32xf32>
    %315 = arith.select %18, %313, %314 : vector<32x32xi1>, vector<32x32xf32>
    %316 = arith.addf %309, %315 : vector<32x32xf32>
    %317 = vector.extract_strided_slice %310 {offsets = [0, 1], sizes = [32, 1], strides = [1, 1]} : vector<32x9xf32> to vector<32x1xf32>
    %cst_129 = arith.constant 0.000000e+00 : f32
    %318 = vector.shape_cast %317 : vector<32x1xf32> to vector<32x1xf32>
    %319 = vector.broadcast %318 : vector<32x1xf32> to vector<32x32xf32>
    %320 = vector.broadcast %cst_129 : f32 to vector<32x32xf32>
    %321 = arith.select %21, %319, %320 : vector<32x32xi1>, vector<32x32xf32>
    %322 = arith.addf %316, %321 : vector<32x32xf32>
    %323 = vector.extract_strided_slice %310 {offsets = [0, 2], sizes = [32, 1], strides = [1, 1]} : vector<32x9xf32> to vector<32x1xf32>
    %cst_130 = arith.constant 0.000000e+00 : f32
    %324 = vector.shape_cast %323 : vector<32x1xf32> to vector<32x1xf32>
    %325 = vector.broadcast %324 : vector<32x1xf32> to vector<32x32xf32>
    %326 = vector.broadcast %cst_130 : f32 to vector<32x32xf32>
    %327 = arith.select %24, %325, %326 : vector<32x32xi1>, vector<32x32xf32>
    %328 = arith.addf %322, %327 : vector<32x32xf32>
    %329 = vector.extract_strided_slice %310 {offsets = [0, 3], sizes = [32, 1], strides = [1, 1]} : vector<32x9xf32> to vector<32x1xf32>
    %cst_131 = arith.constant 0.000000e+00 : f32
    %330 = vector.shape_cast %329 : vector<32x1xf32> to vector<32x1xf32>
    %331 = vector.broadcast %330 : vector<32x1xf32> to vector<32x32xf32>
    %332 = vector.broadcast %cst_131 : f32 to vector<32x32xf32>
    %333 = arith.select %27, %331, %332 : vector<32x32xi1>, vector<32x32xf32>
    %334 = arith.addf %328, %333 : vector<32x32xf32>
    %335 = vector.extract_strided_slice %310 {offsets = [0, 4], sizes = [32, 1], strides = [1, 1]} : vector<32x9xf32> to vector<32x1xf32>
    %cst_132 = arith.constant 0.000000e+00 : f32
    %336 = vector.shape_cast %335 : vector<32x1xf32> to vector<32x1xf32>
    %337 = vector.broadcast %336 : vector<32x1xf32> to vector<32x32xf32>
    %338 = vector.broadcast %cst_132 : f32 to vector<32x32xf32>
    %339 = arith.select %30, %337, %338 : vector<32x32xi1>, vector<32x32xf32>
    %340 = arith.addf %334, %339 : vector<32x32xf32>
    %341 = vector.extract_strided_slice %310 {offsets = [0, 5], sizes = [32, 1], strides = [1, 1]} : vector<32x9xf32> to vector<32x1xf32>
    %cst_133 = arith.constant 0.000000e+00 : f32
    %342 = vector.shape_cast %341 : vector<32x1xf32> to vector<32x1xf32>
    %343 = vector.broadcast %342 : vector<32x1xf32> to vector<32x32xf32>
    %344 = vector.broadcast %cst_133 : f32 to vector<32x32xf32>
    %345 = arith.select %33, %343, %344 : vector<32x32xi1>, vector<32x32xf32>
    %346 = arith.addf %340, %345 : vector<32x32xf32>
    %347 = vector.extract_strided_slice %310 {offsets = [0, 6], sizes = [32, 1], strides = [1, 1]} : vector<32x9xf32> to vector<32x1xf32>
    %cst_134 = arith.constant 0.000000e+00 : f32
    %348 = vector.shape_cast %347 : vector<32x1xf32> to vector<32x1xf32>
    %349 = vector.broadcast %348 : vector<32x1xf32> to vector<32x32xf32>
    %350 = vector.broadcast %cst_134 : f32 to vector<32x32xf32>
    %351 = arith.select %36, %349, %350 : vector<32x32xi1>, vector<32x32xf32>
    %352 = arith.addf %346, %351 : vector<32x32xf32>
    %353 = vector.extract_strided_slice %310 {offsets = [0, 7], sizes = [32, 1], strides = [1, 1]} : vector<32x9xf32> to vector<32x1xf32>
    %cst_135 = arith.constant 0.000000e+00 : f32
    %354 = vector.shape_cast %353 : vector<32x1xf32> to vector<32x1xf32>
    %355 = vector.broadcast %354 : vector<32x1xf32> to vector<32x32xf32>
    %356 = vector.broadcast %cst_135 : f32 to vector<32x32xf32>
    %357 = arith.select %39, %355, %356 : vector<32x32xi1>, vector<32x32xf32>
    %358 = arith.addf %352, %357 : vector<32x32xf32>
    %359 = vector.extract_strided_slice %310 {offsets = [0, 8], sizes = [32, 1], strides = [1, 1]} : vector<32x9xf32> to vector<32x1xf32>
    %cst_136 = arith.constant 0.000000e+00 : f32
    %360 = vector.shape_cast %359 : vector<32x1xf32> to vector<32x1xf32>
    %361 = vector.broadcast %360 : vector<32x1xf32> to vector<32x32xf32>
    %362 = vector.broadcast %cst_136 : f32 to vector<32x32xf32>
    %363 = arith.select %42, %361, %362 : vector<32x32xi1>, vector<32x32xf32>
    %364 = arith.addf %358, %363 : vector<32x32xf32>
    %cst_137 = arith.constant -1.000000e+04 : f32
    %365 = vector.broadcast %cst_137 : f32 to vector<32x32xf32>
    %366 = arith.select %15, %364, %365 : vector<32x32xi1>, vector<32x32xf32>
    %cst_138 = arith.constant dense<0xFF800000> : vector<32xf32>
    %367 = vector.multi_reduction <maximumf>, %366, %cst_138 [1] : vector<32x32xf32> to vector<32xf32>
    %368 = vector.shape_cast %367 : vector<32xf32> to vector<32x1xf32>
    %369 = vector.broadcast %368 : vector<32x1xf32> to vector<32x32xf32>
    %370 = arith.subf %366, %369 : vector<32x32xf32>
    %371 = math.exp %370 : vector<32x32xf32>
    %cst_139 = arith.constant dense<0.000000e+00> : vector<32xf32>
    %372 = vector.multi_reduction <add>, %371, %cst_139 [1] : vector<32x32xf32> to vector<32xf32>
    %373 = vector.shape_cast %372 : vector<32xf32> to vector<32x1xf32>
    %374 = tpu.reciprocal %373 {approx = true} : vector<32x1xf32> -> vector<32x1xf32>
    %375 = vector.broadcast %374 : vector<32x1xf32> to vector<32x32xf32>
    %376 = arith.mulf %371, %375 : vector<32x32xf32>
    %377 = arith.truncf %376 : vector<32x32xf32> to vector<32x32xbf16>
    %378 = arith.truncf %306 : vector<32x32xf32> to vector<32x32xbf16>
    %cst_140 = arith.constant dense<0.000000e+00> : vector<32x32xf32>
    %379 = tpu.matmul %377, %378, %cst_140 {dimension_numbers = #tpu.dot_dimension_numbers<[1], [0], [0], [1], [0, 0, 1, 1], [], []>} : vector<32x32xbf16>, vector<32x32xbf16>, vector<32x32xf32> -> vector<32x32xf32>
    %cst_141 = arith.constant 0.000000e+00 : f32
    %380 = vector.broadcast %cst_141 : f32 to vector<32x9xf32>
    %cst_142 = arith.constant 0.000000e+00 : f32
    %381 = vector.broadcast %cst_142 : f32 to vector<32x32xf32>
    %382 = arith.select %18, %376, %381 : vector<32x32xi1>, vector<32x32xf32>
    %cst_143 = arith.constant dense<0.000000e+00> : vector<32xf32>
    %383 = vector.multi_reduction <add>, %382, %cst_143 [1] : vector<32x32xf32> to vector<32xf32>
    %384 = vector.shape_cast %383 : vector<32xf32> to vector<32x1xf32>
    %c0_i32_144 = arith.constant 0 : i32
    %385 = vector.broadcast %c0_i32_144 : i32 to vector<32x9xi32>
    %386 = arith.cmpi eq, %64, %385 : vector<32x9xi32>
    %cst_145 = arith.constant 0.000000e+00 : f32
    %387 = vector.shape_cast %384 : vector<32x1xf32> to vector<32x1xf32>
    %388 = vector.broadcast %387 : vector<32x1xf32> to vector<32x9xf32>
    %389 = vector.broadcast %cst_145 : f32 to vector<32x9xf32>
    %390 = arith.select %386, %388, %389 : vector<32x9xi1>, vector<32x9xf32>
    %391 = arith.addf %380, %390 : vector<32x9xf32>
    %cst_146 = arith.constant 0.000000e+00 : f32
    %392 = vector.broadcast %cst_146 : f32 to vector<32x32xf32>
    %393 = arith.select %21, %376, %392 : vector<32x32xi1>, vector<32x32xf32>
    %cst_147 = arith.constant dense<0.000000e+00> : vector<32xf32>
    %394 = vector.multi_reduction <add>, %393, %cst_147 [1] : vector<32x32xf32> to vector<32xf32>
    %395 = vector.shape_cast %394 : vector<32xf32> to vector<32x1xf32>
    %c1_i32_148 = arith.constant 1 : i32
    %396 = vector.broadcast %c1_i32_148 : i32 to vector<32x9xi32>
    %397 = arith.cmpi eq, %64, %396 : vector<32x9xi32>
    %cst_149 = arith.constant 0.000000e+00 : f32
    %398 = vector.shape_cast %395 : vector<32x1xf32> to vector<32x1xf32>
    %399 = vector.broadcast %398 : vector<32x1xf32> to vector<32x9xf32>
    %400 = vector.broadcast %cst_149 : f32 to vector<32x9xf32>
    %401 = arith.select %397, %399, %400 : vector<32x9xi1>, vector<32x9xf32>
    %402 = arith.addf %391, %401 : vector<32x9xf32>
    %cst_150 = arith.constant 0.000000e+00 : f32
    %403 = vector.broadcast %cst_150 : f32 to vector<32x32xf32>
    %404 = arith.select %24, %376, %403 : vector<32x32xi1>, vector<32x32xf32>
    %cst_151 = arith.constant dense<0.000000e+00> : vector<32xf32>
    %405 = vector.multi_reduction <add>, %404, %cst_151 [1] : vector<32x32xf32> to vector<32xf32>
    %406 = vector.shape_cast %405 : vector<32xf32> to vector<32x1xf32>
    %c2_i32_152 = arith.constant 2 : i32
    %407 = vector.broadcast %c2_i32_152 : i32 to vector<32x9xi32>
    %408 = arith.cmpi eq, %64, %407 : vector<32x9xi32>
    %cst_153 = arith.constant 0.000000e+00 : f32
    %409 = vector.shape_cast %406 : vector<32x1xf32> to vector<32x1xf32>
    %410 = vector.broadcast %409 : vector<32x1xf32> to vector<32x9xf32>
    %411 = vector.broadcast %cst_153 : f32 to vector<32x9xf32>
    %412 = arith.select %408, %410, %411 : vector<32x9xi1>, vector<32x9xf32>
    %413 = arith.addf %402, %412 : vector<32x9xf32>
    %cst_154 = arith.constant 0.000000e+00 : f32
    %414 = vector.broadcast %cst_154 : f32 to vector<32x32xf32>
    %415 = arith.select %27, %376, %414 : vector<32x32xi1>, vector<32x32xf32>
    %cst_155 = arith.constant dense<0.000000e+00> : vector<32xf32>
    %416 = vector.multi_reduction <add>, %415, %cst_155 [1] : vector<32x32xf32> to vector<32xf32>
    %417 = vector.shape_cast %416 : vector<32xf32> to vector<32x1xf32>
    %c3_i32_156 = arith.constant 3 : i32
    %418 = vector.broadcast %c3_i32_156 : i32 to vector<32x9xi32>
    %419 = arith.cmpi eq, %64, %418 : vector<32x9xi32>
    %cst_157 = arith.constant 0.000000e+00 : f32
    %420 = vector.shape_cast %417 : vector<32x1xf32> to vector<32x1xf32>
    %421 = vector.broadcast %420 : vector<32x1xf32> to vector<32x9xf32>
    %422 = vector.broadcast %cst_157 : f32 to vector<32x9xf32>
    %423 = arith.select %419, %421, %422 : vector<32x9xi1>, vector<32x9xf32>
    %424 = arith.addf %413, %423 : vector<32x9xf32>
    %cst_158 = arith.constant 0.000000e+00 : f32
    %425 = vector.broadcast %cst_158 : f32 to vector<32x32xf32>
    %426 = arith.select %30, %376, %425 : vector<32x32xi1>, vector<32x32xf32>
    %cst_159 = arith.constant dense<0.000000e+00> : vector<32xf32>
    %427 = vector.multi_reduction <add>, %426, %cst_159 [1] : vector<32x32xf32> to vector<32xf32>
    %428 = vector.shape_cast %427 : vector<32xf32> to vector<32x1xf32>
    %c4_i32_160 = arith.constant 4 : i32
    %429 = vector.broadcast %c4_i32_160 : i32 to vector<32x9xi32>
    %430 = arith.cmpi eq, %64, %429 : vector<32x9xi32>
    %cst_161 = arith.constant 0.000000e+00 : f32
    %431 = vector.shape_cast %428 : vector<32x1xf32> to vector<32x1xf32>
    %432 = vector.broadcast %431 : vector<32x1xf32> to vector<32x9xf32>
    %433 = vector.broadcast %cst_161 : f32 to vector<32x9xf32>
    %434 = arith.select %430, %432, %433 : vector<32x9xi1>, vector<32x9xf32>
    %435 = arith.addf %424, %434 : vector<32x9xf32>
    %cst_162 = arith.constant 0.000000e+00 : f32
    %436 = vector.broadcast %cst_162 : f32 to vector<32x32xf32>
    %437 = arith.select %33, %376, %436 : vector<32x32xi1>, vector<32x32xf32>
    %cst_163 = arith.constant dense<0.000000e+00> : vector<32xf32>
    %438 = vector.multi_reduction <add>, %437, %cst_163 [1] : vector<32x32xf32> to vector<32xf32>
    %439 = vector.shape_cast %438 : vector<32xf32> to vector<32x1xf32>
    %c5_i32_164 = arith.constant 5 : i32
    %440 = vector.broadcast %c5_i32_164 : i32 to vector<32x9xi32>
    %441 = arith.cmpi eq, %64, %440 : vector<32x9xi32>
    %cst_165 = arith.constant 0.000000e+00 : f32
    %442 = vector.shape_cast %439 : vector<32x1xf32> to vector<32x1xf32>
    %443 = vector.broadcast %442 : vector<32x1xf32> to vector<32x9xf32>
    %444 = vector.broadcast %cst_165 : f32 to vector<32x9xf32>
    %445 = arith.select %441, %443, %444 : vector<32x9xi1>, vector<32x9xf32>
    %446 = arith.addf %435, %445 : vector<32x9xf32>
    %cst_166 = arith.constant 0.000000e+00 : f32
    %447 = vector.broadcast %cst_166 : f32 to vector<32x32xf32>
    %448 = arith.select %36, %376, %447 : vector<32x32xi1>, vector<32x32xf32>
    %cst_167 = arith.constant dense<0.000000e+00> : vector<32xf32>
    %449 = vector.multi_reduction <add>, %448, %cst_167 [1] : vector<32x32xf32> to vector<32xf32>
    %450 = vector.shape_cast %449 : vector<32xf32> to vector<32x1xf32>
    %c6_i32_168 = arith.constant 6 : i32
    %451 = vector.broadcast %c6_i32_168 : i32 to vector<32x9xi32>
    %452 = arith.cmpi eq, %64, %451 : vector<32x9xi32>
    %cst_169 = arith.constant 0.000000e+00 : f32
    %453 = vector.shape_cast %450 : vector<32x1xf32> to vector<32x1xf32>
    %454 = vector.broadcast %453 : vector<32x1xf32> to vector<32x9xf32>
    %455 = vector.broadcast %cst_169 : f32 to vector<32x9xf32>
    %456 = arith.select %452, %454, %455 : vector<32x9xi1>, vector<32x9xf32>
    %457 = arith.addf %446, %456 : vector<32x9xf32>
    %cst_170 = arith.constant 0.000000e+00 : f32
    %458 = vector.broadcast %cst_170 : f32 to vector<32x32xf32>
    %459 = arith.select %39, %376, %458 : vector<32x32xi1>, vector<32x32xf32>
    %cst_171 = arith.constant dense<0.000000e+00> : vector<32xf32>
    %460 = vector.multi_reduction <add>, %459, %cst_171 [1] : vector<32x32xf32> to vector<32xf32>
    %461 = vector.shape_cast %460 : vector<32xf32> to vector<32x1xf32>
    %c7_i32_172 = arith.constant 7 : i32
    %462 = vector.broadcast %c7_i32_172 : i32 to vector<32x9xi32>
    %463 = arith.cmpi eq, %64, %462 : vector<32x9xi32>
    %cst_173 = arith.constant 0.000000e+00 : f32
    %464 = vector.shape_cast %461 : vector<32x1xf32> to vector<32x1xf32>
    %465 = vector.broadcast %464 : vector<32x1xf32> to vector<32x9xf32>
    %466 = vector.broadcast %cst_173 : f32 to vector<32x9xf32>
    %467 = arith.select %463, %465, %466 : vector<32x9xi1>, vector<32x9xf32>
    %468 = arith.addf %457, %467 : vector<32x9xf32>
    %cst_174 = arith.constant 0.000000e+00 : f32
    %469 = vector.broadcast %cst_174 : f32 to vector<32x32xf32>
    %470 = arith.select %42, %376, %469 : vector<32x32xi1>, vector<32x32xf32>
    %cst_175 = arith.constant dense<0.000000e+00> : vector<32xf32>
    %471 = vector.multi_reduction <add>, %470, %cst_175 [1] : vector<32x32xf32> to vector<32xf32>
    %472 = vector.shape_cast %471 : vector<32xf32> to vector<32x1xf32>
    %c8_i32_176 = arith.constant 8 : i32
    %473 = vector.broadcast %c8_i32_176 : i32 to vector<32x9xi32>
    %474 = arith.cmpi eq, %64, %473 : vector<32x9xi32>
    %cst_177 = arith.constant 0.000000e+00 : f32
    %475 = vector.shape_cast %472 : vector<32x1xf32> to vector<32x1xf32>
    %476 = vector.broadcast %475 : vector<32x1xf32> to vector<32x9xf32>
    %477 = vector.broadcast %cst_177 : f32 to vector<32x9xf32>
    %478 = arith.select %474, %476, %477 : vector<32x9xi1>, vector<32x9xf32>
    %479 = arith.addf %468, %478 : vector<32x9xf32>
    %480 = arith.truncf %479 : vector<32x9xf32> to vector<32x9xbf16>
    %cst_178 = arith.constant dense<0.000000e+00> : vector<32x32xf32>
    %481 = tpu.matmul %480, %74, %cst_178 {dimension_numbers = #tpu.dot_dimension_numbers<[1], [0], [0], [1], [0, 0, 1, 1], [], []>} : vector<32x9xbf16>, vector<9x32xbf16>, vector<32x32xf32> -> vector<32x32xf32>
    %482 = arith.addf %379, %481 : vector<32x32xf32>
    %483 = arith.truncf %482 : vector<32x32xf32> to vector<32x32xbf16>
    %c1_179 = arith.constant 1 : index
    %c0_180 = arith.constant 0 : index
    %c0_181 = arith.constant 0 : index
    %484 = vector.load %arg13[%c1_179, %c0_180, %c0_181] : memref<4x32x64xbf16, #tpu.memory_space<vmem>>, vector<1x32x64xbf16>
    %485 = vector.shape_cast %484 : vector<1x32x64xbf16> to vector<32x64xbf16>
    %cst_182 = arith.constant dense<0.000000e+00> : vector<32x64xf32>
    %486 = tpu.matmul %483, %485, %cst_182 {dimension_numbers = #tpu.dot_dimension_numbers<[1], [0], [0], [1], [0, 0, 1, 1], [], []>} : vector<32x32xbf16>, vector<32x64xbf16>, vector<32x64xf32> -> vector<32x64xf32>
    %487 = arith.addf %283, %486 : vector<32x64xf32>
    %488 = arith.addf %69, %487 : vector<32x64xf32>
    %c0_183 = arith.constant 0 : index
    %c0_184 = arith.constant 0 : index
    %c0_185 = arith.constant 0 : index
    %489 = vector.load %arg15[%c0_183, %c0_184, %c0_185] : memref<2x1x64xf32, #tpu.memory_space<vmem>>, vector<1x1x64xf32>
    %490 = vector.shape_cast %489 : vector<1x1x64xf32> to vector<1x64xf32>
    %c0_186 = arith.constant 0 : index
    %c0_187 = arith.constant 0 : index
    %c0_188 = arith.constant 0 : index
    %491 = vector.load %arg16[%c0_186, %c0_187, %c0_188] : memref<2x1x64xf32, #tpu.memory_space<vmem>>, vector<1x1x64xf32>
    %492 = vector.shape_cast %491 : vector<1x1x64xf32> to vector<1x64xf32>
    %cst_189 = arith.constant dense<0.000000e+00> : vector<32xf32>
    %493 = vector.multi_reduction <add>, %488, %cst_189 [1] : vector<32x64xf32> to vector<32xf32>
    %494 = vector.shape_cast %493 : vector<32xf32> to vector<32x1xf32>
    %cst_190 = arith.constant 6.400000e+01 : f32
    %495 = vector.broadcast %cst_190 : f32 to vector<32x1xf32>
    %496 = arith.divf %494, %495 : vector<32x1xf32>
    %497 = vector.broadcast %496 : vector<32x1xf32> to vector<32x64xf32>
    %498 = arith.subf %488, %497 : vector<32x64xf32>
    %499 = arith.mulf %498, %498 : vector<32x64xf32>
    %cst_191 = arith.constant dense<0.000000e+00> : vector<32xf32>
    %500 = vector.multi_reduction <add>, %499, %cst_191 [1] : vector<32x64xf32> to vector<32xf32>
    %501 = vector.shape_cast %500 : vector<32xf32> to vector<32x1xf32>
    %cst_192 = arith.constant 6.400000e+01 : f32
    %502 = vector.broadcast %cst_192 : f32 to vector<32x1xf32>
    %503 = arith.divf %501, %502 : vector<32x1xf32>
    %504 = vector.broadcast %496 : vector<32x1xf32> to vector<32x64xf32>
    %505 = arith.subf %488, %504 : vector<32x64xf32>
    %cst_193 = arith.constant 9.99999974E-6 : f32
    %506 = vector.broadcast %cst_193 : f32 to vector<32x1xf32>
    %507 = arith.addf %503, %506 : vector<32x1xf32>
    %508 = math.rsqrt %507 : vector<32x1xf32>
    %509 = vector.broadcast %508 : vector<32x1xf32> to vector<32x64xf32>
    %510 = arith.mulf %505, %509 : vector<32x64xf32>
    %511 = vector.broadcast %490 : vector<1x64xf32> to vector<32x64xf32>
    %512 = arith.mulf %510, %511 : vector<32x64xf32>
    %513 = vector.broadcast %492 : vector<1x64xf32> to vector<32x64xf32>
    %514 = arith.addf %512, %513 : vector<32x64xf32>
    %515 = vector.broadcast %0 : vector<32x1xf32> to vector<32x64xf32>
    %516 = arith.mulf %514, %515 : vector<32x64xf32>
    %517 = arith.truncf %516 : vector<32x64xf32> to vector<32x64xbf16>
    %cst_194 = arith.constant 0.000000e+00 : f32
    %518 = vector.broadcast %cst_194 : f32 to vector<32x128xf32>
    %c0_195 = arith.constant 0 : index
    %c0_196 = arith.constant 0 : index
    %c0_197 = arith.constant 0 : index
    %519 = vector.load %arg20[%c0_195, %c0_196, %c0_197] : memref<2x1x128xf32, #tpu.memory_space<vmem>>, vector<1x1x128xf32>
    %520 = vector.shape_cast %519 : vector<1x1x128xf32> to vector<1x128xf32>
    %521 = vector.broadcast %520 : vector<1x128xf32> to vector<32x128xf32>
    %522 = arith.addf %518, %521 : vector<32x128xf32>
    %cst_198 = arith.constant dense<0.000000e+00> : vector<32x64xf32>
    %523 = tpu.matmul %49, %517, %cst_198 {dimension_numbers = #tpu.dot_dimension_numbers<[1], [0], [0], [1], [0, 0, 1, 1], [], []>} : vector<32x32xbf16>, vector<32x64xbf16>, vector<32x64xf32> -> vector<32x64xf32>
    %524 = arith.truncf %523 : vector<32x64xf32> to vector<32x64xbf16>
    %c0_199 = arith.constant 0 : index
    %c0_200 = arith.constant 0 : index
    %c0_201 = arith.constant 0 : index
    %525 = vector.load %arg19[%c0_199, %c0_200, %c0_201] : memref<6x64x128xbf16, #tpu.memory_space<vmem>>, vector<1x64x128xbf16>
    %526 = vector.shape_cast %525 : vector<1x64x128xbf16> to vector<64x128xbf16>
    %cst_202 = arith.constant dense<0.000000e+00> : vector<32x128xf32>
    %527 = tpu.matmul %524, %526, %cst_202 {dimension_numbers = #tpu.dot_dimension_numbers<[1], [0], [0], [1], [0, 0, 1, 1], [], []>} : vector<32x64xbf16>, vector<64x128xbf16>, vector<32x128xf32> -> vector<32x128xf32>
    %528 = arith.addf %522, %527 : vector<32x128xf32>
    %cst_203 = arith.constant dense<0.000000e+00> : vector<32x64xf32>
    %529 = tpu.matmul %56, %517, %cst_203 {dimension_numbers = #tpu.dot_dimension_numbers<[1], [0], [0], [1], [0, 0, 1, 1], [], []>} : vector<32x32xbf16>, vector<32x64xbf16>, vector<32x64xf32> -> vector<32x64xf32>
    %530 = arith.truncf %529 : vector<32x64xf32> to vector<32x64xbf16>
    %c1_204 = arith.constant 1 : index
    %c0_205 = arith.constant 0 : index
    %c0_206 = arith.constant 0 : index
    %531 = vector.load %arg19[%c1_204, %c0_205, %c0_206] : memref<6x64x128xbf16, #tpu.memory_space<vmem>>, vector<1x64x128xbf16>
    %532 = vector.shape_cast %531 : vector<1x64x128xbf16> to vector<64x128xbf16>
    %cst_207 = arith.constant dense<0.000000e+00> : vector<32x128xf32>
    %533 = tpu.matmul %530, %532, %cst_207 {dimension_numbers = #tpu.dot_dimension_numbers<[1], [0], [0], [1], [0, 0, 1, 1], [], []>} : vector<32x64xbf16>, vector<64x128xbf16>, vector<32x128xf32> -> vector<32x128xf32>
    %534 = arith.addf %528, %533 : vector<32x128xf32>
    %cst_208 = arith.constant dense<0.000000e+00> : vector<32x64xf32>
    %535 = tpu.matmul %63, %517, %cst_208 {dimension_numbers = #tpu.dot_dimension_numbers<[1], [0], [0], [1], [0, 0, 1, 1], [], []>} : vector<32x32xbf16>, vector<32x64xbf16>, vector<32x64xf32> -> vector<32x64xf32>
    %536 = arith.truncf %535 : vector<32x64xf32> to vector<32x64xbf16>
    %c2 = arith.constant 2 : index
    %c0_209 = arith.constant 0 : index
    %c0_210 = arith.constant 0 : index
    %537 = vector.load %arg19[%c2, %c0_209, %c0_210] : memref<6x64x128xbf16, #tpu.memory_space<vmem>>, vector<1x64x128xbf16>
    %538 = vector.shape_cast %537 : vector<1x64x128xbf16> to vector<64x128xbf16>
    %cst_211 = arith.constant dense<0.000000e+00> : vector<32x128xf32>
    %539 = tpu.matmul %536, %538, %cst_211 {dimension_numbers = #tpu.dot_dimension_numbers<[1], [0], [0], [1], [0, 0, 1, 1], [], []>} : vector<32x64xbf16>, vector<64x128xbf16>, vector<32x128xf32> -> vector<32x128xf32>
    %540 = arith.addf %534, %539 : vector<32x128xf32>
    %cst_212 = arith.constant 0.000000e+00 : f32
    %541 = vector.broadcast %cst_212 : f32 to vector<32x128xf32>
    %542 = arith.maximumf %540, %541 : vector<32x128xf32>
    %543 = vector.broadcast %0 : vector<32x1xf32> to vector<32x128xf32>
    %544 = arith.mulf %542, %543 : vector<32x128xf32>
    %545 = arith.truncf %544 : vector<32x128xf32> to vector<32x128xbf16>
    %cst_213 = arith.constant 0.000000e+00 : f32
    %546 = vector.broadcast %cst_213 : f32 to vector<32x64xf32>
    %c0_214 = arith.constant 0 : index
    %c0_215 = arith.constant 0 : index
    %c0_216 = arith.constant 0 : index
    %547 = vector.load %arg22[%c0_214, %c0_215, %c0_216] : memref<2x1x64xf32, #tpu.memory_space<vmem>>, vector<1x1x64xf32>
    %548 = vector.shape_cast %547 : vector<1x1x64xf32> to vector<1x64xf32>
    %549 = vector.broadcast %548 : vector<1x64xf32> to vector<32x64xf32>
    %550 = arith.addf %546, %549 : vector<32x64xf32>
    %cst_217 = arith.constant dense<0.000000e+00> : vector<32x128xf32>
    %551 = tpu.matmul %49, %545, %cst_217 {dimension_numbers = #tpu.dot_dimension_numbers<[1], [0], [0], [1], [0, 0, 1, 1], [], []>} : vector<32x32xbf16>, vector<32x128xbf16>, vector<32x128xf32> -> vector<32x128xf32>
    %552 = arith.truncf %551 : vector<32x128xf32> to vector<32x128xbf16>
    %c0_218 = arith.constant 0 : index
    %c0_219 = arith.constant 0 : index
    %c0_220 = arith.constant 0 : index
    %553 = vector.load %arg21[%c0_218, %c0_219, %c0_220] : memref<6x128x64xbf16, #tpu.memory_space<vmem>>, vector<1x128x64xbf16>
    %554 = vector.shape_cast %553 : vector<1x128x64xbf16> to vector<128x64xbf16>
    %cst_221 = arith.constant dense<0.000000e+00> : vector<32x64xf32>
    %555 = tpu.matmul %552, %554, %cst_221 {dimension_numbers = #tpu.dot_dimension_numbers<[1], [0], [0], [1], [0, 0, 1, 1], [], []>} : vector<32x128xbf16>, vector<128x64xbf16>, vector<32x64xf32> -> vector<32x64xf32>
    %556 = arith.addf %550, %555 : vector<32x64xf32>
    %cst_222 = arith.constant dense<0.000000e+00> : vector<32x128xf32>
    %557 = tpu.matmul %56, %545, %cst_222 {dimension_numbers = #tpu.dot_dimension_numbers<[1], [0], [0], [1], [0, 0, 1, 1], [], []>} : vector<32x32xbf16>, vector<32x128xbf16>, vector<32x128xf32> -> vector<32x128xf32>
    %558 = arith.truncf %557 : vector<32x128xf32> to vector<32x128xbf16>
    %c1_223 = arith.constant 1 : index
    %c0_224 = arith.constant 0 : index
    %c0_225 = arith.constant 0 : index
    %559 = vector.load %arg21[%c1_223, %c0_224, %c0_225] : memref<6x128x64xbf16, #tpu.memory_space<vmem>>, vector<1x128x64xbf16>
    %560 = vector.shape_cast %559 : vector<1x128x64xbf16> to vector<128x64xbf16>
    %cst_226 = arith.constant dense<0.000000e+00> : vector<32x64xf32>
    %561 = tpu.matmul %558, %560, %cst_226 {dimension_numbers = #tpu.dot_dimension_numbers<[1], [0], [0], [1], [0, 0, 1, 1], [], []>} : vector<32x128xbf16>, vector<128x64xbf16>, vector<32x64xf32> -> vector<32x64xf32>
    %562 = arith.addf %556, %561 : vector<32x64xf32>
    %cst_227 = arith.constant dense<0.000000e+00> : vector<32x128xf32>
    %563 = tpu.matmul %63, %545, %cst_227 {dimension_numbers = #tpu.dot_dimension_numbers<[1], [0], [0], [1], [0, 0, 1, 1], [], []>} : vector<32x32xbf16>, vector<32x128xbf16>, vector<32x128xf32> -> vector<32x128xf32>
    %564 = arith.truncf %563 : vector<32x128xf32> to vector<32x128xbf16>
    %c2_228 = arith.constant 2 : index
    %c0_229 = arith.constant 0 : index
    %c0_230 = arith.constant 0 : index
    %565 = vector.load %arg21[%c2_228, %c0_229, %c0_230] : memref<6x128x64xbf16, #tpu.memory_space<vmem>>, vector<1x128x64xbf16>
    %566 = vector.shape_cast %565 : vector<1x128x64xbf16> to vector<128x64xbf16>
    %cst_231 = arith.constant dense<0.000000e+00> : vector<32x64xf32>
    %567 = tpu.matmul %564, %566, %cst_231 {dimension_numbers = #tpu.dot_dimension_numbers<[1], [0], [0], [1], [0, 0, 1, 1], [], []>} : vector<32x128xbf16>, vector<128x64xbf16>, vector<32x64xf32> -> vector<32x64xf32>
    %568 = arith.addf %562, %567 : vector<32x64xf32>
    %569 = vector.broadcast %0 : vector<32x1xf32> to vector<32x64xf32>
    %570 = arith.mulf %568, %569 : vector<32x64xf32>
    %571 = arith.addf %514, %570 : vector<32x64xf32>
    %c0_232 = arith.constant 0 : index
    %c0_233 = arith.constant 0 : index
    %c0_234 = arith.constant 0 : index
    %572 = vector.load %arg23[%c0_232, %c0_233, %c0_234] : memref<2x1x64xf32, #tpu.memory_space<vmem>>, vector<1x1x64xf32>
    %573 = vector.shape_cast %572 : vector<1x1x64xf32> to vector<1x64xf32>
    %c0_235 = arith.constant 0 : index
    %c0_236 = arith.constant 0 : index
    %c0_237 = arith.constant 0 : index
    %574 = vector.load %arg24[%c0_235, %c0_236, %c0_237] : memref<2x1x64xf32, #tpu.memory_space<vmem>>, vector<1x1x64xf32>
    %575 = vector.shape_cast %574 : vector<1x1x64xf32> to vector<1x64xf32>
    %cst_238 = arith.constant dense<0.000000e+00> : vector<32xf32>
    %576 = vector.multi_reduction <add>, %571, %cst_238 [1] : vector<32x64xf32> to vector<32xf32>
    %577 = vector.shape_cast %576 : vector<32xf32> to vector<32x1xf32>
    %cst_239 = arith.constant 6.400000e+01 : f32
    %578 = vector.broadcast %cst_239 : f32 to vector<32x1xf32>
    %579 = arith.divf %577, %578 : vector<32x1xf32>
    %580 = vector.broadcast %579 : vector<32x1xf32> to vector<32x64xf32>
    %581 = arith.subf %571, %580 : vector<32x64xf32>
    %582 = arith.mulf %581, %581 : vector<32x64xf32>
    %cst_240 = arith.constant dense<0.000000e+00> : vector<32xf32>
    %583 = vector.multi_reduction <add>, %582, %cst_240 [1] : vector<32x64xf32> to vector<32xf32>
    %584 = vector.shape_cast %583 : vector<32xf32> to vector<32x1xf32>
    %cst_241 = arith.constant 6.400000e+01 : f32
    %585 = vector.broadcast %cst_241 : f32 to vector<32x1xf32>
    %586 = arith.divf %584, %585 : vector<32x1xf32>
    %587 = vector.broadcast %579 : vector<32x1xf32> to vector<32x64xf32>
    %588 = arith.subf %571, %587 : vector<32x64xf32>
    %cst_242 = arith.constant 9.99999974E-6 : f32
    %589 = vector.broadcast %cst_242 : f32 to vector<32x1xf32>
    %590 = arith.addf %586, %589 : vector<32x1xf32>
    %591 = math.rsqrt %590 : vector<32x1xf32>
    %592 = vector.broadcast %591 : vector<32x1xf32> to vector<32x64xf32>
    %593 = arith.mulf %588, %592 : vector<32x64xf32>
    %594 = vector.broadcast %573 : vector<1x64xf32> to vector<32x64xf32>
    %595 = arith.mulf %593, %594 : vector<32x64xf32>
    %596 = vector.broadcast %575 : vector<1x64xf32> to vector<32x64xf32>
    %597 = arith.addf %595, %596 : vector<32x64xf32>
    %598 = arith.truncf %597 : vector<32x64xf32> to vector<32x64xbf16>
    %c1_243 = arith.constant 1 : index
    %c0_244 = arith.constant 0 : index
    %c0_245 = arith.constant 0 : index
    %599 = vector.load %arg17[%c1_243, %c0_244, %c0_245] : memref<2x9x32xbf16, #tpu.memory_space<vmem>>, vector<1x9x32xbf16>
    %600 = vector.shape_cast %599 : vector<1x9x32xbf16> to vector<9x32xbf16>
    %c1_246 = arith.constant 1 : index
    %c0_247 = arith.constant 0 : index
    %c0_248 = arith.constant 0 : index
    %601 = vector.load %arg18[%c1_246, %c0_247, %c0_248] : memref<2x9x32xbf16, #tpu.memory_space<vmem>>, vector<1x9x32xbf16>
    %602 = vector.shape_cast %601 : vector<1x9x32xbf16> to vector<9x32xbf16>
    %cst_249 = arith.constant 0.000000e+00 : f32
    %603 = vector.broadcast %cst_249 : f32 to vector<32x64xf32>
    %c1_250 = arith.constant 1 : index
    %c0_251 = arith.constant 0 : index
    %c0_252 = arith.constant 0 : index
    %604 = vector.load %arg14[%c1_250, %c0_251, %c0_252] : memref<2x1x64xf32, #tpu.memory_space<vmem>>, vector<1x1x64xf32>
    %605 = vector.shape_cast %604 : vector<1x1x64xf32> to vector<1x64xf32>
    %606 = vector.broadcast %605 : vector<1x64xf32> to vector<32x64xf32>
    %607 = arith.addf %603, %606 : vector<32x64xf32>
    %c2_253 = arith.constant 2 : index
    %c0_254 = arith.constant 0 : index
    %c0_255 = arith.constant 0 : index
    %608 = vector.load %arg7[%c2_253, %c0_254, %c0_255] : memref<4x64x32xbf16, #tpu.memory_space<vmem>>, vector<1x64x32xbf16>
    %609 = vector.shape_cast %608 : vector<1x64x32xbf16> to vector<64x32xbf16>
    %cst_256 = arith.constant dense<0.000000e+00> : vector<32x32xf32>
    %610 = tpu.matmul %598, %609, %cst_256 {dimension_numbers = #tpu.dot_dimension_numbers<[1], [0], [0], [1], [0, 0, 1, 1], [], []>} : vector<32x64xbf16>, vector<64x32xbf16>, vector<32x32xf32> -> vector<32x32xf32>
    %c2_257 = arith.constant 2 : index
    %c0_258 = arith.constant 0 : index
    %c0_259 = arith.constant 0 : index
    %611 = vector.load %arg8[%c2_257, %c0_258, %c0_259] : memref<4x1x32xf32, #tpu.memory_space<vmem>>, vector<1x1x32xf32>
    %612 = vector.shape_cast %611 : vector<1x1x32xf32> to vector<1x32xf32>
    %613 = vector.broadcast %612 : vector<1x32xf32> to vector<32x32xf32>
    %614 = arith.addf %610, %613 : vector<32x32xf32>
    %cst_260 = arith.constant 0.176776692 : f32
    %615 = vector.broadcast %cst_260 : f32 to vector<32x32xf32>
    %616 = arith.mulf %614, %615 : vector<32x32xf32>
    %c2_261 = arith.constant 2 : index
    %c0_262 = arith.constant 0 : index
    %c0_263 = arith.constant 0 : index
    %617 = vector.load %arg9[%c2_261, %c0_262, %c0_263] : memref<4x64x32xbf16, #tpu.memory_space<vmem>>, vector<1x64x32xbf16>
    %618 = vector.shape_cast %617 : vector<1x64x32xbf16> to vector<64x32xbf16>
    %cst_264 = arith.constant dense<0.000000e+00> : vector<32x32xf32>
    %619 = tpu.matmul %598, %618, %cst_264 {dimension_numbers = #tpu.dot_dimension_numbers<[1], [0], [0], [1], [0, 0, 1, 1], [], []>} : vector<32x64xbf16>, vector<64x32xbf16>, vector<32x32xf32> -> vector<32x32xf32>
    %c2_265 = arith.constant 2 : index
    %c0_266 = arith.constant 0 : index
    %c0_267 = arith.constant 0 : index
    %620 = vector.load %arg10[%c2_265, %c0_266, %c0_267] : memref<4x1x32xf32, #tpu.memory_space<vmem>>, vector<1x1x32xf32>
    %621 = vector.shape_cast %620 : vector<1x1x32xf32> to vector<1x32xf32>
    %622 = vector.broadcast %621 : vector<1x32xf32> to vector<32x32xf32>
    %623 = arith.addf %619, %622 : vector<32x32xf32>
    %c2_268 = arith.constant 2 : index
    %c0_269 = arith.constant 0 : index
    %c0_270 = arith.constant 0 : index
    %624 = vector.load %arg11[%c2_268, %c0_269, %c0_270] : memref<4x64x32xbf16, #tpu.memory_space<vmem>>, vector<1x64x32xbf16>
    %625 = vector.shape_cast %624 : vector<1x64x32xbf16> to vector<64x32xbf16>
    %cst_271 = arith.constant dense<0.000000e+00> : vector<32x32xf32>
    %626 = tpu.matmul %598, %625, %cst_271 {dimension_numbers = #tpu.dot_dimension_numbers<[1], [0], [0], [1], [0, 0, 1, 1], [], []>} : vector<32x64xbf16>, vector<64x32xbf16>, vector<32x32xf32> -> vector<32x32xf32>
    %c2_272 = arith.constant 2 : index
    %c0_273 = arith.constant 0 : index
    %c0_274 = arith.constant 0 : index
    %627 = vector.load %arg12[%c2_272, %c0_273, %c0_274] : memref<4x1x32xf32, #tpu.memory_space<vmem>>, vector<1x1x32xf32>
    %628 = vector.shape_cast %627 : vector<1x1x32xf32> to vector<1x32xf32>
    %629 = vector.broadcast %628 : vector<1x32xf32> to vector<32x32xf32>
    %630 = arith.addf %626, %629 : vector<32x32xf32>
    %631 = arith.truncf %616 : vector<32x32xf32> to vector<32x32xbf16>
    %632 = arith.truncf %623 : vector<32x32xf32> to vector<32x32xbf16>
    %cst_275 = arith.constant dense<0.000000e+00> : vector<32x32xf32>
    %633 = tpu.matmul %631, %632, %cst_275 {dimension_numbers = #tpu.dot_dimension_numbers<[1], [1], [0], [0], [0, 0, 1, 0], [], []>} : vector<32x32xbf16>, vector<32x32xbf16>, vector<32x32xf32> -> vector<32x32xf32>
    %cst_276 = arith.constant dense<0.000000e+00> : vector<32x9xf32>
    %634 = tpu.matmul %631, %600, %cst_276 {dimension_numbers = #tpu.dot_dimension_numbers<[1], [1], [0], [0], [0, 0, 1, 0], [], []>} : vector<32x32xbf16>, vector<9x32xbf16>, vector<32x9xf32> -> vector<32x9xf32>
    %635 = vector.extract_strided_slice %634 {offsets = [0, 0], sizes = [32, 1], strides = [1, 1]} : vector<32x9xf32> to vector<32x1xf32>
    %cst_277 = arith.constant 0.000000e+00 : f32
    %636 = vector.shape_cast %635 : vector<32x1xf32> to vector<32x1xf32>
    %637 = vector.broadcast %636 : vector<32x1xf32> to vector<32x32xf32>
    %638 = vector.broadcast %cst_277 : f32 to vector<32x32xf32>
    %639 = arith.select %18, %637, %638 : vector<32x32xi1>, vector<32x32xf32>
    %640 = arith.addf %633, %639 : vector<32x32xf32>
    %641 = vector.extract_strided_slice %634 {offsets = [0, 1], sizes = [32, 1], strides = [1, 1]} : vector<32x9xf32> to vector<32x1xf32>
    %cst_278 = arith.constant 0.000000e+00 : f32
    %642 = vector.shape_cast %641 : vector<32x1xf32> to vector<32x1xf32>
    %643 = vector.broadcast %642 : vector<32x1xf32> to vector<32x32xf32>
    %644 = vector.broadcast %cst_278 : f32 to vector<32x32xf32>
    %645 = arith.select %21, %643, %644 : vector<32x32xi1>, vector<32x32xf32>
    %646 = arith.addf %640, %645 : vector<32x32xf32>
    %647 = vector.extract_strided_slice %634 {offsets = [0, 2], sizes = [32, 1], strides = [1, 1]} : vector<32x9xf32> to vector<32x1xf32>
    %cst_279 = arith.constant 0.000000e+00 : f32
    %648 = vector.shape_cast %647 : vector<32x1xf32> to vector<32x1xf32>
    %649 = vector.broadcast %648 : vector<32x1xf32> to vector<32x32xf32>
    %650 = vector.broadcast %cst_279 : f32 to vector<32x32xf32>
    %651 = arith.select %24, %649, %650 : vector<32x32xi1>, vector<32x32xf32>
    %652 = arith.addf %646, %651 : vector<32x32xf32>
    %653 = vector.extract_strided_slice %634 {offsets = [0, 3], sizes = [32, 1], strides = [1, 1]} : vector<32x9xf32> to vector<32x1xf32>
    %cst_280 = arith.constant 0.000000e+00 : f32
    %654 = vector.shape_cast %653 : vector<32x1xf32> to vector<32x1xf32>
    %655 = vector.broadcast %654 : vector<32x1xf32> to vector<32x32xf32>
    %656 = vector.broadcast %cst_280 : f32 to vector<32x32xf32>
    %657 = arith.select %27, %655, %656 : vector<32x32xi1>, vector<32x32xf32>
    %658 = arith.addf %652, %657 : vector<32x32xf32>
    %659 = vector.extract_strided_slice %634 {offsets = [0, 4], sizes = [32, 1], strides = [1, 1]} : vector<32x9xf32> to vector<32x1xf32>
    %cst_281 = arith.constant 0.000000e+00 : f32
    %660 = vector.shape_cast %659 : vector<32x1xf32> to vector<32x1xf32>
    %661 = vector.broadcast %660 : vector<32x1xf32> to vector<32x32xf32>
    %662 = vector.broadcast %cst_281 : f32 to vector<32x32xf32>
    %663 = arith.select %30, %661, %662 : vector<32x32xi1>, vector<32x32xf32>
    %664 = arith.addf %658, %663 : vector<32x32xf32>
    %665 = vector.extract_strided_slice %634 {offsets = [0, 5], sizes = [32, 1], strides = [1, 1]} : vector<32x9xf32> to vector<32x1xf32>
    %cst_282 = arith.constant 0.000000e+00 : f32
    %666 = vector.shape_cast %665 : vector<32x1xf32> to vector<32x1xf32>
    %667 = vector.broadcast %666 : vector<32x1xf32> to vector<32x32xf32>
    %668 = vector.broadcast %cst_282 : f32 to vector<32x32xf32>
    %669 = arith.select %33, %667, %668 : vector<32x32xi1>, vector<32x32xf32>
    %670 = arith.addf %664, %669 : vector<32x32xf32>
    %671 = vector.extract_strided_slice %634 {offsets = [0, 6], sizes = [32, 1], strides = [1, 1]} : vector<32x9xf32> to vector<32x1xf32>
    %cst_283 = arith.constant 0.000000e+00 : f32
    %672 = vector.shape_cast %671 : vector<32x1xf32> to vector<32x1xf32>
    %673 = vector.broadcast %672 : vector<32x1xf32> to vector<32x32xf32>
    %674 = vector.broadcast %cst_283 : f32 to vector<32x32xf32>
    %675 = arith.select %36, %673, %674 : vector<32x32xi1>, vector<32x32xf32>
    %676 = arith.addf %670, %675 : vector<32x32xf32>
    %677 = vector.extract_strided_slice %634 {offsets = [0, 7], sizes = [32, 1], strides = [1, 1]} : vector<32x9xf32> to vector<32x1xf32>
    %cst_284 = arith.constant 0.000000e+00 : f32
    %678 = vector.shape_cast %677 : vector<32x1xf32> to vector<32x1xf32>
    %679 = vector.broadcast %678 : vector<32x1xf32> to vector<32x32xf32>
    %680 = vector.broadcast %cst_284 : f32 to vector<32x32xf32>
    %681 = arith.select %39, %679, %680 : vector<32x32xi1>, vector<32x32xf32>
    %682 = arith.addf %676, %681 : vector<32x32xf32>
    %683 = vector.extract_strided_slice %634 {offsets = [0, 8], sizes = [32, 1], strides = [1, 1]} : vector<32x9xf32> to vector<32x1xf32>
    %cst_285 = arith.constant 0.000000e+00 : f32
    %684 = vector.shape_cast %683 : vector<32x1xf32> to vector<32x1xf32>
    %685 = vector.broadcast %684 : vector<32x1xf32> to vector<32x32xf32>
    %686 = vector.broadcast %cst_285 : f32 to vector<32x32xf32>
    %687 = arith.select %42, %685, %686 : vector<32x32xi1>, vector<32x32xf32>
    %688 = arith.addf %682, %687 : vector<32x32xf32>
    %cst_286 = arith.constant -1.000000e+04 : f32
    %689 = vector.broadcast %cst_286 : f32 to vector<32x32xf32>
    %690 = arith.select %15, %688, %689 : vector<32x32xi1>, vector<32x32xf32>
    %cst_287 = arith.constant dense<0xFF800000> : vector<32xf32>
    %691 = vector.multi_reduction <maximumf>, %690, %cst_287 [1] : vector<32x32xf32> to vector<32xf32>
    %692 = vector.shape_cast %691 : vector<32xf32> to vector<32x1xf32>
    %693 = vector.broadcast %692 : vector<32x1xf32> to vector<32x32xf32>
    %694 = arith.subf %690, %693 : vector<32x32xf32>
    %695 = math.exp %694 : vector<32x32xf32>
    %cst_288 = arith.constant dense<0.000000e+00> : vector<32xf32>
    %696 = vector.multi_reduction <add>, %695, %cst_288 [1] : vector<32x32xf32> to vector<32xf32>
    %697 = vector.shape_cast %696 : vector<32xf32> to vector<32x1xf32>
    %698 = tpu.reciprocal %697 {approx = true} : vector<32x1xf32> -> vector<32x1xf32>
    %699 = vector.broadcast %698 : vector<32x1xf32> to vector<32x32xf32>
    %700 = arith.mulf %695, %699 : vector<32x32xf32>
    %701 = arith.truncf %700 : vector<32x32xf32> to vector<32x32xbf16>
    %702 = arith.truncf %630 : vector<32x32xf32> to vector<32x32xbf16>
    %cst_289 = arith.constant dense<0.000000e+00> : vector<32x32xf32>
    %703 = tpu.matmul %701, %702, %cst_289 {dimension_numbers = #tpu.dot_dimension_numbers<[1], [0], [0], [1], [0, 0, 1, 1], [], []>} : vector<32x32xbf16>, vector<32x32xbf16>, vector<32x32xf32> -> vector<32x32xf32>
    %cst_290 = arith.constant 0.000000e+00 : f32
    %704 = vector.broadcast %cst_290 : f32 to vector<32x9xf32>
    %cst_291 = arith.constant 0.000000e+00 : f32
    %705 = vector.broadcast %cst_291 : f32 to vector<32x32xf32>
    %706 = arith.select %18, %700, %705 : vector<32x32xi1>, vector<32x32xf32>
    %cst_292 = arith.constant dense<0.000000e+00> : vector<32xf32>
    %707 = vector.multi_reduction <add>, %706, %cst_292 [1] : vector<32x32xf32> to vector<32xf32>
    %708 = vector.shape_cast %707 : vector<32xf32> to vector<32x1xf32>
    %c0_i32_293 = arith.constant 0 : i32
    %709 = vector.broadcast %c0_i32_293 : i32 to vector<32x9xi32>
    %710 = arith.cmpi eq, %64, %709 : vector<32x9xi32>
    %cst_294 = arith.constant 0.000000e+00 : f32
    %711 = vector.shape_cast %708 : vector<32x1xf32> to vector<32x1xf32>
    %712 = vector.broadcast %711 : vector<32x1xf32> to vector<32x9xf32>
    %713 = vector.broadcast %cst_294 : f32 to vector<32x9xf32>
    %714 = arith.select %710, %712, %713 : vector<32x9xi1>, vector<32x9xf32>
    %715 = arith.addf %704, %714 : vector<32x9xf32>
    %cst_295 = arith.constant 0.000000e+00 : f32
    %716 = vector.broadcast %cst_295 : f32 to vector<32x32xf32>
    %717 = arith.select %21, %700, %716 : vector<32x32xi1>, vector<32x32xf32>
    %cst_296 = arith.constant dense<0.000000e+00> : vector<32xf32>
    %718 = vector.multi_reduction <add>, %717, %cst_296 [1] : vector<32x32xf32> to vector<32xf32>
    %719 = vector.shape_cast %718 : vector<32xf32> to vector<32x1xf32>
    %c1_i32_297 = arith.constant 1 : i32
    %720 = vector.broadcast %c1_i32_297 : i32 to vector<32x9xi32>
    %721 = arith.cmpi eq, %64, %720 : vector<32x9xi32>
    %cst_298 = arith.constant 0.000000e+00 : f32
    %722 = vector.shape_cast %719 : vector<32x1xf32> to vector<32x1xf32>
    %723 = vector.broadcast %722 : vector<32x1xf32> to vector<32x9xf32>
    %724 = vector.broadcast %cst_298 : f32 to vector<32x9xf32>
    %725 = arith.select %721, %723, %724 : vector<32x9xi1>, vector<32x9xf32>
    %726 = arith.addf %715, %725 : vector<32x9xf32>
    %cst_299 = arith.constant 0.000000e+00 : f32
    %727 = vector.broadcast %cst_299 : f32 to vector<32x32xf32>
    %728 = arith.select %24, %700, %727 : vector<32x32xi1>, vector<32x32xf32>
    %cst_300 = arith.constant dense<0.000000e+00> : vector<32xf32>
    %729 = vector.multi_reduction <add>, %728, %cst_300 [1] : vector<32x32xf32> to vector<32xf32>
    %730 = vector.shape_cast %729 : vector<32xf32> to vector<32x1xf32>
    %c2_i32_301 = arith.constant 2 : i32
    %731 = vector.broadcast %c2_i32_301 : i32 to vector<32x9xi32>
    %732 = arith.cmpi eq, %64, %731 : vector<32x9xi32>
    %cst_302 = arith.constant 0.000000e+00 : f32
    %733 = vector.shape_cast %730 : vector<32x1xf32> to vector<32x1xf32>
    %734 = vector.broadcast %733 : vector<32x1xf32> to vector<32x9xf32>
    %735 = vector.broadcast %cst_302 : f32 to vector<32x9xf32>
    %736 = arith.select %732, %734, %735 : vector<32x9xi1>, vector<32x9xf32>
    %737 = arith.addf %726, %736 : vector<32x9xf32>
    %cst_303 = arith.constant 0.000000e+00 : f32
    %738 = vector.broadcast %cst_303 : f32 to vector<32x32xf32>
    %739 = arith.select %27, %700, %738 : vector<32x32xi1>, vector<32x32xf32>
    %cst_304 = arith.constant dense<0.000000e+00> : vector<32xf32>
    %740 = vector.multi_reduction <add>, %739, %cst_304 [1] : vector<32x32xf32> to vector<32xf32>
    %741 = vector.shape_cast %740 : vector<32xf32> to vector<32x1xf32>
    %c3_i32_305 = arith.constant 3 : i32
    %742 = vector.broadcast %c3_i32_305 : i32 to vector<32x9xi32>
    %743 = arith.cmpi eq, %64, %742 : vector<32x9xi32>
    %cst_306 = arith.constant 0.000000e+00 : f32
    %744 = vector.shape_cast %741 : vector<32x1xf32> to vector<32x1xf32>
    %745 = vector.broadcast %744 : vector<32x1xf32> to vector<32x9xf32>
    %746 = vector.broadcast %cst_306 : f32 to vector<32x9xf32>
    %747 = arith.select %743, %745, %746 : vector<32x9xi1>, vector<32x9xf32>
    %748 = arith.addf %737, %747 : vector<32x9xf32>
    %cst_307 = arith.constant 0.000000e+00 : f32
    %749 = vector.broadcast %cst_307 : f32 to vector<32x32xf32>
    %750 = arith.select %30, %700, %749 : vector<32x32xi1>, vector<32x32xf32>
    %cst_308 = arith.constant dense<0.000000e+00> : vector<32xf32>
    %751 = vector.multi_reduction <add>, %750, %cst_308 [1] : vector<32x32xf32> to vector<32xf32>
    %752 = vector.shape_cast %751 : vector<32xf32> to vector<32x1xf32>
    %c4_i32_309 = arith.constant 4 : i32
    %753 = vector.broadcast %c4_i32_309 : i32 to vector<32x9xi32>
    %754 = arith.cmpi eq, %64, %753 : vector<32x9xi32>
    %cst_310 = arith.constant 0.000000e+00 : f32
    %755 = vector.shape_cast %752 : vector<32x1xf32> to vector<32x1xf32>
    %756 = vector.broadcast %755 : vector<32x1xf32> to vector<32x9xf32>
    %757 = vector.broadcast %cst_310 : f32 to vector<32x9xf32>
    %758 = arith.select %754, %756, %757 : vector<32x9xi1>, vector<32x9xf32>
    %759 = arith.addf %748, %758 : vector<32x9xf32>
    %cst_311 = arith.constant 0.000000e+00 : f32
    %760 = vector.broadcast %cst_311 : f32 to vector<32x32xf32>
    %761 = arith.select %33, %700, %760 : vector<32x32xi1>, vector<32x32xf32>
    %cst_312 = arith.constant dense<0.000000e+00> : vector<32xf32>
    %762 = vector.multi_reduction <add>, %761, %cst_312 [1] : vector<32x32xf32> to vector<32xf32>
    %763 = vector.shape_cast %762 : vector<32xf32> to vector<32x1xf32>
    %c5_i32_313 = arith.constant 5 : i32
    %764 = vector.broadcast %c5_i32_313 : i32 to vector<32x9xi32>
    %765 = arith.cmpi eq, %64, %764 : vector<32x9xi32>
    %cst_314 = arith.constant 0.000000e+00 : f32
    %766 = vector.shape_cast %763 : vector<32x1xf32> to vector<32x1xf32>
    %767 = vector.broadcast %766 : vector<32x1xf32> to vector<32x9xf32>
    %768 = vector.broadcast %cst_314 : f32 to vector<32x9xf32>
    %769 = arith.select %765, %767, %768 : vector<32x9xi1>, vector<32x9xf32>
    %770 = arith.addf %759, %769 : vector<32x9xf32>
    %cst_315 = arith.constant 0.000000e+00 : f32
    %771 = vector.broadcast %cst_315 : f32 to vector<32x32xf32>
    %772 = arith.select %36, %700, %771 : vector<32x32xi1>, vector<32x32xf32>
    %cst_316 = arith.constant dense<0.000000e+00> : vector<32xf32>
    %773 = vector.multi_reduction <add>, %772, %cst_316 [1] : vector<32x32xf32> to vector<32xf32>
    %774 = vector.shape_cast %773 : vector<32xf32> to vector<32x1xf32>
    %c6_i32_317 = arith.constant 6 : i32
    %775 = vector.broadcast %c6_i32_317 : i32 to vector<32x9xi32>
    %776 = arith.cmpi eq, %64, %775 : vector<32x9xi32>
    %cst_318 = arith.constant 0.000000e+00 : f32
    %777 = vector.shape_cast %774 : vector<32x1xf32> to vector<32x1xf32>
    %778 = vector.broadcast %777 : vector<32x1xf32> to vector<32x9xf32>
    %779 = vector.broadcast %cst_318 : f32 to vector<32x9xf32>
    %780 = arith.select %776, %778, %779 : vector<32x9xi1>, vector<32x9xf32>
    %781 = arith.addf %770, %780 : vector<32x9xf32>
    %cst_319 = arith.constant 0.000000e+00 : f32
    %782 = vector.broadcast %cst_319 : f32 to vector<32x32xf32>
    %783 = arith.select %39, %700, %782 : vector<32x32xi1>, vector<32x32xf32>
    %cst_320 = arith.constant dense<0.000000e+00> : vector<32xf32>
    %784 = vector.multi_reduction <add>, %783, %cst_320 [1] : vector<32x32xf32> to vector<32xf32>
    %785 = vector.shape_cast %784 : vector<32xf32> to vector<32x1xf32>
    %c7_i32_321 = arith.constant 7 : i32
    %786 = vector.broadcast %c7_i32_321 : i32 to vector<32x9xi32>
    %787 = arith.cmpi eq, %64, %786 : vector<32x9xi32>
    %cst_322 = arith.constant 0.000000e+00 : f32
    %788 = vector.shape_cast %785 : vector<32x1xf32> to vector<32x1xf32>
    %789 = vector.broadcast %788 : vector<32x1xf32> to vector<32x9xf32>
    %790 = vector.broadcast %cst_322 : f32 to vector<32x9xf32>
    %791 = arith.select %787, %789, %790 : vector<32x9xi1>, vector<32x9xf32>
    %792 = arith.addf %781, %791 : vector<32x9xf32>
    %cst_323 = arith.constant 0.000000e+00 : f32
    %793 = vector.broadcast %cst_323 : f32 to vector<32x32xf32>
    %794 = arith.select %42, %700, %793 : vector<32x32xi1>, vector<32x32xf32>
    %cst_324 = arith.constant dense<0.000000e+00> : vector<32xf32>
    %795 = vector.multi_reduction <add>, %794, %cst_324 [1] : vector<32x32xf32> to vector<32xf32>
    %796 = vector.shape_cast %795 : vector<32xf32> to vector<32x1xf32>
    %c8_i32_325 = arith.constant 8 : i32
    %797 = vector.broadcast %c8_i32_325 : i32 to vector<32x9xi32>
    %798 = arith.cmpi eq, %64, %797 : vector<32x9xi32>
    %cst_326 = arith.constant 0.000000e+00 : f32
    %799 = vector.shape_cast %796 : vector<32x1xf32> to vector<32x1xf32>
    %800 = vector.broadcast %799 : vector<32x1xf32> to vector<32x9xf32>
    %801 = vector.broadcast %cst_326 : f32 to vector<32x9xf32>
    %802 = arith.select %798, %800, %801 : vector<32x9xi1>, vector<32x9xf32>
    %803 = arith.addf %792, %802 : vector<32x9xf32>
    %804 = arith.truncf %803 : vector<32x9xf32> to vector<32x9xbf16>
    %cst_327 = arith.constant dense<0.000000e+00> : vector<32x32xf32>
    %805 = tpu.matmul %804, %602, %cst_327 {dimension_numbers = #tpu.dot_dimension_numbers<[1], [0], [0], [1], [0, 0, 1, 1], [], []>} : vector<32x9xbf16>, vector<9x32xbf16>, vector<32x32xf32> -> vector<32x32xf32>
    %806 = arith.addf %703, %805 : vector<32x32xf32>
    %807 = arith.truncf %806 : vector<32x32xf32> to vector<32x32xbf16>
    %c2_328 = arith.constant 2 : index
    %c0_329 = arith.constant 0 : index
    %c0_330 = arith.constant 0 : index
    %808 = vector.load %arg13[%c2_328, %c0_329, %c0_330] : memref<4x32x64xbf16, #tpu.memory_space<vmem>>, vector<1x32x64xbf16>
    %809 = vector.shape_cast %808 : vector<1x32x64xbf16> to vector<32x64xbf16>
    %cst_331 = arith.constant dense<0.000000e+00> : vector<32x64xf32>
    %810 = tpu.matmul %807, %809, %cst_331 {dimension_numbers = #tpu.dot_dimension_numbers<[1], [0], [0], [1], [0, 0, 1, 1], [], []>} : vector<32x32xbf16>, vector<32x64xbf16>, vector<32x64xf32> -> vector<32x64xf32>
    %811 = arith.addf %607, %810 : vector<32x64xf32>
    %c3 = arith.constant 3 : index
    %c0_332 = arith.constant 0 : index
    %c0_333 = arith.constant 0 : index
    %812 = vector.load %arg7[%c3, %c0_332, %c0_333] : memref<4x64x32xbf16, #tpu.memory_space<vmem>>, vector<1x64x32xbf16>
    %813 = vector.shape_cast %812 : vector<1x64x32xbf16> to vector<64x32xbf16>
    %cst_334 = arith.constant dense<0.000000e+00> : vector<32x32xf32>
    %814 = tpu.matmul %598, %813, %cst_334 {dimension_numbers = #tpu.dot_dimension_numbers<[1], [0], [0], [1], [0, 0, 1, 1], [], []>} : vector<32x64xbf16>, vector<64x32xbf16>, vector<32x32xf32> -> vector<32x32xf32>
    %c3_335 = arith.constant 3 : index
    %c0_336 = arith.constant 0 : index
    %c0_337 = arith.constant 0 : index
    %815 = vector.load %arg8[%c3_335, %c0_336, %c0_337] : memref<4x1x32xf32, #tpu.memory_space<vmem>>, vector<1x1x32xf32>
    %816 = vector.shape_cast %815 : vector<1x1x32xf32> to vector<1x32xf32>
    %817 = vector.broadcast %816 : vector<1x32xf32> to vector<32x32xf32>
    %818 = arith.addf %814, %817 : vector<32x32xf32>
    %cst_338 = arith.constant 0.176776692 : f32
    %819 = vector.broadcast %cst_338 : f32 to vector<32x32xf32>
    %820 = arith.mulf %818, %819 : vector<32x32xf32>
    %c3_339 = arith.constant 3 : index
    %c0_340 = arith.constant 0 : index
    %c0_341 = arith.constant 0 : index
    %821 = vector.load %arg9[%c3_339, %c0_340, %c0_341] : memref<4x64x32xbf16, #tpu.memory_space<vmem>>, vector<1x64x32xbf16>
    %822 = vector.shape_cast %821 : vector<1x64x32xbf16> to vector<64x32xbf16>
    %cst_342 = arith.constant dense<0.000000e+00> : vector<32x32xf32>
    %823 = tpu.matmul %598, %822, %cst_342 {dimension_numbers = #tpu.dot_dimension_numbers<[1], [0], [0], [1], [0, 0, 1, 1], [], []>} : vector<32x64xbf16>, vector<64x32xbf16>, vector<32x32xf32> -> vector<32x32xf32>
    %c3_343 = arith.constant 3 : index
    %c0_344 = arith.constant 0 : index
    %c0_345 = arith.constant 0 : index
    %824 = vector.load %arg10[%c3_343, %c0_344, %c0_345] : memref<4x1x32xf32, #tpu.memory_space<vmem>>, vector<1x1x32xf32>
    %825 = vector.shape_cast %824 : vector<1x1x32xf32> to vector<1x32xf32>
    %826 = vector.broadcast %825 : vector<1x32xf32> to vector<32x32xf32>
    %827 = arith.addf %823, %826 : vector<32x32xf32>
    %c3_346 = arith.constant 3 : index
    %c0_347 = arith.constant 0 : index
    %c0_348 = arith.constant 0 : index
    %828 = vector.load %arg11[%c3_346, %c0_347, %c0_348] : memref<4x64x32xbf16, #tpu.memory_space<vmem>>, vector<1x64x32xbf16>
    %829 = vector.shape_cast %828 : vector<1x64x32xbf16> to vector<64x32xbf16>
    %cst_349 = arith.constant dense<0.000000e+00> : vector<32x32xf32>
    %830 = tpu.matmul %598, %829, %cst_349 {dimension_numbers = #tpu.dot_dimension_numbers<[1], [0], [0], [1], [0, 0, 1, 1], [], []>} : vector<32x64xbf16>, vector<64x32xbf16>, vector<32x32xf32> -> vector<32x32xf32>
    %c3_350 = arith.constant 3 : index
    %c0_351 = arith.constant 0 : index
    %c0_352 = arith.constant 0 : index
    %831 = vector.load %arg12[%c3_350, %c0_351, %c0_352] : memref<4x1x32xf32, #tpu.memory_space<vmem>>, vector<1x1x32xf32>
    %832 = vector.shape_cast %831 : vector<1x1x32xf32> to vector<1x32xf32>
    %833 = vector.broadcast %832 : vector<1x32xf32> to vector<32x32xf32>
    %834 = arith.addf %830, %833 : vector<32x32xf32>
    %835 = arith.truncf %820 : vector<32x32xf32> to vector<32x32xbf16>
    %836 = arith.truncf %827 : vector<32x32xf32> to vector<32x32xbf16>
    %cst_353 = arith.constant dense<0.000000e+00> : vector<32x32xf32>
    %837 = tpu.matmul %835, %836, %cst_353 {dimension_numbers = #tpu.dot_dimension_numbers<[1], [1], [0], [0], [0, 0, 1, 0], [], []>} : vector<32x32xbf16>, vector<32x32xbf16>, vector<32x32xf32> -> vector<32x32xf32>
    %cst_354 = arith.constant dense<0.000000e+00> : vector<32x9xf32>
    %838 = tpu.matmul %835, %600, %cst_354 {dimension_numbers = #tpu.dot_dimension_numbers<[1], [1], [0], [0], [0, 0, 1, 0], [], []>} : vector<32x32xbf16>, vector<9x32xbf16>, vector<32x9xf32> -> vector<32x9xf32>
    %839 = vector.extract_strided_slice %838 {offsets = [0, 0], sizes = [32, 1], strides = [1, 1]} : vector<32x9xf32> to vector<32x1xf32>
    %cst_355 = arith.constant 0.000000e+00 : f32
    %840 = vector.shape_cast %839 : vector<32x1xf32> to vector<32x1xf32>
    %841 = vector.broadcast %840 : vector<32x1xf32> to vector<32x32xf32>
    %842 = vector.broadcast %cst_355 : f32 to vector<32x32xf32>
    %843 = arith.select %18, %841, %842 : vector<32x32xi1>, vector<32x32xf32>
    %844 = arith.addf %837, %843 : vector<32x32xf32>
    %845 = vector.extract_strided_slice %838 {offsets = [0, 1], sizes = [32, 1], strides = [1, 1]} : vector<32x9xf32> to vector<32x1xf32>
    %cst_356 = arith.constant 0.000000e+00 : f32
    %846 = vector.shape_cast %845 : vector<32x1xf32> to vector<32x1xf32>
    %847 = vector.broadcast %846 : vector<32x1xf32> to vector<32x32xf32>
    %848 = vector.broadcast %cst_356 : f32 to vector<32x32xf32>
    %849 = arith.select %21, %847, %848 : vector<32x32xi1>, vector<32x32xf32>
    %850 = arith.addf %844, %849 : vector<32x32xf32>
    %851 = vector.extract_strided_slice %838 {offsets = [0, 2], sizes = [32, 1], strides = [1, 1]} : vector<32x9xf32> to vector<32x1xf32>
    %cst_357 = arith.constant 0.000000e+00 : f32
    %852 = vector.shape_cast %851 : vector<32x1xf32> to vector<32x1xf32>
    %853 = vector.broadcast %852 : vector<32x1xf32> to vector<32x32xf32>
    %854 = vector.broadcast %cst_357 : f32 to vector<32x32xf32>
    %855 = arith.select %24, %853, %854 : vector<32x32xi1>, vector<32x32xf32>
    %856 = arith.addf %850, %855 : vector<32x32xf32>
    %857 = vector.extract_strided_slice %838 {offsets = [0, 3], sizes = [32, 1], strides = [1, 1]} : vector<32x9xf32> to vector<32x1xf32>
    %cst_358 = arith.constant 0.000000e+00 : f32
    %858 = vector.shape_cast %857 : vector<32x1xf32> to vector<32x1xf32>
    %859 = vector.broadcast %858 : vector<32x1xf32> to vector<32x32xf32>
    %860 = vector.broadcast %cst_358 : f32 to vector<32x32xf32>
    %861 = arith.select %27, %859, %860 : vector<32x32xi1>, vector<32x32xf32>
    %862 = arith.addf %856, %861 : vector<32x32xf32>
    %863 = vector.extract_strided_slice %838 {offsets = [0, 4], sizes = [32, 1], strides = [1, 1]} : vector<32x9xf32> to vector<32x1xf32>
    %cst_359 = arith.constant 0.000000e+00 : f32
    %864 = vector.shape_cast %863 : vector<32x1xf32> to vector<32x1xf32>
    %865 = vector.broadcast %864 : vector<32x1xf32> to vector<32x32xf32>
    %866 = vector.broadcast %cst_359 : f32 to vector<32x32xf32>
    %867 = arith.select %30, %865, %866 : vector<32x32xi1>, vector<32x32xf32>
    %868 = arith.addf %862, %867 : vector<32x32xf32>
    %869 = vector.extract_strided_slice %838 {offsets = [0, 5], sizes = [32, 1], strides = [1, 1]} : vector<32x9xf32> to vector<32x1xf32>
    %cst_360 = arith.constant 0.000000e+00 : f32
    %870 = vector.shape_cast %869 : vector<32x1xf32> to vector<32x1xf32>
    %871 = vector.broadcast %870 : vector<32x1xf32> to vector<32x32xf32>
    %872 = vector.broadcast %cst_360 : f32 to vector<32x32xf32>
    %873 = arith.select %33, %871, %872 : vector<32x32xi1>, vector<32x32xf32>
    %874 = arith.addf %868, %873 : vector<32x32xf32>
    %875 = vector.extract_strided_slice %838 {offsets = [0, 6], sizes = [32, 1], strides = [1, 1]} : vector<32x9xf32> to vector<32x1xf32>
    %cst_361 = arith.constant 0.000000e+00 : f32
    %876 = vector.shape_cast %875 : vector<32x1xf32> to vector<32x1xf32>
    %877 = vector.broadcast %876 : vector<32x1xf32> to vector<32x32xf32>
    %878 = vector.broadcast %cst_361 : f32 to vector<32x32xf32>
    %879 = arith.select %36, %877, %878 : vector<32x32xi1>, vector<32x32xf32>
    %880 = arith.addf %874, %879 : vector<32x32xf32>
    %881 = vector.extract_strided_slice %838 {offsets = [0, 7], sizes = [32, 1], strides = [1, 1]} : vector<32x9xf32> to vector<32x1xf32>
    %cst_362 = arith.constant 0.000000e+00 : f32
    %882 = vector.shape_cast %881 : vector<32x1xf32> to vector<32x1xf32>
    %883 = vector.broadcast %882 : vector<32x1xf32> to vector<32x32xf32>
    %884 = vector.broadcast %cst_362 : f32 to vector<32x32xf32>
    %885 = arith.select %39, %883, %884 : vector<32x32xi1>, vector<32x32xf32>
    %886 = arith.addf %880, %885 : vector<32x32xf32>
    %887 = vector.extract_strided_slice %838 {offsets = [0, 8], sizes = [32, 1], strides = [1, 1]} : vector<32x9xf32> to vector<32x1xf32>
    %cst_363 = arith.constant 0.000000e+00 : f32
    %888 = vector.shape_cast %887 : vector<32x1xf32> to vector<32x1xf32>
    %889 = vector.broadcast %888 : vector<32x1xf32> to vector<32x32xf32>
    %890 = vector.broadcast %cst_363 : f32 to vector<32x32xf32>
    %891 = arith.select %42, %889, %890 : vector<32x32xi1>, vector<32x32xf32>
    %892 = arith.addf %886, %891 : vector<32x32xf32>
    %cst_364 = arith.constant -1.000000e+04 : f32
    %893 = vector.broadcast %cst_364 : f32 to vector<32x32xf32>
    %894 = arith.select %15, %892, %893 : vector<32x32xi1>, vector<32x32xf32>
    %cst_365 = arith.constant dense<0xFF800000> : vector<32xf32>
    %895 = vector.multi_reduction <maximumf>, %894, %cst_365 [1] : vector<32x32xf32> to vector<32xf32>
    %896 = vector.shape_cast %895 : vector<32xf32> to vector<32x1xf32>
    %897 = vector.broadcast %896 : vector<32x1xf32> to vector<32x32xf32>
    %898 = arith.subf %894, %897 : vector<32x32xf32>
    %899 = math.exp %898 : vector<32x32xf32>
    %cst_366 = arith.constant dense<0.000000e+00> : vector<32xf32>
    %900 = vector.multi_reduction <add>, %899, %cst_366 [1] : vector<32x32xf32> to vector<32xf32>
    %901 = vector.shape_cast %900 : vector<32xf32> to vector<32x1xf32>
    %902 = tpu.reciprocal %901 {approx = true} : vector<32x1xf32> -> vector<32x1xf32>
    %903 = vector.broadcast %902 : vector<32x1xf32> to vector<32x32xf32>
    %904 = arith.mulf %899, %903 : vector<32x32xf32>
    %905 = arith.truncf %904 : vector<32x32xf32> to vector<32x32xbf16>
    %906 = arith.truncf %834 : vector<32x32xf32> to vector<32x32xbf16>
    %cst_367 = arith.constant dense<0.000000e+00> : vector<32x32xf32>
    %907 = tpu.matmul %905, %906, %cst_367 {dimension_numbers = #tpu.dot_dimension_numbers<[1], [0], [0], [1], [0, 0, 1, 1], [], []>} : vector<32x32xbf16>, vector<32x32xbf16>, vector<32x32xf32> -> vector<32x32xf32>
    %cst_368 = arith.constant 0.000000e+00 : f32
    %908 = vector.broadcast %cst_368 : f32 to vector<32x9xf32>
    %cst_369 = arith.constant 0.000000e+00 : f32
    %909 = vector.broadcast %cst_369 : f32 to vector<32x32xf32>
    %910 = arith.select %18, %904, %909 : vector<32x32xi1>, vector<32x32xf32>
    %cst_370 = arith.constant dense<0.000000e+00> : vector<32xf32>
    %911 = vector.multi_reduction <add>, %910, %cst_370 [1] : vector<32x32xf32> to vector<32xf32>
    %912 = vector.shape_cast %911 : vector<32xf32> to vector<32x1xf32>
    %c0_i32_371 = arith.constant 0 : i32
    %913 = vector.broadcast %c0_i32_371 : i32 to vector<32x9xi32>
    %914 = arith.cmpi eq, %64, %913 : vector<32x9xi32>
    %cst_372 = arith.constant 0.000000e+00 : f32
    %915 = vector.shape_cast %912 : vector<32x1xf32> to vector<32x1xf32>
    %916 = vector.broadcast %915 : vector<32x1xf32> to vector<32x9xf32>
    %917 = vector.broadcast %cst_372 : f32 to vector<32x9xf32>
    %918 = arith.select %914, %916, %917 : vector<32x9xi1>, vector<32x9xf32>
    %919 = arith.addf %908, %918 : vector<32x9xf32>
    %cst_373 = arith.constant 0.000000e+00 : f32
    %920 = vector.broadcast %cst_373 : f32 to vector<32x32xf32>
    %921 = arith.select %21, %904, %920 : vector<32x32xi1>, vector<32x32xf32>
    %cst_374 = arith.constant dense<0.000000e+00> : vector<32xf32>
    %922 = vector.multi_reduction <add>, %921, %cst_374 [1] : vector<32x32xf32> to vector<32xf32>
    %923 = vector.shape_cast %922 : vector<32xf32> to vector<32x1xf32>
    %c1_i32_375 = arith.constant 1 : i32
    %924 = vector.broadcast %c1_i32_375 : i32 to vector<32x9xi32>
    %925 = arith.cmpi eq, %64, %924 : vector<32x9xi32>
    %cst_376 = arith.constant 0.000000e+00 : f32
    %926 = vector.shape_cast %923 : vector<32x1xf32> to vector<32x1xf32>
    %927 = vector.broadcast %926 : vector<32x1xf32> to vector<32x9xf32>
    %928 = vector.broadcast %cst_376 : f32 to vector<32x9xf32>
    %929 = arith.select %925, %927, %928 : vector<32x9xi1>, vector<32x9xf32>
    %930 = arith.addf %919, %929 : vector<32x9xf32>
    %cst_377 = arith.constant 0.000000e+00 : f32
    %931 = vector.broadcast %cst_377 : f32 to vector<32x32xf32>
    %932 = arith.select %24, %904, %931 : vector<32x32xi1>, vector<32x32xf32>
    %cst_378 = arith.constant dense<0.000000e+00> : vector<32xf32>
    %933 = vector.multi_reduction <add>, %932, %cst_378 [1] : vector<32x32xf32> to vector<32xf32>
    %934 = vector.shape_cast %933 : vector<32xf32> to vector<32x1xf32>
    %c2_i32_379 = arith.constant 2 : i32
    %935 = vector.broadcast %c2_i32_379 : i32 to vector<32x9xi32>
    %936 = arith.cmpi eq, %64, %935 : vector<32x9xi32>
    %cst_380 = arith.constant 0.000000e+00 : f32
    %937 = vector.shape_cast %934 : vector<32x1xf32> to vector<32x1xf32>
    %938 = vector.broadcast %937 : vector<32x1xf32> to vector<32x9xf32>
    %939 = vector.broadcast %cst_380 : f32 to vector<32x9xf32>
    %940 = arith.select %936, %938, %939 : vector<32x9xi1>, vector<32x9xf32>
    %941 = arith.addf %930, %940 : vector<32x9xf32>
    %cst_381 = arith.constant 0.000000e+00 : f32
    %942 = vector.broadcast %cst_381 : f32 to vector<32x32xf32>
    %943 = arith.select %27, %904, %942 : vector<32x32xi1>, vector<32x32xf32>
    %cst_382 = arith.constant dense<0.000000e+00> : vector<32xf32>
    %944 = vector.multi_reduction <add>, %943, %cst_382 [1] : vector<32x32xf32> to vector<32xf32>
    %945 = vector.shape_cast %944 : vector<32xf32> to vector<32x1xf32>
    %c3_i32_383 = arith.constant 3 : i32
    %946 = vector.broadcast %c3_i32_383 : i32 to vector<32x9xi32>
    %947 = arith.cmpi eq, %64, %946 : vector<32x9xi32>
    %cst_384 = arith.constant 0.000000e+00 : f32
    %948 = vector.shape_cast %945 : vector<32x1xf32> to vector<32x1xf32>
    %949 = vector.broadcast %948 : vector<32x1xf32> to vector<32x9xf32>
    %950 = vector.broadcast %cst_384 : f32 to vector<32x9xf32>
    %951 = arith.select %947, %949, %950 : vector<32x9xi1>, vector<32x9xf32>
    %952 = arith.addf %941, %951 : vector<32x9xf32>
    %cst_385 = arith.constant 0.000000e+00 : f32
    %953 = vector.broadcast %cst_385 : f32 to vector<32x32xf32>
    %954 = arith.select %30, %904, %953 : vector<32x32xi1>, vector<32x32xf32>
    %cst_386 = arith.constant dense<0.000000e+00> : vector<32xf32>
    %955 = vector.multi_reduction <add>, %954, %cst_386 [1] : vector<32x32xf32> to vector<32xf32>
    %956 = vector.shape_cast %955 : vector<32xf32> to vector<32x1xf32>
    %c4_i32_387 = arith.constant 4 : i32
    %957 = vector.broadcast %c4_i32_387 : i32 to vector<32x9xi32>
    %958 = arith.cmpi eq, %64, %957 : vector<32x9xi32>
    %cst_388 = arith.constant 0.000000e+00 : f32
    %959 = vector.shape_cast %956 : vector<32x1xf32> to vector<32x1xf32>
    %960 = vector.broadcast %959 : vector<32x1xf32> to vector<32x9xf32>
    %961 = vector.broadcast %cst_388 : f32 to vector<32x9xf32>
    %962 = arith.select %958, %960, %961 : vector<32x9xi1>, vector<32x9xf32>
    %963 = arith.addf %952, %962 : vector<32x9xf32>
    %cst_389 = arith.constant 0.000000e+00 : f32
    %964 = vector.broadcast %cst_389 : f32 to vector<32x32xf32>
    %965 = arith.select %33, %904, %964 : vector<32x32xi1>, vector<32x32xf32>
    %cst_390 = arith.constant dense<0.000000e+00> : vector<32xf32>
    %966 = vector.multi_reduction <add>, %965, %cst_390 [1] : vector<32x32xf32> to vector<32xf32>
    %967 = vector.shape_cast %966 : vector<32xf32> to vector<32x1xf32>
    %c5_i32_391 = arith.constant 5 : i32
    %968 = vector.broadcast %c5_i32_391 : i32 to vector<32x9xi32>
    %969 = arith.cmpi eq, %64, %968 : vector<32x9xi32>
    %cst_392 = arith.constant 0.000000e+00 : f32
    %970 = vector.shape_cast %967 : vector<32x1xf32> to vector<32x1xf32>
    %971 = vector.broadcast %970 : vector<32x1xf32> to vector<32x9xf32>
    %972 = vector.broadcast %cst_392 : f32 to vector<32x9xf32>
    %973 = arith.select %969, %971, %972 : vector<32x9xi1>, vector<32x9xf32>
    %974 = arith.addf %963, %973 : vector<32x9xf32>
    %cst_393 = arith.constant 0.000000e+00 : f32
    %975 = vector.broadcast %cst_393 : f32 to vector<32x32xf32>
    %976 = arith.select %36, %904, %975 : vector<32x32xi1>, vector<32x32xf32>
    %cst_394 = arith.constant dense<0.000000e+00> : vector<32xf32>
    %977 = vector.multi_reduction <add>, %976, %cst_394 [1] : vector<32x32xf32> to vector<32xf32>
    %978 = vector.shape_cast %977 : vector<32xf32> to vector<32x1xf32>
    %c6_i32_395 = arith.constant 6 : i32
    %979 = vector.broadcast %c6_i32_395 : i32 to vector<32x9xi32>
    %980 = arith.cmpi eq, %64, %979 : vector<32x9xi32>
    %cst_396 = arith.constant 0.000000e+00 : f32
    %981 = vector.shape_cast %978 : vector<32x1xf32> to vector<32x1xf32>
    %982 = vector.broadcast %981 : vector<32x1xf32> to vector<32x9xf32>
    %983 = vector.broadcast %cst_396 : f32 to vector<32x9xf32>
    %984 = arith.select %980, %982, %983 : vector<32x9xi1>, vector<32x9xf32>
    %985 = arith.addf %974, %984 : vector<32x9xf32>
    %cst_397 = arith.constant 0.000000e+00 : f32
    %986 = vector.broadcast %cst_397 : f32 to vector<32x32xf32>
    %987 = arith.select %39, %904, %986 : vector<32x32xi1>, vector<32x32xf32>
    %cst_398 = arith.constant dense<0.000000e+00> : vector<32xf32>
    %988 = vector.multi_reduction <add>, %987, %cst_398 [1] : vector<32x32xf32> to vector<32xf32>
    %989 = vector.shape_cast %988 : vector<32xf32> to vector<32x1xf32>
    %c7_i32_399 = arith.constant 7 : i32
    %990 = vector.broadcast %c7_i32_399 : i32 to vector<32x9xi32>
    %991 = arith.cmpi eq, %64, %990 : vector<32x9xi32>
    %cst_400 = arith.constant 0.000000e+00 : f32
    %992 = vector.shape_cast %989 : vector<32x1xf32> to vector<32x1xf32>
    %993 = vector.broadcast %992 : vector<32x1xf32> to vector<32x9xf32>
    %994 = vector.broadcast %cst_400 : f32 to vector<32x9xf32>
    %995 = arith.select %991, %993, %994 : vector<32x9xi1>, vector<32x9xf32>
    %996 = arith.addf %985, %995 : vector<32x9xf32>
    %cst_401 = arith.constant 0.000000e+00 : f32
    %997 = vector.broadcast %cst_401 : f32 to vector<32x32xf32>
    %998 = arith.select %42, %904, %997 : vector<32x32xi1>, vector<32x32xf32>
    %cst_402 = arith.constant dense<0.000000e+00> : vector<32xf32>
    %999 = vector.multi_reduction <add>, %998, %cst_402 [1] : vector<32x32xf32> to vector<32xf32>
    %1000 = vector.shape_cast %999 : vector<32xf32> to vector<32x1xf32>
    %c8_i32_403 = arith.constant 8 : i32
    %1001 = vector.broadcast %c8_i32_403 : i32 to vector<32x9xi32>
    %1002 = arith.cmpi eq, %64, %1001 : vector<32x9xi32>
    %cst_404 = arith.constant 0.000000e+00 : f32
    %1003 = vector.shape_cast %1000 : vector<32x1xf32> to vector<32x1xf32>
    %1004 = vector.broadcast %1003 : vector<32x1xf32> to vector<32x9xf32>
    %1005 = vector.broadcast %cst_404 : f32 to vector<32x9xf32>
    %1006 = arith.select %1002, %1004, %1005 : vector<32x9xi1>, vector<32x9xf32>
    %1007 = arith.addf %996, %1006 : vector<32x9xf32>
    %1008 = arith.truncf %1007 : vector<32x9xf32> to vector<32x9xbf16>
    %cst_405 = arith.constant dense<0.000000e+00> : vector<32x32xf32>
    %1009 = tpu.matmul %1008, %602, %cst_405 {dimension_numbers = #tpu.dot_dimension_numbers<[1], [0], [0], [1], [0, 0, 1, 1], [], []>} : vector<32x9xbf16>, vector<9x32xbf16>, vector<32x32xf32> -> vector<32x32xf32>
    %1010 = arith.addf %907, %1009 : vector<32x32xf32>
    %1011 = arith.truncf %1010 : vector<32x32xf32> to vector<32x32xbf16>
    %c3_406 = arith.constant 3 : index
    %c0_407 = arith.constant 0 : index
    %c0_408 = arith.constant 0 : index
    %1012 = vector.load %arg13[%c3_406, %c0_407, %c0_408] : memref<4x32x64xbf16, #tpu.memory_space<vmem>>, vector<1x32x64xbf16>
    %1013 = vector.shape_cast %1012 : vector<1x32x64xbf16> to vector<32x64xbf16>
    %cst_409 = arith.constant dense<0.000000e+00> : vector<32x64xf32>
    %1014 = tpu.matmul %1011, %1013, %cst_409 {dimension_numbers = #tpu.dot_dimension_numbers<[1], [0], [0], [1], [0, 0, 1, 1], [], []>} : vector<32x32xbf16>, vector<32x64xbf16>, vector<32x64xf32> -> vector<32x64xf32>
    %1015 = arith.addf %811, %1014 : vector<32x64xf32>
    %1016 = arith.addf %597, %1015 : vector<32x64xf32>
    %c1_410 = arith.constant 1 : index
    %c0_411 = arith.constant 0 : index
    %c0_412 = arith.constant 0 : index
    %1017 = vector.load %arg15[%c1_410, %c0_411, %c0_412] : memref<2x1x64xf32, #tpu.memory_space<vmem>>, vector<1x1x64xf32>
    %1018 = vector.shape_cast %1017 : vector<1x1x64xf32> to vector<1x64xf32>
    %c1_413 = arith.constant 1 : index
    %c0_414 = arith.constant 0 : index
    %c0_415 = arith.constant 0 : index
    %1019 = vector.load %arg16[%c1_413, %c0_414, %c0_415] : memref<2x1x64xf32, #tpu.memory_space<vmem>>, vector<1x1x64xf32>
    %1020 = vector.shape_cast %1019 : vector<1x1x64xf32> to vector<1x64xf32>
    %cst_416 = arith.constant dense<0.000000e+00> : vector<32xf32>
    %1021 = vector.multi_reduction <add>, %1016, %cst_416 [1] : vector<32x64xf32> to vector<32xf32>
    %1022 = vector.shape_cast %1021 : vector<32xf32> to vector<32x1xf32>
    %cst_417 = arith.constant 6.400000e+01 : f32
    %1023 = vector.broadcast %cst_417 : f32 to vector<32x1xf32>
    %1024 = arith.divf %1022, %1023 : vector<32x1xf32>
    %1025 = vector.broadcast %1024 : vector<32x1xf32> to vector<32x64xf32>
    %1026 = arith.subf %1016, %1025 : vector<32x64xf32>
    %1027 = arith.mulf %1026, %1026 : vector<32x64xf32>
    %cst_418 = arith.constant dense<0.000000e+00> : vector<32xf32>
    %1028 = vector.multi_reduction <add>, %1027, %cst_418 [1] : vector<32x64xf32> to vector<32xf32>
    %1029 = vector.shape_cast %1028 : vector<32xf32> to vector<32x1xf32>
    %cst_419 = arith.constant 6.400000e+01 : f32
    %1030 = vector.broadcast %cst_419 : f32 to vector<32x1xf32>
    %1031 = arith.divf %1029, %1030 : vector<32x1xf32>
    %1032 = vector.broadcast %1024 : vector<32x1xf32> to vector<32x64xf32>
    %1033 = arith.subf %1016, %1032 : vector<32x64xf32>
    %cst_420 = arith.constant 9.99999974E-6 : f32
    %1034 = vector.broadcast %cst_420 : f32 to vector<32x1xf32>
    %1035 = arith.addf %1031, %1034 : vector<32x1xf32>
    %1036 = math.rsqrt %1035 : vector<32x1xf32>
    %1037 = vector.broadcast %1036 : vector<32x1xf32> to vector<32x64xf32>
    %1038 = arith.mulf %1033, %1037 : vector<32x64xf32>
    %1039 = vector.broadcast %1018 : vector<1x64xf32> to vector<32x64xf32>
    %1040 = arith.mulf %1038, %1039 : vector<32x64xf32>
    %1041 = vector.broadcast %1020 : vector<1x64xf32> to vector<32x64xf32>
    %1042 = arith.addf %1040, %1041 : vector<32x64xf32>
    %1043 = vector.broadcast %0 : vector<32x1xf32> to vector<32x64xf32>
    %1044 = arith.mulf %1042, %1043 : vector<32x64xf32>
    %1045 = arith.truncf %1044 : vector<32x64xf32> to vector<32x64xbf16>
    %cst_421 = arith.constant 0.000000e+00 : f32
    %1046 = vector.broadcast %cst_421 : f32 to vector<32x128xf32>
    %c1_422 = arith.constant 1 : index
    %c0_423 = arith.constant 0 : index
    %c0_424 = arith.constant 0 : index
    %1047 = vector.load %arg20[%c1_422, %c0_423, %c0_424] : memref<2x1x128xf32, #tpu.memory_space<vmem>>, vector<1x1x128xf32>
    %1048 = vector.shape_cast %1047 : vector<1x1x128xf32> to vector<1x128xf32>
    %1049 = vector.broadcast %1048 : vector<1x128xf32> to vector<32x128xf32>
    %1050 = arith.addf %1046, %1049 : vector<32x128xf32>
    %cst_425 = arith.constant dense<0.000000e+00> : vector<32x64xf32>
    %1051 = tpu.matmul %49, %1045, %cst_425 {dimension_numbers = #tpu.dot_dimension_numbers<[1], [0], [0], [1], [0, 0, 1, 1], [], []>} : vector<32x32xbf16>, vector<32x64xbf16>, vector<32x64xf32> -> vector<32x64xf32>
    %1052 = arith.truncf %1051 : vector<32x64xf32> to vector<32x64xbf16>
    %c3_426 = arith.constant 3 : index
    %c0_427 = arith.constant 0 : index
    %c0_428 = arith.constant 0 : index
    %1053 = vector.load %arg19[%c3_426, %c0_427, %c0_428] : memref<6x64x128xbf16, #tpu.memory_space<vmem>>, vector<1x64x128xbf16>
    %1054 = vector.shape_cast %1053 : vector<1x64x128xbf16> to vector<64x128xbf16>
    %cst_429 = arith.constant dense<0.000000e+00> : vector<32x128xf32>
    %1055 = tpu.matmul %1052, %1054, %cst_429 {dimension_numbers = #tpu.dot_dimension_numbers<[1], [0], [0], [1], [0, 0, 1, 1], [], []>} : vector<32x64xbf16>, vector<64x128xbf16>, vector<32x128xf32> -> vector<32x128xf32>
    %1056 = arith.addf %1050, %1055 : vector<32x128xf32>
    %cst_430 = arith.constant dense<0.000000e+00> : vector<32x64xf32>
    %1057 = tpu.matmul %56, %1045, %cst_430 {dimension_numbers = #tpu.dot_dimension_numbers<[1], [0], [0], [1], [0, 0, 1, 1], [], []>} : vector<32x32xbf16>, vector<32x64xbf16>, vector<32x64xf32> -> vector<32x64xf32>
    %1058 = arith.truncf %1057 : vector<32x64xf32> to vector<32x64xbf16>
    %c4 = arith.constant 4 : index
    %c0_431 = arith.constant 0 : index
    %c0_432 = arith.constant 0 : index
    %1059 = vector.load %arg19[%c4, %c0_431, %c0_432] : memref<6x64x128xbf16, #tpu.memory_space<vmem>>, vector<1x64x128xbf16>
    %1060 = vector.shape_cast %1059 : vector<1x64x128xbf16> to vector<64x128xbf16>
    %cst_433 = arith.constant dense<0.000000e+00> : vector<32x128xf32>
    %1061 = tpu.matmul %1058, %1060, %cst_433 {dimension_numbers = #tpu.dot_dimension_numbers<[1], [0], [0], [1], [0, 0, 1, 1], [], []>} : vector<32x64xbf16>, vector<64x128xbf16>, vector<32x128xf32> -> vector<32x128xf32>
    %1062 = arith.addf %1056, %1061 : vector<32x128xf32>
    %cst_434 = arith.constant dense<0.000000e+00> : vector<32x64xf32>
    %1063 = tpu.matmul %63, %1045, %cst_434 {dimension_numbers = #tpu.dot_dimension_numbers<[1], [0], [0], [1], [0, 0, 1, 1], [], []>} : vector<32x32xbf16>, vector<32x64xbf16>, vector<32x64xf32> -> vector<32x64xf32>
    %1064 = arith.truncf %1063 : vector<32x64xf32> to vector<32x64xbf16>
    %c5 = arith.constant 5 : index
    %c0_435 = arith.constant 0 : index
    %c0_436 = arith.constant 0 : index
    %1065 = vector.load %arg19[%c5, %c0_435, %c0_436] : memref<6x64x128xbf16, #tpu.memory_space<vmem>>, vector<1x64x128xbf16>
    %1066 = vector.shape_cast %1065 : vector<1x64x128xbf16> to vector<64x128xbf16>
    %cst_437 = arith.constant dense<0.000000e+00> : vector<32x128xf32>
    %1067 = tpu.matmul %1064, %1066, %cst_437 {dimension_numbers = #tpu.dot_dimension_numbers<[1], [0], [0], [1], [0, 0, 1, 1], [], []>} : vector<32x64xbf16>, vector<64x128xbf16>, vector<32x128xf32> -> vector<32x128xf32>
    %1068 = arith.addf %1062, %1067 : vector<32x128xf32>
    %cst_438 = arith.constant 0.000000e+00 : f32
    %1069 = vector.broadcast %cst_438 : f32 to vector<32x128xf32>
    %1070 = arith.maximumf %1068, %1069 : vector<32x128xf32>
    %1071 = vector.broadcast %0 : vector<32x1xf32> to vector<32x128xf32>
    %1072 = arith.mulf %1070, %1071 : vector<32x128xf32>
    %1073 = arith.truncf %1072 : vector<32x128xf32> to vector<32x128xbf16>
    %cst_439 = arith.constant 0.000000e+00 : f32
    %1074 = vector.broadcast %cst_439 : f32 to vector<32x64xf32>
    %c1_440 = arith.constant 1 : index
    %c0_441 = arith.constant 0 : index
    %c0_442 = arith.constant 0 : index
    %1075 = vector.load %arg22[%c1_440, %c0_441, %c0_442] : memref<2x1x64xf32, #tpu.memory_space<vmem>>, vector<1x1x64xf32>
    %1076 = vector.shape_cast %1075 : vector<1x1x64xf32> to vector<1x64xf32>
    %1077 = vector.broadcast %1076 : vector<1x64xf32> to vector<32x64xf32>
    %1078 = arith.addf %1074, %1077 : vector<32x64xf32>
    %cst_443 = arith.constant dense<0.000000e+00> : vector<32x128xf32>
    %1079 = tpu.matmul %49, %1073, %cst_443 {dimension_numbers = #tpu.dot_dimension_numbers<[1], [0], [0], [1], [0, 0, 1, 1], [], []>} : vector<32x32xbf16>, vector<32x128xbf16>, vector<32x128xf32> -> vector<32x128xf32>
    %1080 = arith.truncf %1079 : vector<32x128xf32> to vector<32x128xbf16>
    %c3_444 = arith.constant 3 : index
    %c0_445 = arith.constant 0 : index
    %c0_446 = arith.constant 0 : index
    %1081 = vector.load %arg21[%c3_444, %c0_445, %c0_446] : memref<6x128x64xbf16, #tpu.memory_space<vmem>>, vector<1x128x64xbf16>
    %1082 = vector.shape_cast %1081 : vector<1x128x64xbf16> to vector<128x64xbf16>
    %cst_447 = arith.constant dense<0.000000e+00> : vector<32x64xf32>
    %1083 = tpu.matmul %1080, %1082, %cst_447 {dimension_numbers = #tpu.dot_dimension_numbers<[1], [0], [0], [1], [0, 0, 1, 1], [], []>} : vector<32x128xbf16>, vector<128x64xbf16>, vector<32x64xf32> -> vector<32x64xf32>
    %1084 = arith.addf %1078, %1083 : vector<32x64xf32>
    %cst_448 = arith.constant dense<0.000000e+00> : vector<32x128xf32>
    %1085 = tpu.matmul %56, %1073, %cst_448 {dimension_numbers = #tpu.dot_dimension_numbers<[1], [0], [0], [1], [0, 0, 1, 1], [], []>} : vector<32x32xbf16>, vector<32x128xbf16>, vector<32x128xf32> -> vector<32x128xf32>
    %1086 = arith.truncf %1085 : vector<32x128xf32> to vector<32x128xbf16>
    %c4_449 = arith.constant 4 : index
    %c0_450 = arith.constant 0 : index
    %c0_451 = arith.constant 0 : index
    %1087 = vector.load %arg21[%c4_449, %c0_450, %c0_451] : memref<6x128x64xbf16, #tpu.memory_space<vmem>>, vector<1x128x64xbf16>
    %1088 = vector.shape_cast %1087 : vector<1x128x64xbf16> to vector<128x64xbf16>
    %cst_452 = arith.constant dense<0.000000e+00> : vector<32x64xf32>
    %1089 = tpu.matmul %1086, %1088, %cst_452 {dimension_numbers = #tpu.dot_dimension_numbers<[1], [0], [0], [1], [0, 0, 1, 1], [], []>} : vector<32x128xbf16>, vector<128x64xbf16>, vector<32x64xf32> -> vector<32x64xf32>
    %1090 = arith.addf %1084, %1089 : vector<32x64xf32>
    %cst_453 = arith.constant dense<0.000000e+00> : vector<32x128xf32>
    %1091 = tpu.matmul %63, %1073, %cst_453 {dimension_numbers = #tpu.dot_dimension_numbers<[1], [0], [0], [1], [0, 0, 1, 1], [], []>} : vector<32x32xbf16>, vector<32x128xbf16>, vector<32x128xf32> -> vector<32x128xf32>
    %1092 = arith.truncf %1091 : vector<32x128xf32> to vector<32x128xbf16>
    %c5_454 = arith.constant 5 : index
    %c0_455 = arith.constant 0 : index
    %c0_456 = arith.constant 0 : index
    %1093 = vector.load %arg21[%c5_454, %c0_455, %c0_456] : memref<6x128x64xbf16, #tpu.memory_space<vmem>>, vector<1x128x64xbf16>
    %1094 = vector.shape_cast %1093 : vector<1x128x64xbf16> to vector<128x64xbf16>
    %cst_457 = arith.constant dense<0.000000e+00> : vector<32x64xf32>
    %1095 = tpu.matmul %1092, %1094, %cst_457 {dimension_numbers = #tpu.dot_dimension_numbers<[1], [0], [0], [1], [0, 0, 1, 1], [], []>} : vector<32x128xbf16>, vector<128x64xbf16>, vector<32x64xf32> -> vector<32x64xf32>
    %1096 = arith.addf %1090, %1095 : vector<32x64xf32>
    %1097 = vector.broadcast %0 : vector<32x1xf32> to vector<32x64xf32>
    %1098 = arith.mulf %1096, %1097 : vector<32x64xf32>
    %1099 = arith.addf %1042, %1098 : vector<32x64xf32>
    %c1_458 = arith.constant 1 : index
    %c0_459 = arith.constant 0 : index
    %c0_460 = arith.constant 0 : index
    %1100 = vector.load %arg23[%c1_458, %c0_459, %c0_460] : memref<2x1x64xf32, #tpu.memory_space<vmem>>, vector<1x1x64xf32>
    %1101 = vector.shape_cast %1100 : vector<1x1x64xf32> to vector<1x64xf32>
    %c1_461 = arith.constant 1 : index
    %c0_462 = arith.constant 0 : index
    %c0_463 = arith.constant 0 : index
    %1102 = vector.load %arg24[%c1_461, %c0_462, %c0_463] : memref<2x1x64xf32, #tpu.memory_space<vmem>>, vector<1x1x64xf32>
    %1103 = vector.shape_cast %1102 : vector<1x1x64xf32> to vector<1x64xf32>
    %cst_464 = arith.constant dense<0.000000e+00> : vector<32xf32>
    %1104 = vector.multi_reduction <add>, %1099, %cst_464 [1] : vector<32x64xf32> to vector<32xf32>
    %1105 = vector.shape_cast %1104 : vector<32xf32> to vector<32x1xf32>
    %cst_465 = arith.constant 6.400000e+01 : f32
    %1106 = vector.broadcast %cst_465 : f32 to vector<32x1xf32>
    %1107 = arith.divf %1105, %1106 : vector<32x1xf32>
    %1108 = vector.broadcast %1107 : vector<32x1xf32> to vector<32x64xf32>
    %1109 = arith.subf %1099, %1108 : vector<32x64xf32>
    %1110 = arith.mulf %1109, %1109 : vector<32x64xf32>
    %cst_466 = arith.constant dense<0.000000e+00> : vector<32xf32>
    %1111 = vector.multi_reduction <add>, %1110, %cst_466 [1] : vector<32x64xf32> to vector<32xf32>
    %1112 = vector.shape_cast %1111 : vector<32xf32> to vector<32x1xf32>
    %cst_467 = arith.constant 6.400000e+01 : f32
    %1113 = vector.broadcast %cst_467 : f32 to vector<32x1xf32>
    %1114 = arith.divf %1112, %1113 : vector<32x1xf32>
    %1115 = vector.broadcast %1107 : vector<32x1xf32> to vector<32x64xf32>
    %1116 = arith.subf %1099, %1115 : vector<32x64xf32>
    %cst_468 = arith.constant 9.99999974E-6 : f32
    %1117 = vector.broadcast %cst_468 : f32 to vector<32x1xf32>
    %1118 = arith.addf %1114, %1117 : vector<32x1xf32>
    %1119 = math.rsqrt %1118 : vector<32x1xf32>
    %1120 = vector.broadcast %1119 : vector<32x1xf32> to vector<32x64xf32>
    %1121 = arith.mulf %1116, %1120 : vector<32x64xf32>
    %1122 = vector.broadcast %1101 : vector<1x64xf32> to vector<32x64xf32>
    %1123 = arith.mulf %1121, %1122 : vector<32x64xf32>
    %1124 = vector.broadcast %1103 : vector<1x64xf32> to vector<32x64xf32>
    %1125 = arith.addf %1123, %1124 : vector<32x64xf32>
    %1126 = vector.broadcast %0 : vector<32x1xf32> to vector<32x64xf32>
    %1127 = arith.mulf %1125, %1126 : vector<32x64xf32>
    %1128 = arith.truncf %1127 : vector<32x64xf32> to vector<32x64xbf16>
    %c0_469 = arith.constant 0 : index
    %c0_470 = arith.constant 0 : index
    %1129 = vector.load %arg25[%c0_469, %c0_470] : memref<64x64xbf16, #tpu.memory_space<vmem>>, vector<64x64xbf16>
    %cst_471 = arith.constant dense<0.000000e+00> : vector<32x64xf32>
    %1130 = tpu.matmul %1128, %1129, %cst_471 {dimension_numbers = #tpu.dot_dimension_numbers<[1], [0], [0], [1], [0, 0, 1, 1], [], []>} : vector<32x64xbf16>, vector<64x64xbf16>, vector<32x64xf32> -> vector<32x64xf32>
    %c0_472 = arith.constant 0 : index
    %c0_473 = arith.constant 0 : index
    %1131 = vector.load %arg26[%c0_472, %c0_473] : memref<1x64xf32, #tpu.memory_space<vmem>>, vector<1x64xf32>
    %1132 = vector.broadcast %1131 : vector<1x64xf32> to vector<32x64xf32>
    %1133 = arith.addf %1130, %1132 : vector<32x64xf32>
    %1134 = vector.broadcast %0 : vector<32x1xf32> to vector<32x64xf32>
    %1135 = arith.mulf %1133, %1134 : vector<32x64xf32>
    %1136 = vector.extract_strided_slice %1135 {offsets = [0, 0], sizes = [32, 32], strides = [1, 1]} : vector<32x64xf32> to vector<32x32xf32>
    %1137 = vector.extract_strided_slice %1135 {offsets = [0, 32], sizes = [32, 32], strides = [1, 1]} : vector<32x64xf32> to vector<32x32xf32>
    %c0_474 = arith.constant 0 : index
    %c0_475 = arith.constant 0 : index
    %1138 = vector.load %arg6[%c0_474, %c0_475] : memref<32x32xf32, #tpu.memory_space<vmem>>, vector<32x32xf32>
    %1139 = math.exp %1137 : vector<32x32xf32>
    %1140 = arith.mulf %1138, %1139 : vector<32x32xf32>
    %1141 = arith.addf %1136, %1140 : vector<32x32xf32>
    %1142 = vector.broadcast %0 : vector<32x1xf32> to vector<32x32xf32>
    %1143 = arith.mulf %1141, %1142 : vector<32x32xf32>
    %cst_476 = arith.constant 0.000000e+00 : f32
    %1144 = vector.broadcast %cst_476 : f32 to vector<32x32xf32>
    %1145 = tpu.concatenate %1135, %1143, %1144 in 1 : vector<32x64xf32>, vector<32x32xf32>, vector<32x32xf32> -> vector<32x128xf32>
    %c0_477 = arith.constant 0 : index
    %c0_478 = arith.constant 0 : index
    %1146 = vector.load %arg27[%c0_477, %c0_478] : memref<32x128xf32, #tpu.memory_space<vmem>>, vector<32x128xf32>
    tpu.vector_store %arg27[%c0_477, %c0_478], %1145 {strides = array<i32>} : memref<32x128xf32, #tpu.memory_space<vmem>>, vector<32x128xf32>,
    return
  }
}

</mosaic_0001>

<llo_original>
// kernel: text_encoder_forward.1
$region0: #{text_encoder_forward.1}
  #allocation0 [shape = 'u32[]', space=smem, size = 0x4, offset = 0x4, fixed_abs, tag = 'smem constant byte address 0x4 - core index']
  #allocation1 [shape = 'u32[144,128]{1,0:T(1,128)}', space=vmem, size = 0x12000, scoped, tag = 'internal scratch']
  %s0 = inlined_call_operand.vmem [shape: f32[32,64], index: 0, kind: input, shape index: {}]
  %s1 = inlined_call_operand.vmem [shape: f32[32,64], index: 1, kind: input, shape index: {}]
  %s2 = inlined_call_operand.vmem [shape: f32[32,1], index: 2, kind: input, shape index: {}]
  %s3 = inlined_call_operand.vmem [shape: f32[1,32], index: 3, kind: input, shape index: {}]
  %s4 = inlined_call_operand.vmem [shape: s32[32,1], index: 4, kind: input, shape index: {}]
  %s5 = inlined_call_operand.vmem [shape: s32[1,32], index: 5, kind: input, shape index: {}]
  %s6 = inlined_call_operand.vmem [shape: f32[32,32], index: 6, kind: input, shape index: {}]
  %s7 = inlined_call_operand.vmem [shape: bf16[4,64,32], index: 7, kind: input, shape index: {}]
  %s8 = inlined_call_operand.vmem [shape: f32[4,1,32], index: 8, kind: input, shape index: {}]
  %s9 = inlined_call_operand.vmem [shape: bf16[4,64,32], index: 9, kind: input, shape index: {}]
  %s10 = inlined_call_operand.vmem [shape: f32[4,1,32], index: 10, kind: input, shape index: {}]
  %s11 = inlined_call_operand.vmem [shape: bf16[4,64,32], index: 11, kind: input, shape index: {}]
  %s12 = inlined_call_operand.vmem [shape: f32[4,1,32], index: 12, kind: input, shape index: {}]
  %s13 = inlined_call_operand.vmem [shape: bf16[4,32,64], index: 13, kind: input, shape index: {}]
  %s14 = inlined_call_operand.vmem [shape: f32[2,1,64], index: 14, kind: input, shape index: {}]
  %s15 = inlined_call_operand.vmem [shape: f32[2,1,64], index: 15, kind: input, shape index: {}]
  %s16 = inlined_call_operand.vmem [shape: f32[2,1,64], index: 16, kind: input, shape index: {}]
  %s17 = inlined_call_operand.vmem [shape: bf16[2,9,32], index: 17, kind: input, shape index: {}]
  %s18 = inlined_call_operand.vmem [shape: bf16[2,9,32], index: 18, kind: input, shape index: {}]
  %s19 = inlined_call_operand.vmem [shape: bf16[6,64,128], index: 19, kind: input, shape index: {}]
  %s20 = inlined_call_operand.vmem [shape: f32[2,1,128], index: 20, kind: input, shape index: {}]
  %s21 = inlined_call_operand.vmem [shape: bf16[6,128,64], index: 21, kind: input, shape index: {}]
  %s22 = inlined_call_operand.vmem [shape: f32[2,1,64], index: 22, kind: input, shape index: {}]
  %s23 = inlined_call_operand.vmem [shape: f32[2,1,64], index: 23, kind: input, shape index: {}]
  %s24 = inlined_call_operand.vmem [shape: f32[2,1,64], index: 24, kind: input, shape index: {}]
  %s25 = inlined_call_operand.vmem [shape: bf16[64,64], index: 25, kind: input, shape index: {}]
  %s26 = inlined_call_operand.vmem [shape: f32[1,64], index: 26, kind: input, shape index: {}]
  %s27 = inlined_call_operand.vmem [shape: f32[32,128], index: 27, kind: output, shape index: {}]
  %s28 = sld [smem:[#allocation0]]
  $region118: #{text_encoder_forward.1} parent=0
    _
  %s30 = ssub.s32 1, %s28
  %s31 = scalar_select 0, %s30, %s28
  // Predicated region
  $region2: #{text_encoder_forward.1} parent=0 // pred_check
    _
  $region3: #{text_encoder_forward.1} parent=0 // pred_check_branch
    %33 = sbr.rel (0) target = $region5
  $region4: #{text_encoder_forward.1} parent=0 // pred_region
    _
  $region5: #{text_encoder_forward.1} parent=0 // pred_fallthru
    _
  // Predicated region
  $region6: #{text_encoder_forward.1} parent=0 // pred_check
    _
  $region7: #{text_encoder_forward.1} parent=0 // pred_check_branch
    %35 = sbr.rel (0) target = $region9
  $region8: #{text_encoder_forward.1} parent=0 // pred_region
    _
  $region9: #{text_encoder_forward.1} parent=0 // pred_fallthru
    _
  // Predicated region
  $region10: #{text_encoder_forward.1} parent=0 // pred_check
    _
  $region11: #{text_encoder_forward.1} parent=0 // pred_check_branch
    %37 = sbr.rel (0) target = $region13
  $region12: #{text_encoder_forward.1} parent=0 // pred_region
    _
  $region13: #{text_encoder_forward.1} parent=0 // pred_fallthru
    _
  // Predicated region
  $region14: #{text_encoder_forward.1} parent=0 // pred_check
    _
  $region15: #{text_encoder_forward.1} parent=0 // pred_check_branch
    %39 = sbr.rel (0) target = $region17
  $region16: #{text_encoder_forward.1} parent=0 // pred_region
    _
  $region17: #{text_encoder_forward.1} parent=0 // pred_fallthru
    _
  // Predicated region
  $region18: #{text_encoder_forward.1} parent=0 // pred_check
    _
  $region19: #{text_encoder_forward.1} parent=0 // pred_check_branch
    %41 = sbr.rel (0) target = $region21
  $region20: #{text_encoder_forward.1} parent=0 // pred_region
    _
  $region21: #{text_encoder_forward.1} parent=0 // pred_fallthru
    _
  // Predicated region
  $region22: #{text_encoder_forward.1} parent=0 // pred_check
    _
  $region23: #{text_encoder_forward.1} parent=0 // pred_check_branch
    %43 = sbr.rel (0) target = $region25
  $region24: #{text_encoder_forward.1} parent=0 // pred_region
    _
  $region25: #{text_encoder_forward.1} parent=0 // pred_fallthru
    _
  // Predicated region
  $region26: #{text_encoder_forward.1} parent=0 // pred_check
    _
  $region27: #{text_encoder_forward.1} parent=0 // pred_check_branch
    %45 = sbr.rel (0) target = $region29
  $region28: #{text_encoder_forward.1} parent=0 // pred_region
    _
  $region29: #{text_encoder_forward.1} parent=0 // pred_fallthru
    _
  // Predicated region
  $region30: #{text_encoder_forward.1} parent=0 // pred_check
    _
  $region31: #{text_encoder_forward.1} parent=0 // pred_check_branch
    %47 = sbr.rel (0) target = $region33
  $region32: #{text_encoder_forward.1} parent=0 // pred_region
    _
  $region33: #{text_encoder_forward.1} parent=0 // pred_fallthru
    _
  // Predicated region
  $region34: #{text_encoder_forward.1} parent=0 // pred_check
    _
  $region35: #{text_encoder_forward.1} parent=0 // pred_check_branch
    %49 = sbr.rel (0) target = $region37
  $region36: #{text_encoder_forward.1} parent=0 // pred_region
    _
  $region37: #{text_encoder_forward.1} parent=0 // pred_fallthru
    _
  // Predicated region
  $region38: #{text_encoder_forward.1} parent=0 // pred_check
    _
  $region39: #{text_encoder_forward.1} parent=0 // pred_check_branch
    %51 = sbr.rel (0) target = $region41
  $region40: #{text_encoder_forward.1} parent=0 // pred_region
    _
  $region41: #{text_encoder_forward.1} parent=0 // pred_fallthru
    _
  // Predicated region
  $region42: #{text_encoder_forward.1} parent=0 // pred_check
    _
  $region43: #{text_encoder_forward.1} parent=0 // pred_check_branch
    %53 = sbr.rel (0) target = $region45
  $region44: #{text_encoder_forward.1} parent=0 // pred_region
    _
  $region45: #{text_encoder_forward.1} parent=0 // pred_fallthru
    _
  // Predicated region
  $region46: #{text_encoder_forward.1} parent=0 // pred_check
    _
  $region47: #{text_encoder_forward.1} parent=0 // pred_check_branch
    %55 = sbr.rel (0) target = $region49
  $region48: #{text_encoder_forward.1} parent=0 // pred_region
    _
  $region49: #{text_encoder_forward.1} parent=0 // pred_fallthru
    _
  // Predicated region
  $region50: #{text_encoder_forward.1} parent=0 // pred_check
    _
  $region51: #{text_encoder_forward.1} parent=0 // pred_check_branch
    %57 = sbr.rel (0) target = $region53
  $region52: #{text_encoder_forward.1} parent=0 // pred_region
    _
  $region53: #{text_encoder_forward.1} parent=0 // pred_fallthru
    _
  // Predicated region
  $region54: #{text_encoder_forward.1} parent=0 // pred_check
    _
  $region55: #{text_encoder_forward.1} parent=0 // pred_check_branch
    %59 = sbr.rel (0) target = $region57
  $region56: #{text_encoder_forward.1} parent=0 // pred_region
    _
  $region57: #{text_encoder_forward.1} parent=0 // pred_fallthru
    _
  // Predicated region
  $region58: #{text_encoder_forward.1} parent=0 // pred_check
    _
  $region59: #{text_encoder_forward.1} parent=0 // pred_check_branch
    %61 = sbr.rel (0) target = $region61
  $region60: #{text_encoder_forward.1} parent=0 // pred_region
    _
  $region61: #{text_encoder_forward.1} parent=0 // pred_fallthru
    _
  // Predicated region
  $region62: #{text_encoder_forward.1} parent=0 // pred_check
    _
  $region63: #{text_encoder_forward.1} parent=0 // pred_check_branch
    %63 = sbr.rel (0) target = $region65
  $region64: #{text_encoder_forward.1} parent=0 // pred_region
    _
  $region65: #{text_encoder_forward.1} parent=0 // pred_fallthru
    _
  // Predicated region
  $region66: #{text_encoder_forward.1} parent=0 // pred_check
    _
  $region67: #{text_encoder_forward.1} parent=0 // pred_check_branch
    %65 = sbr.rel (0) target = $region69
  $region68: #{text_encoder_forward.1} parent=0 // pred_region
    _
  $region69: #{text_encoder_forward.1} parent=0 // pred_fallthru
    _
  // Predicated region
  $region70: #{text_encoder_forward.1} parent=0 // pred_check
    _
  $region71: #{text_encoder_forward.1} parent=0 // pred_check_branch
    %67 = sbr.rel (0) target = $region73
  $region72: #{text_encoder_forward.1} parent=0 // pred_region
    _
  $region73: #{text_encoder_forward.1} parent=0 // pred_fallthru
    _
  // Predicated region
  $region74: #{text_encoder_forward.1} parent=0 // pred_check
    _
  $region75: #{text_encoder_forward.1} parent=0 // pred_check_branch
    %69 = sbr.rel (0) target = $region77
  $region76: #{text_encoder_forward.1} parent=0 // pred_region
    _
  $region77: #{text_encoder_forward.1} parent=0 // pred_fallthru
    _
  // Predicated region
  $region78: #{text_encoder_forward.1} parent=0 // pred_check
    _
  $region79: #{text_encoder_forward.1} parent=0 // pred_check_branch
    %71 = sbr.rel (0) target = $region81
  $region80: #{text_encoder_forward.1} parent=0 // pred_region
    _
  $region81: #{text_encoder_forward.1} parent=0 // pred_fallthru
    _
  // Predicated region
  $region82: #{text_encoder_forward.1} parent=0 // pred_check
    _
  $region83: #{text_encoder_forward.1} parent=0 // pred_check_branch
    %73 = sbr.rel (0) target = $region85
  $region84: #{text_encoder_forward.1} parent=0 // pred_region
    _
  $region85: #{text_encoder_forward.1} parent=0 // pred_fallthru
    _
  // Predicated region
  $region86: #{text_encoder_forward.1} parent=0 // pred_check
    _
  $region87: #{text_encoder_forward.1} parent=0 // pred_check_branch
    %75 = sbr.rel (0) target = $region89
  $region88: #{text_encoder_forward.1} parent=0 // pred_region
    _
  $region89: #{text_encoder_forward.1} parent=0 // pred_fallthru
    _
  // Predicated region
  $region90: #{text_encoder_forward.1} parent=0 // pred_check
    _
  $region91: #{text_encoder_forward.1} parent=0 // pred_check_branch
    %77 = sbr.rel (0) target = $region93
  $region92: #{text_encoder_forward.1} parent=0 // pred_region
    _
  $region93: #{text_encoder_forward.1} parent=0 // pred_fallthru
    _
  // Predicated region
  $region94: #{text_encoder_forward.1} parent=0 // pred_check
    _
  $region95: #{text_encoder_forward.1} parent=0 // pred_check_branch
    %79 = sbr.rel (0) target = $region97
  $region96: #{text_encoder_forward.1} parent=0 // pred_region
    _
  $region97: #{text_encoder_forward.1} parent=0 // pred_fallthru
    _
  // Predicated region
  $region98: #{text_encoder_forward.1} parent=0 // pred_check
    _
  $region99: #{text_encoder_forward.1} parent=0 // pred_check_branch
    %81 = sbr.rel (0) target = $region101
  $region100: #{text_encoder_forward.1} parent=0 // pred_region
    _
  $region101: #{text_encoder_forward.1} parent=0 // pred_fallthru
    _
  // Predicated region
  $region102: #{text_encoder_forward.1} parent=0 // pred_check
    _
  $region103: #{text_encoder_forward.1} parent=0 // pred_check_branch
    %83 = sbr.rel (0) target = $region105
  $region104: #{text_encoder_forward.1} parent=0 // pred_region
    _
  $region105: #{text_encoder_forward.1} parent=0 // pred_fallthru
    _
  // Predicated region
  $region106: #{text_encoder_forward.1} parent=0 // pred_check
    _
  $region107: #{text_encoder_forward.1} parent=0 // pred_check_branch
    %85 = sbr.rel (0) target = $region109
  $region108: #{text_encoder_forward.1} parent=0 // pred_region
    _
  $region109: #{text_encoder_forward.1} parent=0 // pred_fallthru
    _
  %v87 = vld [vmem:[%s2] sm:$0xff]
  %v88 = vld [vmem:[%s2 + $0x8] sm:$0xff]
  %v89 = vld [vmem:[%s2 + $0x10] sm:$0xff]
  %v90 = vld [vmem:[%s2 + $0x18] sm:$0xff]
  %v91 = vld [vmem:[%s3] sm:$0x1]
  %v92 = vlaneseq
  %v93 = vshrl.u32 %v92, 7
  %v94 = vadd.s32 %v93, 8
  %v95 = vadd.s32 %v93, 16
  %v96 = vadd.s32 %v93, 24
  %v97 = vlaneseq
  %v98 = vand.u32 %v97, 127
  %v99 = vsub.s32 %v98, %v93
  %v100 = vsub.s32 %v98, %v94
  %v101 = vsub.s32 %v98, %v95
  %v102 = vsub.s32 %v98, %v96
  %v103 = vld [vmem:[%s4] sm:$0xff]
  %v104 = vld [vmem:[%s4 + $0x8] sm:$0xff]
  %v105 = vld [vmem:[%s4 + $0x10] sm:$0xff]
  %v106 = vld [vmem:[%s4 + $0x18] sm:$0xff]
  %v107 = vld [vmem:[%s5] sm:$0x1]
  %108 = vset.pattern.permute.xlu0 0
  %109 = vperm.xlu0 %108, %v103
  %v110 = vpop.permute.xlu0 %109
  %111 = vset.pattern.permute.xlu0 0
  %112 = vperm.xlu0 %111, %v104
  %v113 = vpop.permute.xlu0 %112
  %114 = vset.pattern.permute.xlu0 0
  %115 = vperm.xlu0 %114, %v105
  %v116 = vpop.permute.xlu0 %115
  %117 = vset.pattern.permute.xlu0 0
  %118 = vperm.xlu0 %117, %v106
  %v119 = vpop.permute.xlu0 %118
  %v120 = vlaneseq
  %v121 = vshrl.u32 %v120, 7
  %v122 = vsub.s32 0, %v121
  %v123 = vrot.slane %v107, %v122
  %vm124 = vcmp.eq.s32.totalorder %v110, %v123
  %vm125 = vcmp.eq.s32.totalorder %v113, %v123
  %vm126 = vcmp.eq.s32.totalorder %v116, %v123
  %vm127 = vcmp.eq.s32.totalorder %v119, %v123
  %129 = vset.pattern.permute.xlu0 0
  %130 = vperm.xlu0 %129, %v87
  %v131 = vpop.permute.xlu0 %130
  %134 = vset.pattern.permute.xlu0 0
  %135 = vperm.xlu0 %134, %v88
  %v136 = vpop.permute.xlu0 %135
  %139 = vset.pattern.permute.xlu0 0
  %140 = vperm.xlu0 %139, %v89
  %v141 = vpop.permute.xlu0 %140
  %144 = vset.pattern.permute.xlu0 0
  %145 = vperm.xlu0 %144, %v90
  %v146 = vpop.permute.xlu0 %145
  %v149 = vlaneseq
  %v150 = vshrl.u32 %v149, 7
  %v151 = vsub.s32 0, %v150
  %v152 = vrot.slane %v91, %v151
  %v154 = vmul.f32 %v131, %v152
  %v155 = vmul.f32 %v136, %v152
  %v156 = vmul.f32 %v141, %v152
  %v157 = vmul.f32 %v146, %v152
  %vm158 = vcmp.gt.f32.partialorder %v154, 0.0
  %vm159 = vcmp.gt.f32.partialorder %v155, 0.0
  %vm160 = vcmp.gt.f32.partialorder %v156, 0.0
  %vm161 = vcmp.gt.f32.partialorder %v157, 0.0
  %vm162 = vmand %vm124, %vm158
  %vm163 = vmand %vm125, %vm159
  %vm164 = vmand %vm126, %vm160
  %vm165 = vmand %vm127, %vm161
  %vm166 = vcmp.eq.s32.totalorder %v99, 4294967292
  %vm167 = vcmp.eq.s32.totalorder %v100, 4294967292
  %vm168 = vcmp.eq.s32.totalorder %v101, 4294967292
  %vm169 = vcmp.eq.s32.totalorder %v102, 4294967292
  %vm170 = vmand %vm124, %vm166
  %vm171 = vmand %vm125, %vm167
  %vm172 = vmand %vm126, %vm168
  %vm173 = vmand %vm127, %vm169
  %vm174 = vcmp.eq.s32.totalorder %v99, 4294967293
  %vm175 = vcmp.eq.s32.totalorder %v100, 4294967293
  %vm176 = vcmp.eq.s32.totalorder %v101, 4294967293
  %vm177 = vcmp.eq.s32.totalorder %v102, 4294967293
  %vm178 = vmand %vm124, %vm174
  %vm179 = vmand %vm125, %vm175
  %vm180 = vmand %vm126, %vm176
  %vm181 = vmand %vm127, %vm177
  %vm182 = vcmp.eq.s32.totalorder %v99, 4294967294
  %vm183 = vcmp.eq.s32.totalorder %v100, 4294967294
  %vm184 = vcmp.eq.s32.totalorder %v101, 4294967294
  %vm185 = vcmp.eq.s32.totalorder %v102, 4294967294
  %vm186 = vmand %vm124, %vm182
  %vm187 = vmand %vm125, %vm183
  %vm188 = vmand %vm126, %vm184
  %vm189 = vmand %vm127, %vm185
  %vm190 = vcmp.eq.s32.totalorder %v99, 4294967295
  %vm191 = vcmp.eq.s32.totalorder %v100, 4294967295
  %vm192 = vcmp.eq.s32.totalorder %v101, 4294967295
  %vm193 = vcmp.eq.s32.totalorder %v102, 4294967295
  %vm194 = vmand %vm124, %vm190
  %vm195 = vmand %vm125, %vm191
  %vm196 = vmand %vm126, %vm192
  %vm197 = vmand %vm127, %vm193
  %vm198 = vcmp.eq.s32.totalorder %v99, 0
  %vm199 = vcmp.eq.s32.totalorder %v100, 0
  %vm200 = vcmp.eq.s32.totalorder %v101, 0
  %vm201 = vcmp.eq.s32.totalorder %v102, 0
  %vm202 = vmand %vm124, %vm198
  %vm203 = vmand %vm125, %vm199
  %vm204 = vmand %vm126, %vm200
  %vm205 = vmand %vm127, %vm201
  %vm206 = vcmp.eq.s32.totalorder %v99, 1
  %vm207 = vcmp.eq.s32.totalorder %v100, 1
  %vm208 = vcmp.eq.s32.totalorder %v101, 1
  %vm209 = vcmp.eq.s32.totalorder %v102, 1
  %vm210 = vmand %vm124, %vm206
  %vm211 = vmand %vm125, %vm207
  %vm212 = vmand %vm126, %vm208
  %vm213 = vmand %vm127, %vm209
  %vm214 = vcmp.eq.s32.totalorder %v99, 2
  %vm215 = vcmp.eq.s32.totalorder %v100, 2
  %vm216 = vcmp.eq.s32.totalorder %v101, 2
  %vm217 = vcmp.eq.s32.totalorder %v102, 2
  %vm218 = vmand %vm124, %vm214
  %vm219 = vmand %vm125, %vm215
  %vm220 = vmand %vm126, %vm216
  %vm221 = vmand %vm127, %vm217
  %vm222 = vcmp.eq.s32.totalorder %v99, 3
  %vm223 = vcmp.eq.s32.totalorder %v100, 3
  %vm224 = vcmp.eq.s32.totalorder %v101, 3
  %vm225 = vcmp.eq.s32.totalorder %v102, 3
  %vm226 = vmand %vm124, %vm222
  %vm227 = vmand %vm125, %vm223
  %vm228 = vmand %vm126, %vm224
  %vm229 = vmand %vm127, %vm225
  %vm230 = vcmp.eq.s32.totalorder %v99, 4
  %vm231 = vcmp.eq.s32.totalorder %v100, 4
  %vm232 = vcmp.eq.s32.totalorder %v101, 4
  %vm233 = vcmp.eq.s32.totalorder %v102, 4
  %vm234 = vmand %vm124, %vm230
  %vm235 = vmand %vm125, %vm231
  %vm236 = vmand %vm126, %vm232
  %vm237 = vmand %vm127, %vm233
  %v238 = vsel %vm194, 1.0, 0.0
  %v239 = vsel %vm195, 1.0, 0.0
  %v240 = vsel %vm196, 1.0, 0.0
  %v241 = vsel %vm197, 1.0, 0.0
  %v242 = vpack.c.bf16 %v239, %v238
  %v243 = vpack.c.bf16 %v241, %v240
  %v244 = vsel %vm202, 1.0, 0.0
  %v245 = vsel %vm203, 1.0, 0.0
  %v246 = vsel %vm204, 1.0, 0.0
  %v247 = vsel %vm205, 1.0, 0.0
  %v248 = vpack.c.bf16 %v245, %v244
  %v249 = vpack.c.bf16 %v247, %v246
  %v250 = vsel %vm210, 1.0, 0.0
  %v251 = vsel %vm211, 1.0, 0.0
  %v252 = vsel %vm212, 1.0, 0.0
  %v253 = vsel %vm213, 1.0, 0.0
  %v254 = vpack.c.bf16 %v251, %v250
  %v255 = vpack.c.bf16 %v253, %v252
  %v256 = vld [vmem:[%s0] sm:$0xff]
  %v257 = vld [vmem:[%s0 + $0x8] sm:$0xff]
  %v258 = vld [vmem:[%s0 + $0x10] sm:$0xff]
  %v259 = vld [vmem:[%s0 + $0x18] sm:$0xff]
  %v260 = vld [vmem:[%s1] sm:$0xff]
  %v261 = vld [vmem:[%s1 + $0x8] sm:$0xff]
  %v262 = vld [vmem:[%s1 + $0x10] sm:$0xff]
  %v263 = vld [vmem:[%s1 + $0x18] sm:$0xff]
  %v264 = vadd.f32 %v256, %v260
  %v265 = vadd.f32 %v257, %v261
  %v266 = vadd.f32 %v258, %v262
  %v267 = vadd.f32 %v259, %v263
  %v268 = vmul.f32 %v264, %v131
  %v269 = vmul.f32 %v265, %v136
  %v270 = vmul.f32 %v266, %v141
  %v271 = vmul.f32 %v267, %v146
  %v272 = vpack.c.bf16 %v269, %v268
  %v273 = vpack.c.bf16 %v271, %v270
  %v274 = vld [vmem:[%s17] sm:$0xf]
  %v275 = vld [vmem:[%s17 + $0x4] sm:$0x1]
  %v276 = vld [vmem:[%s18] sm:$0xf]
  %v277 = vld [vmem:[%s18 + $0x4] sm:$0x1]
  %v278 = vld [vmem:[%s14] sm:$0x1]
  %v280 = vlaneseq
  %v281 = vshrl.u32 %v280, 7
  %v282 = vsub.s32 0, %v281
  %v283 = vrot.slane %v278, %v282
  %v285 = vadd.f32 %v283, 0.0
  %v286 = vld [vmem:[%s7] sm:$0xf]
  %v287 = vld [vmem:[%s7 + $0x4] sm:$0xf]
  %v288 = vld [vmem:[%s7 + $0x8] sm:$0xf]
  %v289 = vld [vmem:[%s7 + $0xc] sm:$0xf]
  %v290 = vld [vmem:[%s7 + $0x10] sm:$0xf]
  %v291 = vld [vmem:[%s7 + $0x14] sm:$0xf]
  %v292 = vld [vmem:[%s7 + $0x18] sm:$0xf]
  %v293 = vld [vmem:[%s7 + $0x1c] sm:$0xf]
  %v294 = vld [vmem:[%s8] sm:$0x1]
  %v296 = vlaneseq
  %v297 = vshrl.u32 %v296, 7
  %v298 = vsub.s32 0, %v297
  %v299 = vrot.slane %v294, %v298
  %v309 = vunpack.c.l.b16 %v286
  %v310 = vunpack.c.l.b16 %v287
  %v311 = vunpack.c.l.b16 %v288
  %v312 = vunpack.c.l.b16 %v289
  %v313 = vunpack.c.l.b16 %v290
  %v314 = vunpack.c.l.b16 %v291
  %v315 = vunpack.c.l.b16 %v292
  %v316 = vunpack.c.l.b16 %v293
  %v317 = vpack.c.b16 %v310, %v309
  %v318 = vpack.c.b16 %v312, %v311
  %v319 = vpack.c.b16 %v314, %v313
  %v320 = vpack.c.b16 %v316, %v315
  %vm325 = vcmask 523264
  %v327 = vsel %vm325, %v272, 0
  %v330 = vsel %vm325, %v273, 0
  %332 = vmatprep.subr.bf16.mxu0 0
  %333 = vmatpush1.bf16.msra.mxu0 0
  %334 = vmatprep.subr.bf16.mxu0 0
  %335 = vmatpush1.bf16.msra.mxu0 0
  %336 = vmatprep.subr.bf16.mxu0 0
  %337 = vmatpush1.bf16.msra.mxu0 0
  %338 = vmatprep.subr.bf16.mxu0 0
  %339 = vmatpush1.bf16.msra.mxu0 0
  %340 = vmatprep.subr.bf16.mxu0 0
  %341 = vmatpush1.bf16.msra.mxu0 %v320
  %342 = vmatprep.subr.bf16.mxu0 0
  %343 = vmatpush1.bf16.msra.mxu0 %v319
  %344 = vmatprep.subr.bf16.mxu0 0
  %345 = vmatpush1.bf16.msra.mxu0 %v318
  %346 = vmatprep.subr.bf16.mxu0 0
  %347 = vmatpush1.bf16.msra.mxu0 %v317
  %348 = vmatprep.subr.bf16.mxu0 0
  %349 = vmatpush2.bf16.msra.mxu0 0
  %350 = vmatprep.subr.bf16.mxu0 0
  %351 = vmatpush2.bf16.msra.mxu0 0
  %352 = vmatprep.subr.bf16.mxu0 0
  %353 = vmatpush2.bf16.msra.mxu0 0
  %354 = vmatprep.subr.bf16.mxu0 0
  %355 = vmatpush2.bf16.msra.mxu0 0
  %356 = vmatprep.subr.bf16.mxu0 0
  %357 = vmatpush2.bf16.msra.mxu0 0
  %358 = vmatprep.subr.bf16.mxu0 0
  %359 = vmatpush2.bf16.msra.mxu0 0
  %360 = vmatprep.subr.bf16.mxu0 0
  %361 = vmatpush2.bf16.msra.mxu0 0
  %362 = vmatprep.subr.bf16.mxu0 0
  %363 = vmatpush2.bf16.msra.mxu0 0
  %364 = vmatprep.mubr.bf16.mxu0 0
  %365 = vmatmul.mubr.bf16.gmra.mxu0 %v327
  %v366 = vpop.f32.mrf.mxu0
  %v367 = vadd.f32 %v299, %v366
  %v368 = vpop.f32.mrf.mxu0
  %v369 = vpop.f32.mrf.mxu0
  %v370 = vadd.f32 %v299, %v369
  %v371 = vpop.f32.mrf.mxu0
  %372 = vmatprep.mubr.bf16.mxu0 0
  %373 = vmatmul.mubr.bf16.gmra.mxu0 %v330
  %v374 = vpop.f32.mrf.mxu0
  %v375 = vadd.f32 %v299, %v374
  %v376 = vpop.f32.mrf.mxu0
  %v377 = vpop.f32.mrf.mxu0
  %v378 = vadd.f32 %v299, %v377
  %v379 = vpop.f32.mrf.mxu0
  %380 = vdwg.mxu0
  %v381 = vmul.f32 %v367, 0.17677669
  %v382 = vmul.f32 %v370, 0.17677669
  %v383 = vmul.f32 %v375, 0.17677669
  %v384 = vmul.f32 %v378, 0.17677669
  %v385 = vld [vmem:[%s9] sm:$0xf]
  %v386 = vld [vmem:[%s9 + $0x4] sm:$0xf]
  %v387 = vld [vmem:[%s9 + $0x8] sm:$0xf]
  %v388 = vld [vmem:[%s9 + $0xc] sm:$0xf]
  %v389 = vld [vmem:[%s9 + $0x10] sm:$0xf]
  %v390 = vld [vmem:[%s9 + $0x14] sm:$0xf]
  %v391 = vld [vmem:[%s9 + $0x18] sm:$0xf]
  %v392 = vld [vmem:[%s9 + $0x1c] sm:$0xf]
  %v393 = vld [vmem:[%s10] sm:$0x1]
  %v395 = vlaneseq
  %v396 = vshrl.u32 %v395, 7
  %v397 = vsub.s32 0, %v396
  %v398 = vrot.slane %v393, %v397
  %v408 = vunpack.c.l.b16 %v385
  %v409 = vunpack.c.l.b16 %v386
  %v410 = vunpack.c.l.b16 %v387
  %v411 = vunpack.c.l.b16 %v388
  %v412 = vunpack.c.l.b16 %v389
  %v413 = vunpack.c.l.b16 %v390
  %v414 = vunpack.c.l.b16 %v391
  %v415 = vunpack.c.l.b16 %v392
  %v416 = vpack.c.b16 %v409, %v408
  %v417 = vpack.c.b16 %v411, %v410
  %v418 = vpack.c.b16 %v413, %v412
  %v419 = vpack.c.b16 %v415, %v414
  %424 = vmatprep.subr.bf16.mxu0 0
  %425 = vmatpush1.bf16.msra.mxu0 0
  %426 = vmatprep.subr.bf16.mxu0 0
  %427 = vmatpush1.bf16.msra.mxu0 0
  %428 = vmatprep.subr.bf16.mxu0 0
  %429 = vmatpush1.bf16.msra.mxu0 0
  %430 = vmatprep.subr.bf16.mxu0 0
  %431 = vmatpush1.bf16.msra.mxu0 0
  %432 = vmatprep.subr.bf16.mxu0 0
  %433 = vmatpush1.bf16.msra.mxu0 %v419
  %434 = vmatprep.subr.bf16.mxu0 0
  %435 = vmatpush1.bf16.msra.mxu0 %v418
  %436 = vmatprep.subr.bf16.mxu0 0
  %437 = vmatpush1.bf16.msra.mxu0 %v417
  %438 = vmatprep.subr.bf16.mxu0 0
  %439 = vmatpush1.bf16.msra.mxu0 %v416
  %440 = vmatprep.subr.bf16.mxu0 0
  %441 = vmatpush2.bf16.msra.mxu0 0
  %442 = vmatprep.subr.bf16.mxu0 0
  %443 = vmatpush2.bf16.msra.mxu0 0
  %444 = vmatprep.subr.bf16.mxu0 0
  %445 = vmatpush2.bf16.msra.mxu0 0
  %446 = vmatprep.subr.bf16.mxu0 0
  %447 = vmatpush2.bf16.msra.mxu0 0
  %448 = vmatprep.subr.bf16.mxu0 0
  %449 = vmatpush2.bf16.msra.mxu0 0
  %450 = vmatprep.subr.bf16.mxu0 0
  %451 = vmatpush2.bf16.msra.mxu0 0
  %452 = vmatprep.subr.bf16.mxu0 0
  %453 = vmatpush2.bf16.msra.mxu0 0
  %454 = vmatprep.subr.bf16.mxu0 0
  %455 = vmatpush2.bf16.msra.mxu0 0
  %456 = vmatprep.mubr.bf16.mxu0 0
  %457 = vmatmul.mubr.bf16.gmra.mxu0 %v327
  %v458 = vpop.f32.mrf.mxu0
  %v459 = vadd.f32 %v398, %v458
  %v460 = vpop.f32.mrf.mxu0
  %v461 = vpop.f32.mrf.mxu0
  %v462 = vadd.f32 %v398, %v461
  %v463 = vpop.f32.mrf.mxu0
  %464 = vmatprep.mubr.bf16.mxu0 0
  %465 = vmatmul.mubr.bf16.gmra.mxu0 %v330
  %v466 = vpop.f32.mrf.mxu0
  %v467 = vadd.f32 %v398, %v466
  %v468 = vpop.f32.mrf.mxu0
  %v469 = vpop.f32.mrf.mxu0
  %v470 = vadd.f32 %v398, %v469
  %v471 = vpop.f32.mrf.mxu0
  %472 = vdwg.mxu0
  %v473 = vld [vmem:[%s11] sm:$0xf]
  %v474 = vld [vmem:[%s11 + $0x4] sm:$0xf]
  %v475 = vld [vmem:[%s11 + $0x8] sm:$0xf]
  %v476 = vld [vmem:[%s11 + $0xc] sm:$0xf]
  %v477 = vld [vmem:[%s11 + $0x10] sm:$0xf]
  %v478 = vld [vmem:[%s11 + $0x14] sm:$0xf]
  %v479 = vld [vmem:[%s11 + $0x18] sm:$0xf]
  %v480 = vld [vmem:[%s11 + $0x1c] sm:$0xf]
  %v481 = vld [vmem:[%s12] sm:$0x1]
  %v483 = vlaneseq
  %v484 = vshrl.u32 %v483, 7
  %v485 = vsub.s32 0, %v484
  %v486 = vrot.slane %v481, %v485
  %v496 = vunpack.c.l.b16 %v473
  %v497 = vunpack.c.l.b16 %v474
  %v498 = vunpack.c.l.b16 %v475
  %v499 = vunpack.c.l.b16 %v476
  %v500 = vunpack.c.l.b16 %v477
  %v501 = vunpack.c.l.b16 %v478
  %v502 = vunpack.c.l.b16 %v479
  %v503 = vunpack.c.l.b16 %v480
  %v504 = vpack.c.b16 %v497, %v496
  %v505 = vpack.c.b16 %v499, %v498
  %v506 = vpack.c.b16 %v501, %v500
  %v507 = vpack.c.b16 %v503, %v502
  %512 = vmatprep.subr.bf16.mxu0 0
  %513 = vmatpush1.bf16.msra.mxu0 0
  %514 = vmatprep.subr.bf16.mxu0 0
  %515 = vmatpush1.bf16.msra.mxu0 0
  %516 = vmatprep.subr.bf16.mxu0 0
  %517 = vmatpush1.bf16.msra.mxu0 0
  %518 = vmatprep.subr.bf16.mxu0 0
  %519 = vmatpush1.bf16.msra.mxu0 0
  %520 = vmatprep.subr.bf16.mxu0 0
  %521 = vmatpush1.bf16.msra.mxu0 %v507
  %522 = vmatprep.subr.bf16.mxu0 0
  %523 = vmatpush1.bf16.msra.mxu0 %v506
  %524 = vmatprep.subr.bf16.mxu0 0
  %525 = vmatpush1.bf16.msra.mxu0 %v505
  %526 = vmatprep.subr.bf16.mxu0 0
  %527 = vmatpush1.bf16.msra.mxu0 %v504
  %528 = vmatprep.subr.bf16.mxu0 0
  %529 = vmatpush2.bf16.msra.mxu0 0
  %530 = vmatprep.subr.bf16.mxu0 0
  %531 = vmatpush2.bf16.msra.mxu0 0
  %532 = vmatprep.subr.bf16.mxu0 0
  %533 = vmatpush2.bf16.msra.mxu0 0
  %534 = vmatprep.subr.bf16.mxu0 0
  %535 = vmatpush2.bf16.msra.mxu0 0
  %536 = vmatprep.subr.bf16.mxu0 0
  %537 = vmatpush2.bf16.msra.mxu0 0
  %538 = vmatprep.subr.bf16.mxu0 0
  %539 = vmatpush2.bf16.msra.mxu0 0
  %540 = vmatprep.subr.bf16.mxu0 0
  %541 = vmatpush2.bf16.msra.mxu0 0
  %542 = vmatprep.subr.bf16.mxu0 0
  %543 = vmatpush2.bf16.msra.mxu0 0
  %544 = vmatprep.mubr.bf16.mxu0 0
  %545 = vmatmul.mubr.bf16.gmra.mxu0 %v327
  %v546 = vpop.f32.mrf.mxu0
  %v547 = vadd.f32 %v486, %v546
  %v548 = vpop.f32.mrf.mxu0
  %v549 = vpop.f32.mrf.mxu0
  %v550 = vadd.f32 %v486, %v549
  %v551 = vpop.f32.mrf.mxu0
  %552 = vmatprep.mubr.bf16.mxu0 0
  %553 = vmatmul.mubr.bf16.gmra.mxu0 %v330
  %v554 = vpop.f32.mrf.mxu0
  %v555 = vadd.f32 %v486, %v554
  %v556 = vpop.f32.mrf.mxu0
  %v557 = vpop.f32.mrf.mxu0
  %v558 = vadd.f32 %v486, %v557
  %v559 = vpop.f32.mrf.mxu0
  %560 = vdwg.mxu0
  %v561 = vpack.c.bf16 %v382, %v381
  %v562 = vpack.c.bf16 %v384, %v383
  %v563 = vpack.c.bf16 %v462, %v459
  %v564 = vpack.c.bf16 %v470, %v467
  %v567 = vunpack.c.l.b16 %v274
  %v568 = vunpack.c.l.b16 %v275
  %v569 = vpack.c.b16 %v568, %v567
  %vm570 = vcmask 261120
  %v572 = vsel %vm570, %v561, 0
  %v575 = vsel %vm570, %v562, 0
  %v578 = vsel %vm570, %v569, 0
  %580 = vmatprep.subr.bf16.mxu0 0
  %581 = vmatpush1.bf16.xpose.msra.mxu0 0
  %582 = vmatprep.subr.bf16.mxu0 0
  %583 = vmatpush1.bf16.xpose.msra.mxu0 0
  %584 = vmatprep.subr.bf16.mxu0 0
  %585 = vmatpush1.bf16.xpose.msra.mxu0 0
  %586 = vmatprep.subr.bf16.mxu0 0
  %587 = vmatpush1.bf16.xpose.msra.mxu0 0
  %588 = vmatprep.subr.bf16.mxu0 0
  %589 = vmatpush1.bf16.xpose.msra.mxu0 0
  %590 = vmatprep.subr.bf16.mxu0 0
  %591 = vmatpush1.bf16.xpose.msra.mxu0 0
  %592 = vmatprep.subr.bf16.mxu0 0
  %593 = vmatpush1.bf16.xpose.msra.mxu0 0
  %594 = vmatprep.subr.bf16.mxu0 0
  %595 = vmatpush1.bf16.xpose.msra.mxu0 %v578
  %596 = vmatprep.subr.bf16.mxu0 0
  %597 = vmatpush2.bf16.xpose.msra.mxu0 0
  %598 = vmatprep.subr.bf16.mxu0 0
  %599 = vmatpush2.bf16.xpose.msra.mxu0 0
  %600 = vmatprep.subr.bf16.mxu0 0
  %601 = vmatpush2.bf16.xpose.msra.mxu0 0
  %602 = vmatprep.subr.bf16.mxu0 0
  %603 = vmatpush2.bf16.xpose.msra.mxu0 0
  %604 = vmatprep.subr.bf16.mxu0 0
  %605 = vmatpush2.bf16.xpose.msra.mxu0 0
  %606 = vmatprep.subr.bf16.mxu0 0
  %607 = vmatpush2.bf16.xpose.msra.mxu0 0
  %608 = vmatprep.subr.bf16.mxu0 0
  %609 = vmatpush2.bf16.xpose.msra.mxu0 0
  %610 = vmatprep.subr.bf16.mxu0 0
  %611 = vmatpush2.bf16.xpose.msra.mxu0 0
  %612 = vmatprep.mubr.bf16.mxu0 0
  %613 = vmatmul.mubr.bf16.gmra.mxu0 %v572
  %v614 = vpop.f32.mrf.mxu0
  %v615 = vadd.f32 0.0, %v614
  %v616 = vpop.f32.mrf.mxu0
  %v617 = vpop.f32.mrf.mxu0
  %v618 = vadd.f32 0.0, %v617
  %v619 = vpop.f32.mrf.mxu0
  %620 = vmatprep.mubr.bf16.mxu0 0
  %621 = vmatmul.mubr.bf16.gmra.mxu0 %v575
  %v622 = vpop.f32.mrf.mxu0
  %v623 = vadd.f32 0.0, %v622
  %v624 = vpop.f32.mrf.mxu0
  %v625 = vpop.f32.mrf.mxu0
  %v626 = vadd.f32 0.0, %v625
  %v627 = vpop.f32.mrf.mxu0
  %628 = vdwg.mxu0
  %630 = vset.pattern.permute.xlu0 0
  %631 = vperm.xlu0 %630, %v615
  %v632 = vpop.permute.xlu0 %631
  %635 = vset.pattern.permute.xlu0 0
  %636 = vperm.xlu0 %635, %v618
  %v637 = vpop.permute.xlu0 %636
  %640 = vset.pattern.permute.xlu0 0
  %641 = vperm.xlu0 %640, %v623
  %v642 = vpop.permute.xlu0 %641
  %645 = vset.pattern.permute.xlu0 0
  %646 = vperm.xlu0 %645, %v626
  %v647 = vpop.permute.xlu0 %646
  %v649 = vsel %vm170, %v632, 0.0
  %v650 = vsel %vm171, %v637, 0.0
  %v651 = vsel %vm172, %v642, 0.0
  %v652 = vsel %vm173, %v647, 0.0
  %v654 = vsel %vm570, %v563, 0
  %v657 = vsel %vm570, %v564, 0
  %659 = vmatprep.subr.bf16.mxu0 0
  %660 = vmatpush1.bf16.xpose.msra.mxu0 0
  %661 = vmatprep.subr.bf16.mxu0 0
  %662 = vmatpush1.bf16.xpose.msra.mxu0 0
  %663 = vmatprep.subr.bf16.mxu0 0
  %664 = vmatpush1.bf16.xpose.msra.mxu0 0
  %665 = vmatprep.subr.bf16.mxu0 0
  %666 = vmatpush1.bf16.xpose.msra.mxu0 0
  %667 = vmatprep.subr.bf16.mxu0 0
  %668 = vmatpush1.bf16.xpose.msra.mxu0 0
  %669 = vmatprep.subr.bf16.mxu0 0
  %670 = vmatpush1.bf16.xpose.msra.mxu0 0
  %671 = vmatprep.subr.bf16.mxu0 0
  %672 = vmatpush1.bf16.xpose.msra.mxu0 %v657
  %673 = vmatprep.subr.bf16.mxu0 0
  %674 = vmatpush1.bf16.xpose.msra.mxu0 %v654
  %675 = vmatprep.subr.bf16.mxu0 0
  %676 = vmatpush2.bf16.xpose.msra.mxu0 0
  %677 = vmatprep.subr.bf16.mxu0 0
  %678 = vmatpush2.bf16.xpose.msra.mxu0 0
  %679 = vmatprep.subr.bf16.mxu0 0
  %680 = vmatpush2.bf16.xpose.msra.mxu0 0
  %681 = vmatprep.subr.bf16.mxu0 0
  %682 = vmatpush2.bf16.xpose.msra.mxu0 0
  %683 = vmatprep.subr.bf16.mxu0 0
  %684 = vmatpush2.bf16.xpose.msra.mxu0 0
  %685 = vmatprep.subr.bf16.mxu0 0
  %686 = vmatpush2.bf16.xpose.msra.mxu0 0
  %687 = vmatprep.subr.bf16.mxu0 0
  %688 = vmatpush2.bf16.xpose.msra.mxu0 0
  %689 = vmatprep.subr.bf16.mxu0 0
  %690 = vmatpush2.bf16.xpose.msra.mxu0 0
  %691 = vmatprep.mubr.bf16.mxu0 0
  %692 = vmatmul.mubr.bf16.gmra.mxu0 %v572
  %v693 = vpop.f32.mrf.mxu0
  %v694 = vadd.f32 %v649, %v693
  %v695 = vpop.f32.mrf.mxu0
  %v696 = vpop.f32.mrf.mxu0
  %v697 = vadd.f32 %v650, %v696
  %v698 = vpop.f32.mrf.mxu0
  %699 = vmatprep.mubr.bf16.mxu0 0
  %700 = vmatmul.mubr.bf16.gmra.mxu0 %v575
  %v701 = vpop.f32.mrf.mxu0
  %v702 = vadd.f32 %v651, %v701
  %v703 = vpop.f32.mrf.mxu0
  %v704 = vpop.f32.mrf.mxu0
  %v705 = vadd.f32 %v652, %v704
  %v706 = vpop.f32.mrf.mxu0
  %707 = vdwg.mxu0
  %708 = vset.pattern.permute.xlu0 1
  %709 = vperm.xlu0 %708, %v615
  %v710 = vpop.permute.xlu0 %709
  %712 = vset.pattern.permute.xlu0 1
  %713 = vperm.xlu0 %712, %v618
  %v714 = vpop.permute.xlu0 %713
  %716 = vset.pattern.permute.xlu0 1
  %717 = vperm.xlu0 %716, %v623
  %v718 = vpop.permute.xlu0 %717
  %720 = vset.pattern.permute.xlu0 1
  %721 = vperm.xlu0 %720, %v626
  %v722 = vpop.permute.xlu0 %721
  %v724 = vsel %vm178, %v710, 0.0
  %v725 = vsel %vm179, %v714, 0.0
  %v726 = vsel %vm180, %v718, 0.0
  %v727 = vsel %vm181, %v722, 0.0
  %v728 = vadd.f32 %v694, %v724
  %v729 = vadd.f32 %v697, %v725
  %v730 = vadd.f32 %v702, %v726
  %v731 = vadd.f32 %v705, %v727
  %732 = vset.pattern.permute.xlu0 2
  %733 = vperm.xlu0 %732, %v615
  %v734 = vpop.permute.xlu0 %733
  %736 = vset.pattern.permute.xlu0 2
  %737 = vperm.xlu0 %736, %v618
  %v738 = vpop.permute.xlu0 %737
  %740 = vset.pattern.permute.xlu0 2
  %741 = vperm.xlu0 %740, %v623
  %v742 = vpop.permute.xlu0 %741
  %744 = vset.pattern.permute.xlu0 2
  %745 = vperm.xlu0 %744, %v626
  %v746 = vpop.permute.xlu0 %745
  %v748 = vsel %vm186, %v734, 0.0
  %v749 = vsel %vm187, %v738, 0.0
  %v750 = vsel %vm188, %v742, 0.0
  %v751 = vsel %vm189, %v746, 0.0
  %v752 = vadd.f32 %v728, %v748
  %v753 = vadd.f32 %v729, %v749
  %v754 = vadd.f32 %v730, %v750
  %v755 = vadd.f32 %v731, %v751
  %756 = vset.pattern.permute.xlu0 3
  %757 = vperm.xlu0 %756, %v615
  %v758 = vpop.permute.xlu0 %757
  %760 = vset.pattern.permute.xlu0 3
  %761 = vperm.xlu0 %760, %v618
  %v762 = vpop.permute.xlu0 %761
  %764 = vset.pattern.permute.xlu0 3
  %765 = vperm.xlu0 %764, %v623
  %v766 = vpop.permute.xlu0 %765
  %768 = vset.pattern.permute.xlu0 3
  %769 = vperm.xlu0 %768, %v626
  %v770 = vpop.permute.xlu0 %769
  %v772 = vsel %vm194, %v758, 0.0
  %v773 = vsel %vm195, %v762, 0.0
  %v774 = vsel %vm196, %v766, 0.0
  %v775 = vsel %vm197, %v770, 0.0
  %v776 = vadd.f32 %v752, %v772
  %v777 = vadd.f32 %v753, %v773
  %v778 = vadd.f32 %v754, %v774
  %v779 = vadd.f32 %v755, %v775
  %780 = vset.pattern.permute.xlu0 4
  %781 = vperm.xlu0 %780, %v615
  %v782 = vpop.permute.xlu0 %781
  %784 = vset.pattern.permute.xlu0 4
  %785 = vperm.xlu0 %784, %v618
  %v786 = vpop.permute.xlu0 %785
  %788 = vset.pattern.permute.xlu0 4
  %789 = vperm.xlu0 %788, %v623
  %v790 = vpop.permute.xlu0 %789
  %792 = vset.pattern.permute.xlu0 4
  %793 = vperm.xlu0 %792, %v626
  %v794 = vpop.permute.xlu0 %793
  %v796 = vsel %vm202, %v782, 0.0
  %v797 = vsel %vm203, %v786, 0.0
  %v798 = vsel %vm204, %v790, 0.0
  %v799 = vsel %vm205, %v794, 0.0
  %v800 = vadd.f32 %v776, %v796
  %v801 = vadd.f32 %v777, %v797
  %v802 = vadd.f32 %v778, %v798
  %v803 = vadd.f32 %v779, %v799
  %804 = vset.pattern.permute.xlu0 5
  %805 = vperm.xlu0 %804, %v615
  %v806 = vpop.permute.xlu0 %805
  %808 = vset.pattern.permute.xlu0 5
  %809 = vperm.xlu0 %808, %v618
  %v810 = vpop.permute.xlu0 %809
  %812 = vset.pattern.permute.xlu0 5
  %813 = vperm.xlu0 %812, %v623
  %v814 = vpop.permute.xlu0 %813
  %816 = vset.pattern.permute.xlu0 5
  %817 = vperm.xlu0 %816, %v626
  %v818 = vpop.permute.xlu0 %817
  %v820 = vsel %vm210, %v806, 0.0
  %v821 = vsel %vm211, %v810, 0.0
  %v822 = vsel %vm212, %v814, 0.0
  %v823 = vsel %vm213, %v818, 0.0
  %v824 = vadd.f32 %v800, %v820
  %v825 = vadd.f32 %v801, %v821
  %v826 = vadd.f32 %v802, %v822
  %v827 = vadd.f32 %v803, %v823
  %828 = vset.pattern.permute.xlu0 6
  %829 = vperm.xlu0 %828, %v615
  %v830 = vpop.permute.xlu0 %829
  %832 = vset.pattern.permute.xlu0 6
  %833 = vperm.xlu0 %832, %v618
  %v834 = vpop.permute.xlu0 %833
  %836 = vset.pattern.permute.xlu0 6
  %837 = vperm.xlu0 %836, %v623
  %v838 = vpop.permute.xlu0 %837
  %840 = vset.pattern.permute.xlu0 6
  %841 = vperm.xlu0 %840, %v626
  %v842 = vpop.permute.xlu0 %841
  %v844 = vsel %vm218, %v830, 0.0
  %v845 = vsel %vm219, %v834, 0.0
  %v846 = vsel %vm220, %v838, 0.0
  %v847 = vsel %vm221, %v842, 0.0
  %v848 = vadd.f32 %v824, %v844
  %v849 = vadd.f32 %v825, %v845
  %v850 = vadd.f32 %v826, %v846
  %v851 = vadd.f32 %v827, %v847
  %852 = vset.pattern.permute.xlu0 7
  %853 = vperm.xlu0 %852, %v615
  %v854 = vpop.permute.xlu0 %853
  %856 = vset.pattern.permute.xlu0 7
  %857 = vperm.xlu0 %856, %v618
  %v858 = vpop.permute.xlu0 %857
  %860 = vset.pattern.permute.xlu0 7
  %861 = vperm.xlu0 %860, %v623
  %v862 = vpop.permute.xlu0 %861
  %864 = vset.pattern.permute.xlu0 7
  %865 = vperm.xlu0 %864, %v626
  %v866 = vpop.permute.xlu0 %865
  %v868 = vsel %vm226, %v854, 0.0
  %v869 = vsel %vm227, %v858, 0.0
  %v870 = vsel %vm228, %v862, 0.0
  %v871 = vsel %vm229, %v866, 0.0
  %v872 = vadd.f32 %v848, %v868
  %v873 = vadd.f32 %v849, %v869
  %v874 = vadd.f32 %v850, %v870
  %v875 = vadd.f32 %v851, %v871
  %876 = vset.pattern.permute.xlu0 8
  %877 = vperm.xlu0 %876, %v615
  %v878 = vpop.permute.xlu0 %877
  %880 = vset.pattern.permute.xlu0 8
  %881 = vperm.xlu0 %880, %v618
  %v882 = vpop.permute.xlu0 %881
  %884 = vset.pattern.permute.xlu0 8
  %885 = vperm.xlu0 %884, %v623
  %v886 = vpop.permute.xlu0 %885
  %888 = vset.pattern.permute.xlu0 8
  %889 = vperm.xlu0 %888, %v626
  %v890 = vpop.permute.xlu0 %889
  %v892 = vsel %vm234, %v878, 0.0
  %v893 = vsel %vm235, %v882, 0.0
  %v894 = vsel %vm236, %v886, 0.0
  %v895 = vsel %vm237, %v890, 0.0
  %v896 = vadd.f32 %v872, %v892
  %v897 = vadd.f32 %v873, %v893
  %v898 = vadd.f32 %v874, %v894
  %v899 = vadd.f32 %v875, %v895
  %v900 = vsel %vm162, %v896, -10000.0
  %v901 = vsel %vm163, %v897, -10000.0
  %v902 = vsel %vm164, %v898, -10000.0
  %v903 = vsel %vm165, %v899, -10000.0
  %v904 = vsel %vm570, %v900, -inf
  %905 = vmax.xlane.f32.xlu0 %v904
  %v906 = vpop.xlane.xlu0 %905
  %v907 = vsel %vm570, %v901, -inf
  %908 = vmax.xlane.f32.xlu0 %v907
  %v909 = vpop.xlane.xlu0 %908
  %v910 = vsel %vm570, %v902, -inf
  %911 = vmax.xlane.f32.xlu0 %v910
  %v912 = vpop.xlane.xlu0 %911
  %v913 = vsel %vm570, %v903, -inf
  %914 = vmax.xlane.f32.xlu0 %v913
  %v915 = vpop.xlane.xlu0 %914
  %v916 = vsub.f32 %v900, %v906
  %v917 = vsub.f32 %v901, %v909
  %v918 = vsub.f32 %v902, %v912
  %v919 = vsub.f32 %v903, %v915
  %v920 = vmul.f32 %v916, 1.442695
  %v921 = vpow.pop %v920
  %v922 = vmul.f32 %v917, 1.442695
  %v923 = vpow.pop %v922
  %v924 = vmul.f32 %v918, 1.442695
  %v925 = vpow.pop %v924
  %v926 = vmul.f32 %v919, 1.442695
  %v927 = vpow.pop %v926
  %v928 = vsel %vm570, %v921, 0.0
  %929 = vadd.xlane.f32.xlu0 %v928
  %v930 = vpop.xlane.xlu0 %929
  %v931 = vsel %vm570, %v923, 0.0
  %932 = vadd.xlane.f32.xlu0 %v931
  %v933 = vpop.xlane.xlu0 %932
  %v934 = vsel %vm570, %v925, 0.0
  %935 = vadd.xlane.f32.xlu0 %v934
  %v936 = vpop.xlane.xlu0 %935
  %v937 = vsel %vm570, %v927, 0.0
  %938 = vadd.xlane.f32.xlu0 %v937
  %v939 = vpop.xlane.xlu0 %938
  %v940 = vrcp.pop %v930
  %v941 = vrcp.pop %v933
  %v942 = vrcp.pop %v936
  %v943 = vrcp.pop %v939
  %v944 = vmul.f32 %v921, %v940
  %v945 = vmul.f32 %v923, %v941
  %v946 = vmul.f32 %v925, %v942
  %v947 = vmul.f32 %v927, %v943
  %v948 = vpack.c.bf16 %v945, %v944
  %v949 = vpack.c.bf16 %v947, %v946
  %v950 = vpack.c.bf16 %v550, %v547
  %v951 = vpack.c.bf16 %v558, %v555
  %v952 = vsel %vm170, %v944, 0.0
  %v953 = vsel %vm171, %v945, 0.0
  %v954 = vsel %vm172, %v946, 0.0
  %v955 = vsel %vm173, %v947, 0.0
  %v956 = vsel %vm570, %v952, 0.0
  %957 = vadd.xlane.f32.xlu0 %v956
  %v958 = vpop.xlane.xlu0 %957
  %v959 = vsel %vm570, %v953, 0.0
  %960 = vadd.xlane.f32.xlu0 %v959
  %v961 = vpop.xlane.xlu0 %960
  %v962 = vsel %vm570, %v954, 0.0
  %963 = vadd.xlane.f32.xlu0 %v962
  %v964 = vpop.xlane.xlu0 %963
  %v965 = vsel %vm570, %v955, 0.0
  %966 = vadd.xlane.f32.xlu0 %v965
  %v967 = vpop.xlane.xlu0 %966
  %vm968 = vcmp.eq.s32.totalorder %v98, 0
  %v969 = vsel %vm968, %v958, 0.0
  %v970 = vsel %vm968, %v961, 0.0
  %v971 = vsel %vm968, %v964, 0.0
  %v972 = vsel %vm968, %v967, 0.0
  %v973 = vadd.f32 %v969, 0.0
  %v974 = vadd.f32 %v970, 0.0
  %v975 = vadd.f32 %v971, 0.0
  %v976 = vadd.f32 %v972, 0.0
  %v977 = vsel %vm178, %v944, 0.0
  %v978 = vsel %vm179, %v945, 0.0
  %v979 = vsel %vm180, %v946, 0.0
  %v980 = vsel %vm181, %v947, 0.0
  %v981 = vsel %vm570, %v977, 0.0
  %982 = vadd.xlane.f32.xlu0 %v981
  %v983 = vpop.xlane.xlu0 %982
  %v984 = vsel %vm570, %v978, 0.0
  %985 = vadd.xlane.f32.xlu0 %v984
  %v986 = vpop.xlane.xlu0 %985
  %v987 = vsel %vm570, %v979, 0.0
  %988 = vadd.xlane.f32.xlu0 %v987
  %v989 = vpop.xlane.xlu0 %988
  %v990 = vsel %vm570, %v980, 0.0
  %991 = vadd.xlane.f32.xlu0 %v990
  %v992 = vpop.xlane.xlu0 %991
  %vm993 = vcmp.eq.s32.totalorder %v98, 1
  %v994 = vsel %vm993, %v983, 0.0
  %v995 = vsel %vm993, %v986, 0.0
  %v996 = vsel %vm993, %v989, 0.0
  %v997 = vsel %vm993, %v992, 0.0
  %v998 = vadd.f32 %v973, %v994
  %v999 = vadd.f32 %v974, %v995
  %v1000 = vadd.f32 %v975, %v996
  %v1001 = vadd.f32 %v976, %v997
  %v1002 = vsel %vm186, %v944, 0.0
  %v1003 = vsel %vm187, %v945, 0.0
  %v1004 = vsel %vm188, %v946, 0.0
  %v1005 = vsel %vm189, %v947, 0.0
  %v1006 = vsel %vm570, %v1002, 0.0
  %1007 = vadd.xlane.f32.xlu0 %v1006
  %v1008 = vpop.xlane.xlu0 %1007
  %v1009 = vsel %vm570, %v1003, 0.0
  %1010 = vadd.xlane.f32.xlu0 %v1009
  %v1011 = vpop.xlane.xlu0 %1010
  %v1012 = vsel %vm570, %v1004, 0.0
  %1013 = vadd.xlane.f32.xlu0 %v1012
  %v1014 = vpop.xlane.xlu0 %1013
  %v1015 = vsel %vm570, %v1005, 0.0
  %1016 = vadd.xlane.f32.xlu0 %v1015
  %v1017 = vpop.xlane.xlu0 %1016
  %vm1018 = vcmp.eq.s32.totalorder %v98, 2
  %v1019 = vsel %vm1018, %v1008, 0.0
  %v1020 = vsel %vm1018, %v1011, 0.0
  %v1021 = vsel %vm1018, %v1014, 0.0
  %v1022 = vsel %vm1018, %v1017, 0.0
  %v1023 = vadd.f32 %v998, %v1019
  %v1024 = vadd.f32 %v999, %v1020
  %v1025 = vadd.f32 %v1000, %v1021
  %v1026 = vadd.f32 %v1001, %v1022
  %v1027 = vsel %vm194, %v944, 0.0
  %v1028 = vsel %vm195, %v945, 0.0
  %v1029 = vsel %vm196, %v946, 0.0
  %v1030 = vsel %vm197, %v947, 0.0
  %v1031 = vsel %vm570, %v1027, 0.0
  %1032 = vadd.xlane.f32.xlu0 %v1031
  %v1033 = vpop.xlane.xlu0 %1032
  %v1034 = vsel %vm570, %v1028, 0.0
  %1035 = vadd.xlane.f32.xlu0 %v1034
  %v1036 = vpop.xlane.xlu0 %1035
  %v1037 = vsel %vm570, %v1029, 0.0
  %1038 = vadd.xlane.f32.xlu0 %v1037
  %v1039 = vpop.xlane.xlu0 %1038
  %v1040 = vsel %vm570, %v1030, 0.0
  %1041 = vadd.xlane.f32.xlu0 %v1040
  %v1042 = vpop.xlane.xlu0 %1041
  %vm1043 = vcmp.eq.s32.totalorder %v98, 3
  %v1044 = vsel %vm1043, %v1033, 0.0
  %v1045 = vsel %vm1043, %v1036, 0.0
  %v1046 = vsel %vm1043, %v1039, 0.0
  %v1047 = vsel %vm1043, %v1042, 0.0
  %v1048 = vadd.f32 %v1023, %v1044
  %v1049 = vadd.f32 %v1024, %v1045
  %v1050 = vadd.f32 %v1025, %v1046
  %v1051 = vadd.f32 %v1026, %v1047
  %v1052 = vsel %vm202, %v944, 0.0
  %v1053 = vsel %vm203, %v945, 0.0
  %v1054 = vsel %vm204, %v946, 0.0
  %v1055 = vsel %vm205, %v947, 0.0
  %v1056 = vsel %vm570, %v1052, 0.0
  %1057 = vadd.xlane.f32.xlu0 %v1056
  %v1058 = vpop.xlane.xlu0 %1057
  %v1059 = vsel %vm570, %v1053, 0.0
  %1060 = vadd.xlane.f32.xlu0 %v1059
  %v1061 = vpop.xlane.xlu0 %1060
  %v1062 = vsel %vm570, %v1054, 0.0
  %1063 = vadd.xlane.f32.xlu0 %v1062
  %v1064 = vpop.xlane.xlu0 %1063
  %v1065 = vsel %vm570, %v1055, 0.0
  %1066 = vadd.xlane.f32.xlu0 %v1065
  %v1067 = vpop.xlane.xlu0 %1066
  %vm1068 = vcmp.eq.s32.totalorder %v98, 4
  %v1069 = vsel %vm1068, %v1058, 0.0
  %v1070 = vsel %vm1068, %v1061, 0.0
  %v1071 = vsel %vm1068, %v1064, 0.0
  %v1072 = vsel %vm1068, %v1067, 0.0
  %v1073 = vadd.f32 %v1048, %v1069
  %v1074 = vadd.f32 %v1049, %v1070
  %v1075 = vadd.f32 %v1050, %v1071
  %v1076 = vadd.f32 %v1051, %v1072
  %v1077 = vsel %vm210, %v944, 0.0
  %v1078 = vsel %vm211, %v945, 0.0
  %v1079 = vsel %vm212, %v946, 0.0
  %v1080 = vsel %vm213, %v947, 0.0
  %v1081 = vsel %vm570, %v1077, 0.0
  %1082 = vadd.xlane.f32.xlu0 %v1081
  %v1083 = vpop.xlane.xlu0 %1082
  %v1084 = vsel %vm570, %v1078, 0.0
  %1085 = vadd.xlane.f32.xlu0 %v1084
  %v1086 = vpop.xlane.xlu0 %1085
  %v1087 = vsel %vm570, %v1079, 0.0
  %1088 = vadd.xlane.f32.xlu0 %v1087
  %v1089 = vpop.xlane.xlu0 %1088
  %v1090 = vsel %vm570, %v1080, 0.0
  %1091 = vadd.xlane.f32.xlu0 %v1090
  %v1092 = vpop.xlane.xlu0 %1091
  %vm1093 = vcmp.eq.s32.totalorder %v98, 5
  %v1094 = vsel %vm1093, %v1083, 0.0
  %v1095 = vsel %vm1093, %v1086, 0.0
  %v1096 = vsel %vm1093, %v1089, 0.0
  %v1097 = vsel %vm1093, %v1092, 0.0
  %v1098 = vadd.f32 %v1073, %v1094
  %v1099 = vadd.f32 %v1074, %v1095
  %v1100 = vadd.f32 %v1075, %v1096
  %v1101 = vadd.f32 %v1076, %v1097
  %v1102 = vsel %vm218, %v944, 0.0
  %v1103 = vsel %vm219, %v945, 0.0
  %v1104 = vsel %vm220, %v946, 0.0
  %v1105 = vsel %vm221, %v947, 0.0
  %v1106 = vsel %vm570, %v1102, 0.0
  %1107 = vadd.xlane.f32.xlu0 %v1106
  %v1108 = vpop.xlane.xlu0 %1107
  %v1109 = vsel %vm570, %v1103, 0.0
  %1110 = vadd.xlane.f32.xlu0 %v1109
  %v1111 = vpop.xlane.xlu0 %1110
  %v1112 = vsel %vm570, %v1104, 0.0
  %1113 = vadd.xlane.f32.xlu0 %v1112
  %v1114 = vpop.xlane.xlu0 %1113
  %v1115 = vsel %vm570, %v1105, 0.0
  %1116 = vadd.xlane.f32.xlu0 %v1115
  %v1117 = vpop.xlane.xlu0 %1116
  %vm1118 = vcmp.eq.s32.totalorder %v98, 6
  %v1119 = vsel %vm1118, %v1108, 0.0
  %v1120 = vsel %vm1118, %v1111, 0.0
  %v1121 = vsel %vm1118, %v1114, 0.0
  %v1122 = vsel %vm1118, %v1117, 0.0
  %v1123 = vadd.f32 %v1098, %v1119
  %v1124 = vadd.f32 %v1099, %v1120
  %v1125 = vadd.f32 %v1100, %v1121
  %v1126 = vadd.f32 %v1101, %v1122
  %v1127 = vsel %vm226, %v944, 0.0
  %v1128 = vsel %vm227, %v945, 0.0
  %v1129 = vsel %vm228, %v946, 0.0
  %v1130 = vsel %vm229, %v947, 0.0
  %v1131 = vsel %vm570, %v1127, 0.0
  %1132 = vadd.xlane.f32.xlu0 %v1131
  %v1133 = vpop.xlane.xlu0 %1132
  %v1134 = vsel %vm570, %v1128, 0.0
  %1135 = vadd.xlane.f32.xlu0 %v1134
  %v1136 = vpop.xlane.xlu0 %1135
  %v1137 = vsel %vm570, %v1129, 0.0
  %1138 = vadd.xlane.f32.xlu0 %v1137
  %v1139 = vpop.xlane.xlu0 %1138
  %v1140 = vsel %vm570, %v1130, 0.0
  %1141 = vadd.xlane.f32.xlu0 %v1140
  %v1142 = vpop.xlane.xlu0 %1141
  %vm1143 = vcmp.eq.s32.totalorder %v98, 7
  %v1144 = vsel %vm1143, %v1133, 0.0
  %v1145 = vsel %vm1143, %v1136, 0.0
  %v1146 = vsel %vm1143, %v1139, 0.0
  %v1147 = vsel %vm1143, %v1142, 0.0
  %v1148 = vadd.f32 %v1123, %v1144
  %v1149 = vadd.f32 %v1124, %v1145
  %v1150 = vadd.f32 %v1125, %v1146
  %v1151 = vadd.f32 %v1126, %v1147
  %v1152 = vsel %vm234, %v944, 0.0
  %v1153 = vsel %vm235, %v945, 0.0
  %v1154 = vsel %vm236, %v946, 0.0
  %v1155 = vsel %vm237, %v947, 0.0
  %v1156 = vsel %vm570, %v1152, 0.0
  %1157 = vadd.xlane.f32.xlu0 %v1156
  %v1158 = vpop.xlane.xlu0 %1157
  %v1159 = vsel %vm570, %v1153, 0.0
  %1160 = vadd.xlane.f32.xlu0 %v1159
  %v1161 = vpop.xlane.xlu0 %1160
  %v1162 = vsel %vm570, %v1154, 0.0
  %1163 = vadd.xlane.f32.xlu0 %v1162
  %v1164 = vpop.xlane.xlu0 %1163
  %v1165 = vsel %vm570, %v1155, 0.0
  %1166 = vadd.xlane.f32.xlu0 %v1165
  %v1167 = vpop.xlane.xlu0 %1166
  %vm1168 = vcmp.eq.s32.totalorder %v98, 8
  %v1169 = vsel %vm1168, %v1158, 0.0
  %v1170 = vsel %vm1168, %v1161, 0.0
  %v1171 = vsel %vm1168, %v1164, 0.0
  %v1172 = vsel %vm1168, %v1167, 0.0
  %v1173 = vadd.f32 %v1148, %v1169
  %v1174 = vadd.f32 %v1149, %v1170
  %v1175 = vadd.f32 %v1150, %v1171
  %v1176 = vadd.f32 %v1151, %v1172
  %v1177 = vpack.c.bf16 %v1174, %v1173
  %v1178 = vpack.c.bf16 %v1176, %v1175
  %v1181 = vunpack.c.l.b16 %v276
  %v1182 = vunpack.c.l.b16 %v277
  %v1183 = vpack.c.b16 %v1182, %v1181
  %vm1184 = vcmask 72704
  %v1186 = vsel %vm1184, %v1177, 0
  %v1189 = vsel %vm1184, %v1178, 0
  %vm1191 = vcmask 1043456
  %vm1192 = vcmask 1044480
  %v1193 = vsel %vm1191, 4294967295, 65535
  %v1194 = vsel %vm1192, %v1193, 0
  %v1196 = vand.u32 %v1183, %v1194
  %1198 = vmatprep.subr.bf16.mxu0 0
  %1199 = vmatpush1.bf16.msra.mxu0 0
  %1200 = vmatprep.subr.bf16.mxu0 0
  %1201 = vmatpush1.bf16.msra.mxu0 0
  %1202 = vmatprep.subr.bf16.mxu0 0
  %1203 = vmatpush1.bf16.msra.mxu0 0
  %1204 = vmatprep.subr.bf16.mxu0 0
  %1205 = vmatpush1.bf16.msra.mxu0 0
  %1206 = vmatprep.subr.bf16.mxu0 0
  %1207 = vmatpush1.bf16.msra.mxu0 0
  %1208 = vmatprep.subr.bf16.mxu0 0
  %1209 = vmatpush1.bf16.msra.mxu0 0
  %1210 = vmatprep.subr.bf16.mxu0 0
  %1211 = vmatpush1.bf16.msra.mxu0 0
  %1212 = vmatprep.subr.bf16.mxu0 0
  %1213 = vmatpush1.bf16.msra.mxu0 %v1196
  %1214 = vmatprep.subr.bf16.mxu0 0
  %1215 = vmatpush2.bf16.msra.mxu0 0
  %1216 = vmatprep.subr.bf16.mxu0 0
  %1217 = vmatpush2.bf16.msra.mxu0 0
  %1218 = vmatprep.subr.bf16.mxu0 0
  %1219 = vmatpush2.bf16.msra.mxu0 0
  %1220 = vmatprep.subr.bf16.mxu0 0
  %1221 = vmatpush2.bf16.msra.mxu0 0
  %1222 = vmatprep.subr.bf16.mxu0 0
  %1223 = vmatpush2.bf16.msra.mxu0 0
  %1224 = vmatprep.subr.bf16.mxu0 0
  %1225 = vmatpush2.bf16.msra.mxu0 0
  %1226 = vmatprep.subr.bf16.mxu0 0
  %1227 = vmatpush2.bf16.msra.mxu0 0
  %1228 = vmatprep.subr.bf16.mxu0 0
  %1229 = vmatpush2.bf16.msra.mxu0 0
  %1230 = vmatprep.mubr.bf16.mxu0 0
  %1231 = vmatmul.mubr.bf16.gmra.mxu0 %v1186
  %v1232 = vpop.f32.mrf.mxu0
  %v1233 = vadd.f32 0.0, %v1232
  %v1234 = vpop.f32.mrf.mxu0
  %v1235 = vpop.f32.mrf.mxu0
  %v1236 = vadd.f32 0.0, %v1235
  %v1237 = vpop.f32.mrf.mxu0
  %1238 = vmatprep.mubr.bf16.mxu0 0
  %1239 = vmatmul.mubr.bf16.gmra.mxu0 %v1189
  %v1240 = vpop.f32.mrf.mxu0
  %v1241 = vadd.f32 0.0, %v1240
  %v1242 = vpop.f32.mrf.mxu0
  %v1243 = vpop.f32.mrf.mxu0
  %v1244 = vadd.f32 0.0, %v1243
  %v1245 = vpop.f32.mrf.mxu0
  %1246 = vdwg.mxu0
  %v1248 = vsel %vm570, %v948, 0
  %v1251 = vsel %vm570, %v949, 0
  %1253 = vmatprep.subr.bf16.mxu0 0
  %1254 = vmatpush1.bf16.msra.mxu0 0
  %1255 = vmatprep.subr.bf16.mxu0 0
  %1256 = vmatpush1.bf16.msra.mxu0 0
  %1257 = vmatprep.subr.bf16.mxu0 0
  %1258 = vmatpush1.bf16.msra.mxu0 0
  %1259 = vmatprep.subr.bf16.mxu0 0
  %1260 = vmatpush1.bf16.msra.mxu0 0
  %1261 = vmatprep.subr.bf16.mxu0 0
  %1262 = vmatpush1.bf16.msra.mxu0 0
  %1263 = vmatprep.subr.bf16.mxu0 0
  %1264 = vmatpush1.bf16.msra.mxu0 0
  %1265 = vmatprep.subr.bf16.mxu0 0
  %1266 = vmatpush1.bf16.msra.mxu0 %v951
  %1267 = vmatprep.subr.bf16.mxu0 0
  %1268 = vmatpush1.bf16.msra.mxu0 %v950
  %1269 = vmatprep.subr.bf16.mxu0 0
  %1270 = vmatpush2.bf16.msra.mxu0 0
  %1271 = vmatprep.subr.bf16.mxu0 0
  %1272 = vmatpush2.bf16.msra.mxu0 0
  %1273 = vmatprep.subr.bf16.mxu0 0
  %1274 = vmatpush2.bf16.msra.mxu0 0
  %1275 = vmatprep.subr.bf16.mxu0 0
  %1276 = vmatpush2.bf16.msra.mxu0 0
  %1277 = vmatprep.subr.bf16.mxu0 0
  %1278 = vmatpush2.bf16.msra.mxu0 0
  %1279 = vmatprep.subr.bf16.mxu0 0
  %1280 = vmatpush2.bf16.msra.mxu0 0
  %1281 = vmatprep.subr.bf16.mxu0 0
  %1282 = vmatpush2.bf16.msra.mxu0 0
  %1283 = vmatprep.subr.bf16.mxu0 0
  %1284 = vmatpush2.bf16.msra.mxu0 0
  %1285 = vmatprep.mubr.bf16.mxu0 0
  %1286 = vmatmul.mubr.bf16.gmra.mxu0 %v1248
  %v1287 = vpop.f32.mrf.mxu0
  %v1288 = vadd.f32 %v1233, %v1287
  %v1289 = vpop.f32.mrf.mxu0
  %v1290 = vpop.f32.mrf.mxu0
  %v1291 = vadd.f32 %v1236, %v1290
  %v1292 = vpop.f32.mrf.mxu0
  %1293 = vmatprep.mubr.bf16.mxu0 0
  %1294 = vmatmul.mubr.bf16.gmra.mxu0 %v1251
  %v1295 = vpop.f32.mrf.mxu0
  %v1296 = vadd.f32 %v1241, %v1295
  %v1297 = vpop.f32.mrf.mxu0
  %v1298 = vpop.f32.mrf.mxu0
  %v1299 = vadd.f32 %v1244, %v1298
  %v1300 = vpop.f32.mrf.mxu0
  %1301 = vdwg.mxu0
  %v1302 = vpack.c.bf16 %v1291, %v1288
  %v1303 = vpack.c.bf16 %v1299, %v1296
  %v1304 = vld [vmem:[%s13] sm:$0xf]
  %v1305 = vld [vmem:[%s13 + $0x4] sm:$0xf]
  %v1306 = vld [vmem:[%s13 + $0x8] sm:$0xf]
  %v1307 = vld [vmem:[%s13 + $0xc] sm:$0xf]
  %v1312 = vunpack.c.l.b16 %v1304
  %v1313 = vunpack.c.l.b16 %v1305
  %v1314 = vunpack.c.l.b16 %v1306
  %v1315 = vunpack.c.l.b16 %v1307
  %v1316 = vpack.c.b16 %v1313, %v1312
  %v1317 = vpack.c.b16 %v1315, %v1314
  %v1321 = vsel %vm570, %v1302, 0
  %v1324 = vsel %vm570, %v1303, 0
  %1326 = vmatprep.subr.bf16.mxu0 0
  %1327 = vmatpush1.bf16.msra.mxu0 0
  %1328 = vmatprep.subr.bf16.mxu0 0
  %1329 = vmatpush1.bf16.msra.mxu0 0
  %1330 = vmatprep.subr.bf16.mxu0 0
  %1331 = vmatpush1.bf16.msra.mxu0 0
  %1332 = vmatprep.subr.bf16.mxu0 0
  %1333 = vmatpush1.bf16.msra.mxu0 0
  %1334 = vmatprep.subr.bf16.mxu0 0
  %1335 = vmatpush1.bf16.msra.mxu0 0
  %1336 = vmatprep.subr.bf16.mxu0 0
  %1337 = vmatpush1.bf16.msra.mxu0 0
  %1338 = vmatprep.subr.bf16.mxu0 0
  %1339 = vmatpush1.bf16.msra.mxu0 %v1317
  %1340 = vmatprep.subr.bf16.mxu0 0
  %1341 = vmatpush1.bf16.msra.mxu0 %v1316
  %1342 = vmatprep.subr.bf16.mxu0 0
  %1343 = vmatpush2.bf16.msra.mxu0 0
  %1344 = vmatprep.subr.bf16.mxu0 0
  %1345 = vmatpush2.bf16.msra.mxu0 0
  %1346 = vmatprep.subr.bf16.mxu0 0
  %1347 = vmatpush2.bf16.msra.mxu0 0
  %1348 = vmatprep.subr.bf16.mxu0 0
  %1349 = vmatpush2.bf16.msra.mxu0 0
  %1350 = vmatprep.subr.bf16.mxu0 0
  %1351 = vmatpush2.bf16.msra.mxu0 0
  %1352 = vmatprep.subr.bf16.mxu0 0
  %1353 = vmatpush2.bf16.msra.mxu0 0
  %1354 = vmatprep.subr.bf16.mxu0 0
  %1355 = vmatpush2.bf16.msra.mxu0 0
  %1356 = vmatprep.subr.bf16.mxu0 0
  %1357 = vmatpush2.bf16.msra.mxu0 0
  %1358 = vmatprep.mubr.bf16.mxu0 0
  %1359 = vmatmul.mubr.bf16.gmra.mxu0 %v1321
  %v1360 = vpop.f32.mrf.mxu0
  %v1361 = vadd.f32 0.0, %v1360
  %v1362 = vpop.f32.mrf.mxu0
  %v1363 = vpop.f32.mrf.mxu0
  %v1364 = vadd.f32 0.0, %v1363
  %v1365 = vpop.f32.mrf.mxu0
  %1366 = vmatprep.mubr.bf16.mxu0 0
  %1367 = vmatmul.mubr.bf16.gmra.mxu0 %v1324
  %v1368 = vpop.f32.mrf.mxu0
  %v1369 = vadd.f32 0.0, %v1368
  %v1370 = vpop.f32.mrf.mxu0
  %v1371 = vpop.f32.mrf.mxu0
  %v1372 = vadd.f32 0.0, %v1371
  %v1373 = vpop.f32.mrf.mxu0
  %1374 = vdwg.mxu0
  %v1375 = vadd.f32 %v285, %v1361
  %v1376 = vadd.f32 %v285, %v1364
  %v1377 = vadd.f32 %v285, %v1369
  %v1378 = vadd.f32 %v285, %v1372
  %s1379 = scalar_lea.vmem %s7, 32
  %v1380 = vld [vmem:[%s1379] sm:$0xf]
  %v1381 = vld [vmem:[%s1379 + $0x4] sm:$0xf]
  %v1382 = vld [vmem:[%s1379 + $0x8] sm:$0xf]
  %v1383 = vld [vmem:[%s1379 + $0xc] sm:$0xf]
  %v1384 = vld [vmem:[%s1379 + $0x10] sm:$0xf]
  %v1385 = vld [vmem:[%s1379 + $0x14] sm:$0xf]
  %v1386 = vld [vmem:[%s1379 + $0x18] sm:$0xf]
  %v1387 = vld [vmem:[%s1379 + $0x1c] sm:$0xf]
  %s1388 = scalar_lea.vmem %s8, 1
  %v1389 = vld [vmem:[%s1388] sm:$0x1]
  %v1391 = vlaneseq
  %v1392 = vshrl.u32 %v1391, 7
  %v1393 = vsub.s32 0, %v1392
  %v1394 = vrot.slane %v1389, %v1393
  %v1404 = vunpack.c.l.b16 %v1380
  %v1405 = vunpack.c.l.b16 %v1381
  %v1406 = vunpack.c.l.b16 %v1382
  %v1407 = vunpack.c.l.b16 %v1383
  %v1408 = vunpack.c.l.b16 %v1384
  %v1409 = vunpack.c.l.b16 %v1385
  %v1410 = vunpack.c.l.b16 %v1386
  %v1411 = vunpack.c.l.b16 %v1387
  %v1412 = vpack.c.b16 %v1405, %v1404
  %v1413 = vpack.c.b16 %v1407, %v1406
  %v1414 = vpack.c.b16 %v1409, %v1408
  %v1415 = vpack.c.b16 %v1411, %v1410
  %1420 = vmatprep.subr.bf16.mxu0 0
  %1421 = vmatpush1.bf16.msra.mxu0 0
  %1422 = vmatprep.subr.bf16.mxu0 0
  %1423 = vmatpush1.bf16.msra.mxu0 0
  %1424 = vmatprep.subr.bf16.mxu0 0
  %1425 = vmatpush1.bf16.msra.mxu0 0
  %1426 = vmatprep.subr.bf16.mxu0 0
  %1427 = vmatpush1.bf16.msra.mxu0 0
  %1428 = vmatprep.subr.bf16.mxu0 0
  %1429 = vmatpush1.bf16.msra.mxu0 %v1415
  %1430 = vmatprep.subr.bf16.mxu0 0
  %1431 = vmatpush1.bf16.msra.mxu0 %v1414
  %1432 = vmatprep.subr.bf16.mxu0 0
  %1433 = vmatpush1.bf16.msra.mxu0 %v1413
  %1434 = vmatprep.subr.bf16.mxu0 0
  %1435 = vmatpush1.bf16.msra.mxu0 %v1412
  %1436 = vmatprep.subr.bf16.mxu0 0
  %1437 = vmatpush2.bf16.msra.mxu0 0
  %1438 = vmatprep.subr.bf16.mxu0 0
  %1439 = vmatpush2.bf16.msra.mxu0 0
  %1440 = vmatprep.subr.bf16.mxu0 0
  %1441 = vmatpush2.bf16.msra.mxu0 0
  %1442 = vmatprep.subr.bf16.mxu0 0
  %1443 = vmatpush2.bf16.msra.mxu0 0
  %1444 = vmatprep.subr.bf16.mxu0 0
  %1445 = vmatpush2.bf16.msra.mxu0 0
  %1446 = vmatprep.subr.bf16.mxu0 0
  %1447 = vmatpush2.bf16.msra.mxu0 0
  %1448 = vmatprep.subr.bf16.mxu0 0
  %1449 = vmatpush2.bf16.msra.mxu0 0
  %1450 = vmatprep.subr.bf16.mxu0 0
  %1451 = vmatpush2.bf16.msra.mxu0 0
  %1452 = vmatprep.mubr.bf16.mxu0 0
  %1453 = vmatmul.mubr.bf16.gmra.mxu0 %v327
  %v1454 = vpop.f32.mrf.mxu0
  %v1455 = vadd.f32 %v1394, %v1454
  %v1456 = vpop.f32.mrf.mxu0
  %v1457 = vpop.f32.mrf.mxu0
  %v1458 = vadd.f32 %v1394, %v1457
  %v1459 = vpop.f32.mrf.mxu0
  %1460 = vmatprep.mubr.bf16.mxu0 0
  %1461 = vmatmul.mubr.bf16.gmra.mxu0 %v330
  %v1462 = vpop.f32.mrf.mxu0
  %v1463 = vadd.f32 %v1394, %v1462
  %v1464 = vpop.f32.mrf.mxu0
  %v1465 = vpop.f32.mrf.mxu0
  %v1466 = vadd.f32 %v1394, %v1465
  %v1467 = vpop.f32.mrf.mxu0
  %1468 = vdwg.mxu0
  %v1469 = vmul.f32 %v1455, 0.17677669
  %v1470 = vmul.f32 %v1458, 0.17677669
  %v1471 = vmul.f32 %v1463, 0.17677669
  %v1472 = vmul.f32 %v1466, 0.17677669
  %s1473 = scalar_lea.vmem %s9, 32
  %v1474 = vld [vmem:[%s1473] sm:$0xf]
  %v1475 = vld [vmem:[%s1473 + $0x4] sm:$0xf]
  %v1476 = vld [vmem:[%s1473 + $0x8] sm:$0xf]
  %v1477 = vld [vmem:[%s1473 + $0xc] sm:$0xf]
  %v1478 = vld [vmem:[%s1473 + $0x10] sm:$0xf]
  %v1479 = vld [vmem:[%s1473 + $0x14] sm:$0xf]
  %v1480 = vld [vmem:[%s1473 + $0x18] sm:$0xf]
  %v1481 = vld [vmem:[%s1473 + $0x1c] sm:$0xf]
  %s1482 = scalar_lea.vmem %s10, 1
  %v1483 = vld [vmem:[%s1482] sm:$0x1]
  %v1485 = vlaneseq
  %v1486 = vshrl.u32 %v1485, 7
  %v1487 = vsub.s32 0, %v1486
  %v1488 = vrot.slane %v1483, %v1487
  %v1498 = vunpack.c.l.b16 %v1474
  %v1499 = vunpack.c.l.b16 %v1475
  %v1500 = vunpack.c.l.b16 %v1476
  %v1501 = vunpack.c.l.b16 %v1477
  %v1502 = vunpack.c.l.b16 %v1478
  %v1503 = vunpack.c.l.b16 %v1479
  %v1504 = vunpack.c.l.b16 %v1480
  %v1505 = vunpack.c.l.b16 %v1481
  %v1506 = vpack.c.b16 %v1499, %v1498
  %v1507 = vpack.c.b16 %v1501, %v1500
  %v1508 = vpack.c.b16 %v1503, %v1502
  %v1509 = vpack.c.b16 %v1505, %v1504
  %1514 = vmatprep.subr.bf16.mxu0 0
  %1515 = vmatpush1.bf16.msra.mxu0 0
  %1516 = vmatprep.subr.bf16.mxu0 0
  %1517 = vmatpush1.bf16.msra.mxu0 0
  %1518 = vmatprep.subr.bf16.mxu0 0
  %1519 = vmatpush1.bf16.msra.mxu0 0
  %1520 = vmatprep.subr.bf16.mxu0 0
  %1521 = vmatpush1.bf16.msra.mxu0 0
  %1522 = vmatprep.subr.bf16.mxu0 0
  %1523 = vmatpush1.bf16.msra.mxu0 %v1509
  %1524 = vmatprep.subr.bf16.mxu0 0
  %1525 = vmatpush1.bf16.msra.mxu0 %v1508
  %1526 = vmatprep.subr.bf16.mxu0 0
  %1527 = vmatpush1.bf16.msra.mxu0 %v1507
  %1528 = vmatprep.subr.bf16.mxu0 0
  %1529 = vmatpush1.bf16.msra.mxu0 %v1506
  %1530 = vmatprep.subr.bf16.mxu0 0
  %1531 = vmatpush2.bf16.msra.mxu0 0
  %1532 = vmatprep.subr.bf16.mxu0 0
  %1533 = vmatpush2.bf16.msra.mxu0 0
  %1534 = vmatprep.subr.bf16.mxu0 0
  %1535 = vmatpush2.bf16.msra.mxu0 0
  %1536 = vmatprep.subr.bf16.mxu0 0
  %1537 = vmatpush2.bf16.msra.mxu0 0
  %1538 = vmatprep.subr.bf16.mxu0 0
  %1539 = vmatpush2.bf16.msra.mxu0 0
  %1540 = vmatprep.subr.bf16.mxu0 0
  %1541 = vmatpush2.bf16.msra.mxu0 0
  %1542 = vmatprep.subr.bf16.mxu0 0
  %1543 = vmatpush2.bf16.msra.mxu0 0
  %1544 = vmatprep.subr.bf16.mxu0 0
  %1545 = vmatpush2.bf16.msra.mxu0 0
  %1546 = vmatprep.mubr.bf16.mxu0 0
  %1547 = vmatmul.mubr.bf16.gmra.mxu0 %v327
  %v1548 = vpop.f32.mrf.mxu0
  %v1549 = vadd.f32 %v1488, %v1548
  %v1550 = vpop.f32.mrf.mxu0
  %v1551 = vpop.f32.mrf.mxu0
  %v1552 = vadd.f32 %v1488, %v1551
  %v1553 = vpop.f32.mrf.mxu0
  %1554 = vmatprep.mubr.bf16.mxu0 0
  %1555 = vmatmul.mubr.bf16.gmra.mxu0 %v330
  %v1556 = vpop.f32.mrf.mxu0
  %v1557 = vadd.f32 %v1488, %v1556
  %v1558 = vpop.f32.mrf.mxu0
  %v1559 = vpop.f32.mrf.mxu0
  %v1560 = vadd.f32 %v1488, %v1559
  %v1561 = vpop.f32.mrf.mxu0
  %1562 = vdwg.mxu0
  %s1563 = scalar_lea.vmem %s11, 32
  %v1564 = vld [vmem:[%s1563] sm:$0xf]
  %v1565 = vld [vmem:[%s1563 + $0x4] sm:$0xf]
  %v1566 = vld [vmem:[%s1563 + $0x8] sm:$0xf]
  %v1567 = vld [vmem:[%s1563 + $0xc] sm:$0xf]
  %v1568 = vld [vmem:[%s1563 + $0x10] sm:$0xf]
  %v1569 = vld [vmem:[%s1563 + $0x14] sm:$0xf]
  %v1570 = vld [vmem:[%s1563 + $0x18] sm:$0xf]
  %v1571 = vld [vmem:[%s1563 + $0x1c] sm:$0xf]
  %s1572 = scalar_lea.vmem %s12, 1
  %v1573 = vld [vmem:[%s1572] sm:$0x1]
  %v1575 = vlaneseq
  %v1576 = vshrl.u32 %v1575, 7
  %v1577 = vsub.s32 0, %v1576
  %v1578 = vrot.slane %v1573, %v1577
  %v1588 = vunpack.c.l.b16 %v1564
  %v1589 = vunpack.c.l.b16 %v1565
  %v1590 = vunpack.c.l.b16 %v1566
  %v1591 = vunpack.c.l.b16 %v1567
  %v1592 = vunpack.c.l.b16 %v1568
  %v1593 = vunpack.c.l.b16 %v1569
  %v1594 = vunpack.c.l.b16 %v1570
  %v1595 = vunpack.c.l.b16 %v1571
  %v1596 = vpack.c.b16 %v1589, %v1588
  %v1597 = vpack.c.b16 %v1591, %v1590
  %v1598 = vpack.c.b16 %v1593, %v1592
  %v1599 = vpack.c.b16 %v1595, %v1594
  %1604 = vmatprep.subr.bf16.mxu0 0
  %1605 = vmatpush1.bf16.msra.mxu0 0
  %1606 = vmatprep.subr.bf16.mxu0 0
  %1607 = vmatpush1.bf16.msra.mxu0 0
  %1608 = vmatprep.subr.bf16.mxu0 0
  %1609 = vmatpush1.bf16.msra.mxu0 0
  %1610 = vmatprep.subr.bf16.mxu0 0
  %1611 = vmatpush1.bf16.msra.mxu0 0
  %1612 = vmatprep.subr.bf16.mxu0 0
  %1613 = vmatpush1.bf16.msra.mxu0 %v1599
  %1614 = vmatprep.subr.bf16.mxu0 0
  %1615 = vmatpush1.bf16.msra.mxu0 %v1598
  %1616 = vmatprep.subr.bf16.mxu0 0
  %1617 = vmatpush1.bf16.msra.mxu0 %v1597
  %1618 = vmatprep.subr.bf16.mxu0 0
  %1619 = vmatpush1.bf16.msra.mxu0 %v1596
  %1620 = vmatprep.subr.bf16.mxu0 0
  %1621 = vmatpush2.bf16.msra.mxu0 0
  %1622 = vmatprep.subr.bf16.mxu0 0
  %1623 = vmatpush2.bf16.msra.mxu0 0
  %1624 = vmatprep.subr.bf16.mxu0 0
  %1625 = vmatpush2.bf16.msra.mxu0 0
  %1626 = vmatprep.subr.bf16.mxu0 0
  %1627 = vmatpush2.bf16.msra.mxu0 0
  %1628 = vmatprep.subr.bf16.mxu0 0
  %1629 = vmatpush2.bf16.msra.mxu0 0
  %1630 = vmatprep.subr.bf16.mxu0 0
  %1631 = vmatpush2.bf16.msra.mxu0 0
  %1632 = vmatprep.subr.bf16.mxu0 0
  %1633 = vmatpush2.bf16.msra.mxu0 0
  %1634 = vmatprep.subr.bf16.mxu0 0
  %1635 = vmatpush2.bf16.msra.mxu0 0
  %1636 = vmatprep.mubr.bf16.mxu0 0
  %1637 = vmatmul.mubr.bf16.gmra.mxu0 %v327
  %v1638 = vpop.f32.mrf.mxu0
  %v1639 = vadd.f32 %v1578, %v1638
  %v1640 = vpop.f32.mrf.mxu0
  %v1641 = vpop.f32.mrf.mxu0
  %v1642 = vadd.f32 %v1578, %v1641
  %v1643 = vpop.f32.mrf.mxu0
  %1644 = vmatprep.mubr.bf16.mxu0 0
  %1645 = vmatmul.mubr.bf16.gmra.mxu0 %v330
  %v1646 = vpop.f32.mrf.mxu0
  %v1647 = vadd.f32 %v1578, %v1646
  %v1648 = vpop.f32.mrf.mxu0
  %v1649 = vpop.f32.mrf.mxu0
  %v1650 = vadd.f32 %v1578, %v1649
  %v1651 = vpop.f32.mrf.mxu0
  %1652 = vdwg.mxu0
  %v1653 = vpack.c.bf16 %v1470, %v1469
  %v1654 = vpack.c.bf16 %v1472, %v1471
  %v1655 = vpack.c.bf16 %v1552, %v1549
  %v1656 = vpack.c.bf16 %v1560, %v1557
  %v1658 = vsel %vm570, %v1653, 0
  %v1661 = vsel %vm570, %v1654, 0
  %1663 = vmatprep.subr.bf16.mxu0 0
  %1664 = vmatpush1.bf16.xpose.msra.mxu0 0
  %1665 = vmatprep.subr.bf16.mxu0 0
  %1666 = vmatpush1.bf16.xpose.msra.mxu0 0
  %1667 = vmatprep.subr.bf16.mxu0 0
  %1668 = vmatpush1.bf16.xpose.msra.mxu0 0
  %1669 = vmatprep.subr.bf16.mxu0 0
  %1670 = vmatpush1.bf16.xpose.msra.mxu0 0
  %1671 = vmatprep.subr.bf16.mxu0 0
  %1672 = vmatpush1.bf16.xpose.msra.mxu0 0
  %1673 = vmatprep.subr.bf16.mxu0 0
  %1674 = vmatpush1.bf16.xpose.msra.mxu0 0
  %1675 = vmatprep.subr.bf16.mxu0 0
  %1676 = vmatpush1.bf16.xpose.msra.mxu0 0
  %1677 = vmatprep.subr.bf16.mxu0 0
  %1678 = vmatpush1.bf16.xpose.msra.mxu0 %v578
  %1679 = vmatprep.subr.bf16.mxu0 0
  %1680 = vmatpush2.bf16.xpose.msra.mxu0 0
  %1681 = vmatprep.subr.bf16.mxu0 0
  %1682 = vmatpush2.bf16.xpose.msra.mxu0 0
  %1683 = vmatprep.subr.bf16.mxu0 0
  %1684 = vmatpush2.bf16.xpose.msra.mxu0 0
  %1685 = vmatprep.subr.bf16.mxu0 0
  %1686 = vmatpush2.bf16.xpose.msra.mxu0 0
  %1687 = vmatprep.subr.bf16.mxu0 0
  %1688 = vmatpush2.bf16.xpose.msra.mxu0 0
  %1689 = vmatprep.subr.bf16.mxu0 0
  %1690 = vmatpush2.bf16.xpose.msra.mxu0 0
  %1691 = vmatprep.subr.bf16.mxu0 0
  %1692 = vmatpush2.bf16.xpose.msra.mxu0 0
  %1693 = vmatprep.subr.bf16.mxu0 0
  %1694 = vmatpush2.bf16.xpose.msra.mxu0 0
  %1695 = vmatprep.mubr.bf16.mxu0 0
  %1696 = vmatmul.mubr.bf16.gmra.mxu0 %v1658
  %v1697 = vpop.f32.mrf.mxu0
  %v1698 = vadd.f32 0.0, %v1697
  %v1699 = vpop.f32.mrf.mxu0
  %v1700 = vpop.f32.mrf.mxu0
  %v1701 = vadd.f32 0.0, %v1700
  %v1702 = vpop.f32.mrf.mxu0
  %1703 = vmatprep.mubr.bf16.mxu0 0
  %1704 = vmatmul.mubr.bf16.gmra.mxu0 %v1661
  %v1705 = vpop.f32.mrf.mxu0
  %v1706 = vadd.f32 0.0, %v1705
  %v1707 = vpop.f32.mrf.mxu0
  %v1708 = vpop.f32.mrf.mxu0
  %v1709 = vadd.f32 0.0, %v1708
  %v1710 = vpop.f32.mrf.mxu0
  %1711 = vdwg.mxu0
  %1713 = vset.pattern.permute.xlu0 0
  %1714 = vperm.xlu0 %1713, %v1698
  %v1715 = vpop.permute.xlu0 %1714
  %1718 = vset.pattern.permute.xlu0 0
  %1719 = vperm.xlu0 %1718, %v1701
  %v1720 = vpop.permute.xlu0 %1719
  %1723 = vset.pattern.permute.xlu0 0
  %1724 = vperm.xlu0 %1723, %v1706
  %v1725 = vpop.permute.xlu0 %1724
  %1728 = vset.pattern.permute.xlu0 0
  %1729 = vperm.xlu0 %1728, %v1709
  %v1730 = vpop.permute.xlu0 %1729
  %v1732 = vsel %vm170, %v1715, 0.0
  %v1733 = vsel %vm171, %v1720, 0.0
  %v1734 = vsel %vm172, %v1725, 0.0
  %v1735 = vsel %vm173, %v1730, 0.0
  %v1737 = vsel %vm570, %v1655, 0
  %v1740 = vsel %vm570, %v1656, 0
  %1742 = vmatprep.subr.bf16.mxu0 0
  %1743 = vmatpush1.bf16.xpose.msra.mxu0 0
  %1744 = vmatprep.subr.bf16.mxu0 0
  %1745 = vmatpush1.bf16.xpose.msra.mxu0 0
  %1746 = vmatprep.subr.bf16.mxu0 0
  %1747 = vmatpush1.bf16.xpose.msra.mxu0 0
  %1748 = vmatprep.subr.bf16.mxu0 0
  %1749 = vmatpush1.bf16.xpose.msra.mxu0 0
  %1750 = vmatprep.subr.bf16.mxu0 0
  %1751 = vmatpush1.bf16.xpose.msra.mxu0 0
  %1752 = vmatprep.subr.bf16.mxu0 0
  %1753 = vmatpush1.bf16.xpose.msra.mxu0 0
  %1754 = vmatprep.subr.bf16.mxu0 0
  %1755 = vmatpush1.bf16.xpose.msra.mxu0 %v1740
  %1756 = vmatprep.subr.bf16.mxu0 0
  %1757 = vmatpush1.bf16.xpose.msra.mxu0 %v1737
  %1758 = vmatprep.subr.bf16.mxu0 0
  %1759 = vmatpush2.bf16.xpose.msra.mxu0 0
  %1760 = vmatprep.subr.bf16.mxu0 0
  %1761 = vmatpush2.bf16.xpose.msra.mxu0 0
  %1762 = vmatprep.subr.bf16.mxu0 0
  %1763 = vmatpush2.bf16.xpose.msra.mxu0 0
  %1764 = vmatprep.subr.bf16.mxu0 0
  %1765 = vmatpush2.bf16.xpose.msra.mxu0 0
  %1766 = vmatprep.subr.bf16.mxu0 0
  %1767 = vmatpush2.bf16.xpose.msra.mxu0 0
  %1768 = vmatprep.subr.bf16.mxu0 0
  %1769 = vmatpush2.bf16.xpose.msra.mxu0 0
  %1770 = vmatprep.subr.bf16.mxu0 0
  %1771 = vmatpush2.bf16.xpose.msra.mxu0 0
  %1772 = vmatprep.subr.bf16.mxu0 0
  %1773 = vmatpush2.bf16.xpose.msra.mxu0 0
  %1774 = vmatprep.mubr.bf16.mxu0 0
  %1775 = vmatmul.mubr.bf16.gmra.mxu0 %v1658
  %v1776 = vpop.f32.mrf.mxu0
  %v1777 = vadd.f32 %v1732, %v1776
  %v1778 = vpop.f32.mrf.mxu0
  %v1779 = vpop.f32.mrf.mxu0
  %v1780 = vadd.f32 %v1733, %v1779
  %v1781 = vpop.f32.mrf.mxu0
  %1782 = vmatprep.mubr.bf16.mxu0 0
  %1783 = vmatmul.mubr.bf16.gmra.mxu0 %v1661
  %v1784 = vpop.f32.mrf.mxu0
  %v1785 = vadd.f32 %v1734, %v1784
  %v1786 = vpop.f32.mrf.mxu0
  %v1787 = vpop.f32.mrf.mxu0
  %v1788 = vadd.f32 %v1735, %v1787
  %v1789 = vpop.f32.mrf.mxu0
  %1790 = vdwg.mxu0
  %1791 = vset.pattern.permute.xlu0 1
  %1792 = vperm.xlu0 %1791, %v1698
  %v1793 = vpop.permute.xlu0 %1792
  %1795 = vset.pattern.permute.xlu0 1
  %1796 = vperm.xlu0 %1795, %v1701
  %v1797 = vpop.permute.xlu0 %1796
  %1799 = vset.pattern.permute.xlu0 1
  %1800 = vperm.xlu0 %1799, %v1706
  %v1801 = vpop.permute.xlu0 %1800
  %1803 = vset.pattern.permute.xlu0 1
  %1804 = vperm.xlu0 %1803, %v1709
  %v1805 = vpop.permute.xlu0 %1804
  %v1807 = vsel %vm178, %v1793, 0.0
  %v1808 = vsel %vm179, %v1797, 0.0
  %v1809 = vsel %vm180, %v1801, 0.0
  %v1810 = vsel %vm181, %v1805, 0.0
  %v1811 = vadd.f32 %v1777, %v1807
  %v1812 = vadd.f32 %v1780, %v1808
  %v1813 = vadd.f32 %v1785, %v1809
  %v1814 = vadd.f32 %v1788, %v1810
  %1815 = vset.pattern.permute.xlu0 2
  %1816 = vperm.xlu0 %1815, %v1698
  %v1817 = vpop.permute.xlu0 %1816
  %1819 = vset.pattern.permute.xlu0 2
  %1820 = vperm.xlu0 %1819, %v1701
  %v1821 = vpop.permute.xlu0 %1820
  %1823 = vset.pattern.permute.xlu0 2
  %1824 = vperm.xlu0 %1823, %v1706
  %v1825 = vpop.permute.xlu0 %1824
  %1827 = vset.pattern.permute.xlu0 2
  %1828 = vperm.xlu0 %1827, %v1709
  %v1829 = vpop.permute.xlu0 %1828
  %v1831 = vsel %vm186, %v1817, 0.0
  %v1832 = vsel %vm187, %v1821, 0.0
  %v1833 = vsel %vm188, %v1825, 0.0
  %v1834 = vsel %vm189, %v1829, 0.0
  %v1835 = vadd.f32 %v1811, %v1831
  %v1836 = vadd.f32 %v1812, %v1832
  %v1837 = vadd.f32 %v1813, %v1833
  %v1838 = vadd.f32 %v1814, %v1834
  %1839 = vset.pattern.permute.xlu0 3
  %1840 = vperm.xlu0 %1839, %v1698
  %v1841 = vpop.permute.xlu0 %1840
  %1843 = vset.pattern.permute.xlu0 3
  %1844 = vperm.xlu0 %1843, %v1701
  %v1845 = vpop.permute.xlu0 %1844
  %1847 = vset.pattern.permute.xlu0 3
  %1848 = vperm.xlu0 %1847, %v1706
  %v1849 = vpop.permute.xlu0 %1848
  %1851 = vset.pattern.permute.xlu0 3
  %1852 = vperm.xlu0 %1851, %v1709
  %v1853 = vpop.permute.xlu0 %1852
  %v1855 = vsel %vm194, %v1841, 0.0
  %v1856 = vsel %vm195, %v1845, 0.0
  %v1857 = vsel %vm196, %v1849, 0.0
  %v1858 = vsel %vm197, %v1853, 0.0
  %v1859 = vadd.f32 %v1835, %v1855
  %v1860 = vadd.f32 %v1836, %v1856
  %v1861 = vadd.f32 %v1837, %v1857
  %v1862 = vadd.f32 %v1838, %v1858
  %1863 = vset.pattern.permute.xlu0 4
  %1864 = vperm.xlu0 %1863, %v1698
  %v1865 = vpop.permute.xlu0 %1864
  %1867 = vset.pattern.permute.xlu0 4
  %1868 = vperm.xlu0 %1867, %v1701
  %v1869 = vpop.permute.xlu0 %1868
  %1871 = vset.pattern.permute.xlu0 4
  %1872 = vperm.xlu0 %1871, %v1706
  %v1873 = vpop.permute.xlu0 %1872
  %1875 = vset.pattern.permute.xlu0 4
  %1876 = vperm.xlu0 %1875, %v1709
  %v1877 = vpop.permute.xlu0 %1876
  %v1879 = vsel %vm202, %v1865, 0.0
  %v1880 = vsel %vm203, %v1869, 0.0
  %v1881 = vsel %vm204, %v1873, 0.0
  %v1882 = vsel %vm205, %v1877, 0.0
  %v1883 = vadd.f32 %v1859, %v1879
  %v1884 = vadd.f32 %v1860, %v1880
  %v1885 = vadd.f32 %v1861, %v1881
  %v1886 = vadd.f32 %v1862, %v1882
  %1887 = vset.pattern.permute.xlu0 5
  %1888 = vperm.xlu0 %1887, %v1698
  %v1889 = vpop.permute.xlu0 %1888
  %1891 = vset.pattern.permute.xlu0 5
  %1892 = vperm.xlu0 %1891, %v1701
  %v1893 = vpop.permute.xlu0 %1892
  %1895 = vset.pattern.permute.xlu0 5
  %1896 = vperm.xlu0 %1895, %v1706
  %v1897 = vpop.permute.xlu0 %1896
  %1899 = vset.pattern.permute.xlu0 5
  %1900 = vperm.xlu0 %1899, %v1709
  %v1901 = vpop.permute.xlu0 %1900
  %v1903 = vsel %vm210, %v1889, 0.0
  %v1904 = vsel %vm211, %v1893, 0.0
  %v1905 = vsel %vm212, %v1897, 0.0
  %v1906 = vsel %vm213, %v1901, 0.0
  %v1907 = vadd.f32 %v1883, %v1903
  %v1908 = vadd.f32 %v1884, %v1904
  %v1909 = vadd.f32 %v1885, %v1905
  %v1910 = vadd.f32 %v1886, %v1906
  %1911 = vset.pattern.permute.xlu0 6
  %1912 = vperm.xlu0 %1911, %v1698
  %v1913 = vpop.permute.xlu0 %1912
  %1915 = vset.pattern.permute.xlu0 6
  %1916 = vperm.xlu0 %1915, %v1701
  %v1917 = vpop.permute.xlu0 %1916
  %1919 = vset.pattern.permute.xlu0 6
  %1920 = vperm.xlu0 %1919, %v1706
  %v1921 = vpop.permute.xlu0 %1920
  %1923 = vset.pattern.permute.xlu0 6
  %1924 = vperm.xlu0 %1923, %v1709
  %v1925 = vpop.permute.xlu0 %1924
  %v1927 = vsel %vm218, %v1913, 0.0
  %v1928 = vsel %vm219, %v1917, 0.0
  %v1929 = vsel %vm220, %v1921, 0.0
  %v1930 = vsel %vm221, %v1925, 0.0
  %v1931 = vadd.f32 %v1907, %v1927
  %v1932 = vadd.f32 %v1908, %v1928
  %v1933 = vadd.f32 %v1909, %v1929
  %v1934 = vadd.f32 %v1910, %v1930
  %1935 = vset.pattern.permute.xlu0 7
  %1936 = vperm.xlu0 %1935, %v1698
  %v1937 = vpop.permute.xlu0 %1936
  %1939 = vset.pattern.permute.xlu0 7
  %1940 = vperm.xlu0 %1939, %v1701
  %v1941 = vpop.permute.xlu0 %1940
  %1943 = vset.pattern.permute.xlu0 7
  %1944 = vperm.xlu0 %1943, %v1706
  %v1945 = vpop.permute.xlu0 %1944
  %1947 = vset.pattern.permute.xlu0 7
  %1948 = vperm.xlu0 %1947, %v1709
  %v1949 = vpop.permute.xlu0 %1948
  %v1951 = vsel %vm226, %v1937, 0.0
  %v1952 = vsel %vm227, %v1941, 0.0
  %v1953 = vsel %vm228, %v1945, 0.0
  %v1954 = vsel %vm229, %v1949, 0.0
  %v1955 = vadd.f32 %v1931, %v1951
  %v1956 = vadd.f32 %v1932, %v1952
  %v1957 = vadd.f32 %v1933, %v1953
  %v1958 = vadd.f32 %v1934, %v1954
  %1959 = vset.pattern.permute.xlu0 8
  %1960 = vperm.xlu0 %1959, %v1698
  %v1961 = vpop.permute.xlu0 %1960
  %1963 = vset.pattern.permute.xlu0 8
  %1964 = vperm.xlu0 %1963, %v1701
  %v1965 = vpop.permute.xlu0 %1964
  %1967 = vset.pattern.permute.xlu0 8
  %1968 = vperm.xlu0 %1967, %v1706
  %v1969 = vpop.permute.xlu0 %1968
  %1971 = vset.pattern.permute.xlu0 8
  %1972 = vperm.xlu0 %1971, %v1709
  %v1973 = vpop.permute.xlu0 %1972
  %v1975 = vsel %vm234, %v1961, 0.0
  %v1976 = vsel %vm235, %v1965, 0.0
  %v1977 = vsel %vm236, %v1969, 0.0
  %v1978 = vsel %vm237, %v1973, 0.0
  %v1979 = vadd.f32 %v1955, %v1975
  %v1980 = vadd.f32 %v1956, %v1976
  %v1981 = vadd.f32 %v1957, %v1977
  %v1982 = vadd.f32 %v1958, %v1978
  %v1983 = vsel %vm162, %v1979, -10000.0
  %v1984 = vsel %vm163, %v1980, -10000.0
  %v1985 = vsel %vm164, %v1981, -10000.0
  %v1986 = vsel %vm165, %v1982, -10000.0
  %v1987 = vsel %vm570, %v1983, -inf
  %1988 = vmax.xlane.f32.xlu0 %v1987
  %v1989 = vpop.xlane.xlu0 %1988
  %v1990 = vsel %vm570, %v1984, -inf
  %1991 = vmax.xlane.f32.xlu0 %v1990
  %v1992 = vpop.xlane.xlu0 %1991
  %v1993 = vsel %vm570, %v1985, -inf
  %1994 = vmax.xlane.f32.xlu0 %v1993
  %v1995 = vpop.xlane.xlu0 %1994
  %v1996 = vsel %vm570, %v1986, -inf
  %1997 = vmax.xlane.f32.xlu0 %v1996
  %v1998 = vpop.xlane.xlu0 %1997
  %v1999 = vsub.f32 %v1983, %v1989
  %v2000 = vsub.f32 %v1984, %v1992
  %v2001 = vsub.f32 %v1985, %v1995
  %v2002 = vsub.f32 %v1986, %v1998
  %v2003 = vmul.f32 %v1999, 1.442695
  %v2004 = vpow.pop %v2003
  %v2005 = vmul.f32 %v2000, 1.442695
  %v2006 = vpow.pop %v2005
  %v2007 = vmul.f32 %v2001, 1.442695
  %v2008 = vpow.pop %v2007
  %v2009 = vmul.f32 %v2002, 1.442695
  %v2010 = vpow.pop %v2009
  %v2011 = vsel %vm570, %v2004, 0.0
  %2012 = vadd.xlane.f32.xlu0 %v2011
  %v2013 = vpop.xlane.xlu0 %2012
  %v2014 = vsel %vm570, %v2006, 0.0
  %2015 = vadd.xlane.f32.xlu0 %v2014
  %v2016 = vpop.xlane.xlu0 %2015
  %v2017 = vsel %vm570, %v2008, 0.0
  %2018 = vadd.xlane.f32.xlu0 %v2017
  %v2019 = vpop.xlane.xlu0 %2018
  %v2020 = vsel %vm570, %v2010, 0.0
  %2021 = vadd.xlane.f32.xlu0 %v2020
  %v2022 = vpop.xlane.xlu0 %2021
  %v2023 = vrcp.pop %v2013
  %v2024 = vrcp.pop %v2016
  %v2025 = vrcp.pop %v2019
  %v2026 = vrcp.pop %v2022
  %v2027 = vmul.f32 %v2004, %v2023
  %v2028 = vmul.f32 %v2006, %v2024
  %v2029 = vmul.f32 %v2008, %v2025
  %v2030 = vmul.f32 %v2010, %v2026
  %v2031 = vpack.c.bf16 %v2028, %v2027
  %v2032 = vpack.c.bf16 %v2030, %v2029
  %v2033 = vpack.c.bf16 %v1642, %v1639
  %v2034 = vpack.c.bf16 %v1650, %v1647
  %v2035 = vsel %vm170, %v2027, 0.0
  %v2036 = vsel %vm171, %v2028, 0.0
  %v2037 = vsel %vm172, %v2029, 0.0
  %v2038 = vsel %vm173, %v2030, 0.0
  %v2039 = vsel %vm570, %v2035, 0.0
  %2040 = vadd.xlane.f32.xlu0 %v2039
  %v2041 = vpop.xlane.xlu0 %2040
  %v2042 = vsel %vm570, %v2036, 0.0
  %2043 = vadd.xlane.f32.xlu0 %v2042
  %v2044 = vpop.xlane.xlu0 %2043
  %v2045 = vsel %vm570, %v2037, 0.0
  %2046 = vadd.xlane.f32.xlu0 %v2045
  %v2047 = vpop.xlane.xlu0 %2046
  %v2048 = vsel %vm570, %v2038, 0.0
  %2049 = vadd.xlane.f32.xlu0 %v2048
  %v2050 = vpop.xlane.xlu0 %2049
  %v2051 = vsel %vm968, %v2041, 0.0
  %v2052 = vsel %vm968, %v2044, 0.0
  %v2053 = vsel %vm968, %v2047, 0.0
  %v2054 = vsel %vm968, %v2050, 0.0
  %v2055 = vadd.f32 %v2051, 0.0
  %v2056 = vadd.f32 %v2052, 0.0
  %v2057 = vadd.f32 %v2053, 0.0
  %v2058 = vadd.f32 %v2054, 0.0
  %v2059 = vsel %vm178, %v2027, 0.0
  %v2060 = vsel %vm179, %v2028, 0.0
  %v2061 = vsel %vm180, %v2029, 0.0
  %v2062 = vsel %vm181, %v2030, 0.0
  %v2063 = vsel %vm570, %v2059, 0.0
  %2064 = vadd.xlane.f32.xlu0 %v2063
  %v2065 = vpop.xlane.xlu0 %2064
  %v2066 = vsel %vm570, %v2060, 0.0
  %2067 = vadd.xlane.f32.xlu0 %v2066
  %v2068 = vpop.xlane.xlu0 %2067
  %v2069 = vsel %vm570, %v2061, 0.0
  %2070 = vadd.xlane.f32.xlu0 %v2069
  %v2071 = vpop.xlane.xlu0 %2070
  %v2072 = vsel %vm570, %v2062, 0.0
  %2073 = vadd.xlane.f32.xlu0 %v2072
  %v2074 = vpop.xlane.xlu0 %2073
  %v2075 = vsel %vm993, %v2065, 0.0
  %v2076 = vsel %vm993, %v2068, 0.0
  %v2077 = vsel %vm993, %v2071, 0.0
  %v2078 = vsel %vm993, %v2074, 0.0
  %v2079 = vadd.f32 %v2055, %v2075
  %v2080 = vadd.f32 %v2056, %v2076
  %v2081 = vadd.f32 %v2057, %v2077
  %v2082 = vadd.f32 %v2058, %v2078
  %v2083 = vsel %vm186, %v2027, 0.0
  %v2084 = vsel %vm187, %v2028, 0.0
  %v2085 = vsel %vm188, %v2029, 0.0
  %v2086 = vsel %vm189, %v2030, 0.0
  %v2087 = vsel %vm570, %v2083, 0.0
  %2088 = vadd.xlane.f32.xlu0 %v2087
  %v2089 = vpop.xlane.xlu0 %2088
  %v2090 = vsel %vm570, %v2084, 0.0
  %2091 = vadd.xlane.f32.xlu0 %v2090
  %v2092 = vpop.xlane.xlu0 %2091
  %v2093 = vsel %vm570, %v2085, 0.0
  %2094 = vadd.xlane.f32.xlu0 %v2093
  %v2095 = vpop.xlane.xlu0 %2094
  %v2096 = vsel %vm570, %v2086, 0.0
  %2097 = vadd.xlane.f32.xlu0 %v2096
  %v2098 = vpop.xlane.xlu0 %2097
  %v2099 = vsel %vm1018, %v2089, 0.0
  %v2100 = vsel %vm1018, %v2092, 0.0
  %v2101 = vsel %vm1018, %v2095, 0.0
  %v2102 = vsel %vm1018, %v2098, 0.0
  %v2103 = vadd.f32 %v2079, %v2099
  %v2104 = vadd.f32 %v2080, %v2100
  %v2105 = vadd.f32 %v2081, %v2101
  %v2106 = vadd.f32 %v2082, %v2102
  %v2107 = vsel %vm194, %v2027, 0.0
  %v2108 = vsel %vm195, %v2028, 0.0
  %v2109 = vsel %vm196, %v2029, 0.0
  %v2110 = vsel %vm197, %v2030, 0.0
  %v2111 = vsel %vm570, %v2107, 0.0
  %2112 = vadd.xlane.f32.xlu0 %v2111
  %v2113 = vpop.xlane.xlu0 %2112
  %v2114 = vsel %vm570, %v2108, 0.0
  %2115 = vadd.xlane.f32.xlu0 %v2114
  %v2116 = vpop.xlane.xlu0 %2115
  %v2117 = vsel %vm570, %v2109, 0.0
  %2118 = vadd.xlane.f32.xlu0 %v2117
  %v2119 = vpop.xlane.xlu0 %2118
  %v2120 = vsel %vm570, %v2110, 0.0
  %2121 = vadd.xlane.f32.xlu0 %v2120
  %v2122 = vpop.xlane.xlu0 %2121
  %v2123 = vsel %vm1043, %v2113, 0.0
  %v2124 = vsel %vm1043, %v2116, 0.0
  %v2125 = vsel %vm1043, %v2119, 0.0
  %v2126 = vsel %vm1043, %v2122, 0.0
  %v2127 = vadd.f32 %v2103, %v2123
  %v2128 = vadd.f32 %v2104, %v2124
  %v2129 = vadd.f32 %v2105, %v2125
  %v2130 = vadd.f32 %v2106, %v2126
  %v2131 = vsel %vm202, %v2027, 0.0
  %v2132 = vsel %vm203, %v2028, 0.0
  %v2133 = vsel %vm204, %v2029, 0.0
  %v2134 = vsel %vm205, %v2030, 0.0
  %v2135 = vsel %vm570, %v2131, 0.0
  %2136 = vadd.xlane.f32.xlu0 %v2135
  %v2137 = vpop.xlane.xlu0 %2136
  %v2138 = vsel %vm570, %v2132, 0.0
  %2139 = vadd.xlane.f32.xlu0 %v2138
  %v2140 = vpop.xlane.xlu0 %2139
  %v2141 = vsel %vm570, %v2133, 0.0
  %2142 = vadd.xlane.f32.xlu0 %v2141
  %v2143 = vpop.xlane.xlu0 %2142
  %v2144 = vsel %vm570, %v2134, 0.0
  %2145 = vadd.xlane.f32.xlu0 %v2144
  %v2146 = vpop.xlane.xlu0 %2145
  %v2147 = vsel %vm1068, %v2137, 0.0
  %v2148 = vsel %vm1068, %v2140, 0.0
  %v2149 = vsel %vm1068, %v2143, 0.0
  %v2150 = vsel %vm1068, %v2146, 0.0
  %v2151 = vadd.f32 %v2127, %v2147
  %v2152 = vadd.f32 %v2128, %v2148
  %v2153 = vadd.f32 %v2129, %v2149
  %v2154 = vadd.f32 %v2130, %v2150
  %v2155 = vsel %vm210, %v2027, 0.0
  %v2156 = vsel %vm211, %v2028, 0.0
  %v2157 = vsel %vm212, %v2029, 0.0
  %v2158 = vsel %vm213, %v2030, 0.0
  %v2159 = vsel %vm570, %v2155, 0.0
  %2160 = vadd.xlane.f32.xlu0 %v2159
  %v2161 = vpop.xlane.xlu0 %2160
  %v2162 = vsel %vm570, %v2156, 0.0
  %2163 = vadd.xlane.f32.xlu0 %v2162
  %v2164 = vpop.xlane.xlu0 %2163
  %v2165 = vsel %vm570, %v2157, 0.0
  %2166 = vadd.xlane.f32.xlu0 %v2165
  %v2167 = vpop.xlane.xlu0 %2166
  %v2168 = vsel %vm570, %v2158, 0.0
  %2169 = vadd.xlane.f32.xlu0 %v2168
  %v2170 = vpop.xlane.xlu0 %2169
  %v2171 = vsel %vm1093, %v2161, 0.0
  %v2172 = vsel %vm1093, %v2164, 0.0
  %v2173 = vsel %vm1093, %v2167, 0.0
  %v2174 = vsel %vm1093, %v2170, 0.0
  %v2175 = vadd.f32 %v2151, %v2171
  %v2176 = vadd.f32 %v2152, %v2172
  %v2177 = vadd.f32 %v2153, %v2173
  %v2178 = vadd.f32 %v2154, %v2174
  %v2179 = vsel %vm218, %v2027, 0.0
  %v2180 = vsel %vm219, %v2028, 0.0
  %v2181 = vsel %vm220, %v2029, 0.0
  %v2182 = vsel %vm221, %v2030, 0.0
  %v2183 = vsel %vm570, %v2179, 0.0
  %2184 = vadd.xlane.f32.xlu0 %v2183
  %v2185 = vpop.xlane.xlu0 %2184
  %v2186 = vsel %vm570, %v2180, 0.0
  %2187 = vadd.xlane.f32.xlu0 %v2186
  %v2188 = vpop.xlane.xlu0 %2187
  %v2189 = vsel %vm570, %v2181, 0.0
  %2190 = vadd.xlane.f32.xlu0 %v2189
  %v2191 = vpop.xlane.xlu0 %2190
  %v2192 = vsel %vm570, %v2182, 0.0
  %2193 = vadd.xlane.f32.xlu0 %v2192
  %v2194 = vpop.xlane.xlu0 %2193
  %v2195 = vsel %vm1118, %v2185, 0.0
  %v2196 = vsel %vm1118, %v2188, 0.0
  %v2197 = vsel %vm1118, %v2191, 0.0
  %v2198 = vsel %vm1118, %v2194, 0.0
  %v2199 = vadd.f32 %v2175, %v2195
  %v2200 = vadd.f32 %v2176, %v2196
  %v2201 = vadd.f32 %v2177, %v2197
  %v2202 = vadd.f32 %v2178, %v2198
  %v2203 = vsel %vm226, %v2027, 0.0
  %v2204 = vsel %vm227, %v2028, 0.0
  %v2205 = vsel %vm228, %v2029, 0.0
  %v2206 = vsel %vm229, %v2030, 0.0
  %v2207 = vsel %vm570, %v2203, 0.0
  %2208 = vadd.xlane.f32.xlu0 %v2207
  %v2209 = vpop.xlane.xlu0 %2208
  %v2210 = vsel %vm570, %v2204, 0.0
  %2211 = vadd.xlane.f32.xlu0 %v2210
  %v2212 = vpop.xlane.xlu0 %2211
  %v2213 = vsel %vm570, %v2205, 0.0
  %2214 = vadd.xlane.f32.xlu0 %v2213
  %v2215 = vpop.xlane.xlu0 %2214
  %v2216 = vsel %vm570, %v2206, 0.0
  %2217 = vadd.xlane.f32.xlu0 %v2216
  %v2218 = vpop.xlane.xlu0 %2217
  %v2219 = vsel %vm1143, %v2209, 0.0
  %v2220 = vsel %vm1143, %v2212, 0.0
  %v2221 = vsel %vm1143, %v2215, 0.0
  %v2222 = vsel %vm1143, %v2218, 0.0
  %v2223 = vadd.f32 %v2199, %v2219
  %v2224 = vadd.f32 %v2200, %v2220
  %v2225 = vadd.f32 %v2201, %v2221
  %v2226 = vadd.f32 %v2202, %v2222
  %v2227 = vsel %vm234, %v2027, 0.0
  %v2228 = vsel %vm235, %v2028, 0.0
  %v2229 = vsel %vm236, %v2029, 0.0
  %v2230 = vsel %vm237, %v2030, 0.0
  %v2231 = vsel %vm570, %v2227, 0.0
  %2232 = vadd.xlane.f32.xlu0 %v2231
  %v2233 = vpop.xlane.xlu0 %2232
  %v2234 = vsel %vm570, %v2228, 0.0
  %2235 = vadd.xlane.f32.xlu0 %v2234
  %v2236 = vpop.xlane.xlu0 %2235
  %v2237 = vsel %vm570, %v2229, 0.0
  %2238 = vadd.xlane.f32.xlu0 %v2237
  %v2239 = vpop.xlane.xlu0 %2238
  %v2240 = vsel %vm570, %v2230, 0.0
  %2241 = vadd.xlane.f32.xlu0 %v2240
  %v2242 = vpop.xlane.xlu0 %2241
  %v2243 = vsel %vm1168, %v2233, 0.0
  %v2244 = vsel %vm1168, %v2236, 0.0
  %v2245 = vsel %vm1168, %v2239, 0.0
  %v2246 = vsel %vm1168, %v2242, 0.0
  %v2247 = vadd.f32 %v2223, %v2243
  %v2248 = vadd.f32 %v2224, %v2244
  %v2249 = vadd.f32 %v2225, %v2245
  %v2250 = vadd.f32 %v2226, %v2246
  %v2251 = vpack.c.bf16 %v2248, %v2247
  %v2252 = vpack.c.bf16 %v2250, %v2249
  %v2254 = vsel %vm1184, %v2251, 0
  %v2257 = vsel %vm1184, %v2252, 0
  %2259 = vmatprep.subr.bf16.mxu0 0
  %2260 = vmatpush1.bf16.msra.mxu0 0
  %2261 = vmatprep.subr.bf16.mxu0 0
  %2262 = vmatpush1.bf16.msra.mxu0 0
  %2263 = vmatprep.subr.bf16.mxu0 0
  %2264 = vmatpush1.bf16.msra.mxu0 0
  %2265 = vmatprep.subr.bf16.mxu0 0
  %2266 = vmatpush1.bf16.msra.mxu0 0
  %2267 = vmatprep.subr.bf16.mxu0 0
  %2268 = vmatpush1.bf16.msra.mxu0 0
  %2269 = vmatprep.subr.bf16.mxu0 0
  %2270 = vmatpush1.bf16.msra.mxu0 0
  %2271 = vmatprep.subr.bf16.mxu0 0
  %2272 = vmatpush1.bf16.msra.mxu0 0
  %2273 = vmatprep.subr.bf16.mxu0 0
  %2274 = vmatpush1.bf16.msra.mxu0 %v1196
  %2275 = vmatprep.subr.bf16.mxu0 0
  %2276 = vmatpush2.bf16.msra.mxu0 0
  %2277 = vmatprep.subr.bf16.mxu0 0
  %2278 = vmatpush2.bf16.msra.mxu0 0
  %2279 = vmatprep.subr.bf16.mxu0 0
  %2280 = vmatpush2.bf16.msra.mxu0 0
  %2281 = vmatprep.subr.bf16.mxu0 0
  %2282 = vmatpush2.bf16.msra.mxu0 0
  %2283 = vmatprep.subr.bf16.mxu0 0
  %2284 = vmatpush2.bf16.msra.mxu0 0
  %2285 = vmatprep.subr.bf16.mxu0 0
  %2286 = vmatpush2.bf16.msra.mxu0 0
  %2287 = vmatprep.subr.bf16.mxu0 0
  %2288 = vmatpush2.bf16.msra.mxu0 0
  %2289 = vmatprep.subr.bf16.mxu0 0
  %2290 = vmatpush2.bf16.msra.mxu0 0
  %2291 = vmatprep.mubr.bf16.mxu0 0
  %2292 = vmatmul.mubr.bf16.gmra.mxu0 %v2254
  %v2293 = vpop.f32.mrf.mxu0
  %v2294 = vadd.f32 0.0, %v2293
  %v2295 = vpop.f32.mrf.mxu0
  %v2296 = vpop.f32.mrf.mxu0
  %v2297 = vadd.f32 0.0, %v2296
  %v2298 = vpop.f32.mrf.mxu0
  %2299 = vmatprep.mubr.bf16.mxu0 0
  %2300 = vmatmul.mubr.bf16.gmra.mxu0 %v2257
  %v2301 = vpop.f32.mrf.mxu0
  %v2302 = vadd.f32 0.0, %v2301
  %v2303 = vpop.f32.mrf.mxu0
  %v2304 = vpop.f32.mrf.mxu0
  %v2305 = vadd.f32 0.0, %v2304
  %v2306 = vpop.f32.mrf.mxu0
  %2307 = vdwg.mxu0
  %v2309 = vsel %vm570, %v2031, 0
  %v2312 = vsel %vm570, %v2032, 0
  %2314 = vmatprep.subr.bf16.mxu0 0
  %2315 = vmatpush1.bf16.msra.mxu0 0
  %2316 = vmatprep.subr.bf16.mxu0 0
  %2317 = vmatpush1.bf16.msra.mxu0 0
  %2318 = vmatprep.subr.bf16.mxu0 0
  %2319 = vmatpush1.bf16.msra.mxu0 0
  %2320 = vmatprep.subr.bf16.mxu0 0
  %2321 = vmatpush1.bf16.msra.mxu0 0
  %2322 = vmatprep.subr.bf16.mxu0 0
  %2323 = vmatpush1.bf16.msra.mxu0 0
  %2324 = vmatprep.subr.bf16.mxu0 0
  %2325 = vmatpush1.bf16.msra.mxu0 0
  %2326 = vmatprep.subr.bf16.mxu0 0
  %2327 = vmatpush1.bf16.msra.mxu0 %v2034
  %2328 = vmatprep.subr.bf16.mxu0 0
  %2329 = vmatpush1.bf16.msra.mxu0 %v2033
  %2330 = vmatprep.subr.bf16.mxu0 0
  %2331 = vmatpush2.bf16.msra.mxu0 0
  %2332 = vmatprep.subr.bf16.mxu0 0
  %2333 = vmatpush2.bf16.msra.mxu0 0
  %2334 = vmatprep.subr.bf16.mxu0 0
  %2335 = vmatpush2.bf16.msra.mxu0 0
  %2336 = vmatprep.subr.bf16.mxu0 0
  %2337 = vmatpush2.bf16.msra.mxu0 0
  %2338 = vmatprep.subr.bf16.mxu0 0
  %2339 = vmatpush2.bf16.msra.mxu0 0
  %2340 = vmatprep.subr.bf16.mxu0 0
  %2341 = vmatpush2.bf16.msra.mxu0 0
  %2342 = vmatprep.subr.bf16.mxu0 0
  %2343 = vmatpush2.bf16.msra.mxu0 0
  %2344 = vmatprep.subr.bf16.mxu0 0
  %2345 = vmatpush2.bf16.msra.mxu0 0
  %2346 = vmatprep.mubr.bf16.mxu0 0
  %2347 = vmatmul.mubr.bf16.gmra.mxu0 %v2309
  %v2348 = vpop.f32.mrf.mxu0
  %v2349 = vadd.f32 %v2294, %v2348
  %v2350 = vpop.f32.mrf.mxu0
  %v2351 = vpop.f32.mrf.mxu0
  %v2352 = vadd.f32 %v2297, %v2351
  %v2353 = vpop.f32.mrf.mxu0
  %2354 = vmatprep.mubr.bf16.mxu0 0
  %2355 = vmatmul.mubr.bf16.gmra.mxu0 %v2312
  %v2356 = vpop.f32.mrf.mxu0
  %v2357 = vadd.f32 %v2302, %v2356
  %v2358 = vpop.f32.mrf.mxu0
  %v2359 = vpop.f32.mrf.mxu0
  %v2360 = vadd.f32 %v2305, %v2359
  %v2361 = vpop.f32.mrf.mxu0
  %2362 = vdwg.mxu0
  %v2363 = vpack.c.bf16 %v2352, %v2349
  %v2364 = vpack.c.bf16 %v2360, %v2357
  %s2365 = scalar_lea.vmem %s13, 16
  %v2366 = vld [vmem:[%s2365] sm:$0xf]
  %v2367 = vld [vmem:[%s2365 + $0x4] sm:$0xf]
  %v2368 = vld [vmem:[%s2365 + $0x8] sm:$0xf]
  %v2369 = vld [vmem:[%s2365 + $0xc] sm:$0xf]
  %v2374 = vunpack.c.l.b16 %v2366
  %v2375 = vunpack.c.l.b16 %v2367
  %v2376 = vunpack.c.l.b16 %v2368
  %v2377 = vunpack.c.l.b16 %v2369
  %v2378 = vpack.c.b16 %v2375, %v2374
  %v2379 = vpack.c.b16 %v2377, %v2376
  %v2383 = vsel %vm570, %v2363, 0
  %v2386 = vsel %vm570, %v2364, 0
  %2388 = vmatprep.subr.bf16.mxu0 0
  %2389 = vmatpush1.bf16.msra.mxu0 0
  %2390 = vmatprep.subr.bf16.mxu0 0
  %2391 = vmatpush1.bf16.msra.mxu0 0
  %2392 = vmatprep.subr.bf16.mxu0 0
  %2393 = vmatpush1.bf16.msra.mxu0 0
  %2394 = vmatprep.subr.bf16.mxu0 0
  %2395 = vmatpush1.bf16.msra.mxu0 0
  %2396 = vmatprep.subr.bf16.mxu0 0
  %2397 = vmatpush1.bf16.msra.mxu0 0
  %2398 = vmatprep.subr.bf16.mxu0 0
  %2399 = vmatpush1.bf16.msra.mxu0 0
  %2400 = vmatprep.subr.bf16.mxu0 0
  %2401 = vmatpush1.bf16.msra.mxu0 %v2379
  %2402 = vmatprep.subr.bf16.mxu0 0
  %2403 = vmatpush1.bf16.msra.mxu0 %v2378
  %2404 = vmatprep.subr.bf16.mxu0 0
  %2405 = vmatpush2.bf16.msra.mxu0 0
  %2406 = vmatprep.subr.bf16.mxu0 0
  %2407 = vmatpush2.bf16.msra.mxu0 0
  %2408 = vmatprep.subr.bf16.mxu0 0
  %2409 = vmatpush2.bf16.msra.mxu0 0
  %2410 = vmatprep.subr.bf16.mxu0 0
  %2411 = vmatpush2.bf16.msra.mxu0 0
  %2412 = vmatprep.subr.bf16.mxu0 0
  %2413 = vmatpush2.bf16.msra.mxu0 0
  %2414 = vmatprep.subr.bf16.mxu0 0
  %2415 = vmatpush2.bf16.msra.mxu0 0
  %2416 = vmatprep.subr.bf16.mxu0 0
  %2417 = vmatpush2.bf16.msra.mxu0 0
  %2418 = vmatprep.subr.bf16.mxu0 0
  %2419 = vmatpush2.bf16.msra.mxu0 0
  %2420 = vmatprep.mubr.bf16.mxu0 0
  %2421 = vmatmul.mubr.bf16.gmra.mxu0 %v2383
  %v2422 = vpop.f32.mrf.mxu0
  %v2423 = vadd.f32 0.0, %v2422
  %v2424 = vpop.f32.mrf.mxu0
  %v2425 = vpop.f32.mrf.mxu0
  %v2426 = vadd.f32 0.0, %v2425
  %v2427 = vpop.f32.mrf.mxu0
  %2428 = vmatprep.mubr.bf16.mxu0 0
  %2429 = vmatmul.mubr.bf16.gmra.mxu0 %v2386
  %v2430 = vpop.f32.mrf.mxu0
  %v2431 = vadd.f32 0.0, %v2430
  %v2432 = vpop.f32.mrf.mxu0
  %v2433 = vpop.f32.mrf.mxu0
  %v2434 = vadd.f32 0.0, %v2433
  %v2435 = vpop.f32.mrf.mxu0
  %2436 = vdwg.mxu0
  %v2437 = vadd.f32 %v1375, %v2423
  %v2438 = vadd.f32 %v1376, %v2426
  %v2439 = vadd.f32 %v1377, %v2431
  %v2440 = vadd.f32 %v1378, %v2434
  %v2441 = vadd.f32 %v268, %v2437
  %v2442 = vadd.f32 %v269, %v2438
  %v2443 = vadd.f32 %v270, %v2439
  %v2444 = vadd.f32 %v271, %v2440
  %v2445 = vld [vmem:[%s15] sm:$0x1]
  %v2446 = vld [vmem:[%s16] sm:$0x1]
  %v2447 = vsel %vm325, %v2441, 0.0
  %2448 = vadd.xlane.f32.xlu0 %v2447
  %v2449 = vpop.xlane.xlu0 %2448
  %v2450 = vsel %vm325, %v2442, 0.0
  %2451 = vadd.xlane.f32.xlu0 %v2450
  %v2452 = vpop.xlane.xlu0 %2451
  %v2453 = vsel %vm325, %v2443, 0.0
  %2454 = vadd.xlane.f32.xlu0 %v2453
  %v2455 = vpop.xlane.xlu0 %2454
  %v2456 = vsel %vm325, %v2444, 0.0
  %2457 = vadd.xlane.f32.xlu0 %v2456
  %v2458 = vpop.xlane.xlu0 %2457
  %v2459 = vrcp.pop 64.0
  %v2460 = vmul.f32 %v2449, %v2459
  %v2461 = vmul.f32 %v2452, %v2459
  %v2462 = vmul.f32 %v2455, %v2459
  %v2463 = vmul.f32 %v2458, %v2459
  %v2464 = vsub.f32 %v2441, %v2460
  %v2465 = vsub.f32 %v2442, %v2461
  %v2466 = vsub.f32 %v2443, %v2462
  %v2467 = vsub.f32 %v2444, %v2463
  %v2468 = vmul.f32 %v2464, %v2464
  %v2469 = vmul.f32 %v2465, %v2465
  %v2470 = vmul.f32 %v2466, %v2466
  %v2471 = vmul.f32 %v2467, %v2467
  %v2472 = vsel %vm325, %v2468, 0.0
  %2473 = vadd.xlane.f32.xlu0 %v2472
  %v2474 = vpop.xlane.xlu0 %2473
  %v2475 = vsel %vm325, %v2469, 0.0
  %2476 = vadd.xlane.f32.xlu0 %v2475
  %v2477 = vpop.xlane.xlu0 %2476
  %v2478 = vsel %vm325, %v2470, 0.0
  %2479 = vadd.xlane.f32.xlu0 %v2478
  %v2480 = vpop.xlane.xlu0 %2479
  %v2481 = vsel %vm325, %v2471, 0.0
  %2482 = vadd.xlane.f32.xlu0 %v2481
  %v2483 = vpop.xlane.xlu0 %2482
  %v2484 = vmul.f32 %v2474, %v2459
  %v2485 = vmul.f32 %v2477, %v2459
  %v2486 = vmul.f32 %v2480, %v2459
  %v2487 = vmul.f32 %v2483, %v2459
  %v2488 = vadd.f32 %v2484, 1e-05
  %v2489 = vadd.f32 %v2485, 1e-05
  %v2490 = vadd.f32 %v2486, 1e-05
  %v2491 = vadd.f32 %v2487, 1e-05
  %v2492 = vrsqrt.pop %v2488
  %v2493 = vrsqrt.pop %v2489
  %v2494 = vrsqrt.pop %v2490
  %v2495 = vrsqrt.pop %v2491
  %v2496 = vmul.f32 %v2464, %v2492
  %v2497 = vmul.f32 %v2465, %v2493
  %v2498 = vmul.f32 %v2466, %v2494
  %v2499 = vmul.f32 %v2467, %v2495
  %v2501 = vlaneseq
  %v2502 = vshrl.u32 %v2501, 7
  %v2503 = vsub.s32 0, %v2502
  %v2504 = vrot.slane %v2445, %v2503
  %v2506 = vmul.f32 %v2496, %v2504
  %v2507 = vmul.f32 %v2497, %v2504
  %v2508 = vmul.f32 %v2498, %v2504
  %v2509 = vmul.f32 %v2499, %v2504
  %v2511 = vlaneseq
  %v2512 = vshrl.u32 %v2511, 7
  %v2513 = vsub.s32 0, %v2512
  %v2514 = vrot.slane %v2446, %v2513
  %v2516 = vadd.f32 %v2506, %v2514
  %v2517 = vadd.f32 %v2507, %v2514
  %v2518 = vadd.f32 %v2508, %v2514
  %v2519 = vadd.f32 %v2509, %v2514
  %v2520 = vmul.f32 %v2516, %v131
  %v2521 = vmul.f32 %v2517, %v136
  %v2522 = vmul.f32 %v2518, %v141
  %v2523 = vmul.f32 %v2519, %v146
  %v2524 = vpack.c.bf16 %v2521, %v2520
  %v2525 = vpack.c.bf16 %v2523, %v2522
  %v2526 = vld [vmem:[%s20] sm:$0x1]
  %v2528 = vlaneseq
  %v2529 = vshrl.u32 %v2528, 7
  %v2530 = vsub.s32 0, %v2529
  %v2531 = vrot.slane %v2526, %v2530
  %v2533 = vadd.f32 %v2531, 0.0
  %v2535 = vsel %vm570, %v242, 0
  %v2538 = vsel %vm570, %v243, 0
  %2540 = vmatprep.subr.bf16.mxu0 0
  %2541 = vmatpush1.bf16.msra.mxu0 0
  %2542 = vmatprep.subr.bf16.mxu0 0
  %2543 = vmatpush1.bf16.msra.mxu0 0
  %2544 = vmatprep.subr.bf16.mxu0 0
  %2545 = vmatpush1.bf16.msra.mxu0 0
  %2546 = vmatprep.subr.bf16.mxu0 0
  %2547 = vmatpush1.bf16.msra.mxu0 0
  %2548 = vmatprep.subr.bf16.mxu0 0
  %2549 = vmatpush1.bf16.msra.mxu0 0
  %2550 = vmatprep.subr.bf16.mxu0 0
  %2551 = vmatpush1.bf16.msra.mxu0 0
  %2552 = vmatprep.subr.bf16.mxu0 0
  %2553 = vmatpush1.bf16.msra.mxu0 %v2525
  %2554 = vmatprep.subr.bf16.mxu0 0
  %2555 = vmatpush1.bf16.msra.mxu0 %v2524
  %2556 = vmatprep.subr.bf16.mxu0 0
  %2557 = vmatpush2.bf16.msra.mxu0 0
  %2558 = vmatprep.subr.bf16.mxu0 0
  %2559 = vmatpush2.bf16.msra.mxu0 0
  %2560 = vmatprep.subr.bf16.mxu0 0
  %2561 = vmatpush2.bf16.msra.mxu0 0
  %2562 = vmatprep.subr.bf16.mxu0 0
  %2563 = vmatpush2.bf16.msra.mxu0 0
  %2564 = vmatprep.subr.bf16.mxu0 0
  %2565 = vmatpush2.bf16.msra.mxu0 0
  %2566 = vmatprep.subr.bf16.mxu0 0
  %2567 = vmatpush2.bf16.msra.mxu0 0
  %2568 = vmatprep.subr.bf16.mxu0 0
  %2569 = vmatpush2.bf16.msra.mxu0 0
  %2570 = vmatprep.subr.bf16.mxu0 0
  %2571 = vmatpush2.bf16.msra.mxu0 0
  %2572 = vmatprep.mubr.bf16.mxu0 0
  %2573 = vmatmul.mubr.bf16.gmra.mxu0 %v2535
  %v2574 = vpop.f32.mrf.mxu0
  %v2575 = vadd.f32 0.0, %v2574
  %v2576 = vpop.f32.mrf.mxu0
  %v2577 = vpop.f32.mrf.mxu0
  %v2578 = vadd.f32 0.0, %v2577
  %v2579 = vpop.f32.mrf.mxu0
  %2580 = vmatprep.mubr.bf16.mxu0 0
  %2581 = vmatmul.mubr.bf16.gmra.mxu0 %v2538
  %v2582 = vpop.f32.mrf.mxu0
  %v2583 = vadd.f32 0.0, %v2582
  %v2584 = vpop.f32.mrf.mxu0
  %v2585 = vpop.f32.mrf.mxu0
  %v2586 = vadd.f32 0.0, %v2585
  %v2587 = vpop.f32.mrf.mxu0
  %2588 = vdwg.mxu0
  %v2589 = vpack.c.bf16 %v2578, %v2575
  %v2590 = vpack.c.bf16 %v2586, %v2583
  %v2591 = vld [vmem:[%s19] sm:$0xf]
  %v2592 = vld [vmem:[%s19 + $0x4] sm:$0xf]
  %v2593 = vld [vmem:[%s19 + $0x8] sm:$0xf]
  %v2594 = vld [vmem:[%s19 + $0xc] sm:$0xf]
  %v2595 = vld [vmem:[%s19 + $0x10] sm:$0xf]
  %v2596 = vld [vmem:[%s19 + $0x14] sm:$0xf]
  %v2597 = vld [vmem:[%s19 + $0x18] sm:$0xf]
  %v2598 = vld [vmem:[%s19 + $0x1c] sm:$0xf]
  %v2607 = vunpack.c.l.b16 %v2591
  %v2608 = vunpack.c.l.b16 %v2592
  %v2609 = vunpack.c.l.b16 %v2593
  %v2610 = vunpack.c.l.b16 %v2594
  %v2611 = vunpack.c.l.b16 %v2595
  %v2612 = vunpack.c.l.b16 %v2596
  %v2613 = vunpack.c.l.b16 %v2597
  %v2614 = vunpack.c.l.b16 %v2598
  %v2615 = vpack.c.b16 %v2608, %v2607
  %v2616 = vpack.c.b16 %v2610, %v2609
  %v2617 = vpack.c.b16 %v2612, %v2611
  %v2618 = vpack.c.b16 %v2614, %v2613
  %v2624 = vsel %vm325, %v2589, 0
  %v2627 = vsel %vm325, %v2590, 0
  %2629 = vmatprep.subr.bf16.mxu0 0
  %2630 = vmatpush1.bf16.msra.mxu0 0
  %2631 = vmatprep.subr.bf16.mxu0 0
  %2632 = vmatpush1.bf16.msra.mxu0 0
  %2633 = vmatprep.subr.bf16.mxu0 0
  %2634 = vmatpush1.bf16.msra.mxu0 0
  %2635 = vmatprep.subr.bf16.mxu0 0
  %2636 = vmatpush1.bf16.msra.mxu0 0
  %2637 = vmatprep.subr.bf16.mxu0 0
  %2638 = vmatpush1.bf16.msra.mxu0 %v2618
  %2639 = vmatprep.subr.bf16.mxu0 0
  %2640 = vmatpush1.bf16.msra.mxu0 %v2617
  %2641 = vmatprep.subr.bf16.mxu0 0
  %2642 = vmatpush1.bf16.msra.mxu0 %v2616
  %2643 = vmatprep.subr.bf16.mxu0 0
  %2644 = vmatpush1.bf16.msra.mxu0 %v2615
  %2645 = vmatprep.subr.bf16.mxu0 0
  %2646 = vmatpush2.bf16.msra.mxu0 0
  %2647 = vmatprep.subr.bf16.mxu0 0
  %2648 = vmatpush2.bf16.msra.mxu0 0
  %2649 = vmatprep.subr.bf16.mxu0 0
  %2650 = vmatpush2.bf16.msra.mxu0 0
  %2651 = vmatprep.subr.bf16.mxu0 0
  %2652 = vmatpush2.bf16.msra.mxu0 0
  %2653 = vmatprep.subr.bf16.mxu0 0
  %2654 = vmatpush2.bf16.msra.mxu0 0
  %2655 = vmatprep.subr.bf16.mxu0 0
  %2656 = vmatpush2.bf16.msra.mxu0 0
  %2657 = vmatprep.subr.bf16.mxu0 0
  %2658 = vmatpush2.bf16.msra.mxu0 0
  %2659 = vmatprep.subr.bf16.mxu0 0
  %2660 = vmatpush2.bf16.msra.mxu0 0
  %2661 = vmatprep.mubr.bf16.mxu0 0
  %2662 = vmatmul.mubr.bf16.gmra.mxu0 %v2624
  %v2663 = vpop.f32.mrf.mxu0
  %v2664 = vadd.f32 0.0, %v2663
  %v2665 = vpop.f32.mrf.mxu0
  %v2666 = vpop.f32.mrf.mxu0
  %v2667 = vadd.f32 0.0, %v2666
  %v2668 = vpop.f32.mrf.mxu0
  %2669 = vmatprep.mubr.bf16.mxu0 0
  %2670 = vmatmul.mubr.bf16.gmra.mxu0 %v2627
  %v2671 = vpop.f32.mrf.mxu0
  %v2672 = vadd.f32 0.0, %v2671
  %v2673 = vpop.f32.mrf.mxu0
  %v2674 = vpop.f32.mrf.mxu0
  %v2675 = vadd.f32 0.0, %v2674
  %v2676 = vpop.f32.mrf.mxu0
  %2677 = vdwg.mxu0
  %v2678 = vadd.f32 %v2533, %v2664
  %v2679 = vadd.f32 %v2533, %v2667
  %v2680 = vadd.f32 %v2533, %v2672
  %v2681 = vadd.f32 %v2533, %v2675
  %v2683 = vsel %vm570, %v248, 0
  %v2686 = vsel %vm570, %v249, 0
  %2688 = vmatprep.subr.bf16.mxu0 0
  %2689 = vmatpush1.bf16.msra.mxu0 0
  %2690 = vmatprep.subr.bf16.mxu0 0
  %2691 = vmatpush1.bf16.msra.mxu0 0
  %2692 = vmatprep.subr.bf16.mxu0 0
  %2693 = vmatpush1.bf16.msra.mxu0 0
  %2694 = vmatprep.subr.bf16.mxu0 0
  %2695 = vmatpush1.bf16.msra.mxu0 0
  %2696 = vmatprep.subr.bf16.mxu0 0
  %2697 = vmatpush1.bf16.msra.mxu0 0
  %2698 = vmatprep.subr.bf16.mxu0 0
  %2699 = vmatpush1.bf16.msra.mxu0 0
  %2700 = vmatprep.subr.bf16.mxu0 0
  %2701 = vmatpush1.bf16.msra.mxu0 %v2525
  %2702 = vmatprep.subr.bf16.mxu0 0
  %2703 = vmatpush1.bf16.msra.mxu0 %v2524
  %2704 = vmatprep.subr.bf16.mxu0 0
  %2705 = vmatpush2.bf16.msra.mxu0 0
  %2706 = vmatprep.subr.bf16.mxu0 0
  %2707 = vmatpush2.bf16.msra.mxu0 0
  %2708 = vmatprep.subr.bf16.mxu0 0
  %2709 = vmatpush2.bf16.msra.mxu0 0
  %2710 = vmatprep.subr.bf16.mxu0 0
  %2711 = vmatpush2.bf16.msra.mxu0 0
  %2712 = vmatprep.subr.bf16.mxu0 0
  %2713 = vmatpush2.bf16.msra.mxu0 0
  %2714 = vmatprep.subr.bf16.mxu0 0
  %2715 = vmatpush2.bf16.msra.mxu0 0
  %2716 = vmatprep.subr.bf16.mxu0 0
  %2717 = vmatpush2.bf16.msra.mxu0 0
  %2718 = vmatprep.subr.bf16.mxu0 0
  %2719 = vmatpush2.bf16.msra.mxu0 0
  %2720 = vmatprep.mubr.bf16.mxu0 0
  %2721 = vmatmul.mubr.bf16.gmra.mxu0 %v2683
  %v2722 = vpop.f32.mrf.mxu0
  %v2723 = vadd.f32 0.0, %v2722
  %v2724 = vpop.f32.mrf.mxu0
  %v2725 = vpop.f32.mrf.mxu0
  %v2726 = vadd.f32 0.0, %v2725
  %v2727 = vpop.f32.mrf.mxu0
  %2728 = vmatprep.mubr.bf16.mxu0 0
  %2729 = vmatmul.mubr.bf16.gmra.mxu0 %v2686
  %v2730 = vpop.f32.mrf.mxu0
  %v2731 = vadd.f32 0.0, %v2730
  %v2732 = vpop.f32.mrf.mxu0
  %v2733 = vpop.f32.mrf.mxu0
  %v2734 = vadd.f32 0.0, %v2733
  %v2735 = vpop.f32.mrf.mxu0
  %2736 = vdwg.mxu0
  %v2737 = vpack.c.bf16 %v2726, %v2723
  %v2738 = vpack.c.bf16 %v2734, %v2731
  %s2739 = scalar_lea.vmem %s19, 32
  %v2740 = vld [vmem:[%s2739] sm:$0xf]
  %v2741 = vld [vmem:[%s2739 + $0x4] sm:$0xf]
  %v2742 = vld [vmem:[%s2739 + $0x8] sm:$0xf]
  %v2743 = vld [vmem:[%s2739 + $0xc] sm:$0xf]
  %v2744 = vld [vmem:[%s2739 + $0x10] sm:$0xf]
  %v2745 = vld [vmem:[%s2739 + $0x14] sm:$0xf]
  %v2746 = vld [vmem:[%s2739 + $0x18] sm:$0xf]
  %v2747 = vld [vmem:[%s2739 + $0x1c] sm:$0xf]
  %v2756 = vunpack.c.l.b16 %v2740
  %v2757 = vunpack.c.l.b16 %v2741
  %v2758 = vunpack.c.l.b16 %v2742
  %v2759 = vunpack.c.l.b16 %v2743
  %v2760 = vunpack.c.l.b16 %v2744
  %v2761 = vunpack.c.l.b16 %v2745
  %v2762 = vunpack.c.l.b16 %v2746
  %v2763 = vunpack.c.l.b16 %v2747
  %v2764 = vpack.c.b16 %v2757, %v2756
  %v2765 = vpack.c.b16 %v2759, %v2758
  %v2766 = vpack.c.b16 %v2761, %v2760
  %v2767 = vpack.c.b16 %v2763, %v2762
  %v2773 = vsel %vm325, %v2737, 0
  %v2776 = vsel %vm325, %v2738, 0
  %2778 = vmatprep.subr.bf16.mxu0 0
  %2779 = vmatpush1.bf16.msra.mxu0 0
  %2780 = vmatprep.subr.bf16.mxu0 0
  %2781 = vmatpush1.bf16.msra.mxu0 0
  %2782 = vmatprep.subr.bf16.mxu0 0
  %2783 = vmatpush1.bf16.msra.mxu0 0
  %2784 = vmatprep.subr.bf16.mxu0 0
  %2785 = vmatpush1.bf16.msra.mxu0 0
  %2786 = vmatprep.subr.bf16.mxu0 0
  %2787 = vmatpush1.bf16.msra.mxu0 %v2767
  %2788 = vmatprep.subr.bf16.mxu0 0
  %2789 = vmatpush1.bf16.msra.mxu0 %v2766
  %2790 = vmatprep.subr.bf16.mxu0 0
  %2791 = vmatpush1.bf16.msra.mxu0 %v2765
  %2792 = vmatprep.subr.bf16.mxu0 0
  %2793 = vmatpush1.bf16.msra.mxu0 %v2764
  %2794 = vmatprep.subr.bf16.mxu0 0
  %2795 = vmatpush2.bf16.msra.mxu0 0
  %2796 = vmatprep.subr.bf16.mxu0 0
  %2797 = vmatpush2.bf16.msra.mxu0 0
  %2798 = vmatprep.subr.bf16.mxu0 0
  %2799 = vmatpush2.bf16.msra.mxu0 0
  %2800 = vmatprep.subr.bf16.mxu0 0
  %2801 = vmatpush2.bf16.msra.mxu0 0
  %2802 = vmatprep.subr.bf16.mxu0 0
  %2803 = vmatpush2.bf16.msra.mxu0 0
  %2804 = vmatprep.subr.bf16.mxu0 0
  %2805 = vmatpush2.bf16.msra.mxu0 0
  %2806 = vmatprep.subr.bf16.mxu0 0
  %2807 = vmatpush2.bf16.msra.mxu0 0
  %2808 = vmatprep.subr.bf16.mxu0 0
  %2809 = vmatpush2.bf16.msra.mxu0 0
  %2810 = vmatprep.mubr.bf16.mxu0 0
  %2811 = vmatmul.mubr.bf16.gmra.mxu0 %v2773
  %v2812 = vpop.f32.mrf.mxu0
  %v2813 = vadd.f32 0.0, %v2812
  %v2814 = vpop.f32.mrf.mxu0
  %v2815 = vpop.f32.mrf.mxu0
  %v2816 = vadd.f32 0.0, %v2815
  %v2817 = vpop.f32.mrf.mxu0
  %2818 = vmatprep.mubr.bf16.mxu0 0
  %2819 = vmatmul.mubr.bf16.gmra.mxu0 %v2776
  %v2820 = vpop.f32.mrf.mxu0
  %v2821 = vadd.f32 0.0, %v2820
  %v2822 = vpop.f32.mrf.mxu0
  %v2823 = vpop.f32.mrf.mxu0
  %v2824 = vadd.f32 0.0, %v2823
  %v2825 = vpop.f32.mrf.mxu0
  %2826 = vdwg.mxu0
  %v2827 = vadd.f32 %v2678, %v2813
  %v2828 = vadd.f32 %v2679, %v2816
  %v2829 = vadd.f32 %v2680, %v2821
  %v2830 = vadd.f32 %v2681, %v2824
  %v2832 = vsel %vm570, %v254, 0
  %v2835 = vsel %vm570, %v255, 0
  %2837 = vmatprep.subr.bf16.mxu0 0
  %2838 = vmatpush1.bf16.msra.mxu0 0
  %2839 = vmatprep.subr.bf16.mxu0 0
  %2840 = vmatpush1.bf16.msra.mxu0 0
  %2841 = vmatprep.subr.bf16.mxu0 0
  %2842 = vmatpush1.bf16.msra.mxu0 0
  %2843 = vmatprep.subr.bf16.mxu0 0
  %2844 = vmatpush1.bf16.msra.mxu0 0
  %2845 = vmatprep.subr.bf16.mxu0 0
  %2846 = vmatpush1.bf16.msra.mxu0 0
  %2847 = vmatprep.subr.bf16.mxu0 0
  %2848 = vmatpush1.bf16.msra.mxu0 0
  %2849 = vmatprep.subr.bf16.mxu0 0
  %2850 = vmatpush1.bf16.msra.mxu0 %v2525
  %2851 = vmatprep.subr.bf16.mxu0 0
  %2852 = vmatpush1.bf16.msra.mxu0 %v2524
  %2853 = vmatprep.subr.bf16.mxu0 0
  %2854 = vmatpush2.bf16.msra.mxu0 0
  %2855 = vmatprep.subr.bf16.mxu0 0
  %2856 = vmatpush2.bf16.msra.mxu0 0
  %2857 = vmatprep.subr.bf16.mxu0 0
  %2858 = vmatpush2.bf16.msra.mxu0 0
  %2859 = vmatprep.subr.bf16.mxu0 0
  %2860 = vmatpush2.bf16.msra.mxu0 0
  %2861 = vmatprep.subr.bf16.mxu0 0
  %2862 = vmatpush2.bf16.msra.mxu0 0
  %2863 = vmatprep.subr.bf16.mxu0 0
  %2864 = vmatpush2.bf16.msra.mxu0 0
  %2865 = vmatprep.subr.bf16.mxu0 0
  %2866 = vmatpush2.bf16.msra.mxu0 0
  %2867 = vmatprep.subr.bf16.mxu0 0
  %2868 = vmatpush2.bf16.msra.mxu0 0
  %2869 = vmatprep.mubr.bf16.mxu0 0
  %2870 = vmatmul.mubr.bf16.gmra.mxu0 %v2832
  %v2871 = vpop.f32.mrf.mxu0
  %v2872 = vadd.f32 0.0, %v2871
  %v2873 = vpop.f32.mrf.mxu0
  %v2874 = vpop.f32.mrf.mxu0
  %v2875 = vadd.f32 0.0, %v2874
  %v2876 = vpop.f32.mrf.mxu0
  %2877 = vmatprep.mubr.bf16.mxu0 0
  %2878 = vmatmul.mubr.bf16.gmra.mxu0 %v2835
  %v2879 = vpop.f32.mrf.mxu0
  %v2880 = vadd.f32 0.0, %v2879
  %v2881 = vpop.f32.mrf.mxu0
  %v2882 = vpop.f32.mrf.mxu0
  %v2883 = vadd.f32 0.0, %v2882
  %v2884 = vpop.f32.mrf.mxu0
  %2885 = vdwg.mxu0
  %v2886 = vpack.c.bf16 %v2875, %v2872
  %v2887 = vpack.c.bf16 %v2883, %v2880
  %s2888 = scalar_lea.vmem %s19, 64
  %v2889 = vld [vmem:[%s2888] sm:$0xf]
  %v2890 = vld [vmem:[%s2888 + $0x4] sm:$0xf]
  %v2891 = vld [vmem:[%s2888 + $0x8] sm:$0xf]
  %v2892 = vld [vmem:[%s2888 + $0xc] sm:$0xf]
  %v2893 = vld [vmem:[%s2888 + $0x10] sm:$0xf]
  %v2894 = vld [vmem:[%s2888 + $0x14] sm:$0xf]
  %v2895 = vld [vmem:[%s2888 + $0x18] sm:$0xf]
  %v2896 = vld [vmem:[%s2888 + $0x1c] sm:$0xf]
  %v2905 = vunpack.c.l.b16 %v2889
  %v2906 = vunpack.c.l.b16 %v2890
  %v2907 = vunpack.c.l.b16 %v2891
  %v2908 = vunpack.c.l.b16 %v2892
  %v2909 = vunpack.c.l.b16 %v2893
  %v2910 = vunpack.c.l.b16 %v2894
  %v2911 = vunpack.c.l.b16 %v2895
  %v2912 = vunpack.c.l.b16 %v2896
  %v2913 = vpack.c.b16 %v2906, %v2905
  %v2914 = vpack.c.b16 %v2908, %v2907
  %v2915 = vpack.c.b16 %v2910, %v2909
  %v2916 = vpack.c.b16 %v2912, %v2911
  %v2922 = vsel %vm325, %v2886, 0
  %v2925 = vsel %vm325, %v2887, 0
  %2927 = vmatprep.subr.bf16.mxu0 0
  %2928 = vmatpush1.bf16.msra.mxu0 0
  %2929 = vmatprep.subr.bf16.mxu0 0
  %2930 = vmatpush1.bf16.msra.mxu0 0
  %2931 = vmatprep.subr.bf16.mxu0 0
  %2932 = vmatpush1.bf16.msra.mxu0 0
  %2933 = vmatprep.subr.bf16.mxu0 0
  %2934 = vmatpush1.bf16.msra.mxu0 0
  %2935 = vmatprep.subr.bf16.mxu0 0
  %2936 = vmatpush1.bf16.msra.mxu0 %v2916
  %2937 = vmatprep.subr.bf16.mxu0 0
  %2938 = vmatpush1.bf16.msra.mxu0 %v2915
  %2939 = vmatprep.subr.bf16.mxu0 0
  %2940 = vmatpush1.bf16.msra.mxu0 %v2914
  %2941 = vmatprep.subr.bf16.mxu0 0
  %2942 = vmatpush1.bf16.msra.mxu0 %v2913
  %2943 = vmatprep.subr.bf16.mxu0 0
  %2944 = vmatpush2.bf16.msra.mxu0 0
  %2945 = vmatprep.subr.bf16.mxu0 0
  %2946 = vmatpush2.bf16.msra.mxu0 0
  %2947 = vmatprep.subr.bf16.mxu0 0
  %2948 = vmatpush2.bf16.msra.mxu0 0
  %2949 = vmatprep.subr.bf16.mxu0 0
  %2950 = vmatpush2.bf16.msra.mxu0 0
  %2951 = vmatprep.subr.bf16.mxu0 0
  %2952 = vmatpush2.bf16.msra.mxu0 0
  %2953 = vmatprep.subr.bf16.mxu0 0
  %2954 = vmatpush2.bf16.msra.mxu0 0
  %2955 = vmatprep.subr.bf16.mxu0 0
  %2956 = vmatpush2.bf16.msra.mxu0 0
  %2957 = vmatprep.subr.bf16.mxu0 0
  %2958 = vmatpush2.bf16.msra.mxu0 0
  %2959 = vmatprep.mubr.bf16.mxu0 0
  %2960 = vmatmul.mubr.bf16.gmra.mxu0 %v2922
  %v2961 = vpop.f32.mrf.mxu0
  %v2962 = vadd.f32 0.0, %v2961
  %v2963 = vpop.f32.mrf.mxu0
  %v2964 = vpop.f32.mrf.mxu0
  %v2965 = vadd.f32 0.0, %v2964
  %v2966 = vpop.f32.mrf.mxu0
  %2967 = vmatprep.mubr.bf16.mxu0 0
  %2968 = vmatmul.mubr.bf16.gmra.mxu0 %v2925
  %v2969 = vpop.f32.mrf.mxu0
  %v2970 = vadd.f32 0.0, %v2969
  %v2971 = vpop.f32.mrf.mxu0
  %v2972 = vpop.f32.mrf.mxu0
  %v2973 = vadd.f32 0.0, %v2972
  %v2974 = vpop.f32.mrf.mxu0
  %2975 = vdwg.mxu0
  %v2976 = vadd.f32 %v2827, %v2962
  %v2977 = vadd.f32 %v2828, %v2965
  %v2978 = vadd.f32 %v2829, %v2970
  %v2979 = vadd.f32 %v2830, %v2973
  %v2980 = vmax.f32 %v2976, 0.0
  %v2981 = vmax.f32 %v2977, 0.0
  %v2982 = vmax.f32 %v2978, 0.0
  %v2983 = vmax.f32 %v2979, 0.0
  %v2984 = vmul.f32 %v2980, %v131
  %v2985 = vmul.f32 %v2981, %v136
  %v2986 = vmul.f32 %v2982, %v141
  %v2987 = vmul.f32 %v2983, %v146
  %v2988 = vpack.c.bf16 %v2985, %v2984
  %v2989 = vpack.c.bf16 %v2987, %v2986
  %v2990 = vld [vmem:[%s22] sm:$0x1]
  %v2992 = vlaneseq
  %v2993 = vshrl.u32 %v2992, 7
  %v2994 = vsub.s32 0, %v2993
  %v2995 = vrot.slane %v2990, %v2994
  %v2997 = vadd.f32 %v2995, 0.0
  %2998 = vmatprep.subr.bf16.mxu0 0
  %2999 = vmatpush1.bf16.msra.mxu0 0
  %3000 = vmatprep.subr.bf16.mxu0 0
  %3001 = vmatpush1.bf16.msra.mxu0 0
  %3002 = vmatprep.subr.bf16.mxu0 0
  %3003 = vmatpush1.bf16.msra.mxu0 0
  %3004 = vmatprep.subr.bf16.mxu0 0
  %3005 = vmatpush1.bf16.msra.mxu0 0
  %3006 = vmatprep.subr.bf16.mxu0 0
  %3007 = vmatpush1.bf16.msra.mxu0 0
  %3008 = vmatprep.subr.bf16.mxu0 0
  %3009 = vmatpush1.bf16.msra.mxu0 0
  %3010 = vmatprep.subr.bf16.mxu0 0
  %3011 = vmatpush1.bf16.msra.mxu0 %v2989
  %3012 = vmatprep.subr.bf16.mxu0 0
  %3013 = vmatpush1.bf16.msra.mxu0 %v2988
  %3014 = vmatprep.subr.bf16.mxu0 0
  %3015 = vmatpush2.bf16.msra.mxu0 0
  %3016 = vmatprep.subr.bf16.mxu0 0
  %3017 = vmatpush2.bf16.msra.mxu0 0
  %3018 = vmatprep.subr.bf16.mxu0 0
  %3019 = vmatpush2.bf16.msra.mxu0 0
  %3020 = vmatprep.subr.bf16.mxu0 0
  %3021 = vmatpush2.bf16.msra.mxu0 0
  %3022 = vmatprep.subr.bf16.mxu0 0
  %3023 = vmatpush2.bf16.msra.mxu0 0
  %3024 = vmatprep.subr.bf16.mxu0 0
  %3025 = vmatpush2.bf16.msra.mxu0 0
  %3026 = vmatprep.subr.bf16.mxu0 0
  %3027 = vmatpush2.bf16.msra.mxu0 0
  %3028 = vmatprep.subr.bf16.mxu0 0
  %3029 = vmatpush2.bf16.msra.mxu0 0
  %3030 = vmatprep.mubr.bf16.mxu0 0
  %3031 = vmatmul.mubr.bf16.gmra.mxu0 %v2535
  %v3032 = vpop.f32.mrf.mxu0
  %v3033 = vadd.f32 0.0, %v3032
  %v3034 = vpop.f32.mrf.mxu0
  %v3035 = vpop.f32.mrf.mxu0
  %v3036 = vadd.f32 0.0, %v3035
  %v3037 = vpop.f32.mrf.mxu0
  %3038 = vmatprep.mubr.bf16.mxu0 0
  %3039 = vmatmul.mubr.bf16.gmra.mxu0 %v2538
  %v3040 = vpop.f32.mrf.mxu0
  %v3041 = vadd.f32 0.0, %v3040
  %v3042 = vpop.f32.mrf.mxu0
  %v3043 = vpop.f32.mrf.mxu0
  %v3044 = vadd.f32 0.0, %v3043
  %v3045 = vpop.f32.mrf.mxu0
  %3046 = vdwg.mxu0
  %v3047 = vpack.c.bf16 %v3036, %v3033
  %v3048 = vpack.c.bf16 %v3044, %v3041
  %v3049 = vld [vmem:[%s21] sm:$0xf]
  %v3050 = vld [vmem:[%s21 + $0x4] sm:$0xf]
  %v3051 = vld [vmem:[%s21 + $0x8] sm:$0xf]
  %v3052 = vld [vmem:[%s21 + $0xc] sm:$0xf]
  %v3053 = vld [vmem:[%s21 + $0x10] sm:$0xf]
  %v3054 = vld [vmem:[%s21 + $0x14] sm:$0xf]
  %v3055 = vld [vmem:[%s21 + $0x18] sm:$0xf]
  %v3056 = vld [vmem:[%s21 + $0x1c] sm:$0xf]
  %v3057 = vld [vmem:[%s21 + $0x20] sm:$0xf]
  %v3058 = vld [vmem:[%s21 + $0x24] sm:$0xf]
  %v3059 = vld [vmem:[%s21 + $0x28] sm:$0xf]
  %v3060 = vld [vmem:[%s21 + $0x2c] sm:$0xf]
  %v3061 = vld [vmem:[%s21 + $0x30] sm:$0xf]
  %v3062 = vld [vmem:[%s21 + $0x34] sm:$0xf]
  %v3063 = vld [vmem:[%s21 + $0x38] sm:$0xf]
  %v3064 = vld [vmem:[%s21 + $0x3c] sm:$0xf]
  %v3081 = vunpack.c.l.b16 %v3049
  %v3082 = vunpack.c.l.b16 %v3050
  %v3083 = vunpack.c.l.b16 %v3051
  %v3084 = vunpack.c.l.b16 %v3052
  %v3085 = vunpack.c.l.b16 %v3053
  %v3086 = vunpack.c.l.b16 %v3054
  %v3087 = vunpack.c.l.b16 %v3055
  %v3088 = vunpack.c.l.b16 %v3056
  %v3089 = vunpack.c.l.b16 %v3057
  %v3090 = vunpack.c.l.b16 %v3058
  %v3091 = vunpack.c.l.b16 %v3059
  %v3092 = vunpack.c.l.b16 %v3060
  %v3093 = vunpack.c.l.b16 %v3061
  %v3094 = vunpack.c.l.b16 %v3062
  %v3095 = vunpack.c.l.b16 %v3063
  %v3096 = vunpack.c.l.b16 %v3064
  %v3097 = vpack.c.b16 %v3082, %v3081
  %v3098 = vpack.c.b16 %v3084, %v3083
  %v3099 = vpack.c.b16 %v3086, %v3085
  %v3100 = vpack.c.b16 %v3088, %v3087
  %v3101 = vpack.c.b16 %v3090, %v3089
  %v3102 = vpack.c.b16 %v3092, %v3091
  %v3103 = vpack.c.b16 %v3094, %v3093
  %v3104 = vpack.c.b16 %v3096, %v3095
  %3113 = vmatprep.subr.bf16.mxu0 0
  %3114 = vmatpush1.bf16.msra.mxu0 %v3104
  %3115 = vmatprep.subr.bf16.mxu0 0
  %3116 = vmatpush1.bf16.msra.mxu0 %v3103
  %3117 = vmatprep.subr.bf16.mxu0 0
  %3118 = vmatpush1.bf16.msra.mxu0 %v3102
  %3119 = vmatprep.subr.bf16.mxu0 0
  %3120 = vmatpush1.bf16.msra.mxu0 %v3101
  %3121 = vmatprep.subr.bf16.mxu0 0
  %3122 = vmatpush1.bf16.msra.mxu0 %v3100
  %3123 = vmatprep.subr.bf16.mxu0 0
  %3124 = vmatpush1.bf16.msra.mxu0 %v3099
  %3125 = vmatprep.subr.bf16.mxu0 0
  %3126 = vmatpush1.bf16.msra.mxu0 %v3098
  %3127 = vmatprep.subr.bf16.mxu0 0
  %3128 = vmatpush1.bf16.msra.mxu0 %v3097
  %3129 = vmatprep.subr.bf16.mxu0 0
  %3130 = vmatpush2.bf16.msra.mxu0 0
  %3131 = vmatprep.subr.bf16.mxu0 0
  %3132 = vmatpush2.bf16.msra.mxu0 0
  %3133 = vmatprep.subr.bf16.mxu0 0
  %3134 = vmatpush2.bf16.msra.mxu0 0
  %3135 = vmatprep.subr.bf16.mxu0 0
  %3136 = vmatpush2.bf16.msra.mxu0 0
  %3137 = vmatprep.subr.bf16.mxu0 0
  %3138 = vmatpush2.bf16.msra.mxu0 0
  %3139 = vmatprep.subr.bf16.mxu0 0
  %3140 = vmatpush2.bf16.msra.mxu0 0
  %3141 = vmatprep.subr.bf16.mxu0 0
  %3142 = vmatpush2.bf16.msra.mxu0 0
  %3143 = vmatprep.subr.bf16.mxu0 0
  %3144 = vmatpush2.bf16.msra.mxu0 0
  %3145 = vmatprep.mubr.bf16.mxu0 0
  %3146 = vmatmul.mubr.bf16.gmra.mxu0 %v3047
  %v3147 = vpop.f32.mrf.mxu0
  %v3148 = vadd.f32 0.0, %v3147
  %v3149 = vpop.f32.mrf.mxu0
  %v3150 = vpop.f32.mrf.mxu0
  %v3151 = vadd.f32 0.0, %v3150
  %v3152 = vpop.f32.mrf.mxu0
  %3153 = vmatprep.mubr.bf16.mxu0 0
  %3154 = vmatmul.mubr.bf16.gmra.mxu0 %v3048
  %v3155 = vpop.f32.mrf.mxu0
  %v3156 = vadd.f32 0.0, %v3155
  %v3157 = vpop.f32.mrf.mxu0
  %v3158 = vpop.f32.mrf.mxu0
  %v3159 = vadd.f32 0.0, %v3158
  %v3160 = vpop.f32.mrf.mxu0
  %3161 = vdwg.mxu0
  %v3162 = vadd.f32 %v2997, %v3148
  %v3163 = vadd.f32 %v2997, %v3151
  %v3164 = vadd.f32 %v2997, %v3156
  %v3165 = vadd.f32 %v2997, %v3159
  %3166 = vmatprep.subr.bf16.mxu0 0
  %3167 = vmatpush1.bf16.msra.mxu0 0
  %3168 = vmatprep.subr.bf16.mxu0 0
  %3169 = vmatpush1.bf16.msra.mxu0 0
  %3170 = vmatprep.subr.bf16.mxu0 0
  %3171 = vmatpush1.bf16.msra.mxu0 0
  %3172 = vmatprep.subr.bf16.mxu0 0
  %3173 = vmatpush1.bf16.msra.mxu0 0
  %3174 = vmatprep.subr.bf16.mxu0 0
  %3175 = vmatpush1.bf16.msra.mxu0 0
  %3176 = vmatprep.subr.bf16.mxu0 0
  %3177 = vmatpush1.bf16.msra.mxu0 0
  %3178 = vmatprep.subr.bf16.mxu0 0
  %3179 = vmatpush1.bf16.msra.mxu0 %v2989
  %3180 = vmatprep.subr.bf16.mxu0 0
  %3181 = vmatpush1.bf16.msra.mxu0 %v2988
  %3182 = vmatprep.subr.bf16.mxu0 0
  %3183 = vmatpush2.bf16.msra.mxu0 0
  %3184 = vmatprep.subr.bf16.mxu0 0
  %3185 = vmatpush2.bf16.msra.mxu0 0
  %3186 = vmatprep.subr.bf16.mxu0 0
  %3187 = vmatpush2.bf16.msra.mxu0 0
  %3188 = vmatprep.subr.bf16.mxu0 0
  %3189 = vmatpush2.bf16.msra.mxu0 0
  %3190 = vmatprep.subr.bf16.mxu0 0
  %3191 = vmatpush2.bf16.msra.mxu0 0
  %3192 = vmatprep.subr.bf16.mxu0 0
  %3193 = vmatpush2.bf16.msra.mxu0 0
  %3194 = vmatprep.subr.bf16.mxu0 0
  %3195 = vmatpush2.bf16.msra.mxu0 0
  %3196 = vmatprep.subr.bf16.mxu0 0
  %3197 = vmatpush2.bf16.msra.mxu0 0
  %3198 = vmatprep.mubr.bf16.mxu0 0
  %3199 = vmatmul.mubr.bf16.gmra.mxu0 %v2683
  %v3200 = vpop.f32.mrf.mxu0
  %v3201 = vadd.f32 0.0, %v3200
  %v3202 = vpop.f32.mrf.mxu0
  %v3203 = vpop.f32.mrf.mxu0
  %v3204 = vadd.f32 0.0, %v3203
  %v3205 = vpop.f32.mrf.mxu0
  %3206 = vmatprep.mubr.bf16.mxu0 0
  %3207 = vmatmul.mubr.bf16.gmra.mxu0 %v2686
  %v3208 = vpop.f32.mrf.mxu0
  %v3209 = vadd.f32 0.0, %v3208
  %v3210 = vpop.f32.mrf.mxu0
  %v3211 = vpop.f32.mrf.mxu0
  %v3212 = vadd.f32 0.0, %v3211
  %v3213 = vpop.f32.mrf.mxu0
  %3214 = vdwg.mxu0
  %v3215 = vpack.c.bf16 %v3204, %v3201
  %v3216 = vpack.c.bf16 %v3212, %v3209
  %s3217 = scalar_lea.vmem %s21, 64
  %v3218 = vld [vmem:[%s3217] sm:$0xf]
  %v3219 = vld [vmem:[%s3217 + $0x4] sm:$0xf]
  %v3220 = vld [vmem:[%s3217 + $0x8] sm:$0xf]
  %v3221 = vld [vmem:[%s3217 + $0xc] sm:$0xf]
  %v3222 = vld [vmem:[%s3217 + $0x10] sm:$0xf]
  %v3223 = vld [vmem:[%s3217 + $0x14] sm:$0xf]
  %v3224 = vld [vmem:[%s3217 + $0x18] sm:$0xf]
  %v3225 = vld [vmem:[%s3217 + $0x1c] sm:$0xf]
  %v3226 = vld [vmem:[%s3217 + $0x20] sm:$0xf]
  %v3227 = vld [vmem:[%s3217 + $0x24] sm:$0xf]
  %v3228 = vld [vmem:[%s3217 + $0x28] sm:$0xf]
  %v3229 = vld [vmem:[%s3217 + $0x2c] sm:$0xf]
  %v3230 = vld [vmem:[%s3217 + $0x30] sm:$0xf]
  %v3231 = vld [vmem:[%s3217 + $0x34] sm:$0xf]
  %v3232 = vld [vmem:[%s3217 + $0x38] sm:$0xf]
  %v3233 = vld [vmem:[%s3217 + $0x3c] sm:$0xf]
  %v3250 = vunpack.c.l.b16 %v3218
  %v3251 = vunpack.c.l.b16 %v3219
  %v3252 = vunpack.c.l.b16 %v3220
  %v3253 = vunpack.c.l.b16 %v3221
  %v3254 = vunpack.c.l.b16 %v3222
  %v3255 = vunpack.c.l.b16 %v3223
  %v3256 = vunpack.c.l.b16 %v3224
  %v3257 = vunpack.c.l.b16 %v3225
  %v3258 = vunpack.c.l.b16 %v3226
  %v3259 = vunpack.c.l.b16 %v3227
  %v3260 = vunpack.c.l.b16 %v3228
  %v3261 = vunpack.c.l.b16 %v3229
  %v3262 = vunpack.c.l.b16 %v3230
  %v3263 = vunpack.c.l.b16 %v3231
  %v3264 = vunpack.c.l.b16 %v3232
  %v3265 = vunpack.c.l.b16 %v3233
  %v3266 = vpack.c.b16 %v3251, %v3250
  %v3267 = vpack.c.b16 %v3253, %v3252
  %v3268 = vpack.c.b16 %v3255, %v3254
  %v3269 = vpack.c.b16 %v3257, %v3256
  %v3270 = vpack.c.b16 %v3259, %v3258
  %v3271 = vpack.c.b16 %v3261, %v3260
  %v3272 = vpack.c.b16 %v3263, %v3262
  %v3273 = vpack.c.b16 %v3265, %v3264
  %3282 = vmatprep.subr.bf16.mxu0 0
  %3283 = vmatpush1.bf16.msra.mxu0 %v3273
  %3284 = vmatprep.subr.bf16.mxu0 0
  %3285 = vmatpush1.bf16.msra.mxu0 %v3272
  %3286 = vmatprep.subr.bf16.mxu0 0
  %3287 = vmatpush1.bf16.msra.mxu0 %v3271
  %3288 = vmatprep.subr.bf16.mxu0 0
  %3289 = vmatpush1.bf16.msra.mxu0 %v3270
  %3290 = vmatprep.subr.bf16.mxu0 0
  %3291 = vmatpush1.bf16.msra.mxu0 %v3269
  %3292 = vmatprep.subr.bf16.mxu0 0
  %3293 = vmatpush1.bf16.msra.mxu0 %v3268
  %3294 = vmatprep.subr.bf16.mxu0 0
  %3295 = vmatpush1.bf16.msra.mxu0 %v3267
  %3296 = vmatprep.subr.bf16.mxu0 0
  %3297 = vmatpush1.bf16.msra.mxu0 %v3266
  %3298 = vmatprep.subr.bf16.mxu0 0
  %3299 = vmatpush2.bf16.msra.mxu0 0
  %3300 = vmatprep.subr.bf16.mxu0 0
  %3301 = vmatpush2.bf16.msra.mxu0 0
  %3302 = vmatprep.subr.bf16.mxu0 0
  %3303 = vmatpush2.bf16.msra.mxu0 0
  %3304 = vmatprep.subr.bf16.mxu0 0
  %3305 = vmatpush2.bf16.msra.mxu0 0
  %3306 = vmatprep.subr.bf16.mxu0 0
  %3307 = vmatpush2.bf16.msra.mxu0 0
  %3308 = vmatprep.subr.bf16.mxu0 0
  %3309 = vmatpush2.bf16.msra.mxu0 0
  %3310 = vmatprep.subr.bf16.mxu0 0
  %3311 = vmatpush2.bf16.msra.mxu0 0
  %3312 = vmatprep.subr.bf16.mxu0 0
  %3313 = vmatpush2.bf16.msra.mxu0 0
  %3314 = vmatprep.mubr.bf16.mxu0 0
  %3315 = vmatmul.mubr.bf16.gmra.mxu0 %v3215
  %v3316 = vpop.f32.mrf.mxu0
  %v3317 = vadd.f32 0.0, %v3316
  %v3318 = vpop.f32.mrf.mxu0
  %v3319 = vpop.f32.mrf.mxu0
  %v3320 = vadd.f32 0.0, %v3319
  %v3321 = vpop.f32.mrf.mxu0
  %3322 = vmatprep.mubr.bf16.mxu0 0
  %3323 = vmatmul.mubr.bf16.gmra.mxu0 %v3216
  %v3324 = vpop.f32.mrf.mxu0
  %v3325 = vadd.f32 0.0, %v3324
  %v3326 = vpop.f32.mrf.mxu0
  %v3327 = vpop.f32.mrf.mxu0
  %v3328 = vadd.f32 0.0, %v3327
  %v3329 = vpop.f32.mrf.mxu0
  %3330 = vdwg.mxu0
  %v3331 = vadd.f32 %v3162, %v3317
  %v3332 = vadd.f32 %v3163, %v3320
  %v3333 = vadd.f32 %v3164, %v3325
  %v3334 = vadd.f32 %v3165, %v3328
  %3335 = vmatprep.subr.bf16.mxu0 0
  %3336 = vmatpush1.bf16.msra.mxu0 0
  %3337 = vmatprep.subr.bf16.mxu0 0
  %3338 = vmatpush1.bf16.msra.mxu0 0
  %3339 = vmatprep.subr.bf16.mxu0 0
  %3340 = vmatpush1.bf16.msra.mxu0 0
  %3341 = vmatprep.subr.bf16.mxu0 0
  %3342 = vmatpush1.bf16.msra.mxu0 0
  %3343 = vmatprep.subr.bf16.mxu0 0
  %3344 = vmatpush1.bf16.msra.mxu0 0
  %3345 = vmatprep.subr.bf16.mxu0 0
  %3346 = vmatpush1.bf16.msra.mxu0 0
  %3347 = vmatprep.subr.bf16.mxu0 0
  %3348 = vmatpush1.bf16.msra.mxu0 %v2989
  %3349 = vmatprep.subr.bf16.mxu0 0
  %3350 = vmatpush1.bf16.msra.mxu0 %v2988
  %3351 = vmatprep.subr.bf16.mxu0 0
  %3352 = vmatpush2.bf16.msra.mxu0 0
  %3353 = vmatprep.subr.bf16.mxu0 0
  %3354 = vmatpush2.bf16.msra.mxu0 0
  %3355 = vmatprep.subr.bf16.mxu0 0
  %3356 = vmatpush2.bf16.msra.mxu0 0
  %3357 = vmatprep.subr.bf16.mxu0 0
  %3358 = vmatpush2.bf16.msra.mxu0 0
  %3359 = vmatprep.subr.bf16.mxu0 0
  %3360 = vmatpush2.bf16.msra.mxu0 0
  %3361 = vmatprep.subr.bf16.mxu0 0
  %3362 = vmatpush2.bf16.msra.mxu0 0
  %3363 = vmatprep.subr.bf16.mxu0 0
  %3364 = vmatpush2.bf16.msra.mxu0 0
  %3365 = vmatprep.subr.bf16.mxu0 0
  %3366 = vmatpush2.bf16.msra.mxu0 0
  %3367 = vmatprep.mubr.bf16.mxu0 0
  %3368 = vmatmul.mubr.bf16.gmra.mxu0 %v2832
  %v3369 = vpop.f32.mrf.mxu0
  %v3370 = vadd.f32 0.0, %v3369
  %v3371 = vpop.f32.mrf.mxu0
  %v3372 = vpop.f32.mrf.mxu0
  %v3373 = vadd.f32 0.0, %v3372
  %v3374 = vpop.f32.mrf.mxu0
  %3375 = vmatprep.mubr.bf16.mxu0 0
  %3376 = vmatmul.mubr.bf16.gmra.mxu0 %v2835
  %v3377 = vpop.f32.mrf.mxu0
  %v3378 = vadd.f32 0.0, %v3377
  %v3379 = vpop.f32.mrf.mxu0
  %v3380 = vpop.f32.mrf.mxu0
  %v3381 = vadd.f32 0.0, %v3380
  %v3382 = vpop.f32.mrf.mxu0
  %3383 = vdwg.mxu0
  %v3384 = vpack.c.bf16 %v3373, %v3370
  %v3385 = vpack.c.bf16 %v3381, %v3378
  %s3386 = scalar_lea.vmem %s21, 128
  %v3387 = vld [vmem:[%s3386] sm:$0xf]
  %v3388 = vld [vmem:[%s3386 + $0x4] sm:$0xf]
  %v3389 = vld [vmem:[%s3386 + $0x8] sm:$0xf]
  %v3390 = vld [vmem:[%s3386 + $0xc] sm:$0xf]
  %v3391 = vld [vmem:[%s3386 + $0x10] sm:$0xf]
  %v3392 = vld [vmem:[%s3386 + $0x14] sm:$0xf]
  %v3393 = vld [vmem:[%s3386 + $0x18] sm:$0xf]
  %v3394 = vld [vmem:[%s3386 + $0x1c] sm:$0xf]
  %v3395 = vld [vmem:[%s3386 + $0x20] sm:$0xf]
  %v3396 = vld [vmem:[%s3386 + $0x24] sm:$0xf]
  %v3397 = vld [vmem:[%s3386 + $0x28] sm:$0xf]
  %v3398 = vld [vmem:[%s3386 + $0x2c] sm:$0xf]
  %v3399 = vld [vmem:[%s3386 + $0x30] sm:$0xf]
  %v3400 = vld [vmem:[%s3386 + $0x34] sm:$0xf]
  %v3401 = vld [vmem:[%s3386 + $0x38] sm:$0xf]
  %v3402 = vld [vmem:[%s3386 + $0x3c] sm:$0xf]
  %v3419 = vunpack.c.l.b16 %v3387
  %v3420 = vunpack.c.l.b16 %v3388
  %v3421 = vunpack.c.l.b16 %v3389
  %v3422 = vunpack.c.l.b16 %v3390
  %v3423 = vunpack.c.l.b16 %v3391
  %v3424 = vunpack.c.l.b16 %v3392
  %v3425 = vunpack.c.l.b16 %v3393
  %v3426 = vunpack.c.l.b16 %v3394
  %v3427 = vunpack.c.l.b16 %v3395
  %v3428 = vunpack.c.l.b16 %v3396
  %v3429 = vunpack.c.l.b16 %v3397
  %v3430 = vunpack.c.l.b16 %v3398
  %v3431 = vunpack.c.l.b16 %v3399
  %v3432 = vunpack.c.l.b16 %v3400
  %v3433 = vunpack.c.l.b16 %v3401
  %v3434 = vunpack.c.l.b16 %v3402
  %v3435 = vpack.c.b16 %v3420, %v3419
  %v3436 = vpack.c.b16 %v3422, %v3421
  %v3437 = vpack.c.b16 %v3424, %v3423
  %v3438 = vpack.c.b16 %v3426, %v3425
  %v3439 = vpack.c.b16 %v3428, %v3427
  %v3440 = vpack.c.b16 %v3430, %v3429
  %v3441 = vpack.c.b16 %v3432, %v3431
  %v3442 = vpack.c.b16 %v3434, %v3433
  %3451 = vmatprep.subr.bf16.mxu0 0
  %3452 = vmatpush1.bf16.msra.mxu0 %v3442
  %3453 = vmatprep.subr.bf16.mxu0 0
  %3454 = vmatpush1.bf16.msra.mxu0 %v3441
  %3455 = vmatprep.subr.bf16.mxu0 0
  %3456 = vmatpush1.bf16.msra.mxu0 %v3440
  %3457 = vmatprep.subr.bf16.mxu0 0
  %3458 = vmatpush1.bf16.msra.mxu0 %v3439
  %3459 = vmatprep.subr.bf16.mxu0 0
  %3460 = vmatpush1.bf16.msra.mxu0 %v3438
  %3461 = vmatprep.subr.bf16.mxu0 0
  %3462 = vmatpush1.bf16.msra.mxu0 %v3437
  %3463 = vmatprep.subr.bf16.mxu0 0
  %3464 = vmatpush1.bf16.msra.mxu0 %v3436
  %3465 = vmatprep.subr.bf16.mxu0 0
  %3466 = vmatpush1.bf16.msra.mxu0 %v3435
  %3467 = vmatprep.subr.bf16.mxu0 0
  %3468 = vmatpush2.bf16.msra.mxu0 0
  %3469 = vmatprep.subr.bf16.mxu0 0
  %3470 = vmatpush2.bf16.msra.mxu0 0
  %3471 = vmatprep.subr.bf16.mxu0 0
  %3472 = vmatpush2.bf16.msra.mxu0 0
  %3473 = vmatprep.subr.bf16.mxu0 0
  %3474 = vmatpush2.bf16.msra.mxu0 0
  %3475 = vmatprep.subr.bf16.mxu0 0
  %3476 = vmatpush2.bf16.msra.mxu0 0
  %3477 = vmatprep.subr.bf16.mxu0 0
  %3478 = vmatpush2.bf16.msra.mxu0 0
  %3479 = vmatprep.subr.bf16.mxu0 0
  %3480 = vmatpush2.bf16.msra.mxu0 0
  %3481 = vmatprep.subr.bf16.mxu0 0
  %3482 = vmatpush2.bf16.msra.mxu0 0
  %3483 = vmatprep.mubr.bf16.mxu0 0
  %3484 = vmatmul.mubr.bf16.gmra.mxu0 %v3384
  %v3485 = vpop.f32.mrf.mxu0
  %v3486 = vadd.f32 0.0, %v3485
  %v3487 = vpop.f32.mrf.mxu0
  %v3488 = vpop.f32.mrf.mxu0
  %v3489 = vadd.f32 0.0, %v3488
  %v3490 = vpop.f32.mrf.mxu0
  %3491 = vmatprep.mubr.bf16.mxu0 0
  %3492 = vmatmul.mubr.bf16.gmra.mxu0 %v3385
  %v3493 = vpop.f32.mrf.mxu0
  %v3494 = vadd.f32 0.0, %v3493
  %v3495 = vpop.f32.mrf.mxu0
  %v3496 = vpop.f32.mrf.mxu0
  %v3497 = vadd.f32 0.0, %v3496
  %v3498 = vpop.f32.mrf.mxu0
  %3499 = vdwg.mxu0
  %v3500 = vadd.f32 %v3331, %v3486
  %v3501 = vadd.f32 %v3332, %v3489
  %v3502 = vadd.f32 %v3333, %v3494
  %v3503 = vadd.f32 %v3334, %v3497
  %v3504 = vmul.f32 %v3500, %v131
  %v3505 = vmul.f32 %v3501, %v136
  %v3506 = vmul.f32 %v3502, %v141
  %v3507 = vmul.f32 %v3503, %v146
  %v3508 = vadd.f32 %v2516, %v3504
  %v3509 = vadd.f32 %v2517, %v3505
  %v3510 = vadd.f32 %v2518, %v3506
  %v3511 = vadd.f32 %v2519, %v3507
  %v3512 = vld [vmem:[%s23] sm:$0x1]
  %v3513 = vld [vmem:[%s24] sm:$0x1]
  %v3514 = vsel %vm325, %v3508, 0.0
  %3515 = vadd.xlane.f32.xlu0 %v3514
  %v3516 = vpop.xlane.xlu0 %3515
  %v3517 = vsel %vm325, %v3509, 0.0
  %3518 = vadd.xlane.f32.xlu0 %v3517
  %v3519 = vpop.xlane.xlu0 %3518
  %v3520 = vsel %vm325, %v3510, 0.0
  %3521 = vadd.xlane.f32.xlu0 %v3520
  %v3522 = vpop.xlane.xlu0 %3521
  %v3523 = vsel %vm325, %v3511, 0.0
  %3524 = vadd.xlane.f32.xlu0 %v3523
  %v3525 = vpop.xlane.xlu0 %3524
  %v3526 = vmul.f32 %v3516, %v2459
  %v3527 = vmul.f32 %v3519, %v2459
  %v3528 = vmul.f32 %v3522, %v2459
  %v3529 = vmul.f32 %v3525, %v2459
  %v3530 = vsub.f32 %v3508, %v3526
  %v3531 = vsub.f32 %v3509, %v3527
  %v3532 = vsub.f32 %v3510, %v3528
  %v3533 = vsub.f32 %v3511, %v3529
  %v3534 = vmul.f32 %v3530, %v3530
  %v3535 = vmul.f32 %v3531, %v3531
  %v3536 = vmul.f32 %v3532, %v3532
  %v3537 = vmul.f32 %v3533, %v3533
  %v3538 = vsel %vm325, %v3534, 0.0
  %3539 = vadd.xlane.f32.xlu0 %v3538
  %v3540 = vpop.xlane.xlu0 %3539
  %v3541 = vsel %vm325, %v3535, 0.0
  %3542 = vadd.xlane.f32.xlu0 %v3541
  %v3543 = vpop.xlane.xlu0 %3542
  %v3544 = vsel %vm325, %v3536, 0.0
  %3545 = vadd.xlane.f32.xlu0 %v3544
  %v3546 = vpop.xlane.xlu0 %3545
  %v3547 = vsel %vm325, %v3537, 0.0
  %3548 = vadd.xlane.f32.xlu0 %v3547
  %v3549 = vpop.xlane.xlu0 %3548
  %v3550 = vmul.f32 %v3540, %v2459
  %v3551 = vmul.f32 %v3543, %v2459
  %v3552 = vmul.f32 %v3546, %v2459
  %v3553 = vmul.f32 %v3549, %v2459
  %v3554 = vadd.f32 %v3550, 1e-05
  %v3555 = vadd.f32 %v3551, 1e-05
  %v3556 = vadd.f32 %v3552, 1e-05
  %v3557 = vadd.f32 %v3553, 1e-05
  %v3558 = vrsqrt.pop %v3554
  %v3559 = vrsqrt.pop %v3555
  %v3560 = vrsqrt.pop %v3556
  %v3561 = vrsqrt.pop %v3557
  %v3562 = vmul.f32 %v3530, %v3558
  %v3563 = vmul.f32 %v3531, %v3559
  %v3564 = vmul.f32 %v3532, %v3560
  %v3565 = vmul.f32 %v3533, %v3561
  %v3567 = vlaneseq
  %v3568 = vshrl.u32 %v3567, 7
  %v3569 = vsub.s32 0, %v3568
  %v3570 = vrot.slane %v3512, %v3569
  %v3572 = vmul.f32 %v3562, %v3570
  %v3573 = vmul.f32 %v3563, %v3570
  %v3574 = vmul.f32 %v3564, %v3570
  %v3575 = vmul.f32 %v3565, %v3570
  %v3577 = vlaneseq
  %v3578 = vshrl.u32 %v3577, 7
  %v3579 = vsub.s32 0, %v3578
  %v3580 = vrot.slane %v3513, %v3579
  %v3582 = vadd.f32 %v3572, %v3580
  %v3583 = vadd.f32 %v3573, %v3580
  %v3584 = vadd.f32 %v3574, %v3580
  %v3585 = vadd.f32 %v3575, %v3580
  %v3586 = vpack.c.bf16 %v3583, %v3582
  %v3587 = vpack.c.bf16 %v3585, %v3584
  %s3588 = scalar_lea.vmem %s17, 8
  %v3589 = vld [vmem:[%s3588] sm:$0xf]
  %v3590 = vld [vmem:[%s3588 + $0x4] sm:$0x1]
  %s3591 = scalar_lea.vmem %s18, 8
  %v3592 = vld [vmem:[%s3591] sm:$0xf]
  %v3593 = vld [vmem:[%s3591 + $0x4] sm:$0x1]
  %s3594 = scalar_lea.vmem %s14, 1
  %v3595 = vld [vmem:[%s3594] sm:$0x1]
  %v3597 = vlaneseq
  %v3598 = vshrl.u32 %v3597, 7
  %v3599 = vsub.s32 0, %v3598
  %v3600 = vrot.slane %v3595, %v3599
  %v3602 = vadd.f32 %v3600, 0.0
  %s3603 = scalar_lea.vmem %s7, 64
  %v3604 = vld [vmem:[%s3603] sm:$0xf]
  %v3605 = vld [vmem:[%s3603 + $0x4] sm:$0xf]
  %v3606 = vld [vmem:[%s3603 + $0x8] sm:$0xf]
  %v3607 = vld [vmem:[%s3603 + $0xc] sm:$0xf]
  %v3608 = vld [vmem:[%s3603 + $0x10] sm:$0xf]
  %v3609 = vld [vmem:[%s3603 + $0x14] sm:$0xf]
  %v3610 = vld [vmem:[%s3603 + $0x18] sm:$0xf]
  %v3611 = vld [vmem:[%s3603 + $0x1c] sm:$0xf]
  %s3612 = scalar_lea.vmem %s8, 2
  %v3613 = vld [vmem:[%s3612] sm:$0x1]
  %v3615 = vlaneseq
  %v3616 = vshrl.u32 %v3615, 7
  %v3617 = vsub.s32 0, %v3616
  %v3618 = vrot.slane %v3613, %v3617
  %v3628 = vunpack.c.l.b16 %v3604
  %v3629 = vunpack.c.l.b16 %v3605
  %v3630 = vunpack.c.l.b16 %v3606
  %v3631 = vunpack.c.l.b16 %v3607
  %v3632 = vunpack.c.l.b16 %v3608
  %v3633 = vunpack.c.l.b16 %v3609
  %v3634 = vunpack.c.l.b16 %v3610
  %v3635 = vunpack.c.l.b16 %v3611
  %v3636 = vpack.c.b16 %v3629, %v3628
  %v3637 = vpack.c.b16 %v3631, %v3630
  %v3638 = vpack.c.b16 %v3633, %v3632
  %v3639 = vpack.c.b16 %v3635, %v3634
  %v3645 = vsel %vm325, %v3586, 0
  %v3648 = vsel %vm325, %v3587, 0
  %3650 = vmatprep.subr.bf16.mxu0 0
  %3651 = vmatpush1.bf16.msra.mxu0 0
  %3652 = vmatprep.subr.bf16.mxu0 0
  %3653 = vmatpush1.bf16.msra.mxu0 0
  %3654 = vmatprep.subr.bf16.mxu0 0
  %3655 = vmatpush1.bf16.msra.mxu0 0
  %3656 = vmatprep.subr.bf16.mxu0 0
  %3657 = vmatpush1.bf16.msra.mxu0 0
  %3658 = vmatprep.subr.bf16.mxu0 0
  %3659 = vmatpush1.bf16.msra.mxu0 %v3639
  %3660 = vmatprep.subr.bf16.mxu0 0
  %3661 = vmatpush1.bf16.msra.mxu0 %v3638
  %3662 = vmatprep.subr.bf16.mxu0 0
  %3663 = vmatpush1.bf16.msra.mxu0 %v3637
  %3664 = vmatprep.subr.bf16.mxu0 0
  %3665 = vmatpush1.bf16.msra.mxu0 %v3636
  %3666 = vmatprep.subr.bf16.mxu0 0
  %3667 = vmatpush2.bf16.msra.mxu0 0
  %3668 = vmatprep.subr.bf16.mxu0 0
  %3669 = vmatpush2.bf16.msra.mxu0 0
  %3670 = vmatprep.subr.bf16.mxu0 0
  %3671 = vmatpush2.bf16.msra.mxu0 0
  %3672 = vmatprep.subr.bf16.mxu0 0
  %3673 = vmatpush2.bf16.msra.mxu0 0
  %3674 = vmatprep.subr.bf16.mxu0 0
  %3675 = vmatpush2.bf16.msra.mxu0 0
  %3676 = vmatprep.subr.bf16.mxu0 0
  %3677 = vmatpush2.bf16.msra.mxu0 0
  %3678 = vmatprep.subr.bf16.mxu0 0
  %3679 = vmatpush2.bf16.msra.mxu0 0
  %3680 = vmatprep.subr.bf16.mxu0 0
  %3681 = vmatpush2.bf16.msra.mxu0 0
  %3682 = vmatprep.mubr.bf16.mxu0 0
  %3683 = vmatmul.mubr.bf16.gmra.mxu0 %v3645
  %v3684 = vpop.f32.mrf.mxu0
  %v3685 = vadd.f32 %v3618, %v3684
  %v3686 = vpop.f32.mrf.mxu0
  %v3687 = vpop.f32.mrf.mxu0
  %v3688 = vadd.f32 %v3618, %v3687
  %v3689 = vpop.f32.mrf.mxu0
  %3690 = vmatprep.mubr.bf16.mxu0 0
  %3691 = vmatmul.mubr.bf16.gmra.mxu0 %v3648
  %v3692 = vpop.f32.mrf.mxu0
  %v3693 = vadd.f32 %v3618, %v3692
  %v3694 = vpop.f32.mrf.mxu0
  %v3695 = vpop.f32.mrf.mxu0
  %v3696 = vadd.f32 %v3618, %v3695
  %v3697 = vpop.f32.mrf.mxu0
  %3698 = vdwg.mxu0
  %v3699 = vmul.f32 %v3685, 0.17677669
  %v3700 = vmul.f32 %v3688, 0.17677669
  %v3701 = vmul.f32 %v3693, 0.17677669
  %v3702 = vmul.f32 %v3696, 0.17677669
  %s3703 = scalar_lea.vmem %s9, 64
  %v3704 = vld [vmem:[%s3703] sm:$0xf]
  %v3705 = vld [vmem:[%s3703 + $0x4] sm:$0xf]
  %v3706 = vld [vmem:[%s3703 + $0x8] sm:$0xf]
  %v3707 = vld [vmem:[%s3703 + $0xc] sm:$0xf]
  %v3708 = vld [vmem:[%s3703 + $0x10] sm:$0xf]
  %v3709 = vld [vmem:[%s3703 + $0x14] sm:$0xf]
  %v3710 = vld [vmem:[%s3703 + $0x18] sm:$0xf]
  %v3711 = vld [vmem:[%s3703 + $0x1c] sm:$0xf]
  %s3712 = scalar_lea.vmem %s10, 2
  %v3713 = vld [vmem:[%s3712] sm:$0x1]
  %v3715 = vlaneseq
  %v3716 = vshrl.u32 %v3715, 7
  %v3717 = vsub.s32 0, %v3716
  %v3718 = vrot.slane %v3713, %v3717
  %v3728 = vunpack.c.l.b16 %v3704
  %v3729 = vunpack.c.l.b16 %v3705
  %v3730 = vunpack.c.l.b16 %v3706
  %v3731 = vunpack.c.l.b16 %v3707
  %v3732 = vunpack.c.l.b16 %v3708
  %v3733 = vunpack.c.l.b16 %v3709
  %v3734 = vunpack.c.l.b16 %v3710
  %v3735 = vunpack.c.l.b16 %v3711
  %v3736 = vpack.c.b16 %v3729, %v3728
  %v3737 = vpack.c.b16 %v3731, %v3730
  %v3738 = vpack.c.b16 %v3733, %v3732
  %v3739 = vpack.c.b16 %v3735, %v3734
  %3744 = vmatprep.subr.bf16.mxu0 0
  %3745 = vmatpush1.bf16.msra.mxu0 0
  %3746 = vmatprep.subr.bf16.mxu0 0
  %3747 = vmatpush1.bf16.msra.mxu0 0
  %3748 = vmatprep.subr.bf16.mxu0 0
  %3749 = vmatpush1.bf16.msra.mxu0 0
  %3750 = vmatprep.subr.bf16.mxu0 0
  %3751 = vmatpush1.bf16.msra.mxu0 0
  %3752 = vmatprep.subr.bf16.mxu0 0
  %3753 = vmatpush1.bf16.msra.mxu0 %v3739
  %3754 = vmatprep.subr.bf16.mxu0 0
  %3755 = vmatpush1.bf16.msra.mxu0 %v3738
  %3756 = vmatprep.subr.bf16.mxu0 0
  %3757 = vmatpush1.bf16.msra.mxu0 %v3737
  %3758 = vmatprep.subr.bf16.mxu0 0
  %3759 = vmatpush1.bf16.msra.mxu0 %v3736
  %3760 = vmatprep.subr.bf16.mxu0 0
  %3761 = vmatpush2.bf16.msra.mxu0 0
  %3762 = vmatprep.subr.bf16.mxu0 0
  %3763 = vmatpush2.bf16.msra.mxu0 0
  %3764 = vmatprep.subr.bf16.mxu0 0
  %3765 = vmatpush2.bf16.msra.mxu0 0
  %3766 = vmatprep.subr.bf16.mxu0 0
  %3767 = vmatpush2.bf16.msra.mxu0 0
  %3768 = vmatprep.subr.bf16.mxu0 0
  %3769 = vmatpush2.bf16.msra.mxu0 0
  %3770 = vmatprep.subr.bf16.mxu0 0
  %3771 = vmatpush2.bf16.msra.mxu0 0
  %3772 = vmatprep.subr.bf16.mxu0 0
  %3773 = vmatpush2.bf16.msra.mxu0 0
  %3774 = vmatprep.subr.bf16.mxu0 0
  %3775 = vmatpush2.bf16.msra.mxu0 0
  %3776 = vmatprep.mubr.bf16.mxu0 0
  %3777 = vmatmul.mubr.bf16.gmra.mxu0 %v3645
  %v3778 = vpop.f32.mrf.mxu0
  %v3779 = vadd.f32 %v3718, %v3778
  %v3780 = vpop.f32.mrf.mxu0
  %v3781 = vpop.f32.mrf.mxu0
  %v3782 = vadd.f32 %v3718, %v3781
  %v3783 = vpop.f32.mrf.mxu0
  %3784 = vmatprep.mubr.bf16.mxu0 0
  %3785 = vmatmul.mubr.bf16.gmra.mxu0 %v3648
  %v3786 = vpop.f32.mrf.mxu0
  %v3787 = vadd.f32 %v3718, %v3786
  %v3788 = vpop.f32.mrf.mxu0
  %v3789 = vpop.f32.mrf.mxu0
  %v3790 = vadd.f32 %v3718, %v3789
  %v3791 = vpop.f32.mrf.mxu0
  %3792 = vdwg.mxu0
  %s3793 = scalar_lea.vmem %s11, 64
  %v3794 = vld [vmem:[%s3793] sm:$0xf]
  %v3795 = vld [vmem:[%s3793 + $0x4] sm:$0xf]
  %v3796 = vld [vmem:[%s3793 + $0x8] sm:$0xf]
  %v3797 = vld [vmem:[%s3793 + $0xc] sm:$0xf]
  %v3798 = vld [vmem:[%s3793 + $0x10] sm:$0xf]
  %v3799 = vld [vmem:[%s3793 + $0x14] sm:$0xf]
  %v3800 = vld [vmem:[%s3793 + $0x18] sm:$0xf]
  %v3801 = vld [vmem:[%s3793 + $0x1c] sm:$0xf]
  %s3802 = scalar_lea.vmem %s12, 2
  %v3803 = vld [vmem:[%s3802] sm:$0x1]
  %v3805 = vlaneseq
  %v3806 = vshrl.u32 %v3805, 7
  %v3807 = vsub.s32 0, %v3806
  %v3808 = vrot.slane %v3803, %v3807
  %v3818 = vunpack.c.l.b16 %v3794
  %v3819 = vunpack.c.l.b16 %v3795
  %v3820 = vunpack.c.l.b16 %v3796
  %v3821 = vunpack.c.l.b16 %v3797
  %v3822 = vunpack.c.l.b16 %v3798
  %v3823 = vunpack.c.l.b16 %v3799
  %v3824 = vunpack.c.l.b16 %v3800
  %v3825 = vunpack.c.l.b16 %v3801
  %v3826 = vpack.c.b16 %v3819, %v3818
  %v3827 = vpack.c.b16 %v3821, %v3820
  %v3828 = vpack.c.b16 %v3823, %v3822
  %v3829 = vpack.c.b16 %v3825, %v3824
  %3834 = vmatprep.subr.bf16.mxu0 0
  %3835 = vmatpush1.bf16.msra.mxu0 0
  %3836 = vmatprep.subr.bf16.mxu0 0
  %3837 = vmatpush1.bf16.msra.mxu0 0
  %3838 = vmatprep.subr.bf16.mxu0 0
  %3839 = vmatpush1.bf16.msra.mxu0 0
  %3840 = vmatprep.subr.bf16.mxu0 0
  %3841 = vmatpush1.bf16.msra.mxu0 0
  %3842 = vmatprep.subr.bf16.mxu0 0
  %3843 = vmatpush1.bf16.msra.mxu0 %v3829
  %3844 = vmatprep.subr.bf16.mxu0 0
  %3845 = vmatpush1.bf16.msra.mxu0 %v3828
  %3846 = vmatprep.subr.bf16.mxu0 0
  %3847 = vmatpush1.bf16.msra.mxu0 %v3827
  %3848 = vmatprep.subr.bf16.mxu0 0
  %3849 = vmatpush1.bf16.msra.mxu0 %v3826
  %3850 = vmatprep.subr.bf16.mxu0 0
  %3851 = vmatpush2.bf16.msra.mxu0 0
  %3852 = vmatprep.subr.bf16.mxu0 0
  %3853 = vmatpush2.bf16.msra.mxu0 0
  %3854 = vmatprep.subr.bf16.mxu0 0
  %3855 = vmatpush2.bf16.msra.mxu0 0
  %3856 = vmatprep.subr.bf16.mxu0 0
  %3857 = vmatpush2.bf16.msra.mxu0 0
  %3858 = vmatprep.subr.bf16.mxu0 0
  %3859 = vmatpush2.bf16.msra.mxu0 0
  %3860 = vmatprep.subr.bf16.mxu0 0
  %3861 = vmatpush2.bf16.msra.mxu0 0
  %3862 = vmatprep.subr.bf16.mxu0 0
  %3863 = vmatpush2.bf16.msra.mxu0 0
  %3864 = vmatprep.subr.bf16.mxu0 0
  %3865 = vmatpush2.bf16.msra.mxu0 0
  %3866 = vmatprep.mubr.bf16.mxu0 0
  %3867 = vmatmul.mubr.bf16.gmra.mxu0 %v3645
  %v3868 = vpop.f32.mrf.mxu0
  %v3869 = vadd.f32 %v3808, %v3868
  %v3870 = vpop.f32.mrf.mxu0
  %v3871 = vpop.f32.mrf.mxu0
  %v3872 = vadd.f32 %v3808, %v3871
  %v3873 = vpop.f32.mrf.mxu0
  %3874 = vmatprep.mubr.bf16.mxu0 0
  %3875 = vmatmul.mubr.bf16.gmra.mxu0 %v3648
  %v3876 = vpop.f32.mrf.mxu0
  %v3877 = vadd.f32 %v3808, %v3876
  %v3878 = vpop.f32.mrf.mxu0
  %v3879 = vpop.f32.mrf.mxu0
  %v3880 = vadd.f32 %v3808, %v3879
  %v3881 = vpop.f32.mrf.mxu0
  %3882 = vdwg.mxu0
  %v3883 = vpack.c.bf16 %v3700, %v3699
  %v3884 = vpack.c.bf16 %v3702, %v3701
  %v3885 = vpack.c.bf16 %v3782, %v3779
  %v3886 = vpack.c.bf16 %v3790, %v3787
  %v3889 = vunpack.c.l.b16 %v3589
  %v3890 = vunpack.c.l.b16 %v3590
  %v3891 = vpack.c.b16 %v3890, %v3889
  %v3893 = vsel %vm570, %v3883, 0
  %v3896 = vsel %vm570, %v3884, 0
  %v3899 = vsel %vm570, %v3891, 0
  %3901 = vmatprep.subr.bf16.mxu0 0
  %3902 = vmatpush1.bf16.xpose.msra.mxu0 0
  %3903 = vmatprep.subr.bf16.mxu0 0
  %3904 = vmatpush1.bf16.xpose.msra.mxu0 0
  %3905 = vmatprep.subr.bf16.mxu0 0
  %3906 = vmatpush1.bf16.xpose.msra.mxu0 0
  %3907 = vmatprep.subr.bf16.mxu0 0
  %3908 = vmatpush1.bf16.xpose.msra.mxu0 0
  %3909 = vmatprep.subr.bf16.mxu0 0
  %3910 = vmatpush1.bf16.xpose.msra.mxu0 0
  %3911 = vmatprep.subr.bf16.mxu0 0
  %3912 = vmatpush1.bf16.xpose.msra.mxu0 0
  %3913 = vmatprep.subr.bf16.mxu0 0
  %3914 = vmatpush1.bf16.xpose.msra.mxu0 0
  %3915 = vmatprep.subr.bf16.mxu0 0
  %3916 = vmatpush1.bf16.xpose.msra.mxu0 %v3899
  %3917 = vmatprep.subr.bf16.mxu0 0
  %3918 = vmatpush2.bf16.xpose.msra.mxu0 0
  %3919 = vmatprep.subr.bf16.mxu0 0
  %3920 = vmatpush2.bf16.xpose.msra.mxu0 0
  %3921 = vmatprep.subr.bf16.mxu0 0
  %3922 = vmatpush2.bf16.xpose.msra.mxu0 0
  %3923 = vmatprep.subr.bf16.mxu0 0
  %3924 = vmatpush2.bf16.xpose.msra.mxu0 0
  %3925 = vmatprep.subr.bf16.mxu0 0
  %3926 = vmatpush2.bf16.xpose.msra.mxu0 0
  %3927 = vmatprep.subr.bf16.mxu0 0
  %3928 = vmatpush2.bf16.xpose.msra.mxu0 0
  %3929 = vmatprep.subr.bf16.mxu0 0
  %3930 = vmatpush2.bf16.xpose.msra.mxu0 0
  %3931 = vmatprep.subr.bf16.mxu0 0
  %3932 = vmatpush2.bf16.xpose.msra.mxu0 0
  %3933 = vmatprep.mubr.bf16.mxu0 0
  %3934 = vmatmul.mubr.bf16.gmra.mxu0 %v3893
  %v3935 = vpop.f32.mrf.mxu0
  %v3936 = vadd.f32 0.0, %v3935
  %v3937 = vpop.f32.mrf.mxu0
  %v3938 = vpop.f32.mrf.mxu0
  %v3939 = vadd.f32 0.0, %v3938
  %v3940 = vpop.f32.mrf.mxu0
  %3941 = vmatprep.mubr.bf16.mxu0 0
  %3942 = vmatmul.mubr.bf16.gmra.mxu0 %v3896
  %v3943 = vpop.f32.mrf.mxu0
  %v3944 = vadd.f32 0.0, %v3943
  %v3945 = vpop.f32.mrf.mxu0
  %v3946 = vpop.f32.mrf.mxu0
  %v3947 = vadd.f32 0.0, %v3946
  %v3948 = vpop.f32.mrf.mxu0
  %3949 = vdwg.mxu0
  %3951 = vset.pattern.permute.xlu0 0
  %3952 = vperm.xlu0 %3951, %v3936
  %v3953 = vpop.permute.xlu0 %3952
  %3956 = vset.pattern.permute.xlu0 0
  %3957 = vperm.xlu0 %3956, %v3939
  %v3958 = vpop.permute.xlu0 %3957
  %3961 = vset.pattern.permute.xlu0 0
  %3962 = vperm.xlu0 %3961, %v3944
  %v3963 = vpop.permute.xlu0 %3962
  %3966 = vset.pattern.permute.xlu0 0
  %3967 = vperm.xlu0 %3966, %v3947
  %v3968 = vpop.permute.xlu0 %3967
  %v3970 = vsel %vm170, %v3953, 0.0
  %v3971 = vsel %vm171, %v3958, 0.0
  %v3972 = vsel %vm172, %v3963, 0.0
  %v3973 = vsel %vm173, %v3968, 0.0
  %v3975 = vsel %vm570, %v3885, 0
  %v3978 = vsel %vm570, %v3886, 0
  %3980 = vmatprep.subr.bf16.mxu0 0
  %3981 = vmatpush1.bf16.xpose.msra.mxu0 0
  %3982 = vmatprep.subr.bf16.mxu0 0
  %3983 = vmatpush1.bf16.xpose.msra.mxu0 0
  %3984 = vmatprep.subr.bf16.mxu0 0
  %3985 = vmatpush1.bf16.xpose.msra.mxu0 0
  %3986 = vmatprep.subr.bf16.mxu0 0
  %3987 = vmatpush1.bf16.xpose.msra.mxu0 0
  %3988 = vmatprep.subr.bf16.mxu0 0
  %3989 = vmatpush1.bf16.xpose.msra.mxu0 0
  %3990 = vmatprep.subr.bf16.mxu0 0
  %3991 = vmatpush1.bf16.xpose.msra.mxu0 0
  %3992 = vmatprep.subr.bf16.mxu0 0
  %3993 = vmatpush1.bf16.xpose.msra.mxu0 %v3978
  %3994 = vmatprep.subr.bf16.mxu0 0
  %3995 = vmatpush1.bf16.xpose.msra.mxu0 %v3975
  %3996 = vmatprep.subr.bf16.mxu0 0
  %3997 = vmatpush2.bf16.xpose.msra.mxu0 0
  %3998 = vmatprep.subr.bf16.mxu0 0
  %3999 = vmatpush2.bf16.xpose.msra.mxu0 0
  %4000 = vmatprep.subr.bf16.mxu0 0
  %4001 = vmatpush2.bf16.xpose.msra.mxu0 0
  %4002 = vmatprep.subr.bf16.mxu0 0
  %4003 = vmatpush2.bf16.xpose.msra.mxu0 0
  %4004 = vmatprep.subr.bf16.mxu0 0
  %4005 = vmatpush2.bf16.xpose.msra.mxu0 0
  %4006 = vmatprep.subr.bf16.mxu0 0
  %4007 = vmatpush2.bf16.xpose.msra.mxu0 0
  %4008 = vmatprep.subr.bf16.mxu0 0
  %4009 = vmatpush2.bf16.xpose.msra.mxu0 0
  %4010 = vmatprep.subr.bf16.mxu0 0
  %4011 = vmatpush2.bf16.xpose.msra.mxu0 0
  %4012 = vmatprep.mubr.bf16.mxu0 0
  %4013 = vmatmul.mubr.bf16.gmra.mxu0 %v3893
  %v4014 = vpop.f32.mrf.mxu0
  %v4015 = vadd.f32 %v3970, %v4014
  %v4016 = vpop.f32.mrf.mxu0
  %v4017 = vpop.f32.mrf.mxu0
  %v4018 = vadd.f32 %v3971, %v4017
  %v4019 = vpop.f32.mrf.mxu0
  %4020 = vmatprep.mubr.bf16.mxu0 0
  %4021 = vmatmul.mubr.bf16.gmra.mxu0 %v3896
  %v4022 = vpop.f32.mrf.mxu0
  %v4023 = vadd.f32 %v3972, %v4022
  %v4024 = vpop.f32.mrf.mxu0
  %v4025 = vpop.f32.mrf.mxu0
  %v4026 = vadd.f32 %v3973, %v4025
  %v4027 = vpop.f32.mrf.mxu0
  %4028 = vdwg.mxu0
  %4029 = vset.pattern.permute.xlu0 1
  %4030 = vperm.xlu0 %4029, %v3936
  %v4031 = vpop.permute.xlu0 %4030
  %4033 = vset.pattern.permute.xlu0 1
  %4034 = vperm.xlu0 %4033, %v3939
  %v4035 = vpop.permute.xlu0 %4034
  %4037 = vset.pattern.permute.xlu0 1
  %4038 = vperm.xlu0 %4037, %v3944
  %v4039 = vpop.permute.xlu0 %4038
  %4041 = vset.pattern.permute.xlu0 1
  %4042 = vperm.xlu0 %4041, %v3947
  %v4043 = vpop.permute.xlu0 %4042
  %v4045 = vsel %vm178, %v4031, 0.0
  %v4046 = vsel %vm179, %v4035, 0.0
  %v4047 = vsel %vm180, %v4039, 0.0
  %v4048 = vsel %vm181, %v4043, 0.0
  %v4049 = vadd.f32 %v4015, %v4045
  %v4050 = vadd.f32 %v4018, %v4046
  %v4051 = vadd.f32 %v4023, %v4047
  %v4052 = vadd.f32 %v4026, %v4048
  %4053 = vset.pattern.permute.xlu0 2
  %4054 = vperm.xlu0 %4053, %v3936
  %v4055 = vpop.permute.xlu0 %4054
  %4057 = vset.pattern.permute.xlu0 2
  %4058 = vperm.xlu0 %4057, %v3939
  %v4059 = vpop.permute.xlu0 %4058
  %4061 = vset.pattern.permute.xlu0 2
  %4062 = vperm.xlu0 %4061, %v3944
  %v4063 = vpop.permute.xlu0 %4062
  %4065 = vset.pattern.permute.xlu0 2
  %4066 = vperm.xlu0 %4065, %v3947
  %v4067 = vpop.permute.xlu0 %4066
  %v4069 = vsel %vm186, %v4055, 0.0
  %v4070 = vsel %vm187, %v4059, 0.0
  %v4071 = vsel %vm188, %v4063, 0.0
  %v4072 = vsel %vm189, %v4067, 0.0
  %v4073 = vadd.f32 %v4049, %v4069
  %v4074 = vadd.f32 %v4050, %v4070
  %v4075 = vadd.f32 %v4051, %v4071
  %v4076 = vadd.f32 %v4052, %v4072
  %4077 = vset.pattern.permute.xlu0 3
  %4078 = vperm.xlu0 %4077, %v3936
  %v4079 = vpop.permute.xlu0 %4078
  %4081 = vset.pattern.permute.xlu0 3
  %4082 = vperm.xlu0 %4081, %v3939
  %v4083 = vpop.permute.xlu0 %4082
  %4085 = vset.pattern.permute.xlu0 3
  %4086 = vperm.xlu0 %4085, %v3944
  %v4087 = vpop.permute.xlu0 %4086
  %4089 = vset.pattern.permute.xlu0 3
  %4090 = vperm.xlu0 %4089, %v3947
  %v4091 = vpop.permute.xlu0 %4090
  %v4093 = vsel %vm194, %v4079, 0.0
  %v4094 = vsel %vm195, %v4083, 0.0
  %v4095 = vsel %vm196, %v4087, 0.0
  %v4096 = vsel %vm197, %v4091, 0.0
  %v4097 = vadd.f32 %v4073, %v4093
  %v4098 = vadd.f32 %v4074, %v4094
  %v4099 = vadd.f32 %v4075, %v4095
  %v4100 = vadd.f32 %v4076, %v4096
  %4101 = vset.pattern.permute.xlu0 4
  %4102 = vperm.xlu0 %4101, %v3936
  %v4103 = vpop.permute.xlu0 %4102
  %4105 = vset.pattern.permute.xlu0 4
  %4106 = vperm.xlu0 %4105, %v3939
  %v4107 = vpop.permute.xlu0 %4106
  %4109 = vset.pattern.permute.xlu0 4
  %4110 = vperm.xlu0 %4109, %v3944
  %v4111 = vpop.permute.xlu0 %4110
  %4113 = vset.pattern.permute.xlu0 4
  %4114 = vperm.xlu0 %4113, %v3947
  %v4115 = vpop.permute.xlu0 %4114
  %v4117 = vsel %vm202, %v4103, 0.0
  %v4118 = vsel %vm203, %v4107, 0.0
  %v4119 = vsel %vm204, %v4111, 0.0
  %v4120 = vsel %vm205, %v4115, 0.0
  %v4121 = vadd.f32 %v4097, %v4117
  %v4122 = vadd.f32 %v4098, %v4118
  %v4123 = vadd.f32 %v4099, %v4119
  %v4124 = vadd.f32 %v4100, %v4120
  %4125 = vset.pattern.permute.xlu0 5
  %4126 = vperm.xlu0 %4125, %v3936
  %v4127 = vpop.permute.xlu0 %4126
  %4129 = vset.pattern.permute.xlu0 5
  %4130 = vperm.xlu0 %4129, %v3939
  %v4131 = vpop.permute.xlu0 %4130
  %4133 = vset.pattern.permute.xlu0 5
  %4134 = vperm.xlu0 %4133, %v3944
  %v4135 = vpop.permute.xlu0 %4134
  %4137 = vset.pattern.permute.xlu0 5
  %4138 = vperm.xlu0 %4137, %v3947
  %v4139 = vpop.permute.xlu0 %4138
  %v4141 = vsel %vm210, %v4127, 0.0
  %v4142 = vsel %vm211, %v4131, 0.0
  %v4143 = vsel %vm212, %v4135, 0.0
  %v4144 = vsel %vm213, %v4139, 0.0
  %v4145 = vadd.f32 %v4121, %v4141
  %v4146 = vadd.f32 %v4122, %v4142
  %v4147 = vadd.f32 %v4123, %v4143
  %v4148 = vadd.f32 %v4124, %v4144
  %4149 = vset.pattern.permute.xlu0 6
  %4150 = vperm.xlu0 %4149, %v3936
  %v4151 = vpop.permute.xlu0 %4150
  %4153 = vset.pattern.permute.xlu0 6
  %4154 = vperm.xlu0 %4153, %v3939
  %v4155 = vpop.permute.xlu0 %4154
  %4157 = vset.pattern.permute.xlu0 6
  %4158 = vperm.xlu0 %4157, %v3944
  %v4159 = vpop.permute.xlu0 %4158
  %4161 = vset.pattern.permute.xlu0 6
  %4162 = vperm.xlu0 %4161, %v3947
  %v4163 = vpop.permute.xlu0 %4162
  %v4165 = vsel %vm218, %v4151, 0.0
  %v4166 = vsel %vm219, %v4155, 0.0
  %v4167 = vsel %vm220, %v4159, 0.0
  %v4168 = vsel %vm221, %v4163, 0.0
  %v4169 = vadd.f32 %v4145, %v4165
  %v4170 = vadd.f32 %v4146, %v4166
  %v4171 = vadd.f32 %v4147, %v4167
  %v4172 = vadd.f32 %v4148, %v4168
  %4173 = vset.pattern.permute.xlu0 7
  %4174 = vperm.xlu0 %4173, %v3936
  %v4175 = vpop.permute.xlu0 %4174
  %4177 = vset.pattern.permute.xlu0 7
  %4178 = vperm.xlu0 %4177, %v3939
  %v4179 = vpop.permute.xlu0 %4178
  %4181 = vset.pattern.permute.xlu0 7
  %4182 = vperm.xlu0 %4181, %v3944
  %v4183 = vpop.permute.xlu0 %4182
  %4185 = vset.pattern.permute.xlu0 7
  %4186 = vperm.xlu0 %4185, %v3947
  %v4187 = vpop.permute.xlu0 %4186
  %v4189 = vsel %vm226, %v4175, 0.0
  %v4190 = vsel %vm227, %v4179, 0.0
  %v4191 = vsel %vm228, %v4183, 0.0
  %v4192 = vsel %vm229, %v4187, 0.0
  %v4193 = vadd.f32 %v4169, %v4189
  %v4194 = vadd.f32 %v4170, %v4190
  %v4195 = vadd.f32 %v4171, %v4191
  %v4196 = vadd.f32 %v4172, %v4192
  %4197 = vset.pattern.permute.xlu0 8
  %4198 = vperm.xlu0 %4197, %v3936
  %v4199 = vpop.permute.xlu0 %4198
  %4201 = vset.pattern.permute.xlu0 8
  %4202 = vperm.xlu0 %4201, %v3939
  %v4203 = vpop.permute.xlu0 %4202
  %4205 = vset.pattern.permute.xlu0 8
  %4206 = vperm.xlu0 %4205, %v3944
  %v4207 = vpop.permute.xlu0 %4206
  %4209 = vset.pattern.permute.xlu0 8
  %4210 = vperm.xlu0 %4209, %v3947
  %v4211 = vpop.permute.xlu0 %4210
  %v4213 = vsel %vm234, %v4199, 0.0
  %v4214 = vsel %vm235, %v4203, 0.0
  %v4215 = vsel %vm236, %v4207, 0.0
  %v4216 = vsel %vm237, %v4211, 0.0
  %v4217 = vadd.f32 %v4193, %v4213
  %v4218 = vadd.f32 %v4194, %v4214
  %v4219 = vadd.f32 %v4195, %v4215
  %v4220 = vadd.f32 %v4196, %v4216
  %v4221 = vsel %vm162, %v4217, -10000.0
  %v4222 = vsel %vm163, %v4218, -10000.0
  %v4223 = vsel %vm164, %v4219, -10000.0
  %v4224 = vsel %vm165, %v4220, -10000.0
  %v4225 = vsel %vm570, %v4221, -inf
  %4226 = vmax.xlane.f32.xlu0 %v4225
  %v4227 = vpop.xlane.xlu0 %4226
  %v4228 = vsel %vm570, %v4222, -inf
  %4229 = vmax.xlane.f32.xlu0 %v4228
  %v4230 = vpop.xlane.xlu0 %4229
  %v4231 = vsel %vm570, %v4223, -inf
  %4232 = vmax.xlane.f32.xlu0 %v4231
  %v4233 = vpop.xlane.xlu0 %4232
  %v4234 = vsel %vm570, %v4224, -inf
  %4235 = vmax.xlane.f32.xlu0 %v4234
  %v4236 = vpop.xlane.xlu0 %4235
  %v4237 = vsub.f32 %v4221, %v4227
  %v4238 = vsub.f32 %v4222, %v4230
  %v4239 = vsub.f32 %v4223, %v4233
  %v4240 = vsub.f32 %v4224, %v4236
  %v4241 = vmul.f32 %v4237, 1.442695
  %v4242 = vpow.pop %v4241
  %v4243 = vmul.f32 %v4238, 1.442695
  %v4244 = vpow.pop %v4243
  %v4245 = vmul.f32 %v4239, 1.442695
  %v4246 = vpow.pop %v4245
  %v4247 = vmul.f32 %v4240, 1.442695
  %v4248 = vpow.pop %v4247
  %v4249 = vsel %vm570, %v4242, 0.0
  %4250 = vadd.xlane.f32.xlu0 %v4249
  %v4251 = vpop.xlane.xlu0 %4250
  %v4252 = vsel %vm570, %v4244, 0.0
  %4253 = vadd.xlane.f32.xlu0 %v4252
  %v4254 = vpop.xlane.xlu0 %4253
  %v4255 = vsel %vm570, %v4246, 0.0
  %4256 = vadd.xlane.f32.xlu0 %v4255
  %v4257 = vpop.xlane.xlu0 %4256
  %v4258 = vsel %vm570, %v4248, 0.0
  %4259 = vadd.xlane.f32.xlu0 %v4258
  %v4260 = vpop.xlane.xlu0 %4259
  %v4261 = vrcp.pop %v4251
  %v4262 = vrcp.pop %v4254
  %v4263 = vrcp.pop %v4257
  %v4264 = vrcp.pop %v4260
  %v4265 = vmul.f32 %v4242, %v4261
  %v4266 = vmul.f32 %v4244, %v4262
  %v4267 = vmul.f32 %v4246, %v4263
  %v4268 = vmul.f32 %v4248, %v4264
  %v4269 = vpack.c.bf16 %v4266, %v4265
  %v4270 = vpack.c.bf16 %v4268, %v4267
  %v4271 = vpack.c.bf16 %v3872, %v3869
  %v4272 = vpack.c.bf16 %v3880, %v3877
  %v4273 = vsel %vm170, %v4265, 0.0
  %v4274 = vsel %vm171, %v4266, 0.0
  %v4275 = vsel %vm172, %v4267, 0.0
  %v4276 = vsel %vm173, %v4268, 0.0
  %v4277 = vsel %vm570, %v4273, 0.0
  %4278 = vadd.xlane.f32.xlu0 %v4277
  %v4279 = vpop.xlane.xlu0 %4278
  %v4280 = vsel %vm570, %v4274, 0.0
  %4281 = vadd.xlane.f32.xlu0 %v4280
  %v4282 = vpop.xlane.xlu0 %4281
  %v4283 = vsel %vm570, %v4275, 0.0
  %4284 = vadd.xlane.f32.xlu0 %v4283
  %v4285 = vpop.xlane.xlu0 %4284
  %v4286 = vsel %vm570, %v4276, 0.0
  %4287 = vadd.xlane.f32.xlu0 %v4286
  %v4288 = vpop.xlane.xlu0 %4287
  %v4289 = vsel %vm968, %v4279, 0.0
  %v4290 = vsel %vm968, %v4282, 0.0
  %v4291 = vsel %vm968, %v4285, 0.0
  %v4292 = vsel %vm968, %v4288, 0.0
  %v4293 = vadd.f32 %v4289, 0.0
  %v4294 = vadd.f32 %v4290, 0.0
  %v4295 = vadd.f32 %v4291, 0.0
  %v4296 = vadd.f32 %v4292, 0.0
  %v4297 = vsel %vm178, %v4265, 0.0
  %v4298 = vsel %vm179, %v4266, 0.0
  %v4299 = vsel %vm180, %v4267, 0.0
  %v4300 = vsel %vm181, %v4268, 0.0
  %v4301 = vsel %vm570, %v4297, 0.0
  %4302 = vadd.xlane.f32.xlu0 %v4301
  %v4303 = vpop.xlane.xlu0 %4302
  %v4304 = vsel %vm570, %v4298, 0.0
  %4305 = vadd.xlane.f32.xlu0 %v4304
  %v4306 = vpop.xlane.xlu0 %4305
  %v4307 = vsel %vm570, %v4299, 0.0
  %4308 = vadd.xlane.f32.xlu0 %v4307
  %v4309 = vpop.xlane.xlu0 %4308
  %v4310 = vsel %vm570, %v4300, 0.0
  %4311 = vadd.xlane.f32.xlu0 %v4310
  %v4312 = vpop.xlane.xlu0 %4311
  %v4313 = vsel %vm993, %v4303, 0.0
  %v4314 = vsel %vm993, %v4306, 0.0
  %v4315 = vsel %vm993, %v4309, 0.0
  %v4316 = vsel %vm993, %v4312, 0.0
  %v4317 = vadd.f32 %v4293, %v4313
  %v4318 = vadd.f32 %v4294, %v4314
  %v4319 = vadd.f32 %v4295, %v4315
  %v4320 = vadd.f32 %v4296, %v4316
  %v4321 = vsel %vm186, %v4265, 0.0
  %v4322 = vsel %vm187, %v4266, 0.0
  %v4323 = vsel %vm188, %v4267, 0.0
  %v4324 = vsel %vm189, %v4268, 0.0
  %v4325 = vsel %vm570, %v4321, 0.0
  %4326 = vadd.xlane.f32.xlu0 %v4325
  %v4327 = vpop.xlane.xlu0 %4326
  %v4328 = vsel %vm570, %v4322, 0.0
  %4329 = vadd.xlane.f32.xlu0 %v4328
  %v4330 = vpop.xlane.xlu0 %4329
  %v4331 = vsel %vm570, %v4323, 0.0
  %4332 = vadd.xlane.f32.xlu0 %v4331
  %v4333 = vpop.xlane.xlu0 %4332
  %v4334 = vsel %vm570, %v4324, 0.0
  %4335 = vadd.xlane.f32.xlu0 %v4334
  %v4336 = vpop.xlane.xlu0 %4335
  %v4337 = vsel %vm1018, %v4327, 0.0
  %v4338 = vsel %vm1018, %v4330, 0.0
  %v4339 = vsel %vm1018, %v4333, 0.0
  %v4340 = vsel %vm1018, %v4336, 0.0
  %v4341 = vadd.f32 %v4317, %v4337
  %v4342 = vadd.f32 %v4318, %v4338
  %v4343 = vadd.f32 %v4319, %v4339
  %v4344 = vadd.f32 %v4320, %v4340
  %v4345 = vsel %vm194, %v4265, 0.0
  %v4346 = vsel %vm195, %v4266, 0.0
  %v4347 = vsel %vm196, %v4267, 0.0
  %v4348 = vsel %vm197, %v4268, 0.0
  %v4349 = vsel %vm570, %v4345, 0.0
  %4350 = vadd.xlane.f32.xlu0 %v4349
  %v4351 = vpop.xlane.xlu0 %4350
  %v4352 = vsel %vm570, %v4346, 0.0
  %4353 = vadd.xlane.f32.xlu0 %v4352
  %v4354 = vpop.xlane.xlu0 %4353
  %v4355 = vsel %vm570, %v4347, 0.0
  %4356 = vadd.xlane.f32.xlu0 %v4355
  %v4357 = vpop.xlane.xlu0 %4356
  %v4358 = vsel %vm570, %v4348, 0.0
  %4359 = vadd.xlane.f32.xlu0 %v4358
  %v4360 = vpop.xlane.xlu0 %4359
  %v4361 = vsel %vm1043, %v4351, 0.0
  %v4362 = vsel %vm1043, %v4354, 0.0
  %v4363 = vsel %vm1043, %v4357, 0.0
  %v4364 = vsel %vm1043, %v4360, 0.0
  %v4365 = vadd.f32 %v4341, %v4361
  %v4366 = vadd.f32 %v4342, %v4362
  %v4367 = vadd.f32 %v4343, %v4363
  %v4368 = vadd.f32 %v4344, %v4364
  %v4369 = vsel %vm202, %v4265, 0.0
  %v4370 = vsel %vm203, %v4266, 0.0
  %v4371 = vsel %vm204, %v4267, 0.0
  %v4372 = vsel %vm205, %v4268, 0.0
  %v4373 = vsel %vm570, %v4369, 0.0
  %4374 = vadd.xlane.f32.xlu0 %v4373
  %v4375 = vpop.xlane.xlu0 %4374
  %v4376 = vsel %vm570, %v4370, 0.0
  %4377 = vadd.xlane.f32.xlu0 %v4376
  %v4378 = vpop.xlane.xlu0 %4377
  %v4379 = vsel %vm570, %v4371, 0.0
  %4380 = vadd.xlane.f32.xlu0 %v4379
  %v4381 = vpop.xlane.xlu0 %4380
  %v4382 = vsel %vm570, %v4372, 0.0
  %4383 = vadd.xlane.f32.xlu0 %v4382
  %v4384 = vpop.xlane.xlu0 %4383
  %v4385 = vsel %vm1068, %v4375, 0.0
  %v4386 = vsel %vm1068, %v4378, 0.0
  %v4387 = vsel %vm1068, %v4381, 0.0
  %v4388 = vsel %vm1068, %v4384, 0.0
  %v4389 = vadd.f32 %v4365, %v4385
  %v4390 = vadd.f32 %v4366, %v4386
  %v4391 = vadd.f32 %v4367, %v4387
  %v4392 = vadd.f32 %v4368, %v4388
  %v4393 = vsel %vm210, %v4265, 0.0
  %v4394 = vsel %vm211, %v4266, 0.0
  %v4395 = vsel %vm212, %v4267, 0.0
  %v4396 = vsel %vm213, %v4268, 0.0
  %v4397 = vsel %vm570, %v4393, 0.0
  %4398 = vadd.xlane.f32.xlu0 %v4397
  %v4399 = vpop.xlane.xlu0 %4398
  %v4400 = vsel %vm570, %v4394, 0.0
  %4401 = vadd.xlane.f32.xlu0 %v4400
  %v4402 = vpop.xlane.xlu0 %4401
  %v4403 = vsel %vm570, %v4395, 0.0
  %4404 = vadd.xlane.f32.xlu0 %v4403
  %v4405 = vpop.xlane.xlu0 %4404
  %v4406 = vsel %vm570, %v4396, 0.0
  %4407 = vadd.xlane.f32.xlu0 %v4406
  %v4408 = vpop.xlane.xlu0 %4407
  %v4409 = vsel %vm1093, %v4399, 0.0
  %v4410 = vsel %vm1093, %v4402, 0.0
  %v4411 = vsel %vm1093, %v4405, 0.0
  %v4412 = vsel %vm1093, %v4408, 0.0
  %v4413 = vadd.f32 %v4389, %v4409
  %v4414 = vadd.f32 %v4390, %v4410
  %v4415 = vadd.f32 %v4391, %v4411
  %v4416 = vadd.f32 %v4392, %v4412
  %v4417 = vsel %vm218, %v4265, 0.0
  %v4418 = vsel %vm219, %v4266, 0.0
  %v4419 = vsel %vm220, %v4267, 0.0
  %v4420 = vsel %vm221, %v4268, 0.0
  %v4421 = vsel %vm570, %v4417, 0.0
  %4422 = vadd.xlane.f32.xlu0 %v4421
  %v4423 = vpop.xlane.xlu0 %4422
  %v4424 = vsel %vm570, %v4418, 0.0
  %4425 = vadd.xlane.f32.xlu0 %v4424
  %v4426 = vpop.xlane.xlu0 %4425
  %v4427 = vsel %vm570, %v4419, 0.0
  %4428 = vadd.xlane.f32.xlu0 %v4427
  %v4429 = vpop.xlane.xlu0 %4428
  %v4430 = vsel %vm570, %v4420, 0.0
  %4431 = vadd.xlane.f32.xlu0 %v4430
  %v4432 = vpop.xlane.xlu0 %4431
  %v4433 = vsel %vm1118, %v4423, 0.0
  %v4434 = vsel %vm1118, %v4426, 0.0
  %v4435 = vsel %vm1118, %v4429, 0.0
  %v4436 = vsel %vm1118, %v4432, 0.0
  %v4437 = vadd.f32 %v4413, %v4433
  %v4438 = vadd.f32 %v4414, %v4434
  %v4439 = vadd.f32 %v4415, %v4435
  %v4440 = vadd.f32 %v4416, %v4436
  %v4441 = vsel %vm226, %v4265, 0.0
  %v4442 = vsel %vm227, %v4266, 0.0
  %v4443 = vsel %vm228, %v4267, 0.0
  %v4444 = vsel %vm229, %v4268, 0.0
  %v4445 = vsel %vm570, %v4441, 0.0
  %4446 = vadd.xlane.f32.xlu0 %v4445
  %v4447 = vpop.xlane.xlu0 %4446
  %v4448 = vsel %vm570, %v4442, 0.0
  %4449 = vadd.xlane.f32.xlu0 %v4448
  %v4450 = vpop.xlane.xlu0 %4449
  %v4451 = vsel %vm570, %v4443, 0.0
  %4452 = vadd.xlane.f32.xlu0 %v4451
  %v4453 = vpop.xlane.xlu0 %4452
  %v4454 = vsel %vm570, %v4444, 0.0
  %4455 = vadd.xlane.f32.xlu0 %v4454
  %v4456 = vpop.xlane.xlu0 %4455
  %v4457 = vsel %vm1143, %v4447, 0.0
  %v4458 = vsel %vm1143, %v4450, 0.0
  %v4459 = vsel %vm1143, %v4453, 0.0
  %v4460 = vsel %vm1143, %v4456, 0.0
  %v4461 = vadd.f32 %v4437, %v4457
  %v4462 = vadd.f32 %v4438, %v4458
  %v4463 = vadd.f32 %v4439, %v4459
  %v4464 = vadd.f32 %v4440, %v4460
  %v4465 = vsel %vm234, %v4265, 0.0
  %v4466 = vsel %vm235, %v4266, 0.0
  %v4467 = vsel %vm236, %v4267, 0.0
  %v4468 = vsel %vm237, %v4268, 0.0
  %v4469 = vsel %vm570, %v4465, 0.0
  %4470 = vadd.xlane.f32.xlu0 %v4469
  %v4471 = vpop.xlane.xlu0 %4470
  %v4472 = vsel %vm570, %v4466, 0.0
  %4473 = vadd.xlane.f32.xlu0 %v4472
  %v4474 = vpop.xlane.xlu0 %4473
  %v4475 = vsel %vm570, %v4467, 0.0
  %4476 = vadd.xlane.f32.xlu0 %v4475
  %v4477 = vpop.xlane.xlu0 %4476
  %v4478 = vsel %vm570, %v4468, 0.0
  %4479 = vadd.xlane.f32.xlu0 %v4478
  %v4480 = vpop.xlane.xlu0 %4479
  %v4481 = vsel %vm1168, %v4471, 0.0
  %v4482 = vsel %vm1168, %v4474, 0.0
  %v4483 = vsel %vm1168, %v4477, 0.0
  %v4484 = vsel %vm1168, %v4480, 0.0
  %v4485 = vadd.f32 %v4461, %v4481
  %v4486 = vadd.f32 %v4462, %v4482
  %v4487 = vadd.f32 %v4463, %v4483
  %v4488 = vadd.f32 %v4464, %v4484
  %v4489 = vpack.c.bf16 %v4486, %v4485
  %v4490 = vpack.c.bf16 %v4488, %v4487
  %v4493 = vunpack.c.l.b16 %v3592
  %v4494 = vunpack.c.l.b16 %v3593
  %v4495 = vpack.c.b16 %v4494, %v4493
  %v4497 = vsel %vm1184, %v4489, 0
  %v4500 = vsel %vm1184, %v4490, 0
  %v4503 = vand.u32 %v4495, %v1194
  %4505 = vmatprep.subr.bf16.mxu0 0
  %4506 = vmatpush1.bf16.msra.mxu0 0
  %4507 = vmatprep.subr.bf16.mxu0 0
  %4508 = vmatpush1.bf16.msra.mxu0 0
  %4509 = vmatprep.subr.bf16.mxu0 0
  %4510 = vmatpush1.bf16.msra.mxu0 0
  %4511 = vmatprep.subr.bf16.mxu0 0
  %4512 = vmatpush1.bf16.msra.mxu0 0
  %4513 = vmatprep.subr.bf16.mxu0 0
  %4514 = vmatpush1.bf16.msra.mxu0 0
  %4515 = vmatprep.subr.bf16.mxu0 0
  %4516 = vmatpush1.bf16.msra.mxu0 0
  %4517 = vmatprep.subr.bf16.mxu0 0
  %4518 = vmatpush1.bf16.msra.mxu0 0
  %4519 = vmatprep.subr.bf16.mxu0 0
  %4520 = vmatpush1.bf16.msra.mxu0 %v4503
  %4521 = vmatprep.subr.bf16.mxu0 0
  %4522 = vmatpush2.bf16.msra.mxu0 0
  %4523 = vmatprep.subr.bf16.mxu0 0
  %4524 = vmatpush2.bf16.msra.mxu0 0
  %4525 = vmatprep.subr.bf16.mxu0 0
  %4526 = vmatpush2.bf16.msra.mxu0 0
  %4527 = vmatprep.subr.bf16.mxu0 0
  %4528 = vmatpush2.bf16.msra.mxu0 0
  %4529 = vmatprep.subr.bf16.mxu0 0
  %4530 = vmatpush2.bf16.msra.mxu0 0
  %4531 = vmatprep.subr.bf16.mxu0 0
  %4532 = vmatpush2.bf16.msra.mxu0 0
  %4533 = vmatprep.subr.bf16.mxu0 0
  %4534 = vmatpush2.bf16.msra.mxu0 0
  %4535 = vmatprep.subr.bf16.mxu0 0
  %4536 = vmatpush2.bf16.msra.mxu0 0
  %4537 = vmatprep.mubr.bf16.mxu0 0
  %4538 = vmatmul.mubr.bf16.gmra.mxu0 %v4497
  %v4539 = vpop.f32.mrf.mxu0
  %v4540 = vadd.f32 0.0, %v4539
  %v4541 = vpop.f32.mrf.mxu0
  %v4542 = vpop.f32.mrf.mxu0
  %v4543 = vadd.f32 0.0, %v4542
  %v4544 = vpop.f32.mrf.mxu0
  %4545 = vmatprep.mubr.bf16.mxu0 0
  %4546 = vmatmul.mubr.bf16.gmra.mxu0 %v4500
  %v4547 = vpop.f32.mrf.mxu0
  %v4548 = vadd.f32 0.0, %v4547
  %v4549 = vpop.f32.mrf.mxu0
  %v4550 = vpop.f32.mrf.mxu0
  %v4551 = vadd.f32 0.0, %v4550
  %v4552 = vpop.f32.mrf.mxu0
  %4553 = vdwg.mxu0
  %v4555 = vsel %vm570, %v4269, 0
  %v4558 = vsel %vm570, %v4270, 0
  %4560 = vmatprep.subr.bf16.mxu0 0
  %4561 = vmatpush1.bf16.msra.mxu0 0
  %4562 = vmatprep.subr.bf16.mxu0 0
  %4563 = vmatpush1.bf16.msra.mxu0 0
  %4564 = vmatprep.subr.bf16.mxu0 0
  %4565 = vmatpush1.bf16.msra.mxu0 0
  %4566 = vmatprep.subr.bf16.mxu0 0
  %4567 = vmatpush1.bf16.msra.mxu0 0
  %4568 = vmatprep.subr.bf16.mxu0 0
  %4569 = vmatpush1.bf16.msra.mxu0 0
  %4570 = vmatprep.subr.bf16.mxu0 0
  %4571 = vmatpush1.bf16.msra.mxu0 0
  %4572 = vmatprep.subr.bf16.mxu0 0
  %4573 = vmatpush1.bf16.msra.mxu0 %v4272
  %4574 = vmatprep.subr.bf16.mxu0 0
  %4575 = vmatpush1.bf16.msra.mxu0 %v4271
  %4576 = vmatprep.subr.bf16.mxu0 0
  %4577 = vmatpush2.bf16.msra.mxu0 0
  %4578 = vmatprep.subr.bf16.mxu0 0
  %4579 = vmatpush2.bf16.msra.mxu0 0
  %4580 = vmatprep.subr.bf16.mxu0 0
  %4581 = vmatpush2.bf16.msra.mxu0 0
  %4582 = vmatprep.subr.bf16.mxu0 0
  %4583 = vmatpush2.bf16.msra.mxu0 0
  %4584 = vmatprep.subr.bf16.mxu0 0
  %4585 = vmatpush2.bf16.msra.mxu0 0
  %4586 = vmatprep.subr.bf16.mxu0 0
  %4587 = vmatpush2.bf16.msra.mxu0 0
  %4588 = vmatprep.subr.bf16.mxu0 0
  %4589 = vmatpush2.bf16.msra.mxu0 0
  %4590 = vmatprep.subr.bf16.mxu0 0
  %4591 = vmatpush2.bf16.msra.mxu0 0
  %4592 = vmatprep.mubr.bf16.mxu0 0
  %4593 = vmatmul.mubr.bf16.gmra.mxu0 %v4555
  %v4594 = vpop.f32.mrf.mxu0
  %v4595 = vadd.f32 %v4540, %v4594
  %v4596 = vpop.f32.mrf.mxu0
  %v4597 = vpop.f32.mrf.mxu0
  %v4598 = vadd.f32 %v4543, %v4597
  %v4599 = vpop.f32.mrf.mxu0
  %4600 = vmatprep.mubr.bf16.mxu0 0
  %4601 = vmatmul.mubr.bf16.gmra.mxu0 %v4558
  %v4602 = vpop.f32.mrf.mxu0
  %v4603 = vadd.f32 %v4548, %v4602
  %v4604 = vpop.f32.mrf.mxu0
  %v4605 = vpop.f32.mrf.mxu0
  %v4606 = vadd.f32 %v4551, %v4605
  %v4607 = vpop.f32.mrf.mxu0
  %4608 = vdwg.mxu0
  %v4609 = vpack.c.bf16 %v4598, %v4595
  %v4610 = vpack.c.bf16 %v4606, %v4603
  %s4611 = scalar_lea.vmem %s13, 32
  %v4612 = vld [vmem:[%s4611] sm:$0xf]
  %v4613 = vld [vmem:[%s4611 + $0x4] sm:$0xf]
  %v4614 = vld [vmem:[%s4611 + $0x8] sm:$0xf]
  %v4615 = vld [vmem:[%s4611 + $0xc] sm:$0xf]
  %v4620 = vunpack.c.l.b16 %v4612
  %v4621 = vunpack.c.l.b16 %v4613
  %v4622 = vunpack.c.l.b16 %v4614
  %v4623 = vunpack.c.l.b16 %v4615
  %v4624 = vpack.c.b16 %v4621, %v4620
  %v4625 = vpack.c.b16 %v4623, %v4622
  %v4629 = vsel %vm570, %v4609, 0
  %v4632 = vsel %vm570, %v4610, 0
  %4634 = vmatprep.subr.bf16.mxu0 0
  %4635 = vmatpush1.bf16.msra.mxu0 0
  %4636 = vmatprep.subr.bf16.mxu0 0
  %4637 = vmatpush1.bf16.msra.mxu0 0
  %4638 = vmatprep.subr.bf16.mxu0 0
  %4639 = vmatpush1.bf16.msra.mxu0 0
  %4640 = vmatprep.subr.bf16.mxu0 0
  %4641 = vmatpush1.bf16.msra.mxu0 0
  %4642 = vmatprep.subr.bf16.mxu0 0
  %4643 = vmatpush1.bf16.msra.mxu0 0
  %4644 = vmatprep.subr.bf16.mxu0 0
  %4645 = vmatpush1.bf16.msra.mxu0 0
  %4646 = vmatprep.subr.bf16.mxu0 0
  %4647 = vmatpush1.bf16.msra.mxu0 %v4625
  %4648 = vmatprep.subr.bf16.mxu0 0
  %4649 = vmatpush1.bf16.msra.mxu0 %v4624
  %4650 = vmatprep.subr.bf16.mxu0 0
  %4651 = vmatpush2.bf16.msra.mxu0 0
  %4652 = vmatprep.subr.bf16.mxu0 0
  %4653 = vmatpush2.bf16.msra.mxu0 0
  %4654 = vmatprep.subr.bf16.mxu0 0
  %4655 = vmatpush2.bf16.msra.mxu0 0
  %4656 = vmatprep.subr.bf16.mxu0 0
  %4657 = vmatpush2.bf16.msra.mxu0 0
  %4658 = vmatprep.subr.bf16.mxu0 0
  %4659 = vmatpush2.bf16.msra.mxu0 0
  %4660 = vmatprep.subr.bf16.mxu0 0
  %4661 = vmatpush2.bf16.msra.mxu0 0
  %4662 = vmatprep.subr.bf16.mxu0 0
  %4663 = vmatpush2.bf16.msra.mxu0 0
  %4664 = vmatprep.subr.bf16.mxu0 0
  %4665 = vmatpush2.bf16.msra.mxu0 0
  %4666 = vmatprep.mubr.bf16.mxu0 0
  %4667 = vmatmul.mubr.bf16.gmra.mxu0 %v4629
  %v4668 = vpop.f32.mrf.mxu0
  %v4669 = vadd.f32 0.0, %v4668
  %v4670 = vpop.f32.mrf.mxu0
  %v4671 = vpop.f32.mrf.mxu0
  %v4672 = vadd.f32 0.0, %v4671
  %v4673 = vpop.f32.mrf.mxu0
  %4674 = vmatprep.mubr.bf16.mxu0 0
  %4675 = vmatmul.mubr.bf16.gmra.mxu0 %v4632
  %v4676 = vpop.f32.mrf.mxu0
  %v4677 = vadd.f32 0.0, %v4676
  %v4678 = vpop.f32.mrf.mxu0
  %v4679 = vpop.f32.mrf.mxu0
  %v4680 = vadd.f32 0.0, %v4679
  %v4681 = vpop.f32.mrf.mxu0
  %4682 = vdwg.mxu0
  %v4683 = vadd.f32 %v3602, %v4669
  %v4684 = vadd.f32 %v3602, %v4672
  %v4685 = vadd.f32 %v3602, %v4677
  %v4686 = vadd.f32 %v3602, %v4680
  %s4687 = scalar_lea.vmem %s7, 96
  %v4688 = vld [vmem:[%s4687] sm:$0xf]
  %v4689 = vld [vmem:[%s4687 + $0x4] sm:$0xf]
  %v4690 = vld [vmem:[%s4687 + $0x8] sm:$0xf]
  %v4691 = vld [vmem:[%s4687 + $0xc] sm:$0xf]
  %v4692 = vld [vmem:[%s4687 + $0x10] sm:$0xf]
  %v4693 = vld [vmem:[%s4687 + $0x14] sm:$0xf]
  %v4694 = vld [vmem:[%s4687 + $0x18] sm:$0xf]
  %v4695 = vld [vmem:[%s4687 + $0x1c] sm:$0xf]
  %s4696 = scalar_lea.vmem %s8, 3
  %v4697 = vld [vmem:[%s4696] sm:$0x1]
  %v4699 = vlaneseq
  %v4700 = vshrl.u32 %v4699, 7
  %v4701 = vsub.s32 0, %v4700
  %v4702 = vrot.slane %v4697, %v4701
  %v4712 = vunpack.c.l.b16 %v4688
  %v4713 = vunpack.c.l.b16 %v4689
  %v4714 = vunpack.c.l.b16 %v4690
  %v4715 = vunpack.c.l.b16 %v4691
  %v4716 = vunpack.c.l.b16 %v4692
  %v4717 = vunpack.c.l.b16 %v4693
  %v4718 = vunpack.c.l.b16 %v4694
  %v4719 = vunpack.c.l.b16 %v4695
  %v4720 = vpack.c.b16 %v4713, %v4712
  %v4721 = vpack.c.b16 %v4715, %v4714
  %v4722 = vpack.c.b16 %v4717, %v4716
  %v4723 = vpack.c.b16 %v4719, %v4718
  %4728 = vmatprep.subr.bf16.mxu0 0
  %4729 = vmatpush1.bf16.msra.mxu0 0
  %4730 = vmatprep.subr.bf16.mxu0 0
  %4731 = vmatpush1.bf16.msra.mxu0 0
  %4732 = vmatprep.subr.bf16.mxu0 0
  %4733 = vmatpush1.bf16.msra.mxu0 0
  %4734 = vmatprep.subr.bf16.mxu0 0
  %4735 = vmatpush1.bf16.msra.mxu0 0
  %4736 = vmatprep.subr.bf16.mxu0 0
  %4737 = vmatpush1.bf16.msra.mxu0 %v4723
  %4738 = vmatprep.subr.bf16.mxu0 0
  %4739 = vmatpush1.bf16.msra.mxu0 %v4722
  %4740 = vmatprep.subr.bf16.mxu0 0
  %4741 = vmatpush1.bf16.msra.mxu0 %v4721
  %4742 = vmatprep.subr.bf16.mxu0 0
  %4743 = vmatpush1.bf16.msra.mxu0 %v4720
  %4744 = vmatprep.subr.bf16.mxu0 0
  %4745 = vmatpush2.bf16.msra.mxu0 0
  %4746 = vmatprep.subr.bf16.mxu0 0
  %4747 = vmatpush2.bf16.msra.mxu0 0
  %4748 = vmatprep.subr.bf16.mxu0 0
  %4749 = vmatpush2.bf16.msra.mxu0 0
  %4750 = vmatprep.subr.bf16.mxu0 0
  %4751 = vmatpush2.bf16.msra.mxu0 0
  %4752 = vmatprep.subr.bf16.mxu0 0
  %4753 = vmatpush2.bf16.msra.mxu0 0
  %4754 = vmatprep.subr.bf16.mxu0 0
  %4755 = vmatpush2.bf16.msra.mxu0 0
  %4756 = vmatprep.subr.bf16.mxu0 0
  %4757 = vmatpush2.bf16.msra.mxu0 0
  %4758 = vmatprep.subr.bf16.mxu0 0
  %4759 = vmatpush2.bf16.msra.mxu0 0
  %4760 = vmatprep.mubr.bf16.mxu0 0
  %4761 = vmatmul.mubr.bf16.gmra.mxu0 %v3645
  %v4762 = vpop.f32.mrf.mxu0
  %v4763 = vadd.f32 %v4702, %v4762
  %v4764 = vpop.f32.mrf.mxu0
  %v4765 = vpop.f32.mrf.mxu0
  %v4766 = vadd.f32 %v4702, %v4765
  %v4767 = vpop.f32.mrf.mxu0
  %4768 = vmatprep.mubr.bf16.mxu0 0
  %4769 = vmatmul.mubr.bf16.gmra.mxu0 %v3648
  %v4770 = vpop.f32.mrf.mxu0
  %v4771 = vadd.f32 %v4702, %v4770
  %v4772 = vpop.f32.mrf.mxu0
  %v4773 = vpop.f32.mrf.mxu0
  %v4774 = vadd.f32 %v4702, %v4773
  %v4775 = vpop.f32.mrf.mxu0
  %4776 = vdwg.mxu0
  %v4777 = vmul.f32 %v4763, 0.17677669
  %v4778 = vmul.f32 %v4766, 0.17677669
  %v4779 = vmul.f32 %v4771, 0.17677669
  %v4780 = vmul.f32 %v4774, 0.17677669
  %s4781 = scalar_lea.vmem %s9, 96
  %v4782 = vld [vmem:[%s4781] sm:$0xf]
  %v4783 = vld [vmem:[%s4781 + $0x4] sm:$0xf]
  %v4784 = vld [vmem:[%s4781 + $0x8] sm:$0xf]
  %v4785 = vld [vmem:[%s4781 + $0xc] sm:$0xf]
  %v4786 = vld [vmem:[%s4781 + $0x10] sm:$0xf]
  %v4787 = vld [vmem:[%s4781 + $0x14] sm:$0xf]
  %v4788 = vld [vmem:[%s4781 + $0x18] sm:$0xf]
  %v4789 = vld [vmem:[%s4781 + $0x1c] sm:$0xf]
  %s4790 = scalar_lea.vmem %s10, 3
  %v4791 = vld [vmem:[%s4790] sm:$0x1]
  %v4793 = vlaneseq
  %v4794 = vshrl.u32 %v4793, 7
  %v4795 = vsub.s32 0, %v4794
  %v4796 = vrot.slane %v4791, %v4795
  %v4806 = vunpack.c.l.b16 %v4782
  %v4807 = vunpack.c.l.b16 %v4783
  %v4808 = vunpack.c.l.b16 %v4784
  %v4809 = vunpack.c.l.b16 %v4785
  %v4810 = vunpack.c.l.b16 %v4786
  %v4811 = vunpack.c.l.b16 %v4787
  %v4812 = vunpack.c.l.b16 %v4788
  %v4813 = vunpack.c.l.b16 %v4789
  %v4814 = vpack.c.b16 %v4807, %v4806
  %v4815 = vpack.c.b16 %v4809, %v4808
  %v4816 = vpack.c.b16 %v4811, %v4810
  %v4817 = vpack.c.b16 %v4813, %v4812
  %4822 = vmatprep.subr.bf16.mxu0 0
  %4823 = vmatpush1.bf16.msra.mxu0 0
  %4824 = vmatprep.subr.bf16.mxu0 0
  %4825 = vmatpush1.bf16.msra.mxu0 0
  %4826 = vmatprep.subr.bf16.mxu0 0
  %4827 = vmatpush1.bf16.msra.mxu0 0
  %4828 = vmatprep.subr.bf16.mxu0 0
  %4829 = vmatpush1.bf16.msra.mxu0 0
  %4830 = vmatprep.subr.bf16.mxu0 0
  %4831 = vmatpush1.bf16.msra.mxu0 %v4817
  %4832 = vmatprep.subr.bf16.mxu0 0
  %4833 = vmatpush1.bf16.msra.mxu0 %v4816
  %4834 = vmatprep.subr.bf16.mxu0 0
  %4835 = vmatpush1.bf16.msra.mxu0 %v4815
  %4836 = vmatprep.subr.bf16.mxu0 0
  %4837 = vmatpush1.bf16.msra.mxu0 %v4814
  %4838 = vmatprep.subr.bf16.mxu0 0
  %4839 = vmatpush2.bf16.msra.mxu0 0
  %4840 = vmatprep.subr.bf16.mxu0 0
  %4841 = vmatpush2.bf16.msra.mxu0 0
  %4842 = vmatprep.subr.bf16.mxu0 0
  %4843 = vmatpush2.bf16.msra.mxu0 0
  %4844 = vmatprep.subr.bf16.mxu0 0
  %4845 = vmatpush2.bf16.msra.mxu0 0
  %4846 = vmatprep.subr.bf16.mxu0 0
  %4847 = vmatpush2.bf16.msra.mxu0 0
  %4848 = vmatprep.subr.bf16.mxu0 0
  %4849 = vmatpush2.bf16.msra.mxu0 0
  %4850 = vmatprep.subr.bf16.mxu0 0
  %4851 = vmatpush2.bf16.msra.mxu0 0
  %4852 = vmatprep.subr.bf16.mxu0 0
  %4853 = vmatpush2.bf16.msra.mxu0 0
  %4854 = vmatprep.mubr.bf16.mxu0 0
  %4855 = vmatmul.mubr.bf16.gmra.mxu0 %v3645
  %v4856 = vpop.f32.mrf.mxu0
  %v4857 = vadd.f32 %v4796, %v4856
  %v4858 = vpop.f32.mrf.mxu0
  %v4859 = vpop.f32.mrf.mxu0
  %v4860 = vadd.f32 %v4796, %v4859
  %v4861 = vpop.f32.mrf.mxu0
  %4862 = vmatprep.mubr.bf16.mxu0 0
  %4863 = vmatmul.mubr.bf16.gmra.mxu0 %v3648
  %v4864 = vpop.f32.mrf.mxu0
  %v4865 = vadd.f32 %v4796, %v4864
  %v4866 = vpop.f32.mrf.mxu0
  %v4867 = vpop.f32.mrf.mxu0
  %v4868 = vadd.f32 %v4796, %v4867
  %v4869 = vpop.f32.mrf.mxu0
  %4870 = vdwg.mxu0
  %s4871 = scalar_lea.vmem %s11, 96
  %v4872 = vld [vmem:[%s4871] sm:$0xf]
  %v4873 = vld [vmem:[%s4871 + $0x4] sm:$0xf]
  %v4874 = vld [vmem:[%s4871 + $0x8] sm:$0xf]
  %v4875 = vld [vmem:[%s4871 + $0xc] sm:$0xf]
  %v4876 = vld [vmem:[%s4871 + $0x10] sm:$0xf]
  %v4877 = vld [vmem:[%s4871 + $0x14] sm:$0xf]
  %v4878 = vld [vmem:[%s4871 + $0x18] sm:$0xf]
  %v4879 = vld [vmem:[%s4871 + $0x1c] sm:$0xf]
  %s4880 = scalar_lea.vmem %s12, 3
  %v4881 = vld [vmem:[%s4880] sm:$0x1]
  %v4883 = vlaneseq
  %v4884 = vshrl.u32 %v4883, 7
  %v4885 = vsub.s32 0, %v4884
  %v4886 = vrot.slane %v4881, %v4885
  %v4896 = vunpack.c.l.b16 %v4872
  %v4897 = vunpack.c.l.b16 %v4873
  %v4898 = vunpack.c.l.b16 %v4874
  %v4899 = vunpack.c.l.b16 %v4875
  %v4900 = vunpack.c.l.b16 %v4876
  %v4901 = vunpack.c.l.b16 %v4877
  %v4902 = vunpack.c.l.b16 %v4878
  %v4903 = vunpack.c.l.b16 %v4879
  %v4904 = vpack.c.b16 %v4897, %v4896
  %v4905 = vpack.c.b16 %v4899, %v4898
  %v4906 = vpack.c.b16 %v4901, %v4900
  %v4907 = vpack.c.b16 %v4903, %v4902
  %4912 = vmatprep.subr.bf16.mxu0 0
  %4913 = vmatpush1.bf16.msra.mxu0 0
  %4914 = vmatprep.subr.bf16.mxu0 0
  %4915 = vmatpush1.bf16.msra.mxu0 0
  %4916 = vmatprep.subr.bf16.mxu0 0
  %4917 = vmatpush1.bf16.msra.mxu0 0
  %4918 = vmatprep.subr.bf16.mxu0 0
  %4919 = vmatpush1.bf16.msra.mxu0 0
  %4920 = vmatprep.subr.bf16.mxu0 0
  %4921 = vmatpush1.bf16.msra.mxu0 %v4907
  %4922 = vmatprep.subr.bf16.mxu0 0
  %4923 = vmatpush1.bf16.msra.mxu0 %v4906
  %4924 = vmatprep.subr.bf16.mxu0 0
  %4925 = vmatpush1.bf16.msra.mxu0 %v4905
  %4926 = vmatprep.subr.bf16.mxu0 0
  %4927 = vmatpush1.bf16.msra.mxu0 %v4904
  %4928 = vmatprep.subr.bf16.mxu0 0
  %4929 = vmatpush2.bf16.msra.mxu0 0
  %4930 = vmatprep.subr.bf16.mxu0 0
  %4931 = vmatpush2.bf16.msra.mxu0 0
  %4932 = vmatprep.subr.bf16.mxu0 0
  %4933 = vmatpush2.bf16.msra.mxu0 0
  %4934 = vmatprep.subr.bf16.mxu0 0
  %4935 = vmatpush2.bf16.msra.mxu0 0
  %4936 = vmatprep.subr.bf16.mxu0 0
  %4937 = vmatpush2.bf16.msra.mxu0 0
  %4938 = vmatprep.subr.bf16.mxu0 0
  %4939 = vmatpush2.bf16.msra.mxu0 0
  %4940 = vmatprep.subr.bf16.mxu0 0
  %4941 = vmatpush2.bf16.msra.mxu0 0
  %4942 = vmatprep.subr.bf16.mxu0 0
  %4943 = vmatpush2.bf16.msra.mxu0 0
  %4944 = vmatprep.mubr.bf16.mxu0 0
  %4945 = vmatmul.mubr.bf16.gmra.mxu0 %v3645
  %v4946 = vpop.f32.mrf.mxu0
  %v4947 = vadd.f32 %v4886, %v4946
  %v4948 = vpop.f32.mrf.mxu0
  %v4949 = vpop.f32.mrf.mxu0
  %v4950 = vadd.f32 %v4886, %v4949
  %v4951 = vpop.f32.mrf.mxu0
  %4952 = vmatprep.mubr.bf16.mxu0 0
  %4953 = vmatmul.mubr.bf16.gmra.mxu0 %v3648
  %v4954 = vpop.f32.mrf.mxu0
  %v4955 = vadd.f32 %v4886, %v4954
  %v4956 = vpop.f32.mrf.mxu0
  %v4957 = vpop.f32.mrf.mxu0
  %v4958 = vadd.f32 %v4886, %v4957
  %v4959 = vpop.f32.mrf.mxu0
  %4960 = vdwg.mxu0
  %v4961 = vpack.c.bf16 %v4778, %v4777
  %v4962 = vpack.c.bf16 %v4780, %v4779
  %v4963 = vpack.c.bf16 %v4860, %v4857
  %v4964 = vpack.c.bf16 %v4868, %v4865
  %v4966 = vsel %vm570, %v4961, 0
  %v4969 = vsel %vm570, %v4962, 0
  %4971 = vmatprep.subr.bf16.mxu0 0
  %4972 = vmatpush1.bf16.xpose.msra.mxu0 0
  %4973 = vmatprep.subr.bf16.mxu0 0
  %4974 = vmatpush1.bf16.xpose.msra.mxu0 0
  %4975 = vmatprep.subr.bf16.mxu0 0
  %4976 = vmatpush1.bf16.xpose.msra.mxu0 0
  %4977 = vmatprep.subr.bf16.mxu0 0
  %4978 = vmatpush1.bf16.xpose.msra.mxu0 0
  %4979 = vmatprep.subr.bf16.mxu0 0
  %4980 = vmatpush1.bf16.xpose.msra.mxu0 0
  %4981 = vmatprep.subr.bf16.mxu0 0
  %4982 = vmatpush1.bf16.xpose.msra.mxu0 0
  %4983 = vmatprep.subr.bf16.mxu0 0
  %4984 = vmatpush1.bf16.xpose.msra.mxu0 0
  %4985 = vmatprep.subr.bf16.mxu0 0
  %4986 = vmatpush1.bf16.xpose.msra.mxu0 %v3899
  %4987 = vmatprep.subr.bf16.mxu0 0
  %4988 = vmatpush2.bf16.xpose.msra.mxu0 0
  %4989 = vmatprep.subr.bf16.mxu0 0
  %4990 = vmatpush2.bf16.xpose.msra.mxu0 0
  %4991 = vmatprep.subr.bf16.mxu0 0
  %4992 = vmatpush2.bf16.xpose.msra.mxu0 0
  %4993 = vmatprep.subr.bf16.mxu0 0
  %4994 = vmatpush2.bf16.xpose.msra.mxu0 0
  %4995 = vmatprep.subr.bf16.mxu0 0
  %4996 = vmatpush2.bf16.xpose.msra.mxu0 0
  %4997 = vmatprep.subr.bf16.mxu0 0
  %4998 = vmatpush2.bf16.xpose.msra.mxu0 0
  %4999 = vmatprep.subr.bf16.mxu0 0
  %5000 = vmatpush2.bf16.xpose.msra.mxu0 0
  %5001 = vmatprep.subr.bf16.mxu0 0
  %5002 = vmatpush2.bf16.xpose.msra.mxu0 0
  %5003 = vmatprep.mubr.bf16.mxu0 0
  %5004 = vmatmul.mubr.bf16.gmra.mxu0 %v4966
  %v5005 = vpop.f32.mrf.mxu0
  %v5006 = vadd.f32 0.0, %v5005
  %v5007 = vpop.f32.mrf.mxu0
  %v5008 = vpop.f32.mrf.mxu0
  %v5009 = vadd.f32 0.0, %v5008
  %v5010 = vpop.f32.mrf.mxu0
  %5011 = vmatprep.mubr.bf16.mxu0 0
  %5012 = vmatmul.mubr.bf16.gmra.mxu0 %v4969
  %v5013 = vpop.f32.mrf.mxu0
  %v5014 = vadd.f32 0.0, %v5013
  %v5015 = vpop.f32.mrf.mxu0
  %v5016 = vpop.f32.mrf.mxu0
  %v5017 = vadd.f32 0.0, %v5016
  %v5018 = vpop.f32.mrf.mxu0
  %5019 = vdwg.mxu0
  %5021 = vset.pattern.permute.xlu0 0
  %5022 = vperm.xlu0 %5021, %v5006
  %v5023 = vpop.permute.xlu0 %5022
  %5026 = vset.pattern.permute.xlu0 0
  %5027 = vperm.xlu0 %5026, %v5009
  %v5028 = vpop.permute.xlu0 %5027
  %5031 = vset.pattern.permute.xlu0 0
  %5032 = vperm.xlu0 %5031, %v5014
  %v5033 = vpop.permute.xlu0 %5032
  %5036 = vset.pattern.permute.xlu0 0
  %5037 = vperm.xlu0 %5036, %v5017
  %v5038 = vpop.permute.xlu0 %5037
  %v5040 = vsel %vm170, %v5023, 0.0
  %v5041 = vsel %vm171, %v5028, 0.0
  %v5042 = vsel %vm172, %v5033, 0.0
  %v5043 = vsel %vm173, %v5038, 0.0
  %v5045 = vsel %vm570, %v4963, 0
  %v5048 = vsel %vm570, %v4964, 0
  %5050 = vmatprep.subr.bf16.mxu0 0
  %5051 = vmatpush1.bf16.xpose.msra.mxu0 0
  %5052 = vmatprep.subr.bf16.mxu0 0
  %5053 = vmatpush1.bf16.xpose.msra.mxu0 0
  %5054 = vmatprep.subr.bf16.mxu0 0
  %5055 = vmatpush1.bf16.xpose.msra.mxu0 0
  %5056 = vmatprep.subr.bf16.mxu0 0
  %5057 = vmatpush1.bf16.xpose.msra.mxu0 0
  %5058 = vmatprep.subr.bf16.mxu0 0
  %5059 = vmatpush1.bf16.xpose.msra.mxu0 0
  %5060 = vmatprep.subr.bf16.mxu0 0
  %5061 = vmatpush1.bf16.xpose.msra.mxu0 0
  %5062 = vmatprep.subr.bf16.mxu0 0
  %5063 = vmatpush1.bf16.xpose.msra.mxu0 %v5048
  %5064 = vmatprep.subr.bf16.mxu0 0
  %5065 = vmatpush1.bf16.xpose.msra.mxu0 %v5045
  %5066 = vmatprep.subr.bf16.mxu0 0
  %5067 = vmatpush2.bf16.xpose.msra.mxu0 0
  %5068 = vmatprep.subr.bf16.mxu0 0
  %5069 = vmatpush2.bf16.xpose.msra.mxu0 0
  %5070 = vmatprep.subr.bf16.mxu0 0
  %5071 = vmatpush2.bf16.xpose.msra.mxu0 0
  %5072 = vmatprep.subr.bf16.mxu0 0
  %5073 = vmatpush2.bf16.xpose.msra.mxu0 0
  %5074 = vmatprep.subr.bf16.mxu0 0
  %5075 = vmatpush2.bf16.xpose.msra.mxu0 0
  %5076 = vmatprep.subr.bf16.mxu0 0
  %5077 = vmatpush2.bf16.xpose.msra.mxu0 0
  %5078 = vmatprep.subr.bf16.mxu0 0
  %5079 = vmatpush2.bf16.xpose.msra.mxu0 0
  %5080 = vmatprep.subr.bf16.mxu0 0
  %5081 = vmatpush2.bf16.xpose.msra.mxu0 0
  %5082 = vmatprep.mubr.bf16.mxu0 0
  %5083 = vmatmul.mubr.bf16.gmra.mxu0 %v4966
  %v5084 = vpop.f32.mrf.mxu0
  %v5085 = vadd.f32 %v5040, %v5084
  %v5086 = vpop.f32.mrf.mxu0
  %v5087 = vpop.f32.mrf.mxu0
  %v5088 = vadd.f32 %v5041, %v5087
  %v5089 = vpop.f32.mrf.mxu0
  %5090 = vmatprep.mubr.bf16.mxu0 0
  %5091 = vmatmul.mubr.bf16.gmra.mxu0 %v4969
  %v5092 = vpop.f32.mrf.mxu0
  %v5093 = vadd.f32 %v5042, %v5092
  %v5094 = vpop.f32.mrf.mxu0
  %v5095 = vpop.f32.mrf.mxu0
  %v5096 = vadd.f32 %v5043, %v5095
  %v5097 = vpop.f32.mrf.mxu0
  %5098 = vdwg.mxu0
  %5099 = vset.pattern.permute.xlu0 1
  %5100 = vperm.xlu0 %5099, %v5006
  %v5101 = vpop.permute.xlu0 %5100
  %5103 = vset.pattern.permute.xlu0 1
  %5104 = vperm.xlu0 %5103, %v5009
  %v5105 = vpop.permute.xlu0 %5104
  %5107 = vset.pattern.permute.xlu0 1
  %5108 = vperm.xlu0 %5107, %v5014
  %v5109 = vpop.permute.xlu0 %5108
  %5111 = vset.pattern.permute.xlu0 1
  %5112 = vperm.xlu0 %5111, %v5017
  %v5113 = vpop.permute.xlu0 %5112
  %v5115 = vsel %vm178, %v5101, 0.0
  %v5116 = vsel %vm179, %v5105, 0.0
  %v5117 = vsel %vm180, %v5109, 0.0
  %v5118 = vsel %vm181, %v5113, 0.0
  %v5119 = vadd.f32 %v5085, %v5115
  %v5120 = vadd.f32 %v5088, %v5116
  %v5121 = vadd.f32 %v5093, %v5117
  %v5122 = vadd.f32 %v5096, %v5118
  %5123 = vset.pattern.permute.xlu0 2
  %5124 = vperm.xlu0 %5123, %v5006
  %v5125 = vpop.permute.xlu0 %5124
  %5127 = vset.pattern.permute.xlu0 2
  %5128 = vperm.xlu0 %5127, %v5009
  %v5129 = vpop.permute.xlu0 %5128
  %5131 = vset.pattern.permute.xlu0 2
  %5132 = vperm.xlu0 %5131, %v5014
  %v5133 = vpop.permute.xlu0 %5132
  %5135 = vset.pattern.permute.xlu0 2
  %5136 = vperm.xlu0 %5135, %v5017
  %v5137 = vpop.permute.xlu0 %5136
  %v5139 = vsel %vm186, %v5125, 0.0
  %v5140 = vsel %vm187, %v5129, 0.0
  %v5141 = vsel %vm188, %v5133, 0.0
  %v5142 = vsel %vm189, %v5137, 0.0
  %v5143 = vadd.f32 %v5119, %v5139
  %v5144 = vadd.f32 %v5120, %v5140
  %v5145 = vadd.f32 %v5121, %v5141
  %v5146 = vadd.f32 %v5122, %v5142
  %5147 = vset.pattern.permute.xlu0 3
  %5148 = vperm.xlu0 %5147, %v5006
  %v5149 = vpop.permute.xlu0 %5148
  %5151 = vset.pattern.permute.xlu0 3
  %5152 = vperm.xlu0 %5151, %v5009
  %v5153 = vpop.permute.xlu0 %5152
  %5155 = vset.pattern.permute.xlu0 3
  %5156 = vperm.xlu0 %5155, %v5014
  %v5157 = vpop.permute.xlu0 %5156
  %5159 = vset.pattern.permute.xlu0 3
  %5160 = vperm.xlu0 %5159, %v5017
  %v5161 = vpop.permute.xlu0 %5160
  %v5163 = vsel %vm194, %v5149, 0.0
  %v5164 = vsel %vm195, %v5153, 0.0
  %v5165 = vsel %vm196, %v5157, 0.0
  %v5166 = vsel %vm197, %v5161, 0.0
  %v5167 = vadd.f32 %v5143, %v5163
  %v5168 = vadd.f32 %v5144, %v5164
  %v5169 = vadd.f32 %v5145, %v5165
  %v5170 = vadd.f32 %v5146, %v5166
  %5171 = vset.pattern.permute.xlu0 4
  %5172 = vperm.xlu0 %5171, %v5006
  %v5173 = vpop.permute.xlu0 %5172
  %5175 = vset.pattern.permute.xlu0 4
  %5176 = vperm.xlu0 %5175, %v5009
  %v5177 = vpop.permute.xlu0 %5176
  %5179 = vset.pattern.permute.xlu0 4
  %5180 = vperm.xlu0 %5179, %v5014
  %v5181 = vpop.permute.xlu0 %5180
  %5183 = vset.pattern.permute.xlu0 4
  %5184 = vperm.xlu0 %5183, %v5017
  %v5185 = vpop.permute.xlu0 %5184
  %v5187 = vsel %vm202, %v5173, 0.0
  %v5188 = vsel %vm203, %v5177, 0.0
  %v5189 = vsel %vm204, %v5181, 0.0
  %v5190 = vsel %vm205, %v5185, 0.0
  %v5191 = vadd.f32 %v5167, %v5187
  %v5192 = vadd.f32 %v5168, %v5188
  %v5193 = vadd.f32 %v5169, %v5189
  %v5194 = vadd.f32 %v5170, %v5190
  %5195 = vset.pattern.permute.xlu0 5
  %5196 = vperm.xlu0 %5195, %v5006
  %v5197 = vpop.permute.xlu0 %5196
  %5199 = vset.pattern.permute.xlu0 5
  %5200 = vperm.xlu0 %5199, %v5009
  %v5201 = vpop.permute.xlu0 %5200
  %5203 = vset.pattern.permute.xlu0 5
  %5204 = vperm.xlu0 %5203, %v5014
  %v5205 = vpop.permute.xlu0 %5204
  %5207 = vset.pattern.permute.xlu0 5
  %5208 = vperm.xlu0 %5207, %v5017
  %v5209 = vpop.permute.xlu0 %5208
  %v5211 = vsel %vm210, %v5197, 0.0
  %v5212 = vsel %vm211, %v5201, 0.0
  %v5213 = vsel %vm212, %v5205, 0.0
  %v5214 = vsel %vm213, %v5209, 0.0
  %v5215 = vadd.f32 %v5191, %v5211
  %v5216 = vadd.f32 %v5192, %v5212
  %v5217 = vadd.f32 %v5193, %v5213
  %v5218 = vadd.f32 %v5194, %v5214
  %5219 = vset.pattern.permute.xlu0 6
  %5220 = vperm.xlu0 %5219, %v5006
  %v5221 = vpop.permute.xlu0 %5220
  %5223 = vset.pattern.permute.xlu0 6
  %5224 = vperm.xlu0 %5223, %v5009
  %v5225 = vpop.permute.xlu0 %5224
  %5227 = vset.pattern.permute.xlu0 6
  %5228 = vperm.xlu0 %5227, %v5014
  %v5229 = vpop.permute.xlu0 %5228
  %5231 = vset.pattern.permute.xlu0 6
  %5232 = vperm.xlu0 %5231, %v5017
  %v5233 = vpop.permute.xlu0 %5232
  %v5235 = vsel %vm218, %v5221, 0.0
  %v5236 = vsel %vm219, %v5225, 0.0
  %v5237 = vsel %vm220, %v5229, 0.0
  %v5238 = vsel %vm221, %v5233, 0.0
  %v5239 = vadd.f32 %v5215, %v5235
  %v5240 = vadd.f32 %v5216, %v5236
  %v5241 = vadd.f32 %v5217, %v5237
  %v5242 = vadd.f32 %v5218, %v5238
  %5243 = vset.pattern.permute.xlu0 7
  %5244 = vperm.xlu0 %5243, %v5006
  %v5245 = vpop.permute.xlu0 %5244
  %5247 = vset.pattern.permute.xlu0 7
  %5248 = vperm.xlu0 %5247, %v5009
  %v5249 = vpop.permute.xlu0 %5248
  %5251 = vset.pattern.permute.xlu0 7
  %5252 = vperm.xlu0 %5251, %v5014
  %v5253 = vpop.permute.xlu0 %5252
  %5255 = vset.pattern.permute.xlu0 7
  %5256 = vperm.xlu0 %5255, %v5017
  %v5257 = vpop.permute.xlu0 %5256
  %v5259 = vsel %vm226, %v5245, 0.0
  %v5260 = vsel %vm227, %v5249, 0.0
  %v5261 = vsel %vm228, %v5253, 0.0
  %v5262 = vsel %vm229, %v5257, 0.0
  %v5263 = vadd.f32 %v5239, %v5259
  %v5264 = vadd.f32 %v5240, %v5260
  %v5265 = vadd.f32 %v5241, %v5261
  %v5266 = vadd.f32 %v5242, %v5262
  %5267 = vset.pattern.permute.xlu0 8
  %5268 = vperm.xlu0 %5267, %v5006
  %v5269 = vpop.permute.xlu0 %5268
  %5271 = vset.pattern.permute.xlu0 8
  %5272 = vperm.xlu0 %5271, %v5009
  %v5273 = vpop.permute.xlu0 %5272
  %5275 = vset.pattern.permute.xlu0 8
  %5276 = vperm.xlu0 %5275, %v5014
  %v5277 = vpop.permute.xlu0 %5276
  %5279 = vset.pattern.permute.xlu0 8
  %5280 = vperm.xlu0 %5279, %v5017
  %v5281 = vpop.permute.xlu0 %5280
  %v5283 = vsel %vm234, %v5269, 0.0
  %v5284 = vsel %vm235, %v5273, 0.0
  %v5285 = vsel %vm236, %v5277, 0.0
  %v5286 = vsel %vm237, %v5281, 0.0
  %v5287 = vadd.f32 %v5263, %v5283
  %v5288 = vadd.f32 %v5264, %v5284
  %v5289 = vadd.f32 %v5265, %v5285
  %v5290 = vadd.f32 %v5266, %v5286
  %v5291 = vsel %vm162, %v5287, -10000.0
  %v5292 = vsel %vm163, %v5288, -10000.0
  %v5293 = vsel %vm164, %v5289, -10000.0
  %v5294 = vsel %vm165, %v5290, -10000.0
  %v5295 = vsel %vm570, %v5291, -inf
  %5296 = vmax.xlane.f32.xlu0 %v5295
  %v5297 = vpop.xlane.xlu0 %5296
  %v5298 = vsel %vm570, %v5292, -inf
  %5299 = vmax.xlane.f32.xlu0 %v5298
  %v5300 = vpop.xlane.xlu0 %5299
  %v5301 = vsel %vm570, %v5293, -inf
  %5302 = vmax.xlane.f32.xlu0 %v5301
  %v5303 = vpop.xlane.xlu0 %5302
  %v5304 = vsel %vm570, %v5294, -inf
  %5305 = vmax.xlane.f32.xlu0 %v5304
  %v5306 = vpop.xlane.xlu0 %5305
  %v5307 = vsub.f32 %v5291, %v5297
  %v5308 = vsub.f32 %v5292, %v5300
  %v5309 = vsub.f32 %v5293, %v5303
  %v5310 = vsub.f32 %v5294, %v5306
  %v5311 = vmul.f32 %v5307, 1.442695
  %v5312 = vpow.pop %v5311
  %v5313 = vmul.f32 %v5308, 1.442695
  %v5314 = vpow.pop %v5313
  %v5315 = vmul.f32 %v5309, 1.442695
  %v5316 = vpow.pop %v5315
  %v5317 = vmul.f32 %v5310, 1.442695
  %v5318 = vpow.pop %v5317
  %v5319 = vsel %vm570, %v5312, 0.0
  %5320 = vadd.xlane.f32.xlu0 %v5319
  %v5321 = vpop.xlane.xlu0 %5320
  %v5322 = vsel %vm570, %v5314, 0.0
  %5323 = vadd.xlane.f32.xlu0 %v5322
  %v5324 = vpop.xlane.xlu0 %5323
  %v5325 = vsel %vm570, %v5316, 0.0
  %5326 = vadd.xlane.f32.xlu0 %v5325
  %v5327 = vpop.xlane.xlu0 %5326
  %v5328 = vsel %vm570, %v5318, 0.0
  %5329 = vadd.xlane.f32.xlu0 %v5328
  %v5330 = vpop.xlane.xlu0 %5329
  %v5331 = vrcp.pop %v5321
  %v5332 = vrcp.pop %v5324
  %v5333 = vrcp.pop %v5327
  %v5334 = vrcp.pop %v5330
  %v5335 = vmul.f32 %v5312, %v5331
  %v5336 = vmul.f32 %v5314, %v5332
  %v5337 = vmul.f32 %v5316, %v5333
  %v5338 = vmul.f32 %v5318, %v5334
  %v5339 = vpack.c.bf16 %v5336, %v5335
  %v5340 = vpack.c.bf16 %v5338, %v5337
  %v5341 = vpack.c.bf16 %v4950, %v4947
  %v5342 = vpack.c.bf16 %v4958, %v4955
  %v5343 = vsel %vm170, %v5335, 0.0
  %v5344 = vsel %vm171, %v5336, 0.0
  %v5345 = vsel %vm172, %v5337, 0.0
  %v5346 = vsel %vm173, %v5338, 0.0
  %v5347 = vsel %vm570, %v5343, 0.0
  %5348 = vadd.xlane.f32.xlu0 %v5347
  %v5349 = vpop.xlane.xlu0 %5348
  %v5350 = vsel %vm570, %v5344, 0.0
  %5351 = vadd.xlane.f32.xlu0 %v5350
  %v5352 = vpop.xlane.xlu0 %5351
  %v5353 = vsel %vm570, %v5345, 0.0
  %5354 = vadd.xlane.f32.xlu0 %v5353
  %v5355 = vpop.xlane.xlu0 %5354
  %v5356 = vsel %vm570, %v5346, 0.0
  %5357 = vadd.xlane.f32.xlu0 %v5356
  %v5358 = vpop.xlane.xlu0 %5357
  %v5359 = vsel %vm968, %v5349, 0.0
  %v5360 = vsel %vm968, %v5352, 0.0
  %v5361 = vsel %vm968, %v5355, 0.0
  %v5362 = vsel %vm968, %v5358, 0.0
  %v5363 = vadd.f32 %v5359, 0.0
  %v5364 = vadd.f32 %v5360, 0.0
  %v5365 = vadd.f32 %v5361, 0.0
  %v5366 = vadd.f32 %v5362, 0.0
  %v5367 = vsel %vm178, %v5335, 0.0
  %v5368 = vsel %vm179, %v5336, 0.0
  %v5369 = vsel %vm180, %v5337, 0.0
  %v5370 = vsel %vm181, %v5338, 0.0
  %v5371 = vsel %vm570, %v5367, 0.0
  %5372 = vadd.xlane.f32.xlu0 %v5371
  %v5373 = vpop.xlane.xlu0 %5372
  %v5374 = vsel %vm570, %v5368, 0.0
  %5375 = vadd.xlane.f32.xlu0 %v5374
  %v5376 = vpop.xlane.xlu0 %5375
  %v5377 = vsel %vm570, %v5369, 0.0
  %5378 = vadd.xlane.f32.xlu0 %v5377
  %v5379 = vpop.xlane.xlu0 %5378
  %v5380 = vsel %vm570, %v5370, 0.0
  %5381 = vadd.xlane.f32.xlu0 %v5380
  %v5382 = vpop.xlane.xlu0 %5381
  %v5383 = vsel %vm993, %v5373, 0.0
  %v5384 = vsel %vm993, %v5376, 0.0
  %v5385 = vsel %vm993, %v5379, 0.0
  %v5386 = vsel %vm993, %v5382, 0.0
  %v5387 = vadd.f32 %v5363, %v5383
  %v5388 = vadd.f32 %v5364, %v5384
  %v5389 = vadd.f32 %v5365, %v5385
  %v5390 = vadd.f32 %v5366, %v5386
  %v5391 = vsel %vm186, %v5335, 0.0
  %v5392 = vsel %vm187, %v5336, 0.0
  %v5393 = vsel %vm188, %v5337, 0.0
  %v5394 = vsel %vm189, %v5338, 0.0
  %v5395 = vsel %vm570, %v5391, 0.0
  %5396 = vadd.xlane.f32.xlu0 %v5395
  %v5397 = vpop.xlane.xlu0 %5396
  %v5398 = vsel %vm570, %v5392, 0.0
  %5399 = vadd.xlane.f32.xlu0 %v5398
  %v5400 = vpop.xlane.xlu0 %5399
  %v5401 = vsel %vm570, %v5393, 0.0
  %5402 = vadd.xlane.f32.xlu0 %v5401
  %v5403 = vpop.xlane.xlu0 %5402
  %v5404 = vsel %vm570, %v5394, 0.0
  %5405 = vadd.xlane.f32.xlu0 %v5404
  %v5406 = vpop.xlane.xlu0 %5405
  %v5407 = vsel %vm1018, %v5397, 0.0
  %v5408 = vsel %vm1018, %v5400, 0.0
  %v5409 = vsel %vm1018, %v5403, 0.0
  %v5410 = vsel %vm1018, %v5406, 0.0
  %v5411 = vadd.f32 %v5387, %v5407
  %v5412 = vadd.f32 %v5388, %v5408
  %v5413 = vadd.f32 %v5389, %v5409
  %v5414 = vadd.f32 %v5390, %v5410
  %v5415 = vsel %vm194, %v5335, 0.0
  %v5416 = vsel %vm195, %v5336, 0.0
  %v5417 = vsel %vm196, %v5337, 0.0
  %v5418 = vsel %vm197, %v5338, 0.0
  %v5419 = vsel %vm570, %v5415, 0.0
  %5420 = vadd.xlane.f32.xlu0 %v5419
  %v5421 = vpop.xlane.xlu0 %5420
  %v5422 = vsel %vm570, %v5416, 0.0
  %5423 = vadd.xlane.f32.xlu0 %v5422
  %v5424 = vpop.xlane.xlu0 %5423
  %v5425 = vsel %vm570, %v5417, 0.0
  %5426 = vadd.xlane.f32.xlu0 %v5425
  %v5427 = vpop.xlane.xlu0 %5426
  %v5428 = vsel %vm570, %v5418, 0.0
  %5429 = vadd.xlane.f32.xlu0 %v5428
  %v5430 = vpop.xlane.xlu0 %5429
  %v5431 = vsel %vm1043, %v5421, 0.0
  %v5432 = vsel %vm1043, %v5424, 0.0
  %v5433 = vsel %vm1043, %v5427, 0.0
  %v5434 = vsel %vm1043, %v5430, 0.0
  %v5435 = vadd.f32 %v5411, %v5431
  %v5436 = vadd.f32 %v5412, %v5432
  %v5437 = vadd.f32 %v5413, %v5433
  %v5438 = vadd.f32 %v5414, %v5434
  %v5439 = vsel %vm202, %v5335, 0.0
  %v5440 = vsel %vm203, %v5336, 0.0
  %v5441 = vsel %vm204, %v5337, 0.0
  %v5442 = vsel %vm205, %v5338, 0.0
  %v5443 = vsel %vm570, %v5439, 0.0
  %5444 = vadd.xlane.f32.xlu0 %v5443
  %v5445 = vpop.xlane.xlu0 %5444
  %v5446 = vsel %vm570, %v5440, 0.0
  %5447 = vadd.xlane.f32.xlu0 %v5446
  %v5448 = vpop.xlane.xlu0 %5447
  %v5449 = vsel %vm570, %v5441, 0.0
  %5450 = vadd.xlane.f32.xlu0 %v5449
  %v5451 = vpop.xlane.xlu0 %5450
  %v5452 = vsel %vm570, %v5442, 0.0
  %5453 = vadd.xlane.f32.xlu0 %v5452
  %v5454 = vpop.xlane.xlu0 %5453
  %v5455 = vsel %vm1068, %v5445, 0.0
  %v5456 = vsel %vm1068, %v5448, 0.0
  %v5457 = vsel %vm1068, %v5451, 0.0
  %v5458 = vsel %vm1068, %v5454, 0.0
  %v5459 = vadd.f32 %v5435, %v5455
  %v5460 = vadd.f32 %v5436, %v5456
  %v5461 = vadd.f32 %v5437, %v5457
  %v5462 = vadd.f32 %v5438, %v5458
  %v5463 = vsel %vm210, %v5335, 0.0
  %v5464 = vsel %vm211, %v5336, 0.0
  %v5465 = vsel %vm212, %v5337, 0.0
  %v5466 = vsel %vm213, %v5338, 0.0
  %v5467 = vsel %vm570, %v5463, 0.0
  %5468 = vadd.xlane.f32.xlu0 %v5467
  %v5469 = vpop.xlane.xlu0 %5468
  %v5470 = vsel %vm570, %v5464, 0.0
  %5471 = vadd.xlane.f32.xlu0 %v5470
  %v5472 = vpop.xlane.xlu0 %5471
  %v5473 = vsel %vm570, %v5465, 0.0
  %5474 = vadd.xlane.f32.xlu0 %v5473
  %v5475 = vpop.xlane.xlu0 %5474
  %v5476 = vsel %vm570, %v5466, 0.0
  %5477 = vadd.xlane.f32.xlu0 %v5476
  %v5478 = vpop.xlane.xlu0 %5477
  %v5479 = vsel %vm1093, %v5469, 0.0
  %v5480 = vsel %vm1093, %v5472, 0.0
  %v5481 = vsel %vm1093, %v5475, 0.0
  %v5482 = vsel %vm1093, %v5478, 0.0
  %v5483 = vadd.f32 %v5459, %v5479
  %v5484 = vadd.f32 %v5460, %v5480
  %v5485 = vadd.f32 %v5461, %v5481
  %v5486 = vadd.f32 %v5462, %v5482
  %v5487 = vsel %vm218, %v5335, 0.0
  %v5488 = vsel %vm219, %v5336, 0.0
  %v5489 = vsel %vm220, %v5337, 0.0
  %v5490 = vsel %vm221, %v5338, 0.0
  %v5491 = vsel %vm570, %v5487, 0.0
  %5492 = vadd.xlane.f32.xlu0 %v5491
  %v5493 = vpop.xlane.xlu0 %5492
  %v5494 = vsel %vm570, %v5488, 0.0
  %5495 = vadd.xlane.f32.xlu0 %v5494
  %v5496 = vpop.xlane.xlu0 %5495
  %v5497 = vsel %vm570, %v5489, 0.0
  %5498 = vadd.xlane.f32.xlu0 %v5497
  %v5499 = vpop.xlane.xlu0 %5498
  %v5500 = vsel %vm570, %v5490, 0.0
  %5501 = vadd.xlane.f32.xlu0 %v5500
  %v5502 = vpop.xlane.xlu0 %5501
  %v5503 = vsel %vm1118, %v5493, 0.0
  %v5504 = vsel %vm1118, %v5496, 0.0
  %v5505 = vsel %vm1118, %v5499, 0.0
  %v5506 = vsel %vm1118, %v5502, 0.0
  %v5507 = vadd.f32 %v5483, %v5503
  %v5508 = vadd.f32 %v5484, %v5504
  %v5509 = vadd.f32 %v5485, %v5505
  %v5510 = vadd.f32 %v5486, %v5506
  %v5511 = vsel %vm226, %v5335, 0.0
  %v5512 = vsel %vm227, %v5336, 0.0
  %v5513 = vsel %vm228, %v5337, 0.0
  %v5514 = vsel %vm229, %v5338, 0.0
  %v5515 = vsel %vm570, %v5511, 0.0
  %5516 = vadd.xlane.f32.xlu0 %v5515
  %v5517 = vpop.xlane.xlu0 %5516
  %v5518 = vsel %vm570, %v5512, 0.0
  %5519 = vadd.xlane.f32.xlu0 %v5518
  %v5520 = vpop.xlane.xlu0 %5519
  %v5521 = vsel %vm570, %v5513, 0.0
  %5522 = vadd.xlane.f32.xlu0 %v5521
  %v5523 = vpop.xlane.xlu0 %5522
  %v5524 = vsel %vm570, %v5514, 0.0
  %5525 = vadd.xlane.f32.xlu0 %v5524
  %v5526 = vpop.xlane.xlu0 %5525
  %v5527 = vsel %vm1143, %v5517, 0.0
  %v5528 = vsel %vm1143, %v5520, 0.0
  %v5529 = vsel %vm1143, %v5523, 0.0
  %v5530 = vsel %vm1143, %v5526, 0.0
  %v5531 = vadd.f32 %v5507, %v5527
  %v5532 = vadd.f32 %v5508, %v5528
  %v5533 = vadd.f32 %v5509, %v5529
  %v5534 = vadd.f32 %v5510, %v5530
  %v5535 = vsel %vm234, %v5335, 0.0
  %v5536 = vsel %vm235, %v5336, 0.0
  %v5537 = vsel %vm236, %v5337, 0.0
  %v5538 = vsel %vm237, %v5338, 0.0
  %v5539 = vsel %vm570, %v5535, 0.0
  %5540 = vadd.xlane.f32.xlu0 %v5539
  %v5541 = vpop.xlane.xlu0 %5540
  %v5542 = vsel %vm570, %v5536, 0.0
  %5543 = vadd.xlane.f32.xlu0 %v5542
  %v5544 = vpop.xlane.xlu0 %5543
  %v5545 = vsel %vm570, %v5537, 0.0
  %5546 = vadd.xlane.f32.xlu0 %v5545
  %v5547 = vpop.xlane.xlu0 %5546
  %v5548 = vsel %vm570, %v5538, 0.0
  %5549 = vadd.xlane.f32.xlu0 %v5548
  %v5550 = vpop.xlane.xlu0 %5549
  %v5551 = vsel %vm1168, %v5541, 0.0
  %v5552 = vsel %vm1168, %v5544, 0.0
  %v5553 = vsel %vm1168, %v5547, 0.0
  %v5554 = vsel %vm1168, %v5550, 0.0
  %v5555 = vadd.f32 %v5531, %v5551
  %v5556 = vadd.f32 %v5532, %v5552
  %v5557 = vadd.f32 %v5533, %v5553
  %v5558 = vadd.f32 %v5534, %v5554
  %v5559 = vpack.c.bf16 %v5556, %v5555
  %v5560 = vpack.c.bf16 %v5558, %v5557
  %v5562 = vsel %vm1184, %v5559, 0
  %v5565 = vsel %vm1184, %v5560, 0
  %5567 = vmatprep.subr.bf16.mxu0 0
  %5568 = vmatpush1.bf16.msra.mxu0 0
  %5569 = vmatprep.subr.bf16.mxu0 0
  %5570 = vmatpush1.bf16.msra.mxu0 0
  %5571 = vmatprep.subr.bf16.mxu0 0
  %5572 = vmatpush1.bf16.msra.mxu0 0
  %5573 = vmatprep.subr.bf16.mxu0 0
  %5574 = vmatpush1.bf16.msra.mxu0 0
  %5575 = vmatprep.subr.bf16.mxu0 0
  %5576 = vmatpush1.bf16.msra.mxu0 0
  %5577 = vmatprep.subr.bf16.mxu0 0
  %5578 = vmatpush1.bf16.msra.mxu0 0
  %5579 = vmatprep.subr.bf16.mxu0 0
  %5580 = vmatpush1.bf16.msra.mxu0 0
  %5581 = vmatprep.subr.bf16.mxu0 0
  %5582 = vmatpush1.bf16.msra.mxu0 %v4503
  %5583 = vmatprep.subr.bf16.mxu0 0
  %5584 = vmatpush2.bf16.msra.mxu0 0
  %5585 = vmatprep.subr.bf16.mxu0 0
  %5586 = vmatpush2.bf16.msra.mxu0 0
  %5587 = vmatprep.subr.bf16.mxu0 0
  %5588 = vmatpush2.bf16.msra.mxu0 0
  %5589 = vmatprep.subr.bf16.mxu0 0
  %5590 = vmatpush2.bf16.msra.mxu0 0
  %5591 = vmatprep.subr.bf16.mxu0 0
  %5592 = vmatpush2.bf16.msra.mxu0 0
  %5593 = vmatprep.subr.bf16.mxu0 0
  %5594 = vmatpush2.bf16.msra.mxu0 0
  %5595 = vmatprep.subr.bf16.mxu0 0
  %5596 = vmatpush2.bf16.msra.mxu0 0
  %5597 = vmatprep.subr.bf16.mxu0 0
  %5598 = vmatpush2.bf16.msra.mxu0 0
  %5599 = vmatprep.mubr.bf16.mxu0 0
  %5600 = vmatmul.mubr.bf16.gmra.mxu0 %v5562
  %v5601 = vpop.f32.mrf.mxu0
  %v5602 = vadd.f32 0.0, %v5601
  %v5603 = vpop.f32.mrf.mxu0
  %v5604 = vpop.f32.mrf.mxu0
  %v5605 = vadd.f32 0.0, %v5604
  %v5606 = vpop.f32.mrf.mxu0
  %5607 = vmatprep.mubr.bf16.mxu0 0
  %5608 = vmatmul.mubr.bf16.gmra.mxu0 %v5565
  %v5609 = vpop.f32.mrf.mxu0
  %v5610 = vadd.f32 0.0, %v5609
  %v5611 = vpop.f32.mrf.mxu0
  %v5612 = vpop.f32.mrf.mxu0
  %v5613 = vadd.f32 0.0, %v5612
  %v5614 = vpop.f32.mrf.mxu0
  %5615 = vdwg.mxu0
  %v5617 = vsel %vm570, %v5339, 0
  %v5620 = vsel %vm570, %v5340, 0
  %5622 = vmatprep.subr.bf16.mxu0 0
  %5623 = vmatpush1.bf16.msra.mxu0 0
  %5624 = vmatprep.subr.bf16.mxu0 0
  %5625 = vmatpush1.bf16.msra.mxu0 0
  %5626 = vmatprep.subr.bf16.mxu0 0
  %5627 = vmatpush1.bf16.msra.mxu0 0
  %5628 = vmatprep.subr.bf16.mxu0 0
  %5629 = vmatpush1.bf16.msra.mxu0 0
  %5630 = vmatprep.subr.bf16.mxu0 0
  %5631 = vmatpush1.bf16.msra.mxu0 0
  %5632 = vmatprep.subr.bf16.mxu0 0
  %5633 = vmatpush1.bf16.msra.mxu0 0
  %5634 = vmatprep.subr.bf16.mxu0 0
  %5635 = vmatpush1.bf16.msra.mxu0 %v5342
  %5636 = vmatprep.subr.bf16.mxu0 0
  %5637 = vmatpush1.bf16.msra.mxu0 %v5341
  %5638 = vmatprep.subr.bf16.mxu0 0
  %5639 = vmatpush2.bf16.msra.mxu0 0
  %5640 = vmatprep.subr.bf16.mxu0 0
  %5641 = vmatpush2.bf16.msra.mxu0 0
  %5642 = vmatprep.subr.bf16.mxu0 0
  %5643 = vmatpush2.bf16.msra.mxu0 0
  %5644 = vmatprep.subr.bf16.mxu0 0
  %5645 = vmatpush2.bf16.msra.mxu0 0
  %5646 = vmatprep.subr.bf16.mxu0 0
  %5647 = vmatpush2.bf16.msra.mxu0 0
  %5648 = vmatprep.subr.bf16.mxu0 0
  %5649 = vmatpush2.bf16.msra.mxu0 0
  %5650 = vmatprep.subr.bf16.mxu0 0
  %5651 = vmatpush2.bf16.msra.mxu0 0
  %5652 = vmatprep.subr.bf16.mxu0 0
  %5653 = vmatpush2.bf16.msra.mxu0 0
  %5654 = vmatprep.mubr.bf16.mxu0 0
  %5655 = vmatmul.mubr.bf16.gmra.mxu0 %v5617
  %v5656 = vpop.f32.mrf.mxu0
  %v5657 = vadd.f32 %v5602, %v5656
  %v5658 = vpop.f32.mrf.mxu0
  %v5659 = vpop.f32.mrf.mxu0
  %v5660 = vadd.f32 %v5605, %v5659
  %v5661 = vpop.f32.mrf.mxu0
  %5662 = vmatprep.mubr.bf16.mxu0 0
  %5663 = vmatmul.mubr.bf16.gmra.mxu0 %v5620
  %v5664 = vpop.f32.mrf.mxu0
  %v5665 = vadd.f32 %v5610, %v5664
  %v5666 = vpop.f32.mrf.mxu0
  %v5667 = vpop.f32.mrf.mxu0
  %v5668 = vadd.f32 %v5613, %v5667
  %v5669 = vpop.f32.mrf.mxu0
  %5670 = vdwg.mxu0
  %v5671 = vpack.c.bf16 %v5660, %v5657
  %v5672 = vpack.c.bf16 %v5668, %v5665
  %s5673 = scalar_lea.vmem %s13, 48
  %v5674 = vld [vmem:[%s5673] sm:$0xf]
  %v5675 = vld [vmem:[%s5673 + $0x4] sm:$0xf]
  %v5676 = vld [vmem:[%s5673 + $0x8] sm:$0xf]
  %v5677 = vld [vmem:[%s5673 + $0xc] sm:$0xf]
  %v5682 = vunpack.c.l.b16 %v5674
  %v5683 = vunpack.c.l.b16 %v5675
  %v5684 = vunpack.c.l.b16 %v5676
  %v5685 = vunpack.c.l.b16 %v5677
  %v5686 = vpack.c.b16 %v5683, %v5682
  %v5687 = vpack.c.b16 %v5685, %v5684
  %v5691 = vsel %vm570, %v5671, 0
  %v5694 = vsel %vm570, %v5672, 0
  %5696 = vmatprep.subr.bf16.mxu0 0
  %5697 = vmatpush1.bf16.msra.mxu0 0
  %5698 = vmatprep.subr.bf16.mxu0 0
  %5699 = vmatpush1.bf16.msra.mxu0 0
  %5700 = vmatprep.subr.bf16.mxu0 0
  %5701 = vmatpush1.bf16.msra.mxu0 0
  %5702 = vmatprep.subr.bf16.mxu0 0
  %5703 = vmatpush1.bf16.msra.mxu0 0
  %5704 = vmatprep.subr.bf16.mxu0 0
  %5705 = vmatpush1.bf16.msra.mxu0 0
  %5706 = vmatprep.subr.bf16.mxu0 0
  %5707 = vmatpush1.bf16.msra.mxu0 0
  %5708 = vmatprep.subr.bf16.mxu0 0
  %5709 = vmatpush1.bf16.msra.mxu0 %v5687
  %5710 = vmatprep.subr.bf16.mxu0 0
  %5711 = vmatpush1.bf16.msra.mxu0 %v5686
  %5712 = vmatprep.subr.bf16.mxu0 0
  %5713 = vmatpush2.bf16.msra.mxu0 0
  %5714 = vmatprep.subr.bf16.mxu0 0
  %5715 = vmatpush2.bf16.msra.mxu0 0
  %5716 = vmatprep.subr.bf16.mxu0 0
  %5717 = vmatpush2.bf16.msra.mxu0 0
  %5718 = vmatprep.subr.bf16.mxu0 0
  %5719 = vmatpush2.bf16.msra.mxu0 0
  %5720 = vmatprep.subr.bf16.mxu0 0
  %5721 = vmatpush2.bf16.msra.mxu0 0
  %5722 = vmatprep.subr.bf16.mxu0 0
  %5723 = vmatpush2.bf16.msra.mxu0 0
  %5724 = vmatprep.subr.bf16.mxu0 0
  %5725 = vmatpush2.bf16.msra.mxu0 0
  %5726 = vmatprep.subr.bf16.mxu0 0
  %5727 = vmatpush2.bf16.msra.mxu0 0
  %5728 = vmatprep.mubr.bf16.mxu0 0
  %5729 = vmatmul.mubr.bf16.gmra.mxu0 %v5691
  %v5730 = vpop.f32.mrf.mxu0
  %v5731 = vadd.f32 0.0, %v5730
  %v5732 = vpop.f32.mrf.mxu0
  %v5733 = vpop.f32.mrf.mxu0
  %v5734 = vadd.f32 0.0, %v5733
  %v5735 = vpop.f32.mrf.mxu0
  %5736 = vmatprep.mubr.bf16.mxu0 0
  %5737 = vmatmul.mubr.bf16.gmra.mxu0 %v5694
  %v5738 = vpop.f32.mrf.mxu0
  %v5739 = vadd.f32 0.0, %v5738
  %v5740 = vpop.f32.mrf.mxu0
  %v5741 = vpop.f32.mrf.mxu0
  %v5742 = vadd.f32 0.0, %v5741
  %v5743 = vpop.f32.mrf.mxu0
  %5744 = vdwg.mxu0
  %v5745 = vadd.f32 %v4683, %v5731
  %v5746 = vadd.f32 %v4684, %v5734
  %v5747 = vadd.f32 %v4685, %v5739
  %v5748 = vadd.f32 %v4686, %v5742
  %v5749 = vadd.f32 %v3582, %v5745
  %v5750 = vadd.f32 %v3583, %v5746
  %v5751 = vadd.f32 %v3584, %v5747
  %v5752 = vadd.f32 %v3585, %v5748
  %s5753 = scalar_lea.vmem %s15, 1
  %v5754 = vld [vmem:[%s5753] sm:$0x1]
  %s5755 = scalar_lea.vmem %s16, 1
  %v5756 = vld [vmem:[%s5755] sm:$0x1]
  %v5757 = vsel %vm325, %v5749, 0.0
  %5758 = vadd.xlane.f32.xlu0 %v5757
  %v5759 = vpop.xlane.xlu0 %5758
  %v5760 = vsel %vm325, %v5750, 0.0
  %5761 = vadd.xlane.f32.xlu0 %v5760
  %v5762 = vpop.xlane.xlu0 %5761
  %v5763 = vsel %vm325, %v5751, 0.0
  %5764 = vadd.xlane.f32.xlu0 %v5763
  %v5765 = vpop.xlane.xlu0 %5764
  %v5766 = vsel %vm325, %v5752, 0.0
  %5767 = vadd.xlane.f32.xlu0 %v5766
  %v5768 = vpop.xlane.xlu0 %5767
  %v5769 = vmul.f32 %v5759, %v2459
  %v5770 = vmul.f32 %v5762, %v2459
  %v5771 = vmul.f32 %v5765, %v2459
  %v5772 = vmul.f32 %v5768, %v2459
  %v5773 = vsub.f32 %v5749, %v5769
  %v5774 = vsub.f32 %v5750, %v5770
  %v5775 = vsub.f32 %v5751, %v5771
  %v5776 = vsub.f32 %v5752, %v5772
  %v5777 = vmul.f32 %v5773, %v5773
  %v5778 = vmul.f32 %v5774, %v5774
  %v5779 = vmul.f32 %v5775, %v5775
  %v5780 = vmul.f32 %v5776, %v5776
  %v5781 = vsel %vm325, %v5777, 0.0
  %5782 = vadd.xlane.f32.xlu0 %v5781
  %v5783 = vpop.xlane.xlu0 %5782
  %v5784 = vsel %vm325, %v5778, 0.0
  %5785 = vadd.xlane.f32.xlu0 %v5784
  %v5786 = vpop.xlane.xlu0 %5785
  %v5787 = vsel %vm325, %v5779, 0.0
  %5788 = vadd.xlane.f32.xlu0 %v5787
  %v5789 = vpop.xlane.xlu0 %5788
  %v5790 = vsel %vm325, %v5780, 0.0
  %5791 = vadd.xlane.f32.xlu0 %v5790
  %v5792 = vpop.xlane.xlu0 %5791
  %v5793 = vmul.f32 %v5783, %v2459
  %v5794 = vmul.f32 %v5786, %v2459
  %v5795 = vmul.f32 %v5789, %v2459
  %v5796 = vmul.f32 %v5792, %v2459
  %v5797 = vadd.f32 %v5793, 1e-05
  %v5798 = vadd.f32 %v5794, 1e-05
  %v5799 = vadd.f32 %v5795, 1e-05
  %v5800 = vadd.f32 %v5796, 1e-05
  %v5801 = vrsqrt.pop %v5797
  %v5802 = vrsqrt.pop %v5798
  %v5803 = vrsqrt.pop %v5799
  %v5804 = vrsqrt.pop %v5800
  %v5805 = vmul.f32 %v5773, %v5801
  %v5806 = vmul.f32 %v5774, %v5802
  %v5807 = vmul.f32 %v5775, %v5803
  %v5808 = vmul.f32 %v5776, %v5804
  %v5810 = vlaneseq
  %v5811 = vshrl.u32 %v5810, 7
  %v5812 = vsub.s32 0, %v5811
  %v5813 = vrot.slane %v5754, %v5812
  %v5815 = vmul.f32 %v5805, %v5813
  %v5816 = vmul.f32 %v5806, %v5813
  %v5817 = vmul.f32 %v5807, %v5813
  %v5818 = vmul.f32 %v5808, %v5813
  %v5820 = vlaneseq
  %v5821 = vshrl.u32 %v5820, 7
  %v5822 = vsub.s32 0, %v5821
  %v5823 = vrot.slane %v5756, %v5822
  %v5825 = vadd.f32 %v5815, %v5823
  %v5826 = vadd.f32 %v5816, %v5823
  %v5827 = vadd.f32 %v5817, %v5823
  %v5828 = vadd.f32 %v5818, %v5823
  %v5829 = vmul.f32 %v5825, %v131
  %v5830 = vmul.f32 %v5826, %v136
  %v5831 = vmul.f32 %v5827, %v141
  %v5832 = vmul.f32 %v5828, %v146
  %v5833 = vpack.c.bf16 %v5830, %v5829
  %v5834 = vpack.c.bf16 %v5832, %v5831
  %s5835 = scalar_lea.vmem %s20, 1
  %v5836 = vld [vmem:[%s5835] sm:$0x1]
  %v5838 = vlaneseq
  %v5839 = vshrl.u32 %v5838, 7
  %v5840 = vsub.s32 0, %v5839
  %v5841 = vrot.slane %v5836, %v5840
  %v5843 = vadd.f32 %v5841, 0.0
  %5844 = vmatprep.subr.bf16.mxu0 0
  %5845 = vmatpush1.bf16.msra.mxu0 0
  %5846 = vmatprep.subr.bf16.mxu0 0
  %5847 = vmatpush1.bf16.msra.mxu0 0
  %5848 = vmatprep.subr.bf16.mxu0 0
  %5849 = vmatpush1.bf16.msra.mxu0 0
  %5850 = vmatprep.subr.bf16.mxu0 0
  %5851 = vmatpush1.bf16.msra.mxu0 0
  %5852 = vmatprep.subr.bf16.mxu0 0
  %5853 = vmatpush1.bf16.msra.mxu0 0
  %5854 = vmatprep.subr.bf16.mxu0 0
  %5855 = vmatpush1.bf16.msra.mxu0 0
  %5856 = vmatprep.subr.bf16.mxu0 0
  %5857 = vmatpush1.bf16.msra.mxu0 %v5834
  %5858 = vmatprep.subr.bf16.mxu0 0
  %5859 = vmatpush1.bf16.msra.mxu0 %v5833
  %5860 = vmatprep.subr.bf16.mxu0 0
  %5861 = vmatpush2.bf16.msra.mxu0 0
  %5862 = vmatprep.subr.bf16.mxu0 0
  %5863 = vmatpush2.bf16.msra.mxu0 0
  %5864 = vmatprep.subr.bf16.mxu0 0
  %5865 = vmatpush2.bf16.msra.mxu0 0
  %5866 = vmatprep.subr.bf16.mxu0 0
  %5867 = vmatpush2.bf16.msra.mxu0 0
  %5868 = vmatprep.subr.bf16.mxu0 0
  %5869 = vmatpush2.bf16.msra.mxu0 0
  %5870 = vmatprep.subr.bf16.mxu0 0
  %5871 = vmatpush2.bf16.msra.mxu0 0
  %5872 = vmatprep.subr.bf16.mxu0 0
  %5873 = vmatpush2.bf16.msra.mxu0 0
  %5874 = vmatprep.subr.bf16.mxu0 0
  %5875 = vmatpush2.bf16.msra.mxu0 0
  %5876 = vmatprep.mubr.bf16.mxu0 0
  %5877 = vmatmul.mubr.bf16.gmra.mxu0 %v2535
  %v5878 = vpop.f32.mrf.mxu0
  %v5879 = vadd.f32 0.0, %v5878
  %v5880 = vpop.f32.mrf.mxu0
  %v5881 = vpop.f32.mrf.mxu0
  %v5882 = vadd.f32 0.0, %v5881
  %v5883 = vpop.f32.mrf.mxu0
  %5884 = vmatprep.mubr.bf16.mxu0 0
  %5885 = vmatmul.mubr.bf16.gmra.mxu0 %v2538
  %v5886 = vpop.f32.mrf.mxu0
  %v5887 = vadd.f32 0.0, %v5886
  %v5888 = vpop.f32.mrf.mxu0
  %v5889 = vpop.f32.mrf.mxu0
  %v5890 = vadd.f32 0.0, %v5889
  %v5891 = vpop.f32.mrf.mxu0
  %5892 = vdwg.mxu0
  %v5893 = vpack.c.bf16 %v5882, %v5879
  %v5894 = vpack.c.bf16 %v5890, %v5887
  %s5895 = scalar_lea.vmem %s19, 96
  %v5896 = vld [vmem:[%s5895] sm:$0xf]
  %v5897 = vld [vmem:[%s5895 + $0x4] sm:$0xf]
  %v5898 = vld [vmem:[%s5895 + $0x8] sm:$0xf]
  %v5899 = vld [vmem:[%s5895 + $0xc] sm:$0xf]
  %v5900 = vld [vmem:[%s5895 + $0x10] sm:$0xf]
  %v5901 = vld [vmem:[%s5895 + $0x14] sm:$0xf]
  %v5902 = vld [vmem:[%s5895 + $0x18] sm:$0xf]
  %v5903 = vld [vmem:[%s5895 + $0x1c] sm:$0xf]
  %v5912 = vunpack.c.l.b16 %v5896
  %v5913 = vunpack.c.l.b16 %v5897
  %v5914 = vunpack.c.l.b16 %v5898
  %v5915 = vunpack.c.l.b16 %v5899
  %v5916 = vunpack.c.l.b16 %v5900
  %v5917 = vunpack.c.l.b16 %v5901
  %v5918 = vunpack.c.l.b16 %v5902
  %v5919 = vunpack.c.l.b16 %v5903
  %v5920 = vpack.c.b16 %v5913, %v5912
  %v5921 = vpack.c.b16 %v5915, %v5914
  %v5922 = vpack.c.b16 %v5917, %v5916
  %v5923 = vpack.c.b16 %v5919, %v5918
  %v5929 = vsel %vm325, %v5893, 0
  %v5932 = vsel %vm325, %v5894, 0
  %5934 = vmatprep.subr.bf16.mxu0 0
  %5935 = vmatpush1.bf16.msra.mxu0 0
  %5936 = vmatprep.subr.bf16.mxu0 0
  %5937 = vmatpush1.bf16.msra.mxu0 0
  %5938 = vmatprep.subr.bf16.mxu0 0
  %5939 = vmatpush1.bf16.msra.mxu0 0
  %5940 = vmatprep.subr.bf16.mxu0 0
  %5941 = vmatpush1.bf16.msra.mxu0 0
  %5942 = vmatprep.subr.bf16.mxu0 0
  %5943 = vmatpush1.bf16.msra.mxu0 %v5923
  %5944 = vmatprep.subr.bf16.mxu0 0
  %5945 = vmatpush1.bf16.msra.mxu0 %v5922
  %5946 = vmatprep.subr.bf16.mxu0 0
  %5947 = vmatpush1.bf16.msra.mxu0 %v5921
  %5948 = vmatprep.subr.bf16.mxu0 0
  %5949 = vmatpush1.bf16.msra.mxu0 %v5920
  %5950 = vmatprep.subr.bf16.mxu0 0
  %5951 = vmatpush2.bf16.msra.mxu0 0
  %5952 = vmatprep.subr.bf16.mxu0 0
  %5953 = vmatpush2.bf16.msra.mxu0 0
  %5954 = vmatprep.subr.bf16.mxu0 0
  %5955 = vmatpush2.bf16.msra.mxu0 0
  %5956 = vmatprep.subr.bf16.mxu0 0
  %5957 = vmatpush2.bf16.msra.mxu0 0
  %5958 = vmatprep.subr.bf16.mxu0 0
  %5959 = vmatpush2.bf16.msra.mxu0 0
  %5960 = vmatprep.subr.bf16.mxu0 0
  %5961 = vmatpush2.bf16.msra.mxu0 0
  %5962 = vmatprep.subr.bf16.mxu0 0
  %5963 = vmatpush2.bf16.msra.mxu0 0
  %5964 = vmatprep.subr.bf16.mxu0 0
  %5965 = vmatpush2.bf16.msra.mxu0 0
  %5966 = vmatprep.mubr.bf16.mxu0 0
  %5967 = vmatmul.mubr.bf16.gmra.mxu0 %v5929
  %v5968 = vpop.f32.mrf.mxu0
  %v5969 = vadd.f32 0.0, %v5968
  %v5970 = vpop.f32.mrf.mxu0
  %v5971 = vpop.f32.mrf.mxu0
  %v5972 = vadd.f32 0.0, %v5971
  %v5973 = vpop.f32.mrf.mxu0
  %5974 = vmatprep.mubr.bf16.mxu0 0
  %5975 = vmatmul.mubr.bf16.gmra.mxu0 %v5932
  %v5976 = vpop.f32.mrf.mxu0
  %v5977 = vadd.f32 0.0, %v5976
  %v5978 = vpop.f32.mrf.mxu0
  %v5979 = vpop.f32.mrf.mxu0
  %v5980 = vadd.f32 0.0, %v5979
  %v5981 = vpop.f32.mrf.mxu0
  %5982 = vdwg.mxu0
  %v5983 = vadd.f32 %v5843, %v5969
  %v5984 = vadd.f32 %v5843, %v5972
  %v5985 = vadd.f32 %v5843, %v5977
  %v5986 = vadd.f32 %v5843, %v5980
  %5987 = vmatprep.subr.bf16.mxu0 0
  %5988 = vmatpush1.bf16.msra.mxu0 0
  %5989 = vmatprep.subr.bf16.mxu0 0
  %5990 = vmatpush1.bf16.msra.mxu0 0
  %5991 = vmatprep.subr.bf16.mxu0 0
  %5992 = vmatpush1.bf16.msra.mxu0 0
  %5993 = vmatprep.subr.bf16.mxu0 0
  %5994 = vmatpush1.bf16.msra.mxu0 0
  %5995 = vmatprep.subr.bf16.mxu0 0
  %5996 = vmatpush1.bf16.msra.mxu0 0
  %5997 = vmatprep.subr.bf16.mxu0 0
  %5998 = vmatpush1.bf16.msra.mxu0 0
  %5999 = vmatprep.subr.bf16.mxu0 0
  %6000 = vmatpush1.bf16.msra.mxu0 %v5834
  %6001 = vmatprep.subr.bf16.mxu0 0
  %6002 = vmatpush1.bf16.msra.mxu0 %v5833
  %6003 = vmatprep.subr.bf16.mxu0 0
  %6004 = vmatpush2.bf16.msra.mxu0 0
  %6005 = vmatprep.subr.bf16.mxu0 0
  %6006 = vmatpush2.bf16.msra.mxu0 0
  %6007 = vmatprep.subr.bf16.mxu0 0
  %6008 = vmatpush2.bf16.msra.mxu0 0
  %6009 = vmatprep.subr.bf16.mxu0 0
  %6010 = vmatpush2.bf16.msra.mxu0 0
  %6011 = vmatprep.subr.bf16.mxu0 0
  %6012 = vmatpush2.bf16.msra.mxu0 0
  %6013 = vmatprep.subr.bf16.mxu0 0
  %6014 = vmatpush2.bf16.msra.mxu0 0
  %6015 = vmatprep.subr.bf16.mxu0 0
  %6016 = vmatpush2.bf16.msra.mxu0 0
  %6017 = vmatprep.subr.bf16.mxu0 0
  %6018 = vmatpush2.bf16.msra.mxu0 0
  %6019 = vmatprep.mubr.bf16.mxu0 0
  %6020 = vmatmul.mubr.bf16.gmra.mxu0 %v2683
  %v6021 = vpop.f32.mrf.mxu0
  %v6022 = vadd.f32 0.0, %v6021
  %v6023 = vpop.f32.mrf.mxu0
  %v6024 = vpop.f32.mrf.mxu0
  %v6025 = vadd.f32 0.0, %v6024
  %v6026 = vpop.f32.mrf.mxu0
  %6027 = vmatprep.mubr.bf16.mxu0 0
  %6028 = vmatmul.mubr.bf16.gmra.mxu0 %v2686
  %v6029 = vpop.f32.mrf.mxu0
  %v6030 = vadd.f32 0.0, %v6029
  %v6031 = vpop.f32.mrf.mxu0
  %v6032 = vpop.f32.mrf.mxu0
  %v6033 = vadd.f32 0.0, %v6032
  %v6034 = vpop.f32.mrf.mxu0
  %6035 = vdwg.mxu0
  %v6036 = vpack.c.bf16 %v6025, %v6022
  %v6037 = vpack.c.bf16 %v6033, %v6030
  %s6038 = scalar_lea.vmem %s19, 128
  %v6039 = vld [vmem:[%s6038] sm:$0xf]
  %v6040 = vld [vmem:[%s6038 + $0x4] sm:$0xf]
  %v6041 = vld [vmem:[%s6038 + $0x8] sm:$0xf]
  %v6042 = vld [vmem:[%s6038 + $0xc] sm:$0xf]
  %v6043 = vld [vmem:[%s6038 + $0x10] sm:$0xf]
  %v6044 = vld [vmem:[%s6038 + $0x14] sm:$0xf]
  %v6045 = vld [vmem:[%s6038 + $0x18] sm:$0xf]
  %v6046 = vld [vmem:[%s6038 + $0x1c] sm:$0xf]
  %v6055 = vunpack.c.l.b16 %v6039
  %v6056 = vunpack.c.l.b16 %v6040
  %v6057 = vunpack.c.l.b16 %v6041
  %v6058 = vunpack.c.l.b16 %v6042
  %v6059 = vunpack.c.l.b16 %v6043
  %v6060 = vunpack.c.l.b16 %v6044
  %v6061 = vunpack.c.l.b16 %v6045
  %v6062 = vunpack.c.l.b16 %v6046
  %v6063 = vpack.c.b16 %v6056, %v6055
  %v6064 = vpack.c.b16 %v6058, %v6057
  %v6065 = vpack.c.b16 %v6060, %v6059
  %v6066 = vpack.c.b16 %v6062, %v6061
  %v6072 = vsel %vm325, %v6036, 0
  %v6075 = vsel %vm325, %v6037, 0
  %6077 = vmatprep.subr.bf16.mxu0 0
  %6078 = vmatpush1.bf16.msra.mxu0 0
  %6079 = vmatprep.subr.bf16.mxu0 0
  %6080 = vmatpush1.bf16.msra.mxu0 0
  %6081 = vmatprep.subr.bf16.mxu0 0
  %6082 = vmatpush1.bf16.msra.mxu0 0
  %6083 = vmatprep.subr.bf16.mxu0 0
  %6084 = vmatpush1.bf16.msra.mxu0 0
  %6085 = vmatprep.subr.bf16.mxu0 0
  %6086 = vmatpush1.bf16.msra.mxu0 %v6066
  %6087 = vmatprep.subr.bf16.mxu0 0
  %6088 = vmatpush1.bf16.msra.mxu0 %v6065
  %6089 = vmatprep.subr.bf16.mxu0 0
  %6090 = vmatpush1.bf16.msra.mxu0 %v6064
  %6091 = vmatprep.subr.bf16.mxu0 0
  %6092 = vmatpush1.bf16.msra.mxu0 %v6063
  %6093 = vmatprep.subr.bf16.mxu0 0
  %6094 = vmatpush2.bf16.msra.mxu0 0
  %6095 = vmatprep.subr.bf16.mxu0 0
  %6096 = vmatpush2.bf16.msra.mxu0 0
  %6097 = vmatprep.subr.bf16.mxu0 0
  %6098 = vmatpush2.bf16.msra.mxu0 0
  %6099 = vmatprep.subr.bf16.mxu0 0
  %6100 = vmatpush2.bf16.msra.mxu0 0
  %6101 = vmatprep.subr.bf16.mxu0 0
  %6102 = vmatpush2.bf16.msra.mxu0 0
  %6103 = vmatprep.subr.bf16.mxu0 0
  %6104 = vmatpush2.bf16.msra.mxu0 0
  %6105 = vmatprep.subr.bf16.mxu0 0
  %6106 = vmatpush2.bf16.msra.mxu0 0
  %6107 = vmatprep.subr.bf16.mxu0 0
  %6108 = vmatpush2.bf16.msra.mxu0 0
  %6109 = vmatprep.mubr.bf16.mxu0 0
  %6110 = vmatmul.mubr.bf16.gmra.mxu0 %v6072
  %v6111 = vpop.f32.mrf.mxu0
  %v6112 = vadd.f32 0.0, %v6111
  %v6113 = vpop.f32.mrf.mxu0
  %v6114 = vpop.f32.mrf.mxu0
  %v6115 = vadd.f32 0.0, %v6114
  %v6116 = vpop.f32.mrf.mxu0
  %6117 = vmatprep.mubr.bf16.mxu0 0
  %6118 = vmatmul.mubr.bf16.gmra.mxu0 %v6075
  %v6119 = vpop.f32.mrf.mxu0
  %v6120 = vadd.f32 0.0, %v6119
  %v6121 = vpop.f32.mrf.mxu0
  %v6122 = vpop.f32.mrf.mxu0
  %v6123 = vadd.f32 0.0, %v6122
  %v6124 = vpop.f32.mrf.mxu0
  %6125 = vdwg.mxu0
  %v6126 = vadd.f32 %v5983, %v6112
  %v6127 = vadd.f32 %v5984, %v6115
  %v6128 = vadd.f32 %v5985, %v6120
  %v6129 = vadd.f32 %v5986, %v6123
  %6130 = vmatprep.subr.bf16.mxu0 0
  %6131 = vmatpush1.bf16.msra.mxu0 0
  %6132 = vmatprep.subr.bf16.mxu0 0
  %6133 = vmatpush1.bf16.msra.mxu0 0
  %6134 = vmatprep.subr.bf16.mxu0 0
  %6135 = vmatpush1.bf16.msra.mxu0 0
  %6136 = vmatprep.subr.bf16.mxu0 0
  %6137 = vmatpush1.bf16.msra.mxu0 0
  %6138 = vmatprep.subr.bf16.mxu0 0
  %6139 = vmatpush1.bf16.msra.mxu0 0
  %6140 = vmatprep.subr.bf16.mxu0 0
  %6141 = vmatpush1.bf16.msra.mxu0 0
  %6142 = vmatprep.subr.bf16.mxu0 0
  %6143 = vmatpush1.bf16.msra.mxu0 %v5834
  %6144 = vmatprep.subr.bf16.mxu0 0
  %6145 = vmatpush1.bf16.msra.mxu0 %v5833
  %6146 = vmatprep.subr.bf16.mxu0 0
  %6147 = vmatpush2.bf16.msra.mxu0 0
  %6148 = vmatprep.subr.bf16.mxu0 0
  %6149 = vmatpush2.bf16.msra.mxu0 0
  %6150 = vmatprep.subr.bf16.mxu0 0
  %6151 = vmatpush2.bf16.msra.mxu0 0
  %6152 = vmatprep.subr.bf16.mxu0 0
  %6153 = vmatpush2.bf16.msra.mxu0 0
  %6154 = vmatprep.subr.bf16.mxu0 0
  %6155 = vmatpush2.bf16.msra.mxu0 0
  %6156 = vmatprep.subr.bf16.mxu0 0
  %6157 = vmatpush2.bf16.msra.mxu0 0
  %6158 = vmatprep.subr.bf16.mxu0 0
  %6159 = vmatpush2.bf16.msra.mxu0 0
  %6160 = vmatprep.subr.bf16.mxu0 0
  %6161 = vmatpush2.bf16.msra.mxu0 0
  %6162 = vmatprep.mubr.bf16.mxu0 0
  %6163 = vmatmul.mubr.bf16.gmra.mxu0 %v2832
  %v6164 = vpop.f32.mrf.mxu0
  %v6165 = vadd.f32 0.0, %v6164
  %v6166 = vpop.f32.mrf.mxu0
  %v6167 = vpop.f32.mrf.mxu0
  %v6168 = vadd.f32 0.0, %v6167
  %v6169 = vpop.f32.mrf.mxu0
  %6170 = vmatprep.mubr.bf16.mxu0 0
  %6171 = vmatmul.mubr.bf16.gmra.mxu0 %v2835
  %v6172 = vpop.f32.mrf.mxu0
  %v6173 = vadd.f32 0.0, %v6172
  %v6174 = vpop.f32.mrf.mxu0
  %v6175 = vpop.f32.mrf.mxu0
  %v6176 = vadd.f32 0.0, %v6175
  %v6177 = vpop.f32.mrf.mxu0
  %6178 = vdwg.mxu0
  %v6179 = vpack.c.bf16 %v6168, %v6165
  %v6180 = vpack.c.bf16 %v6176, %v6173
  %s6181 = scalar_lea.vmem %s19, 160
  %v6182 = vld [vmem:[%s6181] sm:$0xf]
  %v6183 = vld [vmem:[%s6181 + $0x4] sm:$0xf]
  %v6184 = vld [vmem:[%s6181 + $0x8] sm:$0xf]
  %v6185 = vld [vmem:[%s6181 + $0xc] sm:$0xf]
  %v6186 = vld [vmem:[%s6181 + $0x10] sm:$0xf]
  %v6187 = vld [vmem:[%s6181 + $0x14] sm:$0xf]
  %v6188 = vld [vmem:[%s6181 + $0x18] sm:$0xf]
  %v6189 = vld [vmem:[%s6181 + $0x1c] sm:$0xf]
  %v6198 = vunpack.c.l.b16 %v6182
  %v6199 = vunpack.c.l.b16 %v6183
  %v6200 = vunpack.c.l.b16 %v6184
  %v6201 = vunpack.c.l.b16 %v6185
  %v6202 = vunpack.c.l.b16 %v6186
  %v6203 = vunpack.c.l.b16 %v6187
  %v6204 = vunpack.c.l.b16 %v6188
  %v6205 = vunpack.c.l.b16 %v6189
  %v6206 = vpack.c.b16 %v6199, %v6198
  %v6207 = vpack.c.b16 %v6201, %v6200
  %v6208 = vpack.c.b16 %v6203, %v6202
  %v6209 = vpack.c.b16 %v6205, %v6204
  %v6215 = vsel %vm325, %v6179, 0
  %v6218 = vsel %vm325, %v6180, 0
  %6220 = vmatprep.subr.bf16.mxu0 0
  %6221 = vmatpush1.bf16.msra.mxu0 0
  %6222 = vmatprep.subr.bf16.mxu0 0
  %6223 = vmatpush1.bf16.msra.mxu0 0
  %6224 = vmatprep.subr.bf16.mxu0 0
  %6225 = vmatpush1.bf16.msra.mxu0 0
  %6226 = vmatprep.subr.bf16.mxu0 0
  %6227 = vmatpush1.bf16.msra.mxu0 0
  %6228 = vmatprep.subr.bf16.mxu0 0
  %6229 = vmatpush1.bf16.msra.mxu0 %v6209
  %6230 = vmatprep.subr.bf16.mxu0 0
  %6231 = vmatpush1.bf16.msra.mxu0 %v6208
  %6232 = vmatprep.subr.bf16.mxu0 0
  %6233 = vmatpush1.bf16.msra.mxu0 %v6207
  %6234 = vmatprep.subr.bf16.mxu0 0
  %6235 = vmatpush1.bf16.msra.mxu0 %v6206
  %6236 = vmatprep.subr.bf16.mxu0 0
  %6237 = vmatpush2.bf16.msra.mxu0 0
  %6238 = vmatprep.subr.bf16.mxu0 0
  %6239 = vmatpush2.bf16.msra.mxu0 0
  %6240 = vmatprep.subr.bf16.mxu0 0
  %6241 = vmatpush2.bf16.msra.mxu0 0
  %6242 = vmatprep.subr.bf16.mxu0 0
  %6243 = vmatpush2.bf16.msra.mxu0 0
  %6244 = vmatprep.subr.bf16.mxu0 0
  %6245 = vmatpush2.bf16.msra.mxu0 0
  %6246 = vmatprep.subr.bf16.mxu0 0
  %6247 = vmatpush2.bf16.msra.mxu0 0
  %6248 = vmatprep.subr.bf16.mxu0 0
  %6249 = vmatpush2.bf16.msra.mxu0 0
  %6250 = vmatprep.subr.bf16.mxu0 0
  %6251 = vmatpush2.bf16.msra.mxu0 0
  %6252 = vmatprep.mubr.bf16.mxu0 0
  %6253 = vmatmul.mubr.bf16.gmra.mxu0 %v6215
  %v6254 = vpop.f32.mrf.mxu0
  %v6255 = vadd.f32 0.0, %v6254
  %v6256 = vpop.f32.mrf.mxu0
  %v6257 = vpop.f32.mrf.mxu0
  %v6258 = vadd.f32 0.0, %v6257
  %v6259 = vpop.f32.mrf.mxu0
  %6260 = vmatprep.mubr.bf16.mxu0 0
  %6261 = vmatmul.mubr.bf16.gmra.mxu0 %v6218
  %v6262 = vpop.f32.mrf.mxu0
  %v6263 = vadd.f32 0.0, %v6262
  %v6264 = vpop.f32.mrf.mxu0
  %v6265 = vpop.f32.mrf.mxu0
  %v6266 = vadd.f32 0.0, %v6265
  %v6267 = vpop.f32.mrf.mxu0
  %6268 = vdwg.mxu0
  %v6269 = vadd.f32 %v6126, %v6255
  %v6270 = vadd.f32 %v6127, %v6258
  %v6271 = vadd.f32 %v6128, %v6263
  %v6272 = vadd.f32 %v6129, %v6266
  %v6273 = vmax.f32 %v6269, 0.0
  %v6274 = vmax.f32 %v6270, 0.0
  %v6275 = vmax.f32 %v6271, 0.0
  %v6276 = vmax.f32 %v6272, 0.0
  %v6277 = vmul.f32 %v6273, %v131
  %v6278 = vmul.f32 %v6274, %v136
  %v6279 = vmul.f32 %v6275, %v141
  %v6280 = vmul.f32 %v6276, %v146
  %v6281 = vpack.c.bf16 %v6278, %v6277
  %v6282 = vpack.c.bf16 %v6280, %v6279
  %s6283 = scalar_lea.vmem %s22, 1
  %v6284 = vld [vmem:[%s6283] sm:$0x1]
  %v6286 = vlaneseq
  %v6287 = vshrl.u32 %v6286, 7
  %v6288 = vsub.s32 0, %v6287
  %v6289 = vrot.slane %v6284, %v6288
  %v6291 = vadd.f32 %v6289, 0.0
  %6292 = vmatprep.subr.bf16.mxu0 0
  %6293 = vmatpush1.bf16.msra.mxu0 0
  %6294 = vmatprep.subr.bf16.mxu0 0
  %6295 = vmatpush1.bf16.msra.mxu0 0
  %6296 = vmatprep.subr.bf16.mxu0 0
  %6297 = vmatpush1.bf16.msra.mxu0 0
  %6298 = vmatprep.subr.bf16.mxu0 0
  %6299 = vmatpush1.bf16.msra.mxu0 0
  %6300 = vmatprep.subr.bf16.mxu0 0
  %6301 = vmatpush1.bf16.msra.mxu0 0
  %6302 = vmatprep.subr.bf16.mxu0 0
  %6303 = vmatpush1.bf16.msra.mxu0 0
  %6304 = vmatprep.subr.bf16.mxu0 0
  %6305 = vmatpush1.bf16.msra.mxu0 %v6282
  %6306 = vmatprep.subr.bf16.mxu0 0
  %6307 = vmatpush1.bf16.msra.mxu0 %v6281
  %6308 = vmatprep.subr.bf16.mxu0 0
  %6309 = vmatpush2.bf16.msra.mxu0 0
  %6310 = vmatprep.subr.bf16.mxu0 0
  %6311 = vmatpush2.bf16.msra.mxu0 0
  %6312 = vmatprep.subr.bf16.mxu0 0
  %6313 = vmatpush2.bf16.msra.mxu0 0
  %6314 = vmatprep.subr.bf16.mxu0 0
  %6315 = vmatpush2.bf16.msra.mxu0 0
  %6316 = vmatprep.subr.bf16.mxu0 0
  %6317 = vmatpush2.bf16.msra.mxu0 0
  %6318 = vmatprep.subr.bf16.mxu0 0
  %6319 = vmatpush2.bf16.msra.mxu0 0
  %6320 = vmatprep.subr.bf16.mxu0 0
  %6321 = vmatpush2.bf16.msra.mxu0 0
  %6322 = vmatprep.subr.bf16.mxu0 0
  %6323 = vmatpush2.bf16.msra.mxu0 0
  %6324 = vmatprep.mubr.bf16.mxu0 0
  %6325 = vmatmul.mubr.bf16.gmra.mxu0 %v2535
  %v6326 = vpop.f32.mrf.mxu0
  %v6327 = vadd.f32 0.0, %v6326
  %v6328 = vpop.f32.mrf.mxu0
  %v6329 = vpop.f32.mrf.mxu0
  %v6330 = vadd.f32 0.0, %v6329
  %v6331 = vpop.f32.mrf.mxu0
  %6332 = vmatprep.mubr.bf16.mxu0 0
  %6333 = vmatmul.mubr.bf16.gmra.mxu0 %v2538
  %v6334 = vpop.f32.mrf.mxu0
  %v6335 = vadd.f32 0.0, %v6334
  %v6336 = vpop.f32.mrf.mxu0
  %v6337 = vpop.f32.mrf.mxu0
  %v6338 = vadd.f32 0.0, %v6337
  %v6339 = vpop.f32.mrf.mxu0
  %6340 = vdwg.mxu0
  %v6341 = vpack.c.bf16 %v6330, %v6327
  %v6342 = vpack.c.bf16 %v6338, %v6335
  %s6343 = scalar_lea.vmem %s21, 192
  %v6344 = vld [vmem:[%s6343] sm:$0xf]
  %v6345 = vld [vmem:[%s6343 + $0x4] sm:$0xf]
  %v6346 = vld [vmem:[%s6343 + $0x8] sm:$0xf]
  %v6347 = vld [vmem:[%s6343 + $0xc] sm:$0xf]
  %v6348 = vld [vmem:[%s6343 + $0x10] sm:$0xf]
  %v6349 = vld [vmem:[%s6343 + $0x14] sm:$0xf]
  %v6350 = vld [vmem:[%s6343 + $0x18] sm:$0xf]
  %v6351 = vld [vmem:[%s6343 + $0x1c] sm:$0xf]
  %v6352 = vld [vmem:[%s6343 + $0x20] sm:$0xf]
  %v6353 = vld [vmem:[%s6343 + $0x24] sm:$0xf]
  %v6354 = vld [vmem:[%s6343 + $0x28] sm:$0xf]
  %v6355 = vld [vmem:[%s6343 + $0x2c] sm:$0xf]
  %v6356 = vld [vmem:[%s6343 + $0x30] sm:$0xf]
  %v6357 = vld [vmem:[%s6343 + $0x34] sm:$0xf]
  %v6358 = vld [vmem:[%s6343 + $0x38] sm:$0xf]
  %v6359 = vld [vmem:[%s6343 + $0x3c] sm:$0xf]
  %v6376 = vunpack.c.l.b16 %v6344
  %v6377 = vunpack.c.l.b16 %v6345
  %v6378 = vunpack.c.l.b16 %v6346
  %v6379 = vunpack.c.l.b16 %v6347
  %v6380 = vunpack.c.l.b16 %v6348
  %v6381 = vunpack.c.l.b16 %v6349
  %v6382 = vunpack.c.l.b16 %v6350
  %v6383 = vunpack.c.l.b16 %v6351
  %v6384 = vunpack.c.l.b16 %v6352
  %v6385 = vunpack.c.l.b16 %v6353
  %v6386 = vunpack.c.l.b16 %v6354
  %v6387 = vunpack.c.l.b16 %v6355
  %v6388 = vunpack.c.l.b16 %v6356
  %v6389 = vunpack.c.l.b16 %v6357
  %v6390 = vunpack.c.l.b16 %v6358
  %v6391 = vunpack.c.l.b16 %v6359
  %v6392 = vpack.c.b16 %v6377, %v6376
  %v6393 = vpack.c.b16 %v6379, %v6378
  %v6394 = vpack.c.b16 %v6381, %v6380
  %v6395 = vpack.c.b16 %v6383, %v6382
  %v6396 = vpack.c.b16 %v6385, %v6384
  %v6397 = vpack.c.b16 %v6387, %v6386
  %v6398 = vpack.c.b16 %v6389, %v6388
  %v6399 = vpack.c.b16 %v6391, %v6390
  %6408 = vmatprep.subr.bf16.mxu0 0
  %6409 = vmatpush1.bf16.msra.mxu0 %v6399
  %6410 = vmatprep.subr.bf16.mxu0 0
  %6411 = vmatpush1.bf16.msra.mxu0 %v6398
  %6412 = vmatprep.subr.bf16.mxu0 0
  %6413 = vmatpush1.bf16.msra.mxu0 %v6397
  %6414 = vmatprep.subr.bf16.mxu0 0
  %6415 = vmatpush1.bf16.msra.mxu0 %v6396
  %6416 = vmatprep.subr.bf16.mxu0 0
  %6417 = vmatpush1.bf16.msra.mxu0 %v6395
  %6418 = vmatprep.subr.bf16.mxu0 0
  %6419 = vmatpush1.bf16.msra.mxu0 %v6394
  %6420 = vmatprep.subr.bf16.mxu0 0
  %6421 = vmatpush1.bf16.msra.mxu0 %v6393
  %6422 = vmatprep.subr.bf16.mxu0 0
  %6423 = vmatpush1.bf16.msra.mxu0 %v6392
  %6424 = vmatprep.subr.bf16.mxu0 0
  %6425 = vmatpush2.bf16.msra.mxu0 0
  %6426 = vmatprep.subr.bf16.mxu0 0
  %6427 = vmatpush2.bf16.msra.mxu0 0
  %6428 = vmatprep.subr.bf16.mxu0 0
  %6429 = vmatpush2.bf16.msra.mxu0 0
  %6430 = vmatprep.subr.bf16.mxu0 0
  %6431 = vmatpush2.bf16.msra.mxu0 0
  %6432 = vmatprep.subr.bf16.mxu0 0
  %6433 = vmatpush2.bf16.msra.mxu0 0
  %6434 = vmatprep.subr.bf16.mxu0 0
  %6435 = vmatpush2.bf16.msra.mxu0 0
  %6436 = vmatprep.subr.bf16.mxu0 0
  %6437 = vmatpush2.bf16.msra.mxu0 0
  %6438 = vmatprep.subr.bf16.mxu0 0
  %6439 = vmatpush2.bf16.msra.mxu0 0
  %6440 = vmatprep.mubr.bf16.mxu0 0
  %6441 = vmatmul.mubr.bf16.gmra.mxu0 %v6341
  %v6442 = vpop.f32.mrf.mxu0
  %v6443 = vadd.f32 0.0, %v6442
  %v6444 = vpop.f32.mrf.mxu0
  %v6445 = vpop.f32.mrf.mxu0
  %v6446 = vadd.f32 0.0, %v6445
  %v6447 = vpop.f32.mrf.mxu0
  %6448 = vmatprep.mubr.bf16.mxu0 0
  %6449 = vmatmul.mubr.bf16.gmra.mxu0 %v6342
  %v6450 = vpop.f32.mrf.mxu0
  %v6451 = vadd.f32 0.0, %v6450
  %v6452 = vpop.f32.mrf.mxu0
  %v6453 = vpop.f32.mrf.mxu0
  %v6454 = vadd.f32 0.0, %v6453
  %v6455 = vpop.f32.mrf.mxu0
  %6456 = vdwg.mxu0
  %v6457 = vadd.f32 %v6291, %v6443
  %v6458 = vadd.f32 %v6291, %v6446
  %v6459 = vadd.f32 %v6291, %v6451
  %v6460 = vadd.f32 %v6291, %v6454
  %6461 = vmatprep.subr.bf16.mxu0 0
  %6462 = vmatpush1.bf16.msra.mxu0 0
  %6463 = vmatprep.subr.bf16.mxu0 0
  %6464 = vmatpush1.bf16.msra.mxu0 0
  %6465 = vmatprep.subr.bf16.mxu0 0
  %6466 = vmatpush1.bf16.msra.mxu0 0
  %6467 = vmatprep.subr.bf16.mxu0 0
  %6468 = vmatpush1.bf16.msra.mxu0 0
  %6469 = vmatprep.subr.bf16.mxu0 0
  %6470 = vmatpush1.bf16.msra.mxu0 0
  %6471 = vmatprep.subr.bf16.mxu0 0
  %6472 = vmatpush1.bf16.msra.mxu0 0
  %6473 = vmatprep.subr.bf16.mxu0 0
  %6474 = vmatpush1.bf16.msra.mxu0 %v6282
  %6475 = vmatprep.subr.bf16.mxu0 0
  %6476 = vmatpush1.bf16.msra.mxu0 %v6281
  %6477 = vmatprep.subr.bf16.mxu0 0
  %6478 = vmatpush2.bf16.msra.mxu0 0
  %6479 = vmatprep.subr.bf16.mxu0 0
  %6480 = vmatpush2.bf16.msra.mxu0 0
  %6481 = vmatprep.subr.bf16.mxu0 0
  %6482 = vmatpush2.bf16.msra.mxu0 0
  %6483 = vmatprep.subr.bf16.mxu0 0
  %6484 = vmatpush2.bf16.msra.mxu0 0
  %6485 = vmatprep.subr.bf16.mxu0 0
  %6486 = vmatpush2.bf16.msra.mxu0 0
  %6487 = vmatprep.subr.bf16.mxu0 0
  %6488 = vmatpush2.bf16.msra.mxu0 0
  %6489 = vmatprep.subr.bf16.mxu0 0
  %6490 = vmatpush2.bf16.msra.mxu0 0
  %6491 = vmatprep.subr.bf16.mxu0 0
  %6492 = vmatpush2.bf16.msra.mxu0 0
  %6493 = vmatprep.mubr.bf16.mxu0 0
  %6494 = vmatmul.mubr.bf16.gmra.mxu0 %v2683
  %v6495 = vpop.f32.mrf.mxu0
  %v6496 = vadd.f32 0.0, %v6495
  %v6497 = vpop.f32.mrf.mxu0
  %v6498 = vpop.f32.mrf.mxu0
  %v6499 = vadd.f32 0.0, %v6498
  %v6500 = vpop.f32.mrf.mxu0
  %6501 = vmatprep.mubr.bf16.mxu0 0
  %6502 = vmatmul.mubr.bf16.gmra.mxu0 %v2686
  %v6503 = vpop.f32.mrf.mxu0
  %v6504 = vadd.f32 0.0, %v6503
  %v6505 = vpop.f32.mrf.mxu0
  %v6506 = vpop.f32.mrf.mxu0
  %v6507 = vadd.f32 0.0, %v6506
  %v6508 = vpop.f32.mrf.mxu0
  %6509 = vdwg.mxu0
  %v6510 = vpack.c.bf16 %v6499, %v6496
  %v6511 = vpack.c.bf16 %v6507, %v6504
  %s6512 = scalar_lea.vmem %s21, 256
  %v6513 = vld [vmem:[%s6512] sm:$0xf]
  %v6514 = vld [vmem:[%s6512 + $0x4] sm:$0xf]
  %v6515 = vld [vmem:[%s6512 + $0x8] sm:$0xf]
  %v6516 = vld [vmem:[%s6512 + $0xc] sm:$0xf]
  %v6517 = vld [vmem:[%s6512 + $0x10] sm:$0xf]
  %v6518 = vld [vmem:[%s6512 + $0x14] sm:$0xf]
  %v6519 = vld [vmem:[%s6512 + $0x18] sm:$0xf]
  %v6520 = vld [vmem:[%s6512 + $0x1c] sm:$0xf]
  %v6521 = vld [vmem:[%s6512 + $0x20] sm:$0xf]
  %v6522 = vld [vmem:[%s6512 + $0x24] sm:$0xf]
  %v6523 = vld [vmem:[%s6512 + $0x28] sm:$0xf]
  %v6524 = vld [vmem:[%s6512 + $0x2c] sm:$0xf]
  %v6525 = vld [vmem:[%s6512 + $0x30] sm:$0xf]
  %v6526 = vld [vmem:[%s6512 + $0x34] sm:$0xf]
  %v6527 = vld [vmem:[%s6512 + $0x38] sm:$0xf]
  %v6528 = vld [vmem:[%s6512 + $0x3c] sm:$0xf]
  %v6545 = vunpack.c.l.b16 %v6513
  %v6546 = vunpack.c.l.b16 %v6514
  %v6547 = vunpack.c.l.b16 %v6515
  %v6548 = vunpack.c.l.b16 %v6516
  %v6549 = vunpack.c.l.b16 %v6517
  %v6550 = vunpack.c.l.b16 %v6518
  %v6551 = vunpack.c.l.b16 %v6519
  %v6552 = vunpack.c.l.b16 %v6520
  %v6553 = vunpack.c.l.b16 %v6521
  %v6554 = vunpack.c.l.b16 %v6522
  %v6555 = vunpack.c.l.b16 %v6523
  %v6556 = vunpack.c.l.b16 %v6524
  %v6557 = vunpack.c.l.b16 %v6525
  %v6558 = vunpack.c.l.b16 %v6526
  %v6559 = vunpack.c.l.b16 %v6527
  %v6560 = vunpack.c.l.b16 %v6528
  %v6561 = vpack.c.b16 %v6546, %v6545
  %v6562 = vpack.c.b16 %v6548, %v6547
  %v6563 = vpack.c.b16 %v6550, %v6549
  %v6564 = vpack.c.b16 %v6552, %v6551
  %v6565 = vpack.c.b16 %v6554, %v6553
  %v6566 = vpack.c.b16 %v6556, %v6555
  %v6567 = vpack.c.b16 %v6558, %v6557
  %v6568 = vpack.c.b16 %v6560, %v6559
  %6577 = vmatprep.subr.bf16.mxu0 0
  %6578 = vmatpush1.bf16.msra.mxu0 %v6568
  %6579 = vmatprep.subr.bf16.mxu0 0
  %6580 = vmatpush1.bf16.msra.mxu0 %v6567
  %6581 = vmatprep.subr.bf16.mxu0 0
  %6582 = vmatpush1.bf16.msra.mxu0 %v6566
  %6583 = vmatprep.subr.bf16.mxu0 0
  %6584 = vmatpush1.bf16.msra.mxu0 %v6565
  %6585 = vmatprep.subr.bf16.mxu0 0
  %6586 = vmatpush1.bf16.msra.mxu0 %v6564
  %6587 = vmatprep.subr.bf16.mxu0 0
  %6588 = vmatpush1.bf16.msra.mxu0 %v6563
  %6589 = vmatprep.subr.bf16.mxu0 0
  %6590 = vmatpush1.bf16.msra.mxu0 %v6562
  %6591 = vmatprep.subr.bf16.mxu0 0
  %6592 = vmatpush1.bf16.msra.mxu0 %v6561
  %6593 = vmatprep.subr.bf16.mxu0 0
  %6594 = vmatpush2.bf16.msra.mxu0 0
  %6595 = vmatprep.subr.bf16.mxu0 0
  %6596 = vmatpush2.bf16.msra.mxu0 0
  %6597 = vmatprep.subr.bf16.mxu0 0
  %6598 = vmatpush2.bf16.msra.mxu0 0
  %6599 = vmatprep.subr.bf16.mxu0 0
  %6600 = vmatpush2.bf16.msra.mxu0 0
  %6601 = vmatprep.subr.bf16.mxu0 0
  %6602 = vmatpush2.bf16.msra.mxu0 0
  %6603 = vmatprep.subr.bf16.mxu0 0
  %6604 = vmatpush2.bf16.msra.mxu0 0
  %6605 = vmatprep.subr.bf16.mxu0 0
  %6606 = vmatpush2.bf16.msra.mxu0 0
  %6607 = vmatprep.subr.bf16.mxu0 0
  %6608 = vmatpush2.bf16.msra.mxu0 0
  %6609 = vmatprep.mubr.bf16.mxu0 0
  %6610 = vmatmul.mubr.bf16.gmra.mxu0 %v6510
  %v6611 = vpop.f32.mrf.mxu0
  %v6612 = vadd.f32 0.0, %v6611
  %v6613 = vpop.f32.mrf.mxu0
  %v6614 = vpop.f32.mrf.mxu0
  %v6615 = vadd.f32 0.0, %v6614
  %v6616 = vpop.f32.mrf.mxu0
  %6617 = vmatprep.mubr.bf16.mxu0 0
  %6618 = vmatmul.mubr.bf16.gmra.mxu0 %v6511
  %v6619 = vpop.f32.mrf.mxu0
  %v6620 = vadd.f32 0.0, %v6619
  %v6621 = vpop.f32.mrf.mxu0
  %v6622 = vpop.f32.mrf.mxu0
  %v6623 = vadd.f32 0.0, %v6622
  %v6624 = vpop.f32.mrf.mxu0
  %6625 = vdwg.mxu0
  %v6626 = vadd.f32 %v6457, %v6612
  %v6627 = vadd.f32 %v6458, %v6615
  %v6628 = vadd.f32 %v6459, %v6620
  %v6629 = vadd.f32 %v6460, %v6623
  %6630 = vmatprep.subr.bf16.mxu0 0
  %6631 = vmatpush1.bf16.msra.mxu0 0
  %6632 = vmatprep.subr.bf16.mxu0 0
  %6633 = vmatpush1.bf16.msra.mxu0 0
  %6634 = vmatprep.subr.bf16.mxu0 0
  %6635 = vmatpush1.bf16.msra.mxu0 0
  %6636 = vmatprep.subr.bf16.mxu0 0
  %6637 = vmatpush1.bf16.msra.mxu0 0
  %6638 = vmatprep.subr.bf16.mxu0 0
  %6639 = vmatpush1.bf16.msra.mxu0 0
  %6640 = vmatprep.subr.bf16.mxu0 0
  %6641 = vmatpush1.bf16.msra.mxu0 0
  %6642 = vmatprep.subr.bf16.mxu0 0
  %6643 = vmatpush1.bf16.msra.mxu0 %v6282
  %6644 = vmatprep.subr.bf16.mxu0 0
  %6645 = vmatpush1.bf16.msra.mxu0 %v6281
  %6646 = vmatprep.subr.bf16.mxu0 0
  %6647 = vmatpush2.bf16.msra.mxu0 0
  %6648 = vmatprep.subr.bf16.mxu0 0
  %6649 = vmatpush2.bf16.msra.mxu0 0
  %6650 = vmatprep.subr.bf16.mxu0 0
  %6651 = vmatpush2.bf16.msra.mxu0 0
  %6652 = vmatprep.subr.bf16.mxu0 0
  %6653 = vmatpush2.bf16.msra.mxu0 0
  %6654 = vmatprep.subr.bf16.mxu0 0
  %6655 = vmatpush2.bf16.msra.mxu0 0
  %6656 = vmatprep.subr.bf16.mxu0 0
  %6657 = vmatpush2.bf16.msra.mxu0 0
  %6658 = vmatprep.subr.bf16.mxu0 0
  %6659 = vmatpush2.bf16.msra.mxu0 0
  %6660 = vmatprep.subr.bf16.mxu0 0
  %6661 = vmatpush2.bf16.msra.mxu0 0
  %6662 = vmatprep.mubr.bf16.mxu0 0
  %6663 = vmatmul.mubr.bf16.gmra.mxu0 %v2832
  %v6664 = vpop.f32.mrf.mxu0
  %v6665 = vadd.f32 0.0, %v6664
  %v6666 = vpop.f32.mrf.mxu0
  %v6667 = vpop.f32.mrf.mxu0
  %v6668 = vadd.f32 0.0, %v6667
  %v6669 = vpop.f32.mrf.mxu0
  %6670 = vmatprep.mubr.bf16.mxu0 0
  %6671 = vmatmul.mubr.bf16.gmra.mxu0 %v2835
  %v6672 = vpop.f32.mrf.mxu0
  %v6673 = vadd.f32 0.0, %v6672
  %v6674 = vpop.f32.mrf.mxu0
  %v6675 = vpop.f32.mrf.mxu0
  %v6676 = vadd.f32 0.0, %v6675
  %v6677 = vpop.f32.mrf.mxu0
  %6678 = vdwg.mxu0
  %v6679 = vpack.c.bf16 %v6668, %v6665
  %v6680 = vpack.c.bf16 %v6676, %v6673
  %s6681 = scalar_lea.vmem %s21, 320
  %v6682 = vld [vmem:[%s6681] sm:$0xf]
  %v6683 = vld [vmem:[%s6681 + $0x4] sm:$0xf]
  %v6684 = vld [vmem:[%s6681 + $0x8] sm:$0xf]
  %v6685 = vld [vmem:[%s6681 + $0xc] sm:$0xf]
  %v6686 = vld [vmem:[%s6681 + $0x10] sm:$0xf]
  %v6687 = vld [vmem:[%s6681 + $0x14] sm:$0xf]
  %v6688 = vld [vmem:[%s6681 + $0x18] sm:$0xf]
  %v6689 = vld [vmem:[%s6681 + $0x1c] sm:$0xf]
  %v6690 = vld [vmem:[%s6681 + $0x20] sm:$0xf]
  %v6691 = vld [vmem:[%s6681 + $0x24] sm:$0xf]
  %v6692 = vld [vmem:[%s6681 + $0x28] sm:$0xf]
  %v6693 = vld [vmem:[%s6681 + $0x2c] sm:$0xf]
  %v6694 = vld [vmem:[%s6681 + $0x30] sm:$0xf]
  %v6695 = vld [vmem:[%s6681 + $0x34] sm:$0xf]
  %v6696 = vld [vmem:[%s6681 + $0x38] sm:$0xf]
  %v6697 = vld [vmem:[%s6681 + $0x3c] sm:$0xf]
  %v6714 = vunpack.c.l.b16 %v6682
  %v6715 = vunpack.c.l.b16 %v6683
  %v6716 = vunpack.c.l.b16 %v6684
  %v6717 = vunpack.c.l.b16 %v6685
  %v6718 = vunpack.c.l.b16 %v6686
  %v6719 = vunpack.c.l.b16 %v6687
  %v6720 = vunpack.c.l.b16 %v6688
  %v6721 = vunpack.c.l.b16 %v6689
  %v6722 = vunpack.c.l.b16 %v6690
  %v6723 = vunpack.c.l.b16 %v6691
  %v6724 = vunpack.c.l.b16 %v6692
  %v6725 = vunpack.c.l.b16 %v6693
  %v6726 = vunpack.c.l.b16 %v6694
  %v6727 = vunpack.c.l.b16 %v6695
  %v6728 = vunpack.c.l.b16 %v6696
  %v6729 = vunpack.c.l.b16 %v6697
  %v6730 = vpack.c.b16 %v6715, %v6714
  %v6731 = vpack.c.b16 %v6717, %v6716
  %v6732 = vpack.c.b16 %v6719, %v6718
  %v6733 = vpack.c.b16 %v6721, %v6720
  %v6734 = vpack.c.b16 %v6723, %v6722
  %v6735 = vpack.c.b16 %v6725, %v6724
  %v6736 = vpack.c.b16 %v6727, %v6726
  %v6737 = vpack.c.b16 %v6729, %v6728
  %6746 = vmatprep.subr.bf16.mxu0 0
  %6747 = vmatpush1.bf16.msra.mxu0 %v6737
  %6748 = vmatprep.subr.bf16.mxu0 0
  %6749 = vmatpush1.bf16.msra.mxu0 %v6736
  %6750 = vmatprep.subr.bf16.mxu0 0
  %6751 = vmatpush1.bf16.msra.mxu0 %v6735
  %6752 = vmatprep.subr.bf16.mxu0 0
  %6753 = vmatpush1.bf16.msra.mxu0 %v6734
  %6754 = vmatprep.subr.bf16.mxu0 0
  %6755 = vmatpush1.bf16.msra.mxu0 %v6733
  %6756 = vmatprep.subr.bf16.mxu0 0
  %6757 = vmatpush1.bf16.msra.mxu0 %v6732
  %6758 = vmatprep.subr.bf16.mxu0 0
  %6759 = vmatpush1.bf16.msra.mxu0 %v6731
  %6760 = vmatprep.subr.bf16.mxu0 0
  %6761 = vmatpush1.bf16.msra.mxu0 %v6730
  %6762 = vmatprep.subr.bf16.mxu0 0
  %6763 = vmatpush2.bf16.msra.mxu0 0
  %6764 = vmatprep.subr.bf16.mxu0 0
  %6765 = vmatpush2.bf16.msra.mxu0 0
  %6766 = vmatprep.subr.bf16.mxu0 0
  %6767 = vmatpush2.bf16.msra.mxu0 0
  %6768 = vmatprep.subr.bf16.mxu0 0
  %6769 = vmatpush2.bf16.msra.mxu0 0
  %6770 = vmatprep.subr.bf16.mxu0 0
  %6771 = vmatpush2.bf16.msra.mxu0 0
  %6772 = vmatprep.subr.bf16.mxu0 0
  %6773 = vmatpush2.bf16.msra.mxu0 0
  %6774 = vmatprep.subr.bf16.mxu0 0
  %6775 = vmatpush2.bf16.msra.mxu0 0
  %6776 = vmatprep.subr.bf16.mxu0 0
  %6777 = vmatpush2.bf16.msra.mxu0 0
  %6778 = vmatprep.mubr.bf16.mxu0 0
  %6779 = vmatmul.mubr.bf16.gmra.mxu0 %v6679
  %v6780 = vpop.f32.mrf.mxu0
  %v6781 = vadd.f32 0.0, %v6780
  %v6782 = vpop.f32.mrf.mxu0
  %v6783 = vpop.f32.mrf.mxu0
  %v6784 = vadd.f32 0.0, %v6783
  %v6785 = vpop.f32.mrf.mxu0
  %6786 = vmatprep.mubr.bf16.mxu0 0
  %6787 = vmatmul.mubr.bf16.gmra.mxu0 %v6680
  %v6788 = vpop.f32.mrf.mxu0
  %v6789 = vadd.f32 0.0, %v6788
  %v6790 = vpop.f32.mrf.mxu0
  %v6791 = vpop.f32.mrf.mxu0
  %v6792 = vadd.f32 0.0, %v6791
  %v6793 = vpop.f32.mrf.mxu0
  %6794 = vdwg.mxu0
  %v6795 = vadd.f32 %v6626, %v6781
  %v6796 = vadd.f32 %v6627, %v6784
  %v6797 = vadd.f32 %v6628, %v6789
  %v6798 = vadd.f32 %v6629, %v6792
  %v6799 = vmul.f32 %v6795, %v131
  %v6800 = vmul.f32 %v6796, %v136
  %v6801 = vmul.f32 %v6797, %v141
  %v6802 = vmul.f32 %v6798, %v146
  %v6803 = vadd.f32 %v5825, %v6799
  %v6804 = vadd.f32 %v5826, %v6800
  %v6805 = vadd.f32 %v5827, %v6801
  %v6806 = vadd.f32 %v5828, %v6802
  %s6807 = scalar_lea.vmem %s23, 1
  %v6808 = vld [vmem:[%s6807] sm:$0x1]
  %s6809 = scalar_lea.vmem %s24, 1
  %v6810 = vld [vmem:[%s6809] sm:$0x1]
  %v6811 = vsel %vm325, %v6803, 0.0
  %6812 = vadd.xlane.f32.xlu0 %v6811
  %v6813 = vpop.xlane.xlu0 %6812
  %v6814 = vsel %vm325, %v6804, 0.0
  %6815 = vadd.xlane.f32.xlu0 %v6814
  %v6816 = vpop.xlane.xlu0 %6815
  %v6817 = vsel %vm325, %v6805, 0.0
  %6818 = vadd.xlane.f32.xlu0 %v6817
  %v6819 = vpop.xlane.xlu0 %6818
  %v6820 = vsel %vm325, %v6806, 0.0
  %6821 = vadd.xlane.f32.xlu0 %v6820
  %v6822 = vpop.xlane.xlu0 %6821
  %v6823 = vmul.f32 %v6813, %v2459
  %v6824 = vmul.f32 %v6816, %v2459
  %v6825 = vmul.f32 %v6819, %v2459
  %v6826 = vmul.f32 %v6822, %v2459
  %v6827 = vsub.f32 %v6803, %v6823
  %v6828 = vsub.f32 %v6804, %v6824
  %v6829 = vsub.f32 %v6805, %v6825
  %v6830 = vsub.f32 %v6806, %v6826
  %v6831 = vmul.f32 %v6827, %v6827
  %v6832 = vmul.f32 %v6828, %v6828
  %v6833 = vmul.f32 %v6829, %v6829
  %v6834 = vmul.f32 %v6830, %v6830
  %v6835 = vsel %vm325, %v6831, 0.0
  %6836 = vadd.xlane.f32.xlu0 %v6835
  %v6837 = vpop.xlane.xlu0 %6836
  %v6838 = vsel %vm325, %v6832, 0.0
  %6839 = vadd.xlane.f32.xlu0 %v6838
  %v6840 = vpop.xlane.xlu0 %6839
  %v6841 = vsel %vm325, %v6833, 0.0
  %6842 = vadd.xlane.f32.xlu0 %v6841
  %v6843 = vpop.xlane.xlu0 %6842
  %v6844 = vsel %vm325, %v6834, 0.0
  %6845 = vadd.xlane.f32.xlu0 %v6844
  %v6846 = vpop.xlane.xlu0 %6845
  %v6847 = vmul.f32 %v6837, %v2459
  %v6848 = vmul.f32 %v6840, %v2459
  %v6849 = vmul.f32 %v6843, %v2459
  %v6850 = vmul.f32 %v6846, %v2459
  %v6851 = vadd.f32 %v6847, 1e-05
  %v6852 = vadd.f32 %v6848, 1e-05
  %v6853 = vadd.f32 %v6849, 1e-05
  %v6854 = vadd.f32 %v6850, 1e-05
  %v6855 = vrsqrt.pop %v6851
  %v6856 = vrsqrt.pop %v6852
  %v6857 = vrsqrt.pop %v6853
  %v6858 = vrsqrt.pop %v6854
  %v6859 = vmul.f32 %v6827, %v6855
  %v6860 = vmul.f32 %v6828, %v6856
  %v6861 = vmul.f32 %v6829, %v6857
  %v6862 = vmul.f32 %v6830, %v6858
  %v6864 = vlaneseq
  %v6865 = vshrl.u32 %v6864, 7
  %v6866 = vsub.s32 0, %v6865
  %v6867 = vrot.slane %v6808, %v6866
  %v6869 = vmul.f32 %v6859, %v6867
  %v6870 = vmul.f32 %v6860, %v6867
  %v6871 = vmul.f32 %v6861, %v6867
  %v6872 = vmul.f32 %v6862, %v6867
  %v6874 = vlaneseq
  %v6875 = vshrl.u32 %v6874, 7
  %v6876 = vsub.s32 0, %v6875
  %v6877 = vrot.slane %v6810, %v6876
  %v6879 = vadd.f32 %v6869, %v6877
  %v6880 = vadd.f32 %v6870, %v6877
  %v6881 = vadd.f32 %v6871, %v6877
  %v6882 = vadd.f32 %v6872, %v6877
  %v6883 = vmul.f32 %v6879, %v131
  %v6884 = vmul.f32 %v6880, %v136
  %v6885 = vmul.f32 %v6881, %v141
  %v6886 = vmul.f32 %v6882, %v146
  %v6887 = vpack.c.bf16 %v6884, %v6883
  %v6888 = vpack.c.bf16 %v6886, %v6885
  %v6889 = vld [vmem:[%s25] sm:$0xf]
  %v6890 = vld [vmem:[%s25 + $0x4] sm:$0xf]
  %v6891 = vld [vmem:[%s25 + $0x8] sm:$0xf]
  %v6892 = vld [vmem:[%s25 + $0xc] sm:$0xf]
  %v6893 = vld [vmem:[%s25 + $0x10] sm:$0xf]
  %v6894 = vld [vmem:[%s25 + $0x14] sm:$0xf]
  %v6895 = vld [vmem:[%s25 + $0x18] sm:$0xf]
  %v6896 = vld [vmem:[%s25 + $0x1c] sm:$0xf]
  %v6897 = vld [vmem:[%s26] sm:$0x1]
  %v6899 = vlaneseq
  %v6900 = vshrl.u32 %v6899, 7
  %v6901 = vsub.s32 0, %v6900
  %v6902 = vrot.slane %v6897, %v6901
  %v6912 = vunpack.c.l.b16 %v6889
  %v6913 = vunpack.c.l.b16 %v6890
  %v6914 = vunpack.c.l.b16 %v6891
  %v6915 = vunpack.c.l.b16 %v6892
  %v6916 = vunpack.c.l.b16 %v6893
  %v6917 = vunpack.c.l.b16 %v6894
  %v6918 = vunpack.c.l.b16 %v6895
  %v6919 = vunpack.c.l.b16 %v6896
  %v6920 = vpack.c.b16 %v6913, %v6912
  %v6921 = vpack.c.b16 %v6915, %v6914
  %v6922 = vpack.c.b16 %v6917, %v6916
  %v6923 = vpack.c.b16 %v6919, %v6918
  %v6929 = vsel %vm325, %v6887, 0
  %v6932 = vsel %vm325, %v6888, 0
  %6934 = vmatprep.subr.bf16.mxu0 0
  %6935 = vmatpush1.bf16.msra.mxu0 0
  %6936 = vmatprep.subr.bf16.mxu0 0
  %6937 = vmatpush1.bf16.msra.mxu0 0
  %6938 = vmatprep.subr.bf16.mxu0 0
  %6939 = vmatpush1.bf16.msra.mxu0 0
  %6940 = vmatprep.subr.bf16.mxu0 0
  %6941 = vmatpush1.bf16.msra.mxu0 0
  %6942 = vmatprep.subr.bf16.mxu0 0
  %6943 = vmatpush1.bf16.msra.mxu0 %v6923
  %6944 = vmatprep.subr.bf16.mxu0 0
  %6945 = vmatpush1.bf16.msra.mxu0 %v6922
  %6946 = vmatprep.subr.bf16.mxu0 0
  %6947 = vmatpush1.bf16.msra.mxu0 %v6921
  %6948 = vmatprep.subr.bf16.mxu0 0
  %6949 = vmatpush1.bf16.msra.mxu0 %v6920
  %6950 = vmatprep.subr.bf16.mxu0 0
  %6951 = vmatpush2.bf16.msra.mxu0 0
  %6952 = vmatprep.subr.bf16.mxu0 0
  %6953 = vmatpush2.bf16.msra.mxu0 0
  %6954 = vmatprep.subr.bf16.mxu0 0
  %6955 = vmatpush2.bf16.msra.mxu0 0
  %6956 = vmatprep.subr.bf16.mxu0 0
  %6957 = vmatpush2.bf16.msra.mxu0 0
  %6958 = vmatprep.subr.bf16.mxu0 0
  %6959 = vmatpush2.bf16.msra.mxu0 0
  %6960 = vmatprep.subr.bf16.mxu0 0
  %6961 = vmatpush2.bf16.msra.mxu0 0
  %6962 = vmatprep.subr.bf16.mxu0 0
  %6963 = vmatpush2.bf16.msra.mxu0 0
  %6964 = vmatprep.subr.bf16.mxu0 0
  %6965 = vmatpush2.bf16.msra.mxu0 0
  %6966 = vmatprep.mubr.bf16.mxu0 0
  %6967 = vmatmul.mubr.bf16.gmra.mxu0 %v6929
  %v6968 = vpop.f32.mrf.mxu0
  %v6969 = vadd.f32 %v6902, %v6968
  %v6970 = vpop.f32.mrf.mxu0
  %v6971 = vpop.f32.mrf.mxu0
  %v6972 = vadd.f32 %v6902, %v6971
  %v6973 = vpop.f32.mrf.mxu0
  %6974 = vmatprep.mubr.bf16.mxu0 0
  %6975 = vmatmul.mubr.bf16.gmra.mxu0 %v6932
  %v6976 = vpop.f32.mrf.mxu0
  %v6977 = vadd.f32 %v6902, %v6976
  %v6978 = vpop.f32.mrf.mxu0
  %v6979 = vpop.f32.mrf.mxu0
  %v6980 = vadd.f32 %v6902, %v6979
  %v6981 = vpop.f32.mrf.mxu0
  %6982 = vdwg.mxu0
  %v6983 = vmul.f32 %v6969, %v131
  %v6984 = vmul.f32 %v6972, %v136
  %v6985 = vmul.f32 %v6977, %v141
  %v6986 = vmul.f32 %v6980, %v146
  %v6987 = vld [vmem:[%s6] sm:$0xff]
  %v6988 = vld [vmem:[%s6 + $0x8] sm:$0xff]
  %v6989 = vld [vmem:[%s6 + $0x10] sm:$0xff]
  %v6990 = vld [vmem:[%s6 + $0x18] sm:$0xff]
  %v6991 = vmul.f32 %v6983, 1.442695
  %v6992 = vpow.pop %v6991
  %v6993 = vmul.f32 %v6984, 1.442695
  %v6994 = vpow.pop %v6993
  %v6995 = vmul.f32 %v6985, 1.442695
  %v6996 = vpow.pop %v6995
  %v6997 = vmul.f32 %v6986, 1.442695
  %v6998 = vpow.pop %v6997
  %7003 = vrot.lane.b32.xlu0 %v6992, 96
  %v7004 = vpop.permute.xlu0 %7003
  %7005 = vrot.lane.b32.xlu0 %v6994, 96
  %v7006 = vpop.permute.xlu0 %7005
  %7007 = vrot.lane.b32.xlu0 %v6996, 96
  %v7008 = vpop.permute.xlu0 %7007
  %7009 = vrot.lane.b32.xlu0 %v6998, 96
  %v7010 = vpop.permute.xlu0 %7009
  %v7015 = vmul.f32 %v6987, %v7004
  %v7016 = vmul.f32 %v6988, %v7006
  %v7017 = vmul.f32 %v6989, %v7008
  %v7018 = vmul.f32 %v6990, %v7010
  %v7019 = vadd.f32 %v6983, %v7015
  %v7020 = vadd.f32 %v6984, %v7016
  %v7021 = vadd.f32 %v6985, %v7017
  %v7022 = vadd.f32 %v6986, %v7018
  %v7023 = vmul.f32 %v7019, %v131
  %v7024 = vmul.f32 %v7020, %v136
  %v7025 = vmul.f32 %v7021, %v141
  %v7026 = vmul.f32 %v7022, %v146
  %7031 = vrot.lane.b32.xlu0 %v7023, 64
  %v7032 = vpop.permute.xlu0 %7031
  %7033 = vrot.lane.b32.xlu0 %v7024, 64
  %v7034 = vpop.permute.xlu0 %7033
  %7035 = vrot.lane.b32.xlu0 %v7025, 64
  %v7036 = vpop.permute.xlu0 %7035
  %7037 = vrot.lane.b32.xlu0 %v7026, 64
  %v7038 = vpop.permute.xlu0 %7037
  %v7043 = vsel %vm325, %v6983, %v7032
  %v7044 = vsel %vm325, %v6984, %v7034
  %v7045 = vsel %vm325, %v6985, %v7036
  %v7046 = vsel %vm325, %v6986, %v7038
  %vm7047 = vcmask 785408
  %v7048 = vsel %vm7047, %v7043, 0.0
  %v7049 = vsel %vm7047, %v7044, 0.0
  %v7050 = vsel %vm7047, %v7045, 0.0
  %v7051 = vsel %vm7047, %v7046, 0.0
  %7052 = vst [vmem:[%s27] sm:$0xff] %v7048
  %7053 = vst [vmem:[%s27 + $0x8] sm:$0xff] %v7049
  %7054 = vst [vmem:[%s27 + $0x10] sm:$0xff] %v7050
  %7055 = vst [vmem:[%s27 + $0x18] sm:$0xff] %v7051
  // Predicated region
  $region110: #{text_encoder_forward.1} parent=0 // pred_check
    _
  $region111: #{text_encoder_forward.1} parent=0 // pred_check_branch
    %7057 = sbr.rel (0) target = $region113
  $region112: #{text_encoder_forward.1} parent=0 // pred_region
    _
  $region113: #{text_encoder_forward.1} parent=0 // pred_fallthru
    _
  // Predicated region
  $region114: #{text_encoder_forward.1} parent=0 // pred_check
    _
  $region115: #{text_encoder_forward.1} parent=0 // pred_check_branch
    %7059 = sbr.rel (0) target = $region117
  $region116: #{text_encoder_forward.1} parent=0 // pred_region
    _
  $region117: #{text_encoder_forward.1} parent=0 // pred_fallthru
    _

</llo_original>
